<compile_context>
chip_gen: v7x
topology: tpu7x:2x2x1
jax: 0.10.0
libtpu: 0.0.40
codegen_flags: <defaults>
</compile_context>

<pallas_src>
import math
import functools

import jax
import jax.numpy as jnp
from jax.experimental import pallas as pl
from jax.experimental.pallas import tpu as pltpu

LAYER_DIMS = [6, 200, 300, 400, 500, 600, 700, 800]
NEG_SLOPE = 0.01  # nn.LeakyReLU default


def _round_up(x, m):
    return (x + m - 1) // m * m


# Lane-aligned hidden dims (multiple of 128); the input dim (6) and the final output dim (800)
# stay as-is (they equal the full last dim of their arrays, so the (8,128) rule is satisfied).
PADDED_DIMS = ([LAYER_DIMS[0]]
               + [_round_up(d, 128) for d in LAYER_DIMS[1:-1]]
               + [LAYER_DIMS[-1]])
# -> [6, 256, 384, 512, 512, 640, 768, 800]


# ----------------------------------------------------------------------------- kernel


def mlp_kernel(x_ref,
               w1, b1, w2, b2, w3, b3, w4, b4, w5, b5, w6, b6, w7, b7,
               o_ref, *, bf16_epilogue=True):
    h = x_ref[...]  # (TM, 6) bf16

    def hidden(h, w_ref, b_ref):
        # bf16 x bf16 matmul with f32 accumulation on the MXU.
        y = jnp.dot(h, w_ref[...], preferred_element_type=jnp.float32)
        if bf16_epilogue:
            # Bias add + LeakyReLU in bf16 (v6e/v7x bf16 VALU); next dot consumes bf16 directly.
            y = y.astype(jnp.bfloat16) + b_ref[...]
        else:
            # v5e path: f32 epilogue (no bf16 VALU), cast to bf16 only for the next matmul.
            y = y + b_ref[...].astype(jnp.float32)
        y = jnp.where(y > 0, y, NEG_SLOPE * y)
        return y.astype(jnp.bfloat16)

    h = hidden(h, w1, b1)
    h = hidden(h, w2, b2)
    h = hidden(h, w3, b3)
    h = hidden(h, w4, b4)
    h = hidden(h, w5, b5)
    h = hidden(h, w6, b6)
    # Final Linear: no activation; f32 bias add, f32 store.
    y = jnp.dot(h, w7[...], preferred_element_type=jnp.float32) + b7[...]
    o_ref[...] = y.astype(o_ref.dtype)


# ----------------------------------------------------------------------------- params


def init_params(key):
    """f32 parameters mirroring the PyTorch module init.
       weights: xavier_uniform_, biases: uniform(-1/sqrt(fan_in), 1/sqrt(fan_in)).
       Weights stored transposed vs PyTorch -> (in, out)."""
    params = []
    for i in range(7):
        fan_in, fan_out = LAYER_DIMS[i], LAYER_DIMS[i + 1]
        key, kw, kb = jax.random.split(key, 3)
        limit_w = math.sqrt(6.0 / (fan_in + fan_out))            # xavier uniform
        w = jax.random.uniform(kw, (fan_in, fan_out), jnp.float32,
                               minval=-limit_w, maxval=limit_w)
        limit_b = 1.0 / math.sqrt(fan_in)                        # torch Linear bias default
        b = jax.random.uniform(kb, (1, fan_out), jnp.float32,
                               minval=-limit_b, maxval=limit_b)
        params.append(w)
        params.append(b)
    return params


def prepare_params(params, weight_dtype=jnp.bfloat16):
    """Zero-pad weights/biases to PADDED_DIMS; cast weights to the compute dtype.
       Hidden-layer biases are bf16 (bf16 epilogue); the final bias stays f32.
       Padded rows/cols are zero, so they stay zero through LeakyReLU and never leak."""
    prepared = []
    for i in range(7):
        w, b = params[2 * i], params[2 * i + 1]
        kin, kout = PADDED_DIMS[i], PADDED_DIMS[i + 1]
        wp = jnp.zeros((kin, kout), weight_dtype)
        wp = wp.at[:w.shape[0], :w.shape[1]].set(w.astype(weight_dtype))
        bias_dtype = jnp.bfloat16 if i < 6 else jnp.float32
        bp = jnp.zeros((1, kout), bias_dtype)
        bp = bp.at[:, :b.shape[1]].set(b.astype(bias_dtype))
        prepared.append(wp)
        prepared.append(bp)
    return prepared


# ----------------------------------------------------------------------------- wrapper


_BUFFERED1_OK = None


def _single_buffer_supported():
    """Probe once whether pipeline_mode=pl.Buffered(1) is accepted by this Pallas build."""
    global _BUFFERED1_OK
    if _BUFFERED1_OK is not None:
        return _BUFFERED1_OK
    try:
        def _probe(a_ref, o_ref):
            o_ref[...] = a_ref[...] * 2.0

        spec = pl.BlockSpec((8, 128), lambda i: (0, 0), pipeline_mode=pl.Buffered(1))
        f = pl.pallas_call(
            _probe,
            out_shape=jax.ShapeDtypeStruct((8, 128), jnp.float32),
            grid=(2,),
            in_specs=[spec],
            out_specs=pl.BlockSpec((8, 128), lambda i: (0, 0)),
        )
        jax.block_until_ready(f(jnp.ones((8, 128), jnp.float32)))
        _BUFFERED1_OK = True
    except Exception:
        _BUFFERED1_OK = False
    return _BUFFERED1_OK


def _resident_spec(shape, pipeline_mode):
    """Constant index_map -> block DMA'd once, resident in VMEM across grid steps."""
    if pipeline_mode is None:
        return pl.BlockSpec(shape, lambda i: (0, 0))
    return pl.BlockSpec(shape, lambda i: (0, 0), pipeline_mode=pipeline_mode)


def _tile_plan(B, tm):
    """Pick (n_tiles, tm_eff) that minimizes batch padding; ensure >=2 grid steps for
       medium batches so the 'parallel' axis can use both v7x TensorCores."""
    n_tiles = max(1, -(-B // tm))
    if n_tiles == 1 and B >= 16:
        n_tiles = 2
    tm_eff = _round_up(-(-B // n_tiles), 8)
    return n_tiles, tm_eff


@functools.partial(jax.jit,
                   static_argnames=("tm_eff", "n_tiles", "single_buffer_w", "bf16_epilogue"))
def _mlp_forward_impl(x, params, *, tm_eff, n_tiles, single_buffer_w, bf16_epilogue):
    B, F = x.shape
    Bp = tm_eff * n_tiles
    xp = x.astype(jnp.bfloat16)
    if Bp != B:
        xp = jnp.zeros((Bp, F), jnp.bfloat16).at[:B, :].set(xp)

    out_dim = PADDED_DIMS[-1]  # 800, no column padding on the output
    pipeline_mode = pl.Buffered(1) if single_buffer_w else None

    in_specs = [pl.BlockSpec((tm_eff, F), lambda i: (i, 0))]   # activation tile (bf16)
    for li in range(7):
        kin, kout = PADDED_DIMS[li], PADDED_DIMS[li + 1]
        in_specs.append(_resident_spec((kin, kout), pipeline_mode))  # weight: resident
        in_specs.append(_resident_spec((1, kout), pipeline_mode))    # bias:   resident
    out_specs = pl.BlockSpec((tm_eff, out_dim), lambda i: (i, 0))

    out = pl.pallas_call(
        functools.partial(mlp_kernel, bf16_epilogue=bf16_epilogue),
        out_shape=jax.ShapeDtypeStruct((Bp, out_dim), jnp.float32),
        grid=(n_tiles,),
        in_specs=in_specs,
        out_specs=out_specs,
        compiler_params=pltpu.CompilerParams(
            dimension_semantics=("parallel",),        # megacore split across batch tiles
            vmem_limit_bytes=40 * 1024 * 1024,        # ~4 MiB weights + out tiles + temps;
        ),                                            # fits v7x's 64 MiB/TC with headroom
    )(xp, *params)

    return out[:B] if Bp != B else out


def mlp_forward(x, prepared_params, *, tm=512, bf16_epilogue=True):
    """x: (B, 6) f32.  prepared_params: output of prepare_params().  Returns (B, 800) f32.
       Set bf16_epilogue=False on v5e (no bf16 VALU)."""
    assert x.shape[1] == LAYER_DIMS[0]
    n_tiles, tm_eff = _tile_plan(x.shape[0], tm)
    single = _single_buffer_supported()
    return _mlp_forward_impl(x, tuple(prepared_params),
                             tm_eff=tm_eff, n_tiles=n_tiles,
                             single_buffer_w=single, bf16_epilogue=bf16_epilogue)


# ----------------------------------------------------------------------------- references


def mlp_reference_matched(x, prepared_params):
    """Pure-JAX reference mirroring the kernel's precision choices
       (bf16 weights/activations, f32 MXU accumulation, bf16 epilogue, f32 final layer)."""
    h = x.astype(jnp.bfloat16)
    for i in range(6):
        w, b = prepared_params[2 * i], prepared_params[2 * i + 1]
        y = jnp.dot(h, w, preferred_element_type=jnp.float32)
        y = y.astype(jnp.bfloat16) + b
        y = jnp.where(y > 0, y, NEG_SLOPE * y)
        h = y.astype(jnp.bfloat16)
    w, b = prepared_params[12], prepared_params[13]
    return jnp.dot(h, w, preferred_element_type=jnp.float32) + b


def mlp_reference_f32(x, params):
    """Full-f32 reference of the original module semantics."""
    h = x
    for i in range(7):
        w, b = params[2 * i], params[2 * i + 1]
        h = h @ w + b
        if i < 6:
            h = jnp.where(h > 0, h, NEG_SLOPE * h)
    return h


# ----------------------------------------------------------------------------- main


if __name__ == "__main__":
    key = jax.random.PRNGKey(0)
    key, kx = jax.random.split(key)

    batch = 8
    x = jax.random.normal(kx, (batch, LAYER_DIMS[0]), jnp.float32)

    params = init_params(key)            # f32, PyTorch-equivalent init
    prepared = prepare_params(params)    # padded + bf16 weights / biases for the kernel

    out = mlp_forward(x, prepared)
    out = jax.block_until_ready(out)
    assert out.shape == (batch, LAYER_DIMS[-1]), out.shape

    # Check vs a precision-matched reference (bf16 dot + bf16 epilogue, f32 accumulation).
    ref_m = mlp_reference_matched(x, prepared)
    assert jnp.allclose(out, ref_m, atol=1e-2, rtol=1e-2), "mismatch vs matched reference"

    # Loose check vs the full-f32 module semantics (bf16 weights/epilogue introduce drift).
    ref_f32 = mlp_reference_f32(x, params)
    rel = float(jnp.max(jnp.abs(out - ref_f32)) / (jnp.max(jnp.abs(ref_f32)) + 1e-6))
    assert rel < 0.08, f"bf16 drift too large vs f32 reference: {rel}"

    # Exercise the multi-tile (two-grid-step / both-TC) path with minimal batch padding.
    xb = jax.random.normal(jax.random.PRNGKey(1), (300, LAYER_DIMS[0]), jnp.float32)
    outb = jax.block_until_ready(mlp_forward(xb, prepared))
    refb = mlp_reference_matched(xb, prepared)
    assert outb.shape == (300, LAYER_DIMS[-1])
    assert jnp.allclose(outb, refb, atol=1e-2, rtol=1e-2), "mismatch on multi-tile batch"

    print("KERNEL_OK")
</pallas_src>

<mosaic_0001>
module attributes {stable_mosaic.version = 11 : i64} {
  func.func @_probe(%arg0: i32, %arg1: memref<8x128xf32, #tpu.memory_space<vmem>>, %arg2: memref<8x128xf32, #tpu.memory_space<vmem>>) attributes {dimension_semantics = [#tpu.dimension_semantics<arbitrary>], iteration_bounds = array<i64: 2>, scalar_prefetch = 0 : i64, scratch_operands = 0 : i64, tpu.core_type = #tpu.core_type<tc>, window_params = [{pipeline_mode = #tpu.pipeline_mode<synchronous>, transform_indices = @transform_0, window_bounds = array<i64: 8, 128>}, {pipeline_mode = #tpu.pipeline_mode<synchronous>, transform_indices = @transform_1, window_bounds = array<i64: 8, 128>}]} {
    %c0 = arith.constant 0 : index
    %c0_0 = arith.constant 0 : index
    %0 = vector.load %arg1[%c0, %c0_0] : memref<8x128xf32, #tpu.memory_space<vmem>>, vector<8x128xf32>
    %cst = arith.constant 2.000000e+00 : f32
    %1 = vector.broadcast %cst : f32 to vector<8x128xf32>
    %2 = arith.mulf %0, %1 : vector<8x128xf32>
    %c0_1 = arith.constant 0 : index
    %c0_2 = arith.constant 0 : index
    %3 = vector.load %arg2[%c0_1, %c0_2] : memref<8x128xf32, #tpu.memory_space<vmem>>, vector<8x128xf32>
    tpu.vector_store %arg2[%c0_1, %c0_2], %2 {strides = array<i32>} : memref<8x128xf32, #tpu.memory_space<vmem>>, vector<8x128xf32>,
    return
  }
  func.func @transform_0(%arg0: i32) -> (i32, i32) {
    %c0_i32 = arith.constant 0 : i32
    %c0_i32_0 = arith.constant 0 : i32
    %c0_i32_1 = arith.constant 0 : i32
    return %c0_i32, %c0_i32_0 : i32, i32
  }
  func.func @transform_1(%arg0: i32) -> (i32, i32) {
    %c0_i32 = arith.constant 0 : i32
    %c0_i32_0 = arith.constant 0 : i32
    %c0_i32_1 = arith.constant 0 : i32
    return %c0_i32, %c0_i32_0 : i32, i32
  }
}

module attributes {stable_mosaic.version = 11 : i64} {
  func.func @mlp_kernel(%arg0: i32, %arg1: memref<8x6xbf16, #tpu.memory_space<vmem>>, %arg2: memref<6x256xbf16, #tpu.memory_space<vmem>>, %arg3: memref<1x256xbf16, #tpu.memory_space<vmem>>, %arg4: memref<256x384xbf16, #tpu.memory_space<vmem>>, %arg5: memref<1x384xbf16, #tpu.memory_space<vmem>>, %arg6: memref<384x512xbf16, #tpu.memory_space<vmem>>, %arg7: memref<1x512xbf16, #tpu.memory_space<vmem>>, %arg8: memref<512x512xbf16, #tpu.memory_space<vmem>>, %arg9: memref<1x512xbf16, #tpu.memory_space<vmem>>, %arg10: memref<512x640xbf16, #tpu.memory_space<vmem>>, %arg11: memref<1x640xbf16, #tpu.memory_space<vmem>>, %arg12: memref<640x768xbf16, #tpu.memory_space<vmem>>, %arg13: memref<1x768xbf16, #tpu.memory_space<vmem>>, %arg14: memref<768x800xbf16, #tpu.memory_space<vmem>>, %arg15: memref<1x800xf32, #tpu.memory_space<vmem>>, %arg16: memref<8x800xf32, #tpu.memory_space<vmem>>) attributes {dimension_semantics = [#tpu.dimension_semantics<parallel>], iteration_bounds = array<i64: 1>, scalar_prefetch = 0 : i64, scratch_operands = 0 : i64, tpu.core_type = #tpu.core_type<tc>, window_params = [{transform_indices = @transform_0, window_bounds = array<i64: 8, 6>}, {pipeline_mode = #tpu.pipeline_mode<synchronous>, transform_indices = @transform_1, window_bounds = array<i64: 6, 256>}, {pipeline_mode = #tpu.pipeline_mode<synchronous>, transform_indices = @transform_2, window_bounds = array<i64: 1, 256>}, {pipeline_mode = #tpu.pipeline_mode<synchronous>, transform_indices = @transform_3, window_bounds = array<i64: 256, 384>}, {pipeline_mode = #tpu.pipeline_mode<synchronous>, transform_indices = @transform_4, window_bounds = array<i64: 1, 384>}, {pipeline_mode = #tpu.pipeline_mode<synchronous>, transform_indices = @transform_5, window_bounds = array<i64: 384, 512>}, {pipeline_mode = #tpu.pipeline_mode<synchronous>, transform_indices = @transform_6, window_bounds = array<i64: 1, 512>}, {pipeline_mode = #tpu.pipeline_mode<synchronous>, transform_indices = @transform_7, window_bounds = array<i64: 512, 512>}, {pipeline_mode = #tpu.pipeline_mode<synchronous>, transform_indices = @transform_8, window_bounds = array<i64: 1, 512>}, {pipeline_mode = #tpu.pipeline_mode<synchronous>, transform_indices = @transform_9, window_bounds = array<i64: 512, 640>}, {pipeline_mode = #tpu.pipeline_mode<synchronous>, transform_indices = @transform_10, window_bounds = array<i64: 1, 640>}, {pipeline_mode = #tpu.pipeline_mode<synchronous>, transform_indices = @transform_11, window_bounds = array<i64: 640, 768>}, {pipeline_mode = #tpu.pipeline_mode<synchronous>, transform_indices = @transform_12, window_bounds = array<i64: 1, 768>}, {pipeline_mode = #tpu.pipeline_mode<synchronous>, transform_indices = @transform_13, window_bounds = array<i64: 768, 800>}, {pipeline_mode = #tpu.pipeline_mode<synchronous>, transform_indices = @transform_14, window_bounds = array<i64: 1, 800>}, {transform_indices = @transform_15, window_bounds = array<i64: 8, 800>}]} {
    %c0 = arith.constant 0 : index
    %c0_0 = arith.constant 0 : index
    %0 = vector.load %arg1[%c0, %c0_0] : memref<8x6xbf16, #tpu.memory_space<vmem>>, vector<8x6xbf16>
    %c0_1 = arith.constant 0 : index
    %c0_2 = arith.constant 0 : index
    %1 = vector.load %arg2[%c0_1, %c0_2] : memref<6x256xbf16, #tpu.memory_space<vmem>>, vector<6x256xbf16>
    %cst = arith.constant dense<0.000000e+00> : vector<8x256xf32>
    %2 = tpu.matmul %0, %1, %cst {dimension_numbers = #tpu.dot_dimension_numbers<[1], [0], [0], [1], [0, 0, 1, 1], [], []>} : vector<8x6xbf16>, vector<6x256xbf16>, vector<8x256xf32> -> vector<8x256xf32>
    %3 = arith.truncf %2 : vector<8x256xf32> to vector<8x256xbf16>
    %c0_3 = arith.constant 0 : index
    %c0_4 = arith.constant 0 : index
    %4 = vector.load %arg3[%c0_3, %c0_4] : memref<1x256xbf16, #tpu.memory_space<vmem>>, vector<1x256xbf16>
    %5 = vector.broadcast %4 : vector<1x256xbf16> to vector<8x256xbf16>
    %6 = arith.addf %3, %5 : vector<8x256xbf16>
    %cst_5 = arith.constant 0.000000e+00 : bf16
    %7 = vector.broadcast %cst_5 : bf16 to vector<8x256xbf16>
    %8 = arith.cmpf ogt, %6, %7 : vector<8x256xbf16>
    %cst_6 = arith.constant 1.000980e-02 : bf16
    %9 = vector.broadcast %cst_6 : bf16 to vector<8x256xbf16>
    %10 = arith.mulf %9, %6 : vector<8x256xbf16>
    %11 = arith.select %8, %6, %10 : vector<8x256xi1>, vector<8x256xbf16>
    %c0_7 = arith.constant 0 : index
    %c0_8 = arith.constant 0 : index
    %12 = vector.load %arg4[%c0_7, %c0_8] : memref<256x384xbf16, #tpu.memory_space<vmem>>, vector<256x384xbf16>
    %cst_9 = arith.constant dense<0.000000e+00> : vector<8x384xf32>
    %13 = tpu.matmul %11, %12, %cst_9 {dimension_numbers = #tpu.dot_dimension_numbers<[1], [0], [0], [1], [0, 0, 1, 1], [], []>} : vector<8x256xbf16>, vector<256x384xbf16>, vector<8x384xf32> -> vector<8x384xf32>
    %14 = arith.truncf %13 : vector<8x384xf32> to vector<8x384xbf16>
    %c0_10 = arith.constant 0 : index
    %c0_11 = arith.constant 0 : index
    %15 = vector.load %arg5[%c0_10, %c0_11] : memref<1x384xbf16, #tpu.memory_space<vmem>>, vector<1x384xbf16>
    %16 = vector.broadcast %15 : vector<1x384xbf16> to vector<8x384xbf16>
    %17 = arith.addf %14, %16 : vector<8x384xbf16>
    %cst_12 = arith.constant 0.000000e+00 : bf16
    %18 = vector.broadcast %cst_12 : bf16 to vector<8x384xbf16>
    %19 = arith.cmpf ogt, %17, %18 : vector<8x384xbf16>
    %cst_13 = arith.constant 1.000980e-02 : bf16
    %20 = vector.broadcast %cst_13 : bf16 to vector<8x384xbf16>
    %21 = arith.mulf %20, %17 : vector<8x384xbf16>
    %22 = arith.select %19, %17, %21 : vector<8x384xi1>, vector<8x384xbf16>
    %c0_14 = arith.constant 0 : index
    %c0_15 = arith.constant 0 : index
    %23 = vector.load %arg6[%c0_14, %c0_15] : memref<384x512xbf16, #tpu.memory_space<vmem>>, vector<384x512xbf16>
    %cst_16 = arith.constant dense<0.000000e+00> : vector<8x512xf32>
    %24 = tpu.matmul %22, %23, %cst_16 {dimension_numbers = #tpu.dot_dimension_numbers<[1], [0], [0], [1], [0, 0, 1, 1], [], []>} : vector<8x384xbf16>, vector<384x512xbf16>, vector<8x512xf32> -> vector<8x512xf32>
    %25 = arith.truncf %24 : vector<8x512xf32> to vector<8x512xbf16>
    %c0_17 = arith.constant 0 : index
    %c0_18 = arith.constant 0 : index
    %26 = vector.load %arg7[%c0_17, %c0_18] : memref<1x512xbf16, #tpu.memory_space<vmem>>, vector<1x512xbf16>
    %27 = vector.broadcast %26 : vector<1x512xbf16> to vector<8x512xbf16>
    %28 = arith.addf %25, %27 : vector<8x512xbf16>
    %cst_19 = arith.constant 0.000000e+00 : bf16
    %29 = vector.broadcast %cst_19 : bf16 to vector<8x512xbf16>
    %30 = arith.cmpf ogt, %28, %29 : vector<8x512xbf16>
    %cst_20 = arith.constant 1.000980e-02 : bf16
    %31 = vector.broadcast %cst_20 : bf16 to vector<8x512xbf16>
    %32 = arith.mulf %31, %28 : vector<8x512xbf16>
    %33 = arith.select %30, %28, %32 : vector<8x512xi1>, vector<8x512xbf16>
    %c0_21 = arith.constant 0 : index
    %c0_22 = arith.constant 0 : index
    %34 = vector.load %arg8[%c0_21, %c0_22] : memref<512x512xbf16, #tpu.memory_space<vmem>>, vector<512x512xbf16>
    %cst_23 = arith.constant dense<0.000000e+00> : vector<8x512xf32>
    %35 = tpu.matmul %33, %34, %cst_23 {dimension_numbers = #tpu.dot_dimension_numbers<[1], [0], [0], [1], [0, 0, 1, 1], [], []>} : vector<8x512xbf16>, vector<512x512xbf16>, vector<8x512xf32> -> vector<8x512xf32>
    %36 = arith.truncf %35 : vector<8x512xf32> to vector<8x512xbf16>
    %c0_24 = arith.constant 0 : index
    %c0_25 = arith.constant 0 : index
    %37 = vector.load %arg9[%c0_24, %c0_25] : memref<1x512xbf16, #tpu.memory_space<vmem>>, vector<1x512xbf16>
    %38 = vector.broadcast %37 : vector<1x512xbf16> to vector<8x512xbf16>
    %39 = arith.addf %36, %38 : vector<8x512xbf16>
    %cst_26 = arith.constant 0.000000e+00 : bf16
    %40 = vector.broadcast %cst_26 : bf16 to vector<8x512xbf16>
    %41 = arith.cmpf ogt, %39, %40 : vector<8x512xbf16>
    %cst_27 = arith.constant 1.000980e-02 : bf16
    %42 = vector.broadcast %cst_27 : bf16 to vector<8x512xbf16>
    %43 = arith.mulf %42, %39 : vector<8x512xbf16>
    %44 = arith.select %41, %39, %43 : vector<8x512xi1>, vector<8x512xbf16>
    %c0_28 = arith.constant 0 : index
    %c0_29 = arith.constant 0 : index
    %45 = vector.load %arg10[%c0_28, %c0_29] : memref<512x640xbf16, #tpu.memory_space<vmem>>, vector<512x640xbf16>
    %cst_30 = arith.constant dense<0.000000e+00> : vector<8x640xf32>
    %46 = tpu.matmul %44, %45, %cst_30 {dimension_numbers = #tpu.dot_dimension_numbers<[1], [0], [0], [1], [0, 0, 1, 1], [], []>} : vector<8x512xbf16>, vector<512x640xbf16>, vector<8x640xf32> -> vector<8x640xf32>
    %47 = arith.truncf %46 : vector<8x640xf32> to vector<8x640xbf16>
    %c0_31 = arith.constant 0 : index
    %c0_32 = arith.constant 0 : index
    %48 = vector.load %arg11[%c0_31, %c0_32] : memref<1x640xbf16, #tpu.memory_space<vmem>>, vector<1x640xbf16>
    %49 = vector.broadcast %48 : vector<1x640xbf16> to vector<8x640xbf16>
    %50 = arith.addf %47, %49 : vector<8x640xbf16>
    %cst_33 = arith.constant 0.000000e+00 : bf16
    %51 = vector.broadcast %cst_33 : bf16 to vector<8x640xbf16>
    %52 = arith.cmpf ogt, %50, %51 : vector<8x640xbf16>
    %cst_34 = arith.constant 1.000980e-02 : bf16
    %53 = vector.broadcast %cst_34 : bf16 to vector<8x640xbf16>
    %54 = arith.mulf %53, %50 : vector<8x640xbf16>
    %55 = arith.select %52, %50, %54 : vector<8x640xi1>, vector<8x640xbf16>
    %c0_35 = arith.constant 0 : index
    %c0_36 = arith.constant 0 : index
    %56 = vector.load %arg12[%c0_35, %c0_36] : memref<640x768xbf16, #tpu.memory_space<vmem>>, vector<640x768xbf16>
    %cst_37 = arith.constant dense<0.000000e+00> : vector<8x768xf32>
    %57 = tpu.matmul %55, %56, %cst_37 {dimension_numbers = #tpu.dot_dimension_numbers<[1], [0], [0], [1], [0, 0, 1, 1], [], []>} : vector<8x640xbf16>, vector<640x768xbf16>, vector<8x768xf32> -> vector<8x768xf32>
    %58 = arith.truncf %57 : vector<8x768xf32> to vector<8x768xbf16>
    %c0_38 = arith.constant 0 : index
    %c0_39 = arith.constant 0 : index
    %59 = vector.load %arg13[%c0_38, %c0_39] : memref<1x768xbf16, #tpu.memory_space<vmem>>, vector<1x768xbf16>
    %60 = vector.broadcast %59 : vector<1x768xbf16> to vector<8x768xbf16>
    %61 = arith.addf %58, %60 : vector<8x768xbf16>
    %cst_40 = arith.constant 0.000000e+00 : bf16
    %62 = vector.broadcast %cst_40 : bf16 to vector<8x768xbf16>
    %63 = arith.cmpf ogt, %61, %62 : vector<8x768xbf16>
    %cst_41 = arith.constant 1.000980e-02 : bf16
    %64 = vector.broadcast %cst_41 : bf16 to vector<8x768xbf16>
    %65 = arith.mulf %64, %61 : vector<8x768xbf16>
    %66 = arith.select %63, %61, %65 : vector<8x768xi1>, vector<8x768xbf16>
    %c0_42 = arith.constant 0 : index
    %c0_43 = arith.constant 0 : index
    %67 = vector.load %arg14[%c0_42, %c0_43] : memref<768x800xbf16, #tpu.memory_space<vmem>>, vector<768x800xbf16>
    %cst_44 = arith.constant dense<0.000000e+00> : vector<8x800xf32>
    %68 = tpu.matmul %66, %67, %cst_44 {dimension_numbers = #tpu.dot_dimension_numbers<[1], [0], [0], [1], [0, 0, 1, 1], [], []>} : vector<8x768xbf16>, vector<768x800xbf16>, vector<8x800xf32> -> vector<8x800xf32>
    %c0_45 = arith.constant 0 : index
    %c0_46 = arith.constant 0 : index
    %69 = vector.load %arg15[%c0_45, %c0_46] : memref<1x800xf32, #tpu.memory_space<vmem>>, vector<1x800xf32>
    %70 = vector.broadcast %69 : vector<1x800xf32> to vector<8x800xf32>
    %71 = arith.addf %68, %70 : vector<8x800xf32>
    %c0_47 = arith.constant 0 : index
    %c0_48 = arith.constant 0 : index
    %72 = vector.load %arg16[%c0_47, %c0_48] : memref<8x800xf32, #tpu.memory_space<vmem>>, vector<8x800xf32>
    tpu.vector_store %arg16[%c0_47, %c0_48], %71 {strides = array<i32>} : memref<8x800xf32, #tpu.memory_space<vmem>>, vector<8x800xf32>,
    return
  }
  func.func @transform_0(%arg0: i32) -> (i32, i32) {
    %c0_i32 = arith.constant 0 : i32
    %c0_i32_0 = arith.constant 0 : i32
    return %arg0, %c0_i32 : i32, i32
  }
  func.func @transform_1(%arg0: i32) -> (i32, i32) {
    %c0_i32 = arith.constant 0 : i32
    %c0_i32_0 = arith.constant 0 : i32
    %c0_i32_1 = arith.constant 0 : i32
    return %c0_i32, %c0_i32_0 : i32, i32
  }
  func.func @transform_2(%arg0: i32) -> (i32, i32) {
    %c0_i32 = arith.constant 0 : i32
    %c0_i32_0 = arith.constant 0 : i32
    %c0_i32_1 = arith.constant 0 : i32
    return %c0_i32, %c0_i32_0 : i32, i32
  }
  func.func @transform_3(%arg0: i32) -> (i32, i32) {
    %c0_i32 = arith.constant 0 : i32
    %c0_i32_0 = arith.constant 0 : i32
    %c0_i32_1 = arith.constant 0 : i32
    return %c0_i32, %c0_i32_0 : i32, i32
  }
  func.func @transform_4(%arg0: i32) -> (i32, i32) {
    %c0_i32 = arith.constant 0 : i32
    %c0_i32_0 = arith.constant 0 : i32
    %c0_i32_1 = arith.constant 0 : i32
    return %c0_i32, %c0_i32_0 : i32, i32
  }
  func.func @transform_5(%arg0: i32) -> (i32, i32) {
    %c0_i32 = arith.constant 0 : i32
    %c0_i32_0 = arith.constant 0 : i32
    %c0_i32_1 = arith.constant 0 : i32
    return %c0_i32, %c0_i32_0 : i32, i32
  }
  func.func @transform_6(%arg0: i32) -> (i32, i32) {
    %c0_i32 = arith.constant 0 : i32
    %c0_i32_0 = arith.constant 0 : i32
    %c0_i32_1 = arith.constant 0 : i32
    return %c0_i32, %c0_i32_0 : i32, i32
  }
  func.func @transform_7(%arg0: i32) -> (i32, i32) {
    %c0_i32 = arith.constant 0 : i32
    %c0_i32_0 = arith.constant 0 : i32
    %c0_i32_1 = arith.constant 0 : i32
    return %c0_i32, %c0_i32_0 : i32, i32
  }
  func.func @transform_8(%arg0: i32) -> (i32, i32) {
    %c0_i32 = arith.constant 0 : i32
    %c0_i32_0 = arith.constant 0 : i32
    %c0_i32_1 = arith.constant 0 : i32
    return %c0_i32, %c0_i32_0 : i32, i32
  }
  func.func @transform_9(%arg0: i32) -> (i32, i32) {
    %c0_i32 = arith.constant 0 : i32
    %c0_i32_0 = arith.constant 0 : i32
    %c0_i32_1 = arith.constant 0 : i32
    return %c0_i32, %c0_i32_0 : i32, i32
  }
  func.func @transform_10(%arg0: i32) -> (i32, i32) {
    %c0_i32 = arith.constant 0 : i32
    %c0_i32_0 = arith.constant 0 : i32
    %c0_i32_1 = arith.constant 0 : i32
    return %c0_i32, %c0_i32_0 : i32, i32
  }
  func.func @transform_11(%arg0: i32) -> (i32, i32) {
    %c0_i32 = arith.constant 0 : i32
    %c0_i32_0 = arith.constant 0 : i32
    %c0_i32_1 = arith.constant 0 : i32
    return %c0_i32, %c0_i32_0 : i32, i32
  }
  func.func @transform_12(%arg0: i32) -> (i32, i32) {
    %c0_i32 = arith.constant 0 : i32
    %c0_i32_0 = arith.constant 0 : i32
    %c0_i32_1 = arith.constant 0 : i32
    return %c0_i32, %c0_i32_0 : i32, i32
  }
  func.func @transform_13(%arg0: i32) -> (i32, i32) {
    %c0_i32 = arith.constant 0 : i32
    %c0_i32_0 = arith.constant 0 : i32
    %c0_i32_1 = arith.constant 0 : i32
    return %c0_i32, %c0_i32_0 : i32, i32
  }
  func.func @transform_14(%arg0: i32) -> (i32, i32) {
    %c0_i32 = arith.constant 0 : i32
    %c0_i32_0 = arith.constant 0 : i32
    %c0_i32_1 = arith.constant 0 : i32
    return %c0_i32, %c0_i32_0 : i32, i32
  }
  func.func @transform_15(%arg0: i32) -> (i32, i32) {
    %c0_i32 = arith.constant 0 : i32
    %c0_i32_0 = arith.constant 0 : i32
    return %arg0, %c0_i32 : i32, i32
  }
}

</mosaic_0001>

<llo_original>
// kernel: tpu_custom_call.1
$region0: #{tpu_custom_call.1}
  #allocation0 [shape = 'u32[]', space=smem, size = 0x4, offset = 0x4, fixed_abs, tag = 'smem constant byte address 0x4 - core index']
  #allocation1 [shape = 'u32[144,128]{1,0:T(1,128)}', space=vmem, size = 0x12000, scoped, tag = 'internal scratch']
  %s0 = inlined_call_operand.hbm [shape: f32[8,128], index: 0, kind: input, shape index: {}]
  %s1 = inlined_call_operand.hbm [shape: f32[8,128], index: 1, kind: output, shape index: {}]
  %s2 = sld [smem:[#allocation0]]
  $region41: #{tpu_custom_call.1} parent=0
    _
  %s4 = ssub.s32 1, %s2
  %s5 = scalar_select 0, %s4, %s2
  $region1: #{tpu_custom_call.1} parent=0
    #allocation2 [shape = 'u8[4096]{0}', space=vmem, size = 0x1000, scoped, tag = 'input window, operand 0, single buffered']
    #allocation3 [shape = 's32[2]{0}', space=sflag, size = 0x8, scoped, tag = 'scoped memory for tpu_custom_call.1']
    #allocation4 [shape = 's32[2]{0}', space=sflag, size = 0x8, scoped, tag = 'scoped memory for tpu_custom_call.1']
    #allocation5 [shape = 'u8[4096]{0}', space=vmem, size = 0x1000, scoped, tag = 'output window, operand 0, single buffered']
    %6 = vsyncpa [#allocation3], 0
    %7 = vsyncpa [#allocation4], 0
    loop: start=0, step=1, limit=4
    $region2: #{tpu_custom_call.1} parent=1 // loop_pre_header
      _
    $region3: #{tpu_custom_call.1} parent=1 // loop_header
      %s9 = sphi 0, %s13
      %p10 = scmp.ge.s32.totalorder %s9, 4
      %s17 = sphi 0, %s17
      %s19 = sphi 0, %s17
      %s20 = sphi 0, %s19
      %s34 = sphi 0, %s20
      %s38 = sphi 0, %s38
      %s40 = sphi 0, %s38
      %s41 = sphi 0, %s40
      %s55 = sphi 0, %s41
    $region4: #{tpu_custom_call.1} parent=1 // loop_header_branch
      %12 = sbr.rel (%p10) target = $region8
    $region5: #{tpu_custom_call.1} parent=1 // loop_body
      %s14 = ssub.s32 %s9, 1
      %s15 = ssub.s32 %s9, 2
      %s16 = sadd.s32 %s9, 1
      %s18 = sadd.s32 %s17, 1
      %p21 = scmp.eq.s32.totalorder %s9, 1
      %p22 = scmp.ne.s32.totalorder %s17, %s19
      %p23 = scmp.eq.s32.totalorder %s9, 0
      %p24 = por %p22, %p23
      %p25 = scmp.ne.s32.totalorder %s17, %s19
      %p26 = scmp.eq.s32.totalorder %s14, 1
      %p27 = por %p25, %p26
      %p28 = scmp.ne.s32.totalorder %s19, %s20
      %p29 = scmp.eq.s32.totalorder %s14, 0
      %p30 = por %p28, %p29
      %p31 = scmp.ne.s32.totalorder %s19, %s20
      %p32 = scmp.eq.s32.totalorder %s15, 1
      %p33 = por %p31, %p32
      %p35 = scmp.ne.s32.totalorder %s20, %s34
      %p36 = scmp.eq.s32.totalorder %s15, 0
      %p37 = por %p35, %p36
      %s39 = sadd.s32 %s38, 1
      %p42 = scmp.eq.s32.totalorder %s9, 1
      %p43 = scmp.ne.s32.totalorder %s38, %s40
      %p44 = scmp.eq.s32.totalorder %s9, 0
      %p45 = por %p43, %p44
      %p46 = scmp.ne.s32.totalorder %s38, %s40
      %p47 = scmp.eq.s32.totalorder %s14, 1
      %p48 = por %p46, %p47
      %p49 = scmp.ne.s32.totalorder %s40, %s41
      %p50 = scmp.eq.s32.totalorder %s14, 0
      %p51 = por %p49, %p50
      %p52 = scmp.ne.s32.totalorder %s40, %s41
      %p53 = scmp.eq.s32.totalorder %s15, 1
      %p54 = por %p52, %p53
      %p56 = scmp.ne.s32.totalorder %s41, %s55
      %p57 = scmp.eq.s32.totalorder %s15, 0
      %p58 = por %p56, %p57
      %p59 = scmp.le.s32.totalorder 1, %s9
      %p60 = scmp.lt.s32.totalorder %s9, 3
      %p61 = pnand %p59, %p60
      %p62 = pneg %p61
      // Predicated region
      $region9: #{tpu_custom_call.1} parent=5 // pred_check
        _
      $region10: #{tpu_custom_call.1} parent=5 // pred_check_branch
        %64 = sbr.rel (%p61) target = $region12
      $region11: #{tpu_custom_call.1} parent=5 // pred_region
        %s65 = ssub.s32 %s9, 1
        // Predicated region
        $region13: #{tpu_custom_call.1} parent=11 // pred_check
          %p66 = pneg %p30
        $region14: #{tpu_custom_call.1} parent=11 // pred_check_branch
          %68 = sbr.rel (%p66) target = $region16
        $region15: #{tpu_custom_call.1} parent=11 // pred_region
          %s70 = ssub.s32 128, 128
          %71 = vsyncadd [#allocation3], %s70
          %s73 = sshll.u32 [#allocation2], 4
          %s74 = int_to_ptr.vmem [resolvable:$true] %s73
          %76 = dma.hbm_to_vmem [thread:$0]  %s0, 128, %s74, [#allocation3]
        $region16: #{tpu_custom_call.1} parent=11 // pred_fallthru
          _
      $region12: #{tpu_custom_call.1} parent=5 // pred_fallthru
        _
      %p77 = scmp.lt.s32.totalorder %s9, 2
      // Predicated region
      $region17: #{tpu_custom_call.1} parent=5 // pred_check
        %p78 = pneg %p77
      $region18: #{tpu_custom_call.1} parent=5 // pred_check_branch
        %80 = sbr.rel (%p78) target = $region20
      $region19: #{tpu_custom_call.1} parent=5 // pred_region
        _
      $region20: #{tpu_custom_call.1} parent=5 // pred_fallthru
        _
      %p81 = scmp.le.s32.totalorder 1, %s9
      %p82 = scmp.lt.s32.totalorder %s9, 3
      %p83 = pnand %p81, %p82
      %p84 = pneg %p83
      // Predicated region
      $region21: #{tpu_custom_call.1} parent=5 // pred_check
        _
      $region22: #{tpu_custom_call.1} parent=5 // pred_check_branch
        %86 = sbr.rel (%p83) target = $region24
      $region23: #{tpu_custom_call.1} parent=5 // pred_region
        %s87 = ssub.s32 %s9, 1
        // Predicated region
        $region25: #{tpu_custom_call.1} parent=23 // pred_check
          %p88 = pneg %p30
        $region26: #{tpu_custom_call.1} parent=23 // pred_check_branch
          %90 = sbr.rel (%p88) target = $region28
        $region27: #{tpu_custom_call.1} parent=23 // pred_region
          %91 = dma.done [#allocation3], 128
        $region28: #{tpu_custom_call.1} parent=23 // pred_fallthru
          _
        %p92 = pneg %p30
        %p93 = pneg %p27
        %p94 = pneg %p51
        %p95 = pneg %p48
        %v96 = vld [vmem:[#allocation2] sm:$0xff]
        %v97 = vmul.f32 %v96, 2.0
        %98 = vst [vmem:[#allocation5] sm:$0xff] %v97
        // Predicated region
        $region29: #{tpu_custom_call.1} parent=23 // pred_check
          %p99 = pneg %p48
        $region30: #{tpu_custom_call.1} parent=23 // pred_check_branch
          %101 = sbr.rel (%p99) target = $region32
        $region31: #{tpu_custom_call.1} parent=23 // pred_region
          %s103 = ssub.s32 128, 128
          %104 = vsyncadd [#allocation4], %s103
          %s106 = sshll.u32 [#allocation5], 4
          %s107 = int_to_ptr.vmem [resolvable:$true] %s106
          %109 = dma.vmem_to_hbm [thread:$0]  %s107, 128, %s1, [#allocation4]
        $region32: #{tpu_custom_call.1} parent=23 // pred_fallthru
          _
        // Predicated region
        $region33: #{tpu_custom_call.1} parent=23 // pred_check
          %p110 = pneg %p48
        $region34: #{tpu_custom_call.1} parent=23 // pred_check_branch
          %112 = sbr.rel (%p110) target = $region36
        $region35: #{tpu_custom_call.1} parent=23 // pred_region
          %113 = dma.done [#allocation4], 128
        $region36: #{tpu_custom_call.1} parent=23 // pred_fallthru
          _
      $region24: #{tpu_custom_call.1} parent=5 // pred_fallthru
        _
      %p114 = scmp.le.s32.totalorder 2, %s9
      // Predicated region
      $region37: #{tpu_custom_call.1} parent=5 // pred_check
        %p115 = pneg %p114
      $region38: #{tpu_custom_call.1} parent=5 // pred_check_branch
        %117 = sbr.rel (%p115) target = $region40
      $region39: #{tpu_custom_call.1} parent=5 // pred_region
        %s118 = ssub.s32 %s9, 2
      $region40: #{tpu_custom_call.1} parent=5 // pred_fallthru
        _
    $region6: #{tpu_custom_call.1} parent=1 // loop_footer
      %s13 = sadd.s32 1, %s9
    $region7: #{tpu_custom_call.1} parent=1 // loop_footer_branch
      %8 = sbr.rel target = $region3
    $region8: #{tpu_custom_call.1} parent=1 // loop_exit
      _
    %119 = vsyncpa [#allocation3], 1
    %s120 = scalar_lea.sflag [#allocation3], 1
    %121 = vsyncpa %s120, 1
    %122 = vsyncpa [#allocation4], 1
    %s123 = scalar_lea.sflag [#allocation4], 1
    %124 = vsyncpa %s123, 1

// kernel: _mlp_forward_impl.1
$region0: #{_mlp_forward_impl.1}
  #allocation0 [shape = 'u32[]', space=smem, size = 0x4, offset = 0x4, fixed_abs, tag = 'smem constant byte address 0x4 - core index']
  #allocation1 [shape = 'u32[144,128]{1,0:T(1,128)}', space=vmem, size = 0x12000, scoped, tag = 'internal scratch']
  %s0 = inlined_call_operand.vmem [shape: bf16[8,6], index: 0, kind: input, shape index: {}]
  %s1 = inlined_call_operand.vmem [shape: bf16[6,256], index: 1, kind: input, shape index: {}]
  %s2 = inlined_call_operand.vmem [shape: bf16[1,256], index: 2, kind: input, shape index: {}]
  %s3 = inlined_call_operand.hbm [shape: bf16[256,384], index: 3, kind: input, shape index: {}]
  %s4 = inlined_call_operand.vmem [shape: bf16[1,384], index: 4, kind: input, shape index: {}]
  %s5 = inlined_call_operand.vmem [shape: bf16[384,512], index: 5, kind: input, shape index: {}]
  %s6 = inlined_call_operand.vmem [shape: bf16[1,512], index: 6, kind: input, shape index: {}]
  %s7 = inlined_call_operand.vmem [shape: bf16[512,512], index: 7, kind: input, shape index: {}]
  %s8 = inlined_call_operand.vmem [shape: bf16[1,512], index: 8, kind: input, shape index: {}]
  %s9 = inlined_call_operand.vmem [shape: bf16[512,640], index: 9, kind: input, shape index: {}]
  %s10 = inlined_call_operand.vmem [shape: bf16[1,640], index: 10, kind: input, shape index: {}]
  %s11 = inlined_call_operand.vmem [shape: bf16[640,768], index: 11, kind: input, shape index: {}]
  %s12 = inlined_call_operand.vmem [shape: bf16[1,768], index: 12, kind: input, shape index: {}]
  %s13 = inlined_call_operand.vmem [shape: bf16[768,800], index: 13, kind: input, shape index: {}]
  %s14 = inlined_call_operand.vmem [shape: f32[1,800], index: 14, kind: input, shape index: {}]
  %s15 = inlined_call_operand.hbm [shape: f32[8,800], index: 15, kind: output, shape index: {}]
  %s16 = sld [smem:[#allocation0]]
  $region74: #{_mlp_forward_impl.1} parent=0
    _
  %s18 = ssub.s32 1, %s16
  %s19 = scalar_select 0, %s18, %s16
  $region1: #{_mlp_forward_impl.1} parent=0
    #allocation2 [shape = 'u8[196608]{0}', space=vmem, size = 0x30000, scoped, tag = 'input window, operand 3, single buffered']
    #allocation3 [shape = 's32[1]{0}', space=sflag, size = 0x4, scoped, tag = 'scoped memory for _mlp_forward_impl.1']
    #allocation4 [shape = 's32[1]{0}', space=sflag, size = 0x4, scoped, tag = 'scoped memory for _mlp_forward_impl.1']
    #allocation5 [shape = 'u8[28672]{0}', space=vmem, size = 0x7000, scoped, tag = 'output window, operand 0, single buffered']
    %20 = vsyncpa [#allocation3], 0
    %21 = vsyncpa [#allocation4], 0
    // Predicated region
    $region2: #{_mlp_forward_impl.1} parent=1 // pred_check
      _
    $region3: #{_mlp_forward_impl.1} parent=1 // pred_check_branch
      %23 = sbr.rel (0) target = $region5
    $region4: #{_mlp_forward_impl.1} parent=1 // pred_region
      _
    $region5: #{_mlp_forward_impl.1} parent=1 // pred_fallthru
      _
    // Predicated region
    $region6: #{_mlp_forward_impl.1} parent=1 // pred_check
      _
    $region7: #{_mlp_forward_impl.1} parent=1 // pred_check_branch
      %25 = sbr.rel (0) target = $region9
    $region8: #{_mlp_forward_impl.1} parent=1 // pred_region
      _
    $region9: #{_mlp_forward_impl.1} parent=1 // pred_fallthru
      _
    // Predicated region
    $region10: #{_mlp_forward_impl.1} parent=1 // pred_check
      _
    $region11: #{_mlp_forward_impl.1} parent=1 // pred_check_branch
      %27 = sbr.rel (0) target = $region13
    $region12: #{_mlp_forward_impl.1} parent=1 // pred_region
      _
    $region13: #{_mlp_forward_impl.1} parent=1 // pred_fallthru
      _
    // Predicated region
    $region14: #{_mlp_forward_impl.1} parent=1 // pred_check
      _
    $region15: #{_mlp_forward_impl.1} parent=1 // pred_check_branch
      %29 = sbr.rel (0) target = $region17
    $region16: #{_mlp_forward_impl.1} parent=1 // pred_region
      %s31 = ssub.s32 6144, 6144
      %32 = vsyncadd [#allocation3], %s31
      %s33 = sshll.u32 [#allocation2], 4
      %s34 = int_to_ptr.vmem [resolvable:$true] %s33
      %39 = dma.hbm_to_vmem [thread:$0]  %s3, 6144, %s34, [#allocation3], 192, 192, 12
    $region17: #{_mlp_forward_impl.1} parent=1 // pred_fallthru
      _
    // Predicated region
    $region18: #{_mlp_forward_impl.1} parent=1 // pred_check
      _
    $region19: #{_mlp_forward_impl.1} parent=1 // pred_check_branch
      %41 = sbr.rel (0) target = $region21
    $region20: #{_mlp_forward_impl.1} parent=1 // pred_region
      _
    $region21: #{_mlp_forward_impl.1} parent=1 // pred_fallthru
      _
    // Predicated region
    $region22: #{_mlp_forward_impl.1} parent=1 // pred_check
      _
    $region23: #{_mlp_forward_impl.1} parent=1 // pred_check_branch
      %43 = sbr.rel (0) target = $region25
    $region24: #{_mlp_forward_impl.1} parent=1 // pred_region
      _
    $region25: #{_mlp_forward_impl.1} parent=1 // pred_fallthru
      _
    // Predicated region
    $region26: #{_mlp_forward_impl.1} parent=1 // pred_check
      _
    $region27: #{_mlp_forward_impl.1} parent=1 // pred_check_branch
      %45 = sbr.rel (0) target = $region29
    $region28: #{_mlp_forward_impl.1} parent=1 // pred_region
      _
    $region29: #{_mlp_forward_impl.1} parent=1 // pred_fallthru
      _
    // Predicated region
    $region30: #{_mlp_forward_impl.1} parent=1 // pred_check
      _
    $region31: #{_mlp_forward_impl.1} parent=1 // pred_check_branch
      %47 = sbr.rel (0) target = $region33
    $region32: #{_mlp_forward_impl.1} parent=1 // pred_region
      _
    $region33: #{_mlp_forward_impl.1} parent=1 // pred_fallthru
      _
    // Predicated region
    $region34: #{_mlp_forward_impl.1} parent=1 // pred_check
      _
    $region35: #{_mlp_forward_impl.1} parent=1 // pred_check_branch
      %49 = sbr.rel (0) target = $region37
    $region36: #{_mlp_forward_impl.1} parent=1 // pred_region
      _
    $region37: #{_mlp_forward_impl.1} parent=1 // pred_fallthru
      _
    // Predicated region
    $region38: #{_mlp_forward_impl.1} parent=1 // pred_check
      _
    $region39: #{_mlp_forward_impl.1} parent=1 // pred_check_branch
      %51 = sbr.rel (0) target = $region41
    $region40: #{_mlp_forward_impl.1} parent=1 // pred_region
      _
    $region41: #{_mlp_forward_impl.1} parent=1 // pred_fallthru
      _
    // Predicated region
    $region42: #{_mlp_forward_impl.1} parent=1 // pred_check
      _
    $region43: #{_mlp_forward_impl.1} parent=1 // pred_check_branch
      %53 = sbr.rel (0) target = $region45
    $region44: #{_mlp_forward_impl.1} parent=1 // pred_region
      _
    $region45: #{_mlp_forward_impl.1} parent=1 // pred_fallthru
      _
    // Predicated region
    $region46: #{_mlp_forward_impl.1} parent=1 // pred_check
      _
    $region47: #{_mlp_forward_impl.1} parent=1 // pred_check_branch
      %55 = sbr.rel (0) target = $region49
    $region48: #{_mlp_forward_impl.1} parent=1 // pred_region
      _
    $region49: #{_mlp_forward_impl.1} parent=1 // pred_fallthru
      _
    // Predicated region
    $region50: #{_mlp_forward_impl.1} parent=1 // pred_check
      _
    $region51: #{_mlp_forward_impl.1} parent=1 // pred_check_branch
      %57 = sbr.rel (0) target = $region53
    $region52: #{_mlp_forward_impl.1} parent=1 // pred_region
      _
    $region53: #{_mlp_forward_impl.1} parent=1 // pred_fallthru
      _
    // Predicated region
    $region54: #{_mlp_forward_impl.1} parent=1 // pred_check
      _
    $region55: #{_mlp_forward_impl.1} parent=1 // pred_check_branch
      %59 = sbr.rel (0) target = $region57
    $region56: #{_mlp_forward_impl.1} parent=1 // pred_region
      _
    $region57: #{_mlp_forward_impl.1} parent=1 // pred_fallthru
      _
    // Predicated region
    $region58: #{_mlp_forward_impl.1} parent=1 // pred_check
      _
    $region59: #{_mlp_forward_impl.1} parent=1 // pred_check_branch
      %61 = sbr.rel (0) target = $region61
    $region60: #{_mlp_forward_impl.1} parent=1 // pred_region
      _
    $region61: #{_mlp_forward_impl.1} parent=1 // pred_fallthru
      _
    // Predicated region
    $region62: #{_mlp_forward_impl.1} parent=1 // pred_check
      _
    $region63: #{_mlp_forward_impl.1} parent=1 // pred_check_branch
      %63 = sbr.rel (0) target = $region65
    $region64: #{_mlp_forward_impl.1} parent=1 // pred_region
      %64 = dma.done [#allocation3], 6144
    $region65: #{_mlp_forward_impl.1} parent=1 // pred_fallthru
      _
    %v67 = vld [vmem:[%s0] sm:$0xf]
    %v68 = vld [vmem:[%s1] sm:$0x77]
    %v70 = vunpack.c.l.b16 %v68
    %v71 = vunpack.c.h.b16 %v68
    %v72 = vpack.c.b16 %v70, %v70
    %v73 = vpack.c.b16 %v71, %v71
    %vm74 = vcmask 48128
    %v76 = vsel %vm74, %v67, 0
    %vm78 = vcmask 1042432
    %v80 = vsel %vm78, %v72, 0
    %v83 = vsel %vm78, %v73, 0
    %85 = vmatprep.subr.bf16.mxu0 %v83
    %86 = vmatpush1.bf16.msra.mxu0 %v80
    %87 = vmatprep.subr.bf16.mxu0 0
    %88 = vmatpush1.bf16.msra.mxu0 0
    %89 = vmatprep.subr.bf16.mxu0 0
    %90 = vmatpush1.bf16.msra.mxu0 0
    %91 = vmatprep.subr.bf16.mxu0 0
    %92 = vmatpush1.bf16.msra.mxu0 0
    %93 = vmatprep.subr.bf16.mxu0 0
    %94 = vmatpush1.bf16.msra.mxu0 0
    %95 = vmatprep.subr.bf16.mxu0 0
    %96 = vmatpush1.bf16.msra.mxu0 0
    %97 = vmatprep.subr.bf16.mxu0 0
    %98 = vmatpush1.bf16.msra.mxu0 0
    %99 = vmatprep.subr.bf16.mxu0 0
    %100 = vmatpush1.bf16.msra.mxu0 0
    %101 = vmatprep.subr.bf16.mxu0 0
    %102 = vmatpush1.bf16.msra.mxu0 0
    %103 = vmatprep.subr.bf16.mxu0 0
    %104 = vmatpush1.bf16.msra.mxu0 0
    %105 = vmatprep.subr.bf16.mxu0 0
    %106 = vmatpush1.bf16.msra.mxu0 0
    %107 = vmatprep.subr.bf16.mxu0 0
    %108 = vmatpush1.bf16.msra.mxu0 0
    %109 = vmatprep.subr.bf16.mxu0 0
    %110 = vmatpush1.bf16.msra.mxu0 0
    %111 = vmatprep.subr.bf16.mxu0 0
    %112 = vmatpush1.bf16.msra.mxu0 0
    %113 = vmatprep.subr.bf16.mxu0 0
    %114 = vmatpush1.bf16.msra.mxu0 0
    %115 = vmatprep.subr.bf16.mxu0 0
    %116 = vmatpush1.bf16.msra.mxu0 0
    %117 = vmatprep.mubr.bf16.mxu0 0
    %118 = vmatmul.mubr.bf16.gmra.mrb[0].mxu0 %v76
    %v119 = vpop.f32.mrb[0].mxu0
    %v120 = vadd.f32 0.0, %v119
    %v121 = vpop.f32.mrb[0].mxu0
    %v122 = vadd.f32 0.0, %v121
    %v123 = vpop.f32.mrb[0].mxu0
    %v124 = vpop.f32.mrb[0].mxu0
    %125 = vdwg.mxu0
    %v126 = vpack.c.bf16 %v120, %v120
    %v127 = vpack.c.bf16 %v122, %v122
    %v128 = vld [vmem:[%s2] sm:$0x3]
    %v131 = vunpack.c.l.s4 1966171168
    %v132 = vunpack.c.0.s8 %v131
    %v133 = vlaneseq
    %v134 = vshrl.u32 %v133, 7
    %v135 = vsub.s32 %v132, %v134
    %v136 = vrot.slane %v128, %v135
    %v137 = vcombine.high %v136, %v136
    %v139 = vunpack.c.l.s4 1966171168
    %v140 = vunpack.c.0.s8 %v139
    %v141 = vlaneseq
    %v142 = vshrl.u32 %v141, 7
    %v143 = vsub.s32 %v140, %v142
    %v144 = vrot.slane %v136, %v143
    %v146 = vunpack.c.l.s4 1966171168
    %v147 = vunpack.c.0.s8 %v146
    %v148 = vlaneseq
    %v149 = vshrl.u32 %v148, 7
    %v150 = vsub.s32 %v147, %v149
    %v151 = vrot.slane %v137, %v150
    %v153 = vpack.i.b16 %v144, %v144
    %v155 = vlaneseq
    %v156 = vshrl.u32 %v155, 7
    %v157 = vsub.s32 0, %v156
    %v158 = vrot.slane %v153, %v157
    %v160 = vpack.i.b16 %v151, %v151
    %v162 = vlaneseq
    %v163 = vshrl.u32 %v162, 7
    %v164 = vsub.s32 0, %v163
    %v165 = vrot.slane %v160, %v164
    %v166 = vadd.bf16 %v126, %v158
    %v167 = vadd.bf16 %v127, %v165
    %vm168 = vcmp.gt.bf16.partialorder %v166, 0
    %vm169 = vcmp.gt.bf16.partialorder %v167, 0
    %v170 = vmul.bf16 %v166, 1009007652
    %v171 = vmul.bf16 %v167, 1009007652
    %v172 = vsel %vm168, %v166, %v170
    %v173 = vsel %vm169, %v167, %v171
    %v174 = vld [vmem:[#allocation2] sm:$0xff]
    %v175 = vld [vmem:[#allocation2 + $0x8] sm:$0xf]
    %v176 = vld [vmem:[#allocation2 + $0xc] sm:$0xff]
    %v177 = vld [vmem:[#allocation2 + $0x14] sm:$0xf]
    %v178 = vld [vmem:[#allocation2 + $0x18] sm:$0xff]
    %v179 = vld [vmem:[#allocation2 + $0x20] sm:$0xf]
    %v180 = vld [vmem:[#allocation2 + $0x24] sm:$0xff]
    %v181 = vld [vmem:[#allocation2 + $0x2c] sm:$0xf]
    %v182 = vld [vmem:[#allocation2 + $0x30] sm:$0xff]
    %v183 = vld [vmem:[#allocation2 + $0x38] sm:$0xf]
    %v184 = vld [vmem:[#allocation2 + $0x3c] sm:$0xff]
    %v185 = vld [vmem:[#allocation2 + $0x44] sm:$0xf]
    %v186 = vld [vmem:[#allocation2 + $0x48] sm:$0xff]
    %v187 = vld [vmem:[#allocation2 + $0x50] sm:$0xf]
    %v188 = vld [vmem:[#allocation2 + $0x54] sm:$0xff]
    %v189 = vld [vmem:[#allocation2 + $0x5c] sm:$0xf]
    %v190 = vld [vmem:[#allocation2 + $0x60] sm:$0xff]
    %v191 = vld [vmem:[#allocation2 + $0x68] sm:$0xf]
    %v192 = vld [vmem:[#allocation2 + $0x6c] sm:$0xff]
    %v193 = vld [vmem:[#allocation2 + $0x74] sm:$0xf]
    %v194 = vld [vmem:[#allocation2 + $0x78] sm:$0xff]
    %v195 = vld [vmem:[#allocation2 + $0x80] sm:$0xf]
    %v196 = vld [vmem:[#allocation2 + $0x84] sm:$0xff]
    %v197 = vld [vmem:[#allocation2 + $0x8c] sm:$0xf]
    %v198 = vld [vmem:[#allocation2 + $0x90] sm:$0xff]
    %v199 = vld [vmem:[#allocation2 + $0x98] sm:$0xf]
    %v200 = vld [vmem:[#allocation2 + $0x9c] sm:$0xff]
    %v201 = vld [vmem:[#allocation2 + $0xa4] sm:$0xf]
    %v202 = vld [vmem:[#allocation2 + $0xa8] sm:$0xff]
    %v203 = vld [vmem:[#allocation2 + $0xb0] sm:$0xf]
    %v204 = vld [vmem:[#allocation2 + $0xb4] sm:$0xff]
    %v205 = vld [vmem:[#allocation2 + $0xbc] sm:$0xf]
    %v206 = vld [vmem:[#allocation2 + $0xc0] sm:$0xff]
    %v207 = vld [vmem:[#allocation2 + $0xc8] sm:$0xf]
    %v208 = vld [vmem:[#allocation2 + $0xcc] sm:$0xff]
    %v209 = vld [vmem:[#allocation2 + $0xd4] sm:$0xf]
    %v210 = vld [vmem:[#allocation2 + $0xd8] sm:$0xff]
    %v211 = vld [vmem:[#allocation2 + $0xe0] sm:$0xf]
    %v212 = vld [vmem:[#allocation2 + $0xe4] sm:$0xff]
    %v213 = vld [vmem:[#allocation2 + $0xec] sm:$0xf]
    %v214 = vld [vmem:[#allocation2 + $0xf0] sm:$0xff]
    %v215 = vld [vmem:[#allocation2 + $0xf8] sm:$0xf]
    %v216 = vld [vmem:[#allocation2 + $0xfc] sm:$0xff]
    %v217 = vld [vmem:[#allocation2 + $0x104] sm:$0xf]
    %v218 = vld [vmem:[#allocation2 + $0x108] sm:$0xff]
    %v219 = vld [vmem:[#allocation2 + $0x110] sm:$0xf]
    %v220 = vld [vmem:[#allocation2 + $0x114] sm:$0xff]
    %v221 = vld [vmem:[#allocation2 + $0x11c] sm:$0xf]
    %v222 = vld [vmem:[#allocation2 + $0x120] sm:$0xff]
    %v223 = vld [vmem:[#allocation2 + $0x128] sm:$0xf]
    %v224 = vld [vmem:[#allocation2 + $0x12c] sm:$0xff]
    %v225 = vld [vmem:[#allocation2 + $0x134] sm:$0xf]
    %v226 = vld [vmem:[#allocation2 + $0x138] sm:$0xff]
    %v227 = vld [vmem:[#allocation2 + $0x140] sm:$0xf]
    %v228 = vld [vmem:[#allocation2 + $0x144] sm:$0xff]
    %v229 = vld [vmem:[#allocation2 + $0x14c] sm:$0xf]
    %v230 = vld [vmem:[#allocation2 + $0x150] sm:$0xff]
    %v231 = vld [vmem:[#allocation2 + $0x158] sm:$0xf]
    %v232 = vld [vmem:[#allocation2 + $0x15c] sm:$0xff]
    %v233 = vld [vmem:[#allocation2 + $0x164] sm:$0xf]
    %v234 = vld [vmem:[#allocation2 + $0x168] sm:$0xff]
    %v235 = vld [vmem:[#allocation2 + $0x170] sm:$0xf]
    %v236 = vld [vmem:[#allocation2 + $0x174] sm:$0xff]
    %v237 = vld [vmem:[#allocation2 + $0x17c] sm:$0xf]
    %v302 = vunpack.c.l.b16 %v174
    %v303 = vunpack.c.h.b16 %v174
    %v304 = vunpack.c.l.b16 %v175
    %v305 = vunpack.c.l.b16 %v176
    %v306 = vunpack.c.h.b16 %v176
    %v307 = vunpack.c.l.b16 %v177
    %v308 = vunpack.c.l.b16 %v178
    %v309 = vunpack.c.h.b16 %v178
    %v310 = vunpack.c.l.b16 %v179
    %v311 = vunpack.c.l.b16 %v180
    %v312 = vunpack.c.h.b16 %v180
    %v313 = vunpack.c.l.b16 %v181
    %v314 = vunpack.c.l.b16 %v182
    %v315 = vunpack.c.h.b16 %v182
    %v316 = vunpack.c.l.b16 %v183
    %v317 = vunpack.c.l.b16 %v184
    %v318 = vunpack.c.h.b16 %v184
    %v319 = vunpack.c.l.b16 %v185
    %v320 = vunpack.c.l.b16 %v186
    %v321 = vunpack.c.h.b16 %v186
    %v322 = vunpack.c.l.b16 %v187
    %v323 = vunpack.c.l.b16 %v188
    %v324 = vunpack.c.h.b16 %v188
    %v325 = vunpack.c.l.b16 %v189
    %v326 = vunpack.c.l.b16 %v190
    %v327 = vunpack.c.h.b16 %v190
    %v328 = vunpack.c.l.b16 %v191
    %v329 = vunpack.c.l.b16 %v192
    %v330 = vunpack.c.h.b16 %v192
    %v331 = vunpack.c.l.b16 %v193
    %v332 = vunpack.c.l.b16 %v194
    %v333 = vunpack.c.h.b16 %v194
    %v334 = vunpack.c.l.b16 %v195
    %v335 = vunpack.c.l.b16 %v196
    %v336 = vunpack.c.h.b16 %v196
    %v337 = vunpack.c.l.b16 %v197
    %v338 = vunpack.c.l.b16 %v198
    %v339 = vunpack.c.h.b16 %v198
    %v340 = vunpack.c.l.b16 %v199
    %v341 = vunpack.c.l.b16 %v200
    %v342 = vunpack.c.h.b16 %v200
    %v343 = vunpack.c.l.b16 %v201
    %v344 = vunpack.c.l.b16 %v202
    %v345 = vunpack.c.h.b16 %v202
    %v346 = vunpack.c.l.b16 %v203
    %v347 = vunpack.c.l.b16 %v204
    %v348 = vunpack.c.h.b16 %v204
    %v349 = vunpack.c.l.b16 %v205
    %v350 = vunpack.c.l.b16 %v206
    %v351 = vunpack.c.h.b16 %v206
    %v352 = vunpack.c.l.b16 %v207
    %v353 = vunpack.c.l.b16 %v208
    %v354 = vunpack.c.h.b16 %v208
    %v355 = vunpack.c.l.b16 %v209
    %v356 = vunpack.c.l.b16 %v210
    %v357 = vunpack.c.h.b16 %v210
    %v358 = vunpack.c.l.b16 %v211
    %v359 = vunpack.c.l.b16 %v212
    %v360 = vunpack.c.h.b16 %v212
    %v361 = vunpack.c.l.b16 %v213
    %v362 = vunpack.c.l.b16 %v214
    %v363 = vunpack.c.h.b16 %v214
    %v364 = vunpack.c.l.b16 %v215
    %v365 = vunpack.c.l.b16 %v216
    %v366 = vunpack.c.h.b16 %v216
    %v367 = vunpack.c.l.b16 %v217
    %v368 = vunpack.c.l.b16 %v218
    %v369 = vunpack.c.h.b16 %v218
    %v370 = vunpack.c.l.b16 %v219
    %v371 = vunpack.c.l.b16 %v220
    %v372 = vunpack.c.h.b16 %v220
    %v373 = vunpack.c.l.b16 %v221
    %v374 = vunpack.c.l.b16 %v222
    %v375 = vunpack.c.h.b16 %v222
    %v376 = vunpack.c.l.b16 %v223
    %v377 = vunpack.c.l.b16 %v224
    %v378 = vunpack.c.h.b16 %v224
    %v379 = vunpack.c.l.b16 %v225
    %v380 = vunpack.c.l.b16 %v226
    %v381 = vunpack.c.h.b16 %v226
    %v382 = vunpack.c.l.b16 %v227
    %v383 = vunpack.c.l.b16 %v228
    %v384 = vunpack.c.h.b16 %v228
    %v385 = vunpack.c.l.b16 %v229
    %v386 = vunpack.c.l.b16 %v230
    %v387 = vunpack.c.h.b16 %v230
    %v388 = vunpack.c.l.b16 %v231
    %v389 = vunpack.c.l.b16 %v232
    %v390 = vunpack.c.h.b16 %v232
    %v391 = vunpack.c.l.b16 %v233
    %v392 = vunpack.c.l.b16 %v234
    %v393 = vunpack.c.h.b16 %v234
    %v394 = vunpack.c.l.b16 %v235
    %v395 = vunpack.c.l.b16 %v236
    %v396 = vunpack.c.h.b16 %v236
    %v397 = vunpack.c.l.b16 %v237
    %v398 = vpack.c.b16 %v305, %v302
    %v399 = vpack.c.b16 %v306, %v303
    %v400 = vpack.c.b16 %v307, %v304
    %v401 = vpack.c.b16 %v311, %v308
    %v402 = vpack.c.b16 %v312, %v309
    %v403 = vpack.c.b16 %v313, %v310
    %v404 = vpack.c.b16 %v317, %v314
    %v405 = vpack.c.b16 %v318, %v315
    %v406 = vpack.c.b16 %v319, %v316
    %v407 = vpack.c.b16 %v323, %v320
    %v408 = vpack.c.b16 %v324, %v321
    %v409 = vpack.c.b16 %v325, %v322
    %v410 = vpack.c.b16 %v329, %v326
    %v411 = vpack.c.b16 %v330, %v327
    %v412 = vpack.c.b16 %v331, %v328
    %v413 = vpack.c.b16 %v335, %v332
    %v414 = vpack.c.b16 %v336, %v333
    %v415 = vpack.c.b16 %v337, %v334
    %v416 = vpack.c.b16 %v341, %v338
    %v417 = vpack.c.b16 %v342, %v339
    %v418 = vpack.c.b16 %v343, %v340
    %v419 = vpack.c.b16 %v347, %v344
    %v420 = vpack.c.b16 %v348, %v345
    %v421 = vpack.c.b16 %v349, %v346
    %v422 = vpack.c.b16 %v353, %v350
    %v423 = vpack.c.b16 %v354, %v351
    %v424 = vpack.c.b16 %v355, %v352
    %v425 = vpack.c.b16 %v359, %v356
    %v426 = vpack.c.b16 %v360, %v357
    %v427 = vpack.c.b16 %v361, %v358
    %v428 = vpack.c.b16 %v365, %v362
    %v429 = vpack.c.b16 %v366, %v363
    %v430 = vpack.c.b16 %v367, %v364
    %v431 = vpack.c.b16 %v371, %v368
    %v432 = vpack.c.b16 %v372, %v369
    %v433 = vpack.c.b16 %v373, %v370
    %v434 = vpack.c.b16 %v377, %v374
    %v435 = vpack.c.b16 %v378, %v375
    %v436 = vpack.c.b16 %v379, %v376
    %v437 = vpack.c.b16 %v383, %v380
    %v438 = vpack.c.b16 %v384, %v381
    %v439 = vpack.c.b16 %v385, %v382
    %v440 = vpack.c.b16 %v389, %v386
    %v441 = vpack.c.b16 %v390, %v387
    %v442 = vpack.c.b16 %v391, %v388
    %v443 = vpack.c.b16 %v395, %v392
    %v444 = vpack.c.b16 %v396, %v393
    %v445 = vpack.c.b16 %v397, %v394
    %494 = vmatprep.subr.bf16.mxu0 %v399
    %495 = vmatpush1.bf16.msra.mxu0 %v398
    %496 = vmatprep.subr.bf16.mxu0 %v402
    %497 = vmatpush1.bf16.msra.mxu0 %v401
    %498 = vmatprep.subr.bf16.mxu0 %v405
    %499 = vmatpush1.bf16.msra.mxu0 %v404
    %500 = vmatprep.subr.bf16.mxu0 %v408
    %501 = vmatpush1.bf16.msra.mxu0 %v407
    %502 = vmatprep.subr.bf16.mxu0 %v411
    %503 = vmatpush1.bf16.msra.mxu0 %v410
    %504 = vmatprep.subr.bf16.mxu0 %v414
    %505 = vmatpush1.bf16.msra.mxu0 %v413
    %506 = vmatprep.subr.bf16.mxu0 %v417
    %507 = vmatpush1.bf16.msra.mxu0 %v416
    %508 = vmatprep.subr.bf16.mxu0 %v420
    %509 = vmatpush1.bf16.msra.mxu0 %v419
    %510 = vmatprep.subr.bf16.mxu0 %v423
    %511 = vmatpush1.bf16.msra.mxu0 %v422
    %512 = vmatprep.subr.bf16.mxu0 %v426
    %513 = vmatpush1.bf16.msra.mxu0 %v425
    %514 = vmatprep.subr.bf16.mxu0 %v429
    %515 = vmatpush1.bf16.msra.mxu0 %v428
    %516 = vmatprep.subr.bf16.mxu0 %v432
    %517 = vmatpush1.bf16.msra.mxu0 %v431
    %518 = vmatprep.subr.bf16.mxu0 %v435
    %519 = vmatpush1.bf16.msra.mxu0 %v434
    %520 = vmatprep.subr.bf16.mxu0 %v438
    %521 = vmatpush1.bf16.msra.mxu0 %v437
    %522 = vmatprep.subr.bf16.mxu0 %v441
    %523 = vmatpush1.bf16.msra.mxu0 %v440
    %524 = vmatprep.subr.bf16.mxu0 %v444
    %525 = vmatpush1.bf16.msra.mxu0 %v443
    %526 = vmatprep.mubr.bf16.mxu0 %v173
    %527 = vmatmul.mubr.bf16.gmra.mrb[0].mxu0 %v172
    %v528 = vpop.f32.mrb[0].mxu0
    %v529 = vadd.f32 0.0, %v528
    %v530 = vpop.f32.mrb[0].mxu0
    %v531 = vadd.f32 0.0, %v530
    %v532 = vpop.f32.mrb[0].mxu0
    %v533 = vpop.f32.mrb[0].mxu0
    %534 = vdwg.mxu0
    %535 = vmatprep.subr.bf16.mxu0 0
    %536 = vmatpush1.bf16.msra.mxu0 %v400
    %537 = vmatprep.subr.bf16.mxu0 0
    %538 = vmatpush1.bf16.msra.mxu0 %v403
    %539 = vmatprep.subr.bf16.mxu0 0
    %540 = vmatpush1.bf16.msra.mxu0 %v406
    %541 = vmatprep.subr.bf16.mxu0 0
    %542 = vmatpush1.bf16.msra.mxu0 %v409
    %543 = vmatprep.subr.bf16.mxu0 0
    %544 = vmatpush1.bf16.msra.mxu0 %v412
    %545 = vmatprep.subr.bf16.mxu0 0
    %546 = vmatpush1.bf16.msra.mxu0 %v415
    %547 = vmatprep.subr.bf16.mxu0 0
    %548 = vmatpush1.bf16.msra.mxu0 %v418
    %549 = vmatprep.subr.bf16.mxu0 0
    %550 = vmatpush1.bf16.msra.mxu0 %v421
    %551 = vmatprep.subr.bf16.mxu0 0
    %552 = vmatpush1.bf16.msra.mxu0 %v424
    %553 = vmatprep.subr.bf16.mxu0 0
    %554 = vmatpush1.bf16.msra.mxu0 %v427
    %555 = vmatprep.subr.bf16.mxu0 0
    %556 = vmatpush1.bf16.msra.mxu0 %v430
    %557 = vmatprep.subr.bf16.mxu0 0
    %558 = vmatpush1.bf16.msra.mxu0 %v433
    %559 = vmatprep.subr.bf16.mxu0 0
    %560 = vmatpush1.bf16.msra.mxu0 %v436
    %561 = vmatprep.subr.bf16.mxu0 0
    %562 = vmatpush1.bf16.msra.mxu0 %v439
    %563 = vmatprep.subr.bf16.mxu0 0
    %564 = vmatpush1.bf16.msra.mxu0 %v442
    %565 = vmatprep.subr.bf16.mxu0 0
    %566 = vmatpush1.bf16.msra.mxu0 %v445
    %567 = vmatprep.mubr.bf16.mxu0 %v173
    %568 = vmatmul.mubr.bf16.gmra.mrb[0].mxu0 %v172
    %v569 = vpop.f32.mrb[0].mxu0
    %v570 = vadd.f32 0.0, %v569
    %v571 = vpop.f32.mrb[0].mxu0
    %v572 = vpop.f32.mrb[0].mxu0
    %v573 = vpop.f32.mrb[0].mxu0
    %574 = vdwg.mxu0
    %v575 = vpack.c.bf16 %v529, %v529
    %v576 = vpack.c.bf16 %v531, %v531
    %v577 = vpack.c.bf16 %v570, %v570
    %v578 = vld [vmem:[%s4] sm:$0x7]
    %v581 = vunpack.c.l.s4 1966171168
    %v582 = vunpack.c.0.s8 %v581
    %v583 = vlaneseq
    %v584 = vshrl.u32 %v583, 7
    %v585 = vsub.s32 %v582, %v584
    %v586 = vrot.slane %v578, %v585
    %v587 = vcombine.high %v586, %v586
    %v589 = vunpack.c.l.s4 1966171168
    %v590 = vunpack.c.0.s8 %v589
    %v591 = vlaneseq
    %v592 = vshrl.u32 %v591, 7
    %v593 = vsub.s32 %v590, %v592
    %v594 = vrot.slane %v586, %v593
    %v596 = vunpack.c.l.s4 1966171168
    %v597 = vunpack.c.0.s8 %v596
    %v598 = vlaneseq
    %v599 = vshrl.u32 %v598, 7
    %v600 = vsub.s32 %v597, %v599
    %v601 = vrot.slane %v587, %v600
    %v602 = vcombine.high %v594, %v594
    %v604 = vpack.i.b16 %v594, %v594
    %v606 = vlaneseq
    %v607 = vshrl.u32 %v606, 7
    %v608 = vsub.s32 0, %v607
    %v609 = vrot.slane %v604, %v608
    %v611 = vpack.i.b16 %v601, %v601
    %v613 = vlaneseq
    %v614 = vshrl.u32 %v613, 7
    %v615 = vsub.s32 0, %v614
    %v616 = vrot.slane %v611, %v615
    %v618 = vpack.i.b16 %v602, %v602
    %v620 = vlaneseq
    %v621 = vshrl.u32 %v620, 7
    %v622 = vsub.s32 0, %v621
    %v623 = vrot.slane %v618, %v622
    %v624 = vadd.bf16 %v575, %v609
    %v625 = vadd.bf16 %v576, %v616
    %v626 = vadd.bf16 %v577, %v623
    %vm627 = vcmp.gt.bf16.partialorder %v624, 0
    %vm628 = vcmp.gt.bf16.partialorder %v625, 0
    %vm629 = vcmp.gt.bf16.partialorder %v626, 0
    %v630 = vmul.bf16 %v624, 1009007652
    %v631 = vmul.bf16 %v625, 1009007652
    %v632 = vmul.bf16 %v626, 1009007652
    %v633 = vsel %vm627, %v624, %v630
    %v634 = vsel %vm628, %v625, %v631
    %v635 = vsel %vm629, %v626, %v632
    %v636 = vld [vmem:[%s5] sm:$0xff]
    %v637 = vld [vmem:[%s5 + $0x8] sm:$0xff]
    %v638 = vld [vmem:[%s5 + $0x10] sm:$0xff]
    %v639 = vld [vmem:[%s5 + $0x18] sm:$0xff]
    %v640 = vld [vmem:[%s5 + $0x20] sm:$0xff]
    %v641 = vld [vmem:[%s5 + $0x28] sm:$0xff]
    %v642 = vld [vmem:[%s5 + $0x30] sm:$0xff]
    %v643 = vld [vmem:[%s5 + $0x38] sm:$0xff]
    %v644 = vld [vmem:[%s5 + $0x40] sm:$0xff]
    %v645 = vld [vmem:[%s5 + $0x48] sm:$0xff]
    %v646 = vld [vmem:[%s5 + $0x50] sm:$0xff]
    %v647 = vld [vmem:[%s5 + $0x58] sm:$0xff]
    %v648 = vld [vmem:[%s5 + $0x60] sm:$0xff]
    %v649 = vld [vmem:[%s5 + $0x68] sm:$0xff]
    %v650 = vld [vmem:[%s5 + $0x70] sm:$0xff]
    %v651 = vld [vmem:[%s5 + $0x78] sm:$0xff]
    %v652 = vld [vmem:[%s5 + $0x80] sm:$0xff]
    %v653 = vld [vmem:[%s5 + $0x88] sm:$0xff]
    %v654 = vld [vmem:[%s5 + $0x90] sm:$0xff]
    %v655 = vld [vmem:[%s5 + $0x98] sm:$0xff]
    %v656 = vld [vmem:[%s5 + $0xa0] sm:$0xff]
    %v657 = vld [vmem:[%s5 + $0xa8] sm:$0xff]
    %v658 = vld [vmem:[%s5 + $0xb0] sm:$0xff]
    %v659 = vld [vmem:[%s5 + $0xb8] sm:$0xff]
    %v660 = vld [vmem:[%s5 + $0xc0] sm:$0xff]
    %v661 = vld [vmem:[%s5 + $0xc8] sm:$0xff]
    %v662 = vld [vmem:[%s5 + $0xd0] sm:$0xff]
    %v663 = vld [vmem:[%s5 + $0xd8] sm:$0xff]
    %v664 = vld [vmem:[%s5 + $0xe0] sm:$0xff]
    %v665 = vld [vmem:[%s5 + $0xe8] sm:$0xff]
    %v666 = vld [vmem:[%s5 + $0xf0] sm:$0xff]
    %v667 = vld [vmem:[%s5 + $0xf8] sm:$0xff]
    %v668 = vld [vmem:[%s5 + $0x100] sm:$0xff]
    %v669 = vld [vmem:[%s5 + $0x108] sm:$0xff]
    %v670 = vld [vmem:[%s5 + $0x110] sm:$0xff]
    %v671 = vld [vmem:[%s5 + $0x118] sm:$0xff]
    %v672 = vld [vmem:[%s5 + $0x120] sm:$0xff]
    %v673 = vld [vmem:[%s5 + $0x128] sm:$0xff]
    %v674 = vld [vmem:[%s5 + $0x130] sm:$0xff]
    %v675 = vld [vmem:[%s5 + $0x138] sm:$0xff]
    %v676 = vld [vmem:[%s5 + $0x140] sm:$0xff]
    %v677 = vld [vmem:[%s5 + $0x148] sm:$0xff]
    %v678 = vld [vmem:[%s5 + $0x150] sm:$0xff]
    %v679 = vld [vmem:[%s5 + $0x158] sm:$0xff]
    %v680 = vld [vmem:[%s5 + $0x160] sm:$0xff]
    %v681 = vld [vmem:[%s5 + $0x168] sm:$0xff]
    %v682 = vld [vmem:[%s5 + $0x170] sm:$0xff]
    %v683 = vld [vmem:[%s5 + $0x178] sm:$0xff]
    %v684 = vld [vmem:[%s5 + $0x180] sm:$0xff]
    %v685 = vld [vmem:[%s5 + $0x188] sm:$0xff]
    %v686 = vld [vmem:[%s5 + $0x190] sm:$0xff]
    %v687 = vld [vmem:[%s5 + $0x198] sm:$0xff]
    %v688 = vld [vmem:[%s5 + $0x1a0] sm:$0xff]
    %v689 = vld [vmem:[%s5 + $0x1a8] sm:$0xff]
    %v690 = vld [vmem:[%s5 + $0x1b0] sm:$0xff]
    %v691 = vld [vmem:[%s5 + $0x1b8] sm:$0xff]
    %v692 = vld [vmem:[%s5 + $0x1c0] sm:$0xff]
    %v693 = vld [vmem:[%s5 + $0x1c8] sm:$0xff]
    %v694 = vld [vmem:[%s5 + $0x1d0] sm:$0xff]
    %v695 = vld [vmem:[%s5 + $0x1d8] sm:$0xff]
    %v696 = vld [vmem:[%s5 + $0x1e0] sm:$0xff]
    %v697 = vld [vmem:[%s5 + $0x1e8] sm:$0xff]
    %v698 = vld [vmem:[%s5 + $0x1f0] sm:$0xff]
    %v699 = vld [vmem:[%s5 + $0x1f8] sm:$0xff]
    %v700 = vld [vmem:[%s5 + $0x200] sm:$0xff]
    %v701 = vld [vmem:[%s5 + $0x208] sm:$0xff]
    %v702 = vld [vmem:[%s5 + $0x210] sm:$0xff]
    %v703 = vld [vmem:[%s5 + $0x218] sm:$0xff]
    %v704 = vld [vmem:[%s5 + $0x220] sm:$0xff]
    %v705 = vld [vmem:[%s5 + $0x228] sm:$0xff]
    %v706 = vld [vmem:[%s5 + $0x230] sm:$0xff]
    %v707 = vld [vmem:[%s5 + $0x238] sm:$0xff]
    %v708 = vld [vmem:[%s5 + $0x240] sm:$0xff]
    %v709 = vld [vmem:[%s5 + $0x248] sm:$0xff]
    %v710 = vld [vmem:[%s5 + $0x250] sm:$0xff]
    %v711 = vld [vmem:[%s5 + $0x258] sm:$0xff]
    %v712 = vld [vmem:[%s5 + $0x260] sm:$0xff]
    %v713 = vld [vmem:[%s5 + $0x268] sm:$0xff]
    %v714 = vld [vmem:[%s5 + $0x270] sm:$0xff]
    %v715 = vld [vmem:[%s5 + $0x278] sm:$0xff]
    %v716 = vld [vmem:[%s5 + $0x280] sm:$0xff]
    %v717 = vld [vmem:[%s5 + $0x288] sm:$0xff]
    %v718 = vld [vmem:[%s5 + $0x290] sm:$0xff]
    %v719 = vld [vmem:[%s5 + $0x298] sm:$0xff]
    %v720 = vld [vmem:[%s5 + $0x2a0] sm:$0xff]
    %v721 = vld [vmem:[%s5 + $0x2a8] sm:$0xff]
    %v722 = vld [vmem:[%s5 + $0x2b0] sm:$0xff]
    %v723 = vld [vmem:[%s5 + $0x2b8] sm:$0xff]
    %v724 = vld [vmem:[%s5 + $0x2c0] sm:$0xff]
    %v725 = vld [vmem:[%s5 + $0x2c8] sm:$0xff]
    %v726 = vld [vmem:[%s5 + $0x2d0] sm:$0xff]
    %v727 = vld [vmem:[%s5 + $0x2d8] sm:$0xff]
    %v728 = vld [vmem:[%s5 + $0x2e0] sm:$0xff]
    %v729 = vld [vmem:[%s5 + $0x2e8] sm:$0xff]
    %v730 = vld [vmem:[%s5 + $0x2f0] sm:$0xff]
    %v731 = vld [vmem:[%s5 + $0x2f8] sm:$0xff]
    %v828 = vunpack.c.l.b16 %v636
    %v829 = vunpack.c.h.b16 %v636
    %v830 = vunpack.c.l.b16 %v637
    %v831 = vunpack.c.h.b16 %v637
    %v832 = vunpack.c.l.b16 %v638
    %v833 = vunpack.c.h.b16 %v638
    %v834 = vunpack.c.l.b16 %v639
    %v835 = vunpack.c.h.b16 %v639
    %v836 = vunpack.c.l.b16 %v640
    %v837 = vunpack.c.h.b16 %v640
    %v838 = vunpack.c.l.b16 %v641
    %v839 = vunpack.c.h.b16 %v641
    %v840 = vunpack.c.l.b16 %v642
    %v841 = vunpack.c.h.b16 %v642
    %v842 = vunpack.c.l.b16 %v643
    %v843 = vunpack.c.h.b16 %v643
    %v844 = vunpack.c.l.b16 %v644
    %v845 = vunpack.c.h.b16 %v644
    %v846 = vunpack.c.l.b16 %v645
    %v847 = vunpack.c.h.b16 %v645
    %v848 = vunpack.c.l.b16 %v646
    %v849 = vunpack.c.h.b16 %v646
    %v850 = vunpack.c.l.b16 %v647
    %v851 = vunpack.c.h.b16 %v647
    %v852 = vunpack.c.l.b16 %v648
    %v853 = vunpack.c.h.b16 %v648
    %v854 = vunpack.c.l.b16 %v649
    %v855 = vunpack.c.h.b16 %v649
    %v856 = vunpack.c.l.b16 %v650
    %v857 = vunpack.c.h.b16 %v650
    %v858 = vunpack.c.l.b16 %v651
    %v859 = vunpack.c.h.b16 %v651
    %v860 = vunpack.c.l.b16 %v652
    %v861 = vunpack.c.h.b16 %v652
    %v862 = vunpack.c.l.b16 %v653
    %v863 = vunpack.c.h.b16 %v653
    %v864 = vunpack.c.l.b16 %v654
    %v865 = vunpack.c.h.b16 %v654
    %v866 = vunpack.c.l.b16 %v655
    %v867 = vunpack.c.h.b16 %v655
    %v868 = vunpack.c.l.b16 %v656
    %v869 = vunpack.c.h.b16 %v656
    %v870 = vunpack.c.l.b16 %v657
    %v871 = vunpack.c.h.b16 %v657
    %v872 = vunpack.c.l.b16 %v658
    %v873 = vunpack.c.h.b16 %v658
    %v874 = vunpack.c.l.b16 %v659
    %v875 = vunpack.c.h.b16 %v659
    %v876 = vunpack.c.l.b16 %v660
    %v877 = vunpack.c.h.b16 %v660
    %v878 = vunpack.c.l.b16 %v661
    %v879 = vunpack.c.h.b16 %v661
    %v880 = vunpack.c.l.b16 %v662
    %v881 = vunpack.c.h.b16 %v662
    %v882 = vunpack.c.l.b16 %v663
    %v883 = vunpack.c.h.b16 %v663
    %v884 = vunpack.c.l.b16 %v664
    %v885 = vunpack.c.h.b16 %v664
    %v886 = vunpack.c.l.b16 %v665
    %v887 = vunpack.c.h.b16 %v665
    %v888 = vunpack.c.l.b16 %v666
    %v889 = vunpack.c.h.b16 %v666
    %v890 = vunpack.c.l.b16 %v667
    %v891 = vunpack.c.h.b16 %v667
    %v892 = vunpack.c.l.b16 %v668
    %v893 = vunpack.c.h.b16 %v668
    %v894 = vunpack.c.l.b16 %v669
    %v895 = vunpack.c.h.b16 %v669
    %v896 = vunpack.c.l.b16 %v670
    %v897 = vunpack.c.h.b16 %v670
    %v898 = vunpack.c.l.b16 %v671
    %v899 = vunpack.c.h.b16 %v671
    %v900 = vunpack.c.l.b16 %v672
    %v901 = vunpack.c.h.b16 %v672
    %v902 = vunpack.c.l.b16 %v673
    %v903 = vunpack.c.h.b16 %v673
    %v904 = vunpack.c.l.b16 %v674
    %v905 = vunpack.c.h.b16 %v674
    %v906 = vunpack.c.l.b16 %v675
    %v907 = vunpack.c.h.b16 %v675
    %v908 = vunpack.c.l.b16 %v676
    %v909 = vunpack.c.h.b16 %v676
    %v910 = vunpack.c.l.b16 %v677
    %v911 = vunpack.c.h.b16 %v677
    %v912 = vunpack.c.l.b16 %v678
    %v913 = vunpack.c.h.b16 %v678
    %v914 = vunpack.c.l.b16 %v679
    %v915 = vunpack.c.h.b16 %v679
    %v916 = vunpack.c.l.b16 %v680
    %v917 = vunpack.c.h.b16 %v680
    %v918 = vunpack.c.l.b16 %v681
    %v919 = vunpack.c.h.b16 %v681
    %v920 = vunpack.c.l.b16 %v682
    %v921 = vunpack.c.h.b16 %v682
    %v922 = vunpack.c.l.b16 %v683
    %v923 = vunpack.c.h.b16 %v683
    %v924 = vunpack.c.l.b16 %v684
    %v925 = vunpack.c.h.b16 %v684
    %v926 = vunpack.c.l.b16 %v685
    %v927 = vunpack.c.h.b16 %v685
    %v928 = vunpack.c.l.b16 %v686
    %v929 = vunpack.c.h.b16 %v686
    %v930 = vunpack.c.l.b16 %v687
    %v931 = vunpack.c.h.b16 %v687
    %v932 = vunpack.c.l.b16 %v688
    %v933 = vunpack.c.h.b16 %v688
    %v934 = vunpack.c.l.b16 %v689
    %v935 = vunpack.c.h.b16 %v689
    %v936 = vunpack.c.l.b16 %v690
    %v937 = vunpack.c.h.b16 %v690
    %v938 = vunpack.c.l.b16 %v691
    %v939 = vunpack.c.h.b16 %v691
    %v940 = vunpack.c.l.b16 %v692
    %v941 = vunpack.c.h.b16 %v692
    %v942 = vunpack.c.l.b16 %v693
    %v943 = vunpack.c.h.b16 %v693
    %v944 = vunpack.c.l.b16 %v694
    %v945 = vunpack.c.h.b16 %v694
    %v946 = vunpack.c.l.b16 %v695
    %v947 = vunpack.c.h.b16 %v695
    %v948 = vunpack.c.l.b16 %v696
    %v949 = vunpack.c.h.b16 %v696
    %v950 = vunpack.c.l.b16 %v697
    %v951 = vunpack.c.h.b16 %v697
    %v952 = vunpack.c.l.b16 %v698
    %v953 = vunpack.c.h.b16 %v698
    %v954 = vunpack.c.l.b16 %v699
    %v955 = vunpack.c.h.b16 %v699
    %v956 = vunpack.c.l.b16 %v700
    %v957 = vunpack.c.h.b16 %v700
    %v958 = vunpack.c.l.b16 %v701
    %v959 = vunpack.c.h.b16 %v701
    %v960 = vunpack.c.l.b16 %v702
    %v961 = vunpack.c.h.b16 %v702
    %v962 = vunpack.c.l.b16 %v703
    %v963 = vunpack.c.h.b16 %v703
    %v964 = vunpack.c.l.b16 %v704
    %v965 = vunpack.c.h.b16 %v704
    %v966 = vunpack.c.l.b16 %v705
    %v967 = vunpack.c.h.b16 %v705
    %v968 = vunpack.c.l.b16 %v706
    %v969 = vunpack.c.h.b16 %v706
    %v970 = vunpack.c.l.b16 %v707
    %v971 = vunpack.c.h.b16 %v707
    %v972 = vunpack.c.l.b16 %v708
    %v973 = vunpack.c.h.b16 %v708
    %v974 = vunpack.c.l.b16 %v709
    %v975 = vunpack.c.h.b16 %v709
    %v976 = vunpack.c.l.b16 %v710
    %v977 = vunpack.c.h.b16 %v710
    %v978 = vunpack.c.l.b16 %v711
    %v979 = vunpack.c.h.b16 %v711
    %v980 = vunpack.c.l.b16 %v712
    %v981 = vunpack.c.h.b16 %v712
    %v982 = vunpack.c.l.b16 %v713
    %v983 = vunpack.c.h.b16 %v713
    %v984 = vunpack.c.l.b16 %v714
    %v985 = vunpack.c.h.b16 %v714
    %v986 = vunpack.c.l.b16 %v715
    %v987 = vunpack.c.h.b16 %v715
    %v988 = vunpack.c.l.b16 %v716
    %v989 = vunpack.c.h.b16 %v716
    %v990 = vunpack.c.l.b16 %v717
    %v991 = vunpack.c.h.b16 %v717
    %v992 = vunpack.c.l.b16 %v718
    %v993 = vunpack.c.h.b16 %v718
    %v994 = vunpack.c.l.b16 %v719
    %v995 = vunpack.c.h.b16 %v719
    %v996 = vunpack.c.l.b16 %v720
    %v997 = vunpack.c.h.b16 %v720
    %v998 = vunpack.c.l.b16 %v721
    %v999 = vunpack.c.h.b16 %v721
    %v1000 = vunpack.c.l.b16 %v722
    %v1001 = vunpack.c.h.b16 %v722
    %v1002 = vunpack.c.l.b16 %v723
    %v1003 = vunpack.c.h.b16 %v723
    %v1004 = vunpack.c.l.b16 %v724
    %v1005 = vunpack.c.h.b16 %v724
    %v1006 = vunpack.c.l.b16 %v725
    %v1007 = vunpack.c.h.b16 %v725
    %v1008 = vunpack.c.l.b16 %v726
    %v1009 = vunpack.c.h.b16 %v726
    %v1010 = vunpack.c.l.b16 %v727
    %v1011 = vunpack.c.h.b16 %v727
    %v1012 = vunpack.c.l.b16 %v728
    %v1013 = vunpack.c.h.b16 %v728
    %v1014 = vunpack.c.l.b16 %v729
    %v1015 = vunpack.c.h.b16 %v729
    %v1016 = vunpack.c.l.b16 %v730
    %v1017 = vunpack.c.h.b16 %v730
    %v1018 = vunpack.c.l.b16 %v731
    %v1019 = vunpack.c.h.b16 %v731
    %v1020 = vpack.c.b16 %v832, %v828
    %v1021 = vpack.c.b16 %v833, %v829
    %v1022 = vpack.c.b16 %v834, %v830
    %v1023 = vpack.c.b16 %v835, %v831
    %v1024 = vpack.c.b16 %v840, %v836
    %v1025 = vpack.c.b16 %v841, %v837
    %v1026 = vpack.c.b16 %v842, %v838
    %v1027 = vpack.c.b16 %v843, %v839
    %v1028 = vpack.c.b16 %v848, %v844
    %v1029 = vpack.c.b16 %v849, %v845
    %v1030 = vpack.c.b16 %v850, %v846
    %v1031 = vpack.c.b16 %v851, %v847
    %v1032 = vpack.c.b16 %v856, %v852
    %v1033 = vpack.c.b16 %v857, %v853
    %v1034 = vpack.c.b16 %v858, %v854
    %v1035 = vpack.c.b16 %v859, %v855
    %v1036 = vpack.c.b16 %v864, %v860
    %v1037 = vpack.c.b16 %v865, %v861
    %v1038 = vpack.c.b16 %v866, %v862
    %v1039 = vpack.c.b16 %v867, %v863
    %v1040 = vpack.c.b16 %v872, %v868
    %v1041 = vpack.c.b16 %v873, %v869
    %v1042 = vpack.c.b16 %v874, %v870
    %v1043 = vpack.c.b16 %v875, %v871
    %v1044 = vpack.c.b16 %v880, %v876
    %v1045 = vpack.c.b16 %v881, %v877
    %v1046 = vpack.c.b16 %v882, %v878
    %v1047 = vpack.c.b16 %v883, %v879
    %v1048 = vpack.c.b16 %v888, %v884
    %v1049 = vpack.c.b16 %v889, %v885
    %v1050 = vpack.c.b16 %v890, %v886
    %v1051 = vpack.c.b16 %v891, %v887
    %v1052 = vpack.c.b16 %v896, %v892
    %v1053 = vpack.c.b16 %v897, %v893
    %v1054 = vpack.c.b16 %v898, %v894
    %v1055 = vpack.c.b16 %v899, %v895
    %v1056 = vpack.c.b16 %v904, %v900
    %v1057 = vpack.c.b16 %v905, %v901
    %v1058 = vpack.c.b16 %v906, %v902
    %v1059 = vpack.c.b16 %v907, %v903
    %v1060 = vpack.c.b16 %v912, %v908
    %v1061 = vpack.c.b16 %v913, %v909
    %v1062 = vpack.c.b16 %v914, %v910
    %v1063 = vpack.c.b16 %v915, %v911
    %v1064 = vpack.c.b16 %v920, %v916
    %v1065 = vpack.c.b16 %v921, %v917
    %v1066 = vpack.c.b16 %v922, %v918
    %v1067 = vpack.c.b16 %v923, %v919
    %v1068 = vpack.c.b16 %v928, %v924
    %v1069 = vpack.c.b16 %v929, %v925
    %v1070 = vpack.c.b16 %v930, %v926
    %v1071 = vpack.c.b16 %v931, %v927
    %v1072 = vpack.c.b16 %v936, %v932
    %v1073 = vpack.c.b16 %v937, %v933
    %v1074 = vpack.c.b16 %v938, %v934
    %v1075 = vpack.c.b16 %v939, %v935
    %v1076 = vpack.c.b16 %v944, %v940
    %v1077 = vpack.c.b16 %v945, %v941
    %v1078 = vpack.c.b16 %v946, %v942
    %v1079 = vpack.c.b16 %v947, %v943
    %v1080 = vpack.c.b16 %v952, %v948
    %v1081 = vpack.c.b16 %v953, %v949
    %v1082 = vpack.c.b16 %v954, %v950
    %v1083 = vpack.c.b16 %v955, %v951
    %v1084 = vpack.c.b16 %v960, %v956
    %v1085 = vpack.c.b16 %v961, %v957
    %v1086 = vpack.c.b16 %v962, %v958
    %v1087 = vpack.c.b16 %v963, %v959
    %v1088 = vpack.c.b16 %v968, %v964
    %v1089 = vpack.c.b16 %v969, %v965
    %v1090 = vpack.c.b16 %v970, %v966
    %v1091 = vpack.c.b16 %v971, %v967
    %v1092 = vpack.c.b16 %v976, %v972
    %v1093 = vpack.c.b16 %v977, %v973
    %v1094 = vpack.c.b16 %v978, %v974
    %v1095 = vpack.c.b16 %v979, %v975
    %v1096 = vpack.c.b16 %v984, %v980
    %v1097 = vpack.c.b16 %v985, %v981
    %v1098 = vpack.c.b16 %v986, %v982
    %v1099 = vpack.c.b16 %v987, %v983
    %v1100 = vpack.c.b16 %v992, %v988
    %v1101 = vpack.c.b16 %v993, %v989
    %v1102 = vpack.c.b16 %v994, %v990
    %v1103 = vpack.c.b16 %v995, %v991
    %v1104 = vpack.c.b16 %v1000, %v996
    %v1105 = vpack.c.b16 %v1001, %v997
    %v1106 = vpack.c.b16 %v1002, %v998
    %v1107 = vpack.c.b16 %v1003, %v999
    %v1108 = vpack.c.b16 %v1008, %v1004
    %v1109 = vpack.c.b16 %v1009, %v1005
    %v1110 = vpack.c.b16 %v1010, %v1006
    %v1111 = vpack.c.b16 %v1011, %v1007
    %v1112 = vpack.c.b16 %v1016, %v1012
    %v1113 = vpack.c.b16 %v1017, %v1013
    %v1114 = vpack.c.b16 %v1018, %v1014
    %v1115 = vpack.c.b16 %v1019, %v1015
    %1212 = vmatprep.subr.bf16.mxu0 %v1021
    %1213 = vmatpush1.bf16.msra.mxu0 %v1020
    %1214 = vmatprep.subr.bf16.mxu0 %v1025
    %1215 = vmatpush1.bf16.msra.mxu0 %v1024
    %1216 = vmatprep.subr.bf16.mxu0 %v1029
    %1217 = vmatpush1.bf16.msra.mxu0 %v1028
    %1218 = vmatprep.subr.bf16.mxu0 %v1033
    %1219 = vmatpush1.bf16.msra.mxu0 %v1032
    %1220 = vmatprep.subr.bf16.mxu0 %v1037
    %1221 = vmatpush1.bf16.msra.mxu0 %v1036
    %1222 = vmatprep.subr.bf16.mxu0 %v1041
    %1223 = vmatpush1.bf16.msra.mxu0 %v1040
    %1224 = vmatprep.subr.bf16.mxu0 %v1045
    %1225 = vmatpush1.bf16.msra.mxu0 %v1044
    %1226 = vmatprep.subr.bf16.mxu0 %v1049
    %1227 = vmatpush1.bf16.msra.mxu0 %v1048
    %1228 = vmatprep.subr.bf16.mxu0 %v1053
    %1229 = vmatpush1.bf16.msra.mxu0 %v1052
    %1230 = vmatprep.subr.bf16.mxu0 %v1057
    %1231 = vmatpush1.bf16.msra.mxu0 %v1056
    %1232 = vmatprep.subr.bf16.mxu0 %v1061
    %1233 = vmatpush1.bf16.msra.mxu0 %v1060
    %1234 = vmatprep.subr.bf16.mxu0 %v1065
    %1235 = vmatpush1.bf16.msra.mxu0 %v1064
    %1236 = vmatprep.subr.bf16.mxu0 %v1069
    %1237 = vmatpush1.bf16.msra.mxu0 %v1068
    %1238 = vmatprep.subr.bf16.mxu0 %v1073
    %1239 = vmatpush1.bf16.msra.mxu0 %v1072
    %1240 = vmatprep.subr.bf16.mxu0 %v1077
    %1241 = vmatpush1.bf16.msra.mxu0 %v1076
    %1242 = vmatprep.subr.bf16.mxu0 %v1081
    %1243 = vmatpush1.bf16.msra.mxu0 %v1080
    %1244 = vmatprep.mubr.bf16.mxu0 %v634
    %1245 = vmatmul.mubr.bf16.gmra.mrb[0].mxu0 %v633
    %v1246 = vpop.f32.mrb[0].mxu0
    %v1247 = vadd.f32 0.0, %v1246
    %v1248 = vpop.f32.mrb[0].mxu0
    %v1249 = vadd.f32 0.0, %v1248
    %v1250 = vpop.f32.mrb[0].mxu0
    %v1251 = vpop.f32.mrb[0].mxu0
    %1252 = vdwg.mxu0
    %1253 = vmatprep.subr.bf16.mxu0 %v1085
    %1254 = vmatpush1.bf16.msra.mxu0 %v1084
    %1255 = vmatprep.subr.bf16.mxu0 %v1089
    %1256 = vmatpush1.bf16.msra.mxu0 %v1088
    %1257 = vmatprep.subr.bf16.mxu0 %v1093
    %1258 = vmatpush1.bf16.msra.mxu0 %v1092
    %1259 = vmatprep.subr.bf16.mxu0 %v1097
    %1260 = vmatpush1.bf16.msra.mxu0 %v1096
    %1261 = vmatprep.subr.bf16.mxu0 %v1101
    %1262 = vmatpush1.bf16.msra.mxu0 %v1100
    %1263 = vmatprep.subr.bf16.mxu0 %v1105
    %1264 = vmatpush1.bf16.msra.mxu0 %v1104
    %1265 = vmatprep.subr.bf16.mxu0 %v1109
    %1266 = vmatpush1.bf16.msra.mxu0 %v1108
    %1267 = vmatprep.subr.bf16.mxu0 %v1113
    %1268 = vmatpush1.bf16.msra.mxu0 %v1112
    %1269 = vmatprep.subr.bf16.mxu0 0
    %1270 = vmatpush1.bf16.msra.mxu0 0
    %1271 = vmatprep.subr.bf16.mxu0 0
    %1272 = vmatpush1.bf16.msra.mxu0 0
    %1273 = vmatprep.subr.bf16.mxu0 0
    %1274 = vmatpush1.bf16.msra.mxu0 0
    %1275 = vmatprep.subr.bf16.mxu0 0
    %1276 = vmatpush1.bf16.msra.mxu0 0
    %1277 = vmatprep.subr.bf16.mxu0 0
    %1278 = vmatpush1.bf16.msra.mxu0 0
    %1279 = vmatprep.subr.bf16.mxu0 0
    %1280 = vmatpush1.bf16.msra.mxu0 0
    %1281 = vmatprep.subr.bf16.mxu0 0
    %1282 = vmatpush1.bf16.msra.mxu0 0
    %1283 = vmatprep.subr.bf16.mxu0 0
    %1284 = vmatpush1.bf16.msra.mxu0 0
    %1285 = vmatprep.mubr.bf16.mxu0 0
    %1286 = vmatmul.mubr.bf16.gmra.mrb[0].mxu0 %v635
    %v1287 = vpop.f32.mrb[0].mxu0
    %v1288 = vadd.f32 %v1247, %v1287
    %v1289 = vpop.f32.mrb[0].mxu0
    %v1290 = vadd.f32 %v1249, %v1289
    %v1291 = vpop.f32.mrb[0].mxu0
    %v1292 = vpop.f32.mrb[0].mxu0
    %1293 = vdwg.mxu0
    %1294 = vmatprep.subr.bf16.mxu0 %v1023
    %1295 = vmatpush1.bf16.msra.mxu0 %v1022
    %1296 = vmatprep.subr.bf16.mxu0 %v1027
    %1297 = vmatpush1.bf16.msra.mxu0 %v1026
    %1298 = vmatprep.subr.bf16.mxu0 %v1031
    %1299 = vmatpush1.bf16.msra.mxu0 %v1030
    %1300 = vmatprep.subr.bf16.mxu0 %v1035
    %1301 = vmatpush1.bf16.msra.mxu0 %v1034
    %1302 = vmatprep.subr.bf16.mxu0 %v1039
    %1303 = vmatpush1.bf16.msra.mxu0 %v1038
    %1304 = vmatprep.subr.bf16.mxu0 %v1043
    %1305 = vmatpush1.bf16.msra.mxu0 %v1042
    %1306 = vmatprep.subr.bf16.mxu0 %v1047
    %1307 = vmatpush1.bf16.msra.mxu0 %v1046
    %1308 = vmatprep.subr.bf16.mxu0 %v1051
    %1309 = vmatpush1.bf16.msra.mxu0 %v1050
    %1310 = vmatprep.subr.bf16.mxu0 %v1055
    %1311 = vmatpush1.bf16.msra.mxu0 %v1054
    %1312 = vmatprep.subr.bf16.mxu0 %v1059
    %1313 = vmatpush1.bf16.msra.mxu0 %v1058
    %1314 = vmatprep.subr.bf16.mxu0 %v1063
    %1315 = vmatpush1.bf16.msra.mxu0 %v1062
    %1316 = vmatprep.subr.bf16.mxu0 %v1067
    %1317 = vmatpush1.bf16.msra.mxu0 %v1066
    %1318 = vmatprep.subr.bf16.mxu0 %v1071
    %1319 = vmatpush1.bf16.msra.mxu0 %v1070
    %1320 = vmatprep.subr.bf16.mxu0 %v1075
    %1321 = vmatpush1.bf16.msra.mxu0 %v1074
    %1322 = vmatprep.subr.bf16.mxu0 %v1079
    %1323 = vmatpush1.bf16.msra.mxu0 %v1078
    %1324 = vmatprep.subr.bf16.mxu0 %v1083
    %1325 = vmatpush1.bf16.msra.mxu0 %v1082
    %1326 = vmatprep.mubr.bf16.mxu0 %v634
    %1327 = vmatmul.mubr.bf16.gmra.mrb[0].mxu0 %v633
    %v1328 = vpop.f32.mrb[0].mxu0
    %v1329 = vadd.f32 0.0, %v1328
    %v1330 = vpop.f32.mrb[0].mxu0
    %v1331 = vadd.f32 0.0, %v1330
    %v1332 = vpop.f32.mrb[0].mxu0
    %v1333 = vpop.f32.mrb[0].mxu0
    %1334 = vdwg.mxu0
    %1335 = vmatprep.subr.bf16.mxu0 %v1087
    %1336 = vmatpush1.bf16.msra.mxu0 %v1086
    %1337 = vmatprep.subr.bf16.mxu0 %v1091
    %1338 = vmatpush1.bf16.msra.mxu0 %v1090
    %1339 = vmatprep.subr.bf16.mxu0 %v1095
    %1340 = vmatpush1.bf16.msra.mxu0 %v1094
    %1341 = vmatprep.subr.bf16.mxu0 %v1099
    %1342 = vmatpush1.bf16.msra.mxu0 %v1098
    %1343 = vmatprep.subr.bf16.mxu0 %v1103
    %1344 = vmatpush1.bf16.msra.mxu0 %v1102
    %1345 = vmatprep.subr.bf16.mxu0 %v1107
    %1346 = vmatpush1.bf16.msra.mxu0 %v1106
    %1347 = vmatprep.subr.bf16.mxu0 %v1111
    %1348 = vmatpush1.bf16.msra.mxu0 %v1110
    %1349 = vmatprep.subr.bf16.mxu0 %v1115
    %1350 = vmatpush1.bf16.msra.mxu0 %v1114
    %1351 = vmatprep.subr.bf16.mxu0 0
    %1352 = vmatpush1.bf16.msra.mxu0 0
    %1353 = vmatprep.subr.bf16.mxu0 0
    %1354 = vmatpush1.bf16.msra.mxu0 0
    %1355 = vmatprep.subr.bf16.mxu0 0
    %1356 = vmatpush1.bf16.msra.mxu0 0
    %1357 = vmatprep.subr.bf16.mxu0 0
    %1358 = vmatpush1.bf16.msra.mxu0 0
    %1359 = vmatprep.subr.bf16.mxu0 0
    %1360 = vmatpush1.bf16.msra.mxu0 0
    %1361 = vmatprep.subr.bf16.mxu0 0
    %1362 = vmatpush1.bf16.msra.mxu0 0
    %1363 = vmatprep.subr.bf16.mxu0 0
    %1364 = vmatpush1.bf16.msra.mxu0 0
    %1365 = vmatprep.subr.bf16.mxu0 0
    %1366 = vmatpush1.bf16.msra.mxu0 0
    %1367 = vmatprep.mubr.bf16.mxu0 0
    %1368 = vmatmul.mubr.bf16.gmra.mrb[0].mxu0 %v635
    %v1369 = vpop.f32.mrb[0].mxu0
    %v1370 = vadd.f32 %v1329, %v1369
    %v1371 = vpop.f32.mrb[0].mxu0
    %v1372 = vadd.f32 %v1331, %v1371
    %v1373 = vpop.f32.mrb[0].mxu0
    %v1374 = vpop.f32.mrb[0].mxu0
    %1375 = vdwg.mxu0
    %v1376 = vpack.c.bf16 %v1288, %v1288
    %v1377 = vpack.c.bf16 %v1290, %v1290
    %v1378 = vpack.c.bf16 %v1370, %v1370
    %v1379 = vpack.c.bf16 %v1372, %v1372
    %v1380 = vld [vmem:[%s6] sm:$0xf]
    %v1383 = vunpack.c.l.s4 1966171168
    %v1384 = vunpack.c.0.s8 %v1383
    %v1385 = vlaneseq
    %v1386 = vshrl.u32 %v1385, 7
    %v1387 = vsub.s32 %v1384, %v1386
    %v1388 = vrot.slane %v1380, %v1387
    %v1389 = vcombine.high %v1388, %v1388
    %v1391 = vunpack.c.l.s4 1966171168
    %v1392 = vunpack.c.0.s8 %v1391
    %v1393 = vlaneseq
    %v1394 = vshrl.u32 %v1393, 7
    %v1395 = vsub.s32 %v1392, %v1394
    %v1396 = vrot.slane %v1388, %v1395
    %v1398 = vunpack.c.l.s4 1966171168
    %v1399 = vunpack.c.0.s8 %v1398
    %v1400 = vlaneseq
    %v1401 = vshrl.u32 %v1400, 7
    %v1402 = vsub.s32 %v1399, %v1401
    %v1403 = vrot.slane %v1389, %v1402
    %v1404 = vcombine.high %v1396, %v1396
    %v1405 = vcombine.high %v1403, %v1403
    %v1407 = vpack.i.b16 %v1396, %v1396
    %v1409 = vlaneseq
    %v1410 = vshrl.u32 %v1409, 7
    %v1411 = vsub.s32 0, %v1410
    %v1412 = vrot.slane %v1407, %v1411
    %v1414 = vpack.i.b16 %v1403, %v1403
    %v1416 = vlaneseq
    %v1417 = vshrl.u32 %v1416, 7
    %v1418 = vsub.s32 0, %v1417
    %v1419 = vrot.slane %v1414, %v1418
    %v1421 = vpack.i.b16 %v1404, %v1404
    %v1423 = vlaneseq
    %v1424 = vshrl.u32 %v1423, 7
    %v1425 = vsub.s32 0, %v1424
    %v1426 = vrot.slane %v1421, %v1425
    %v1428 = vpack.i.b16 %v1405, %v1405
    %v1430 = vlaneseq
    %v1431 = vshrl.u32 %v1430, 7
    %v1432 = vsub.s32 0, %v1431
    %v1433 = vrot.slane %v1428, %v1432
    %v1434 = vadd.bf16 %v1376, %v1412
    %v1435 = vadd.bf16 %v1377, %v1419
    %v1436 = vadd.bf16 %v1378, %v1426
    %v1437 = vadd.bf16 %v1379, %v1433
    %vm1438 = vcmp.gt.bf16.partialorder %v1434, 0
    %vm1439 = vcmp.gt.bf16.partialorder %v1435, 0
    %vm1440 = vcmp.gt.bf16.partialorder %v1436, 0
    %vm1441 = vcmp.gt.bf16.partialorder %v1437, 0
    %v1442 = vmul.bf16 %v1434, 1009007652
    %v1443 = vmul.bf16 %v1435, 1009007652
    %v1444 = vmul.bf16 %v1436, 1009007652
    %v1445 = vmul.bf16 %v1437, 1009007652
    %v1446 = vsel %vm1438, %v1434, %v1442
    %v1447 = vsel %vm1439, %v1435, %v1443
    %v1448 = vsel %vm1440, %v1436, %v1444
    %v1449 = vsel %vm1441, %v1437, %v1445
    %v1450 = vld [vmem:[%s7] sm:$0xff]
    %v1451 = vld [vmem:[%s7 + $0x8] sm:$0xff]
    %v1452 = vld [vmem:[%s7 + $0x10] sm:$0xff]
    %v1453 = vld [vmem:[%s7 + $0x18] sm:$0xff]
    %v1454 = vld [vmem:[%s7 + $0x20] sm:$0xff]
    %v1455 = vld [vmem:[%s7 + $0x28] sm:$0xff]
    %v1456 = vld [vmem:[%s7 + $0x30] sm:$0xff]
    %v1457 = vld [vmem:[%s7 + $0x38] sm:$0xff]
    %v1458 = vld [vmem:[%s7 + $0x40] sm:$0xff]
    %v1459 = vld [vmem:[%s7 + $0x48] sm:$0xff]
    %v1460 = vld [vmem:[%s7 + $0x50] sm:$0xff]
    %v1461 = vld [vmem:[%s7 + $0x58] sm:$0xff]
    %v1462 = vld [vmem:[%s7 + $0x60] sm:$0xff]
    %v1463 = vld [vmem:[%s7 + $0x68] sm:$0xff]
    %v1464 = vld [vmem:[%s7 + $0x70] sm:$0xff]
    %v1465 = vld [vmem:[%s7 + $0x78] sm:$0xff]
    %v1466 = vld [vmem:[%s7 + $0x80] sm:$0xff]
    %v1467 = vld [vmem:[%s7 + $0x88] sm:$0xff]
    %v1468 = vld [vmem:[%s7 + $0x90] sm:$0xff]
    %v1469 = vld [vmem:[%s7 + $0x98] sm:$0xff]
    %v1470 = vld [vmem:[%s7 + $0xa0] sm:$0xff]
    %v1471 = vld [vmem:[%s7 + $0xa8] sm:$0xff]
    %v1472 = vld [vmem:[%s7 + $0xb0] sm:$0xff]
    %v1473 = vld [vmem:[%s7 + $0xb8] sm:$0xff]
    %v1474 = vld [vmem:[%s7 + $0xc0] sm:$0xff]
    %v1475 = vld [vmem:[%s7 + $0xc8] sm:$0xff]
    %v1476 = vld [vmem:[%s7 + $0xd0] sm:$0xff]
    %v1477 = vld [vmem:[%s7 + $0xd8] sm:$0xff]
    %v1478 = vld [vmem:[%s7 + $0xe0] sm:$0xff]
    %v1479 = vld [vmem:[%s7 + $0xe8] sm:$0xff]
    %v1480 = vld [vmem:[%s7 + $0xf0] sm:$0xff]
    %v1481 = vld [vmem:[%s7 + $0xf8] sm:$0xff]
    %v1482 = vld [vmem:[%s7 + $0x100] sm:$0xff]
    %v1483 = vld [vmem:[%s7 + $0x108] sm:$0xff]
    %v1484 = vld [vmem:[%s7 + $0x110] sm:$0xff]
    %v1485 = vld [vmem:[%s7 + $0x118] sm:$0xff]
    %v1486 = vld [vmem:[%s7 + $0x120] sm:$0xff]
    %v1487 = vld [vmem:[%s7 + $0x128] sm:$0xff]
    %v1488 = vld [vmem:[%s7 + $0x130] sm:$0xff]
    %v1489 = vld [vmem:[%s7 + $0x138] sm:$0xff]
    %v1490 = vld [vmem:[%s7 + $0x140] sm:$0xff]
    %v1491 = vld [vmem:[%s7 + $0x148] sm:$0xff]
    %v1492 = vld [vmem:[%s7 + $0x150] sm:$0xff]
    %v1493 = vld [vmem:[%s7 + $0x158] sm:$0xff]
    %v1494 = vld [vmem:[%s7 + $0x160] sm:$0xff]
    %v1495 = vld [vmem:[%s7 + $0x168] sm:$0xff]
    %v1496 = vld [vmem:[%s7 + $0x170] sm:$0xff]
    %v1497 = vld [vmem:[%s7 + $0x178] sm:$0xff]
    %v1498 = vld [vmem:[%s7 + $0x180] sm:$0xff]
    %v1499 = vld [vmem:[%s7 + $0x188] sm:$0xff]
    %v1500 = vld [vmem:[%s7 + $0x190] sm:$0xff]
    %v1501 = vld [vmem:[%s7 + $0x198] sm:$0xff]
    %v1502 = vld [vmem:[%s7 + $0x1a0] sm:$0xff]
    %v1503 = vld [vmem:[%s7 + $0x1a8] sm:$0xff]
    %v1504 = vld [vmem:[%s7 + $0x1b0] sm:$0xff]
    %v1505 = vld [vmem:[%s7 + $0x1b8] sm:$0xff]
    %v1506 = vld [vmem:[%s7 + $0x1c0] sm:$0xff]
    %v1507 = vld [vmem:[%s7 + $0x1c8] sm:$0xff]
    %v1508 = vld [vmem:[%s7 + $0x1d0] sm:$0xff]
    %v1509 = vld [vmem:[%s7 + $0x1d8] sm:$0xff]
    %v1510 = vld [vmem:[%s7 + $0x1e0] sm:$0xff]
    %v1511 = vld [vmem:[%s7 + $0x1e8] sm:$0xff]
    %v1512 = vld [vmem:[%s7 + $0x1f0] sm:$0xff]
    %v1513 = vld [vmem:[%s7 + $0x1f8] sm:$0xff]
    %v1514 = vld [vmem:[%s7 + $0x200] sm:$0xff]
    %v1515 = vld [vmem:[%s7 + $0x208] sm:$0xff]
    %v1516 = vld [vmem:[%s7 + $0x210] sm:$0xff]
    %v1517 = vld [vmem:[%s7 + $0x218] sm:$0xff]
    %v1518 = vld [vmem:[%s7 + $0x220] sm:$0xff]
    %v1519 = vld [vmem:[%s7 + $0x228] sm:$0xff]
    %v1520 = vld [vmem:[%s7 + $0x230] sm:$0xff]
    %v1521 = vld [vmem:[%s7 + $0x238] sm:$0xff]
    %v1522 = vld [vmem:[%s7 + $0x240] sm:$0xff]
    %v1523 = vld [vmem:[%s7 + $0x248] sm:$0xff]
    %v1524 = vld [vmem:[%s7 + $0x250] sm:$0xff]
    %v1525 = vld [vmem:[%s7 + $0x258] sm:$0xff]
    %v1526 = vld [vmem:[%s7 + $0x260] sm:$0xff]
    %v1527 = vld [vmem:[%s7 + $0x268] sm:$0xff]
    %v1528 = vld [vmem:[%s7 + $0x270] sm:$0xff]
    %v1529 = vld [vmem:[%s7 + $0x278] sm:$0xff]
    %v1530 = vld [vmem:[%s7 + $0x280] sm:$0xff]
    %v1531 = vld [vmem:[%s7 + $0x288] sm:$0xff]
    %v1532 = vld [vmem:[%s7 + $0x290] sm:$0xff]
    %v1533 = vld [vmem:[%s7 + $0x298] sm:$0xff]
    %v1534 = vld [vmem:[%s7 + $0x2a0] sm:$0xff]
    %v1535 = vld [vmem:[%s7 + $0x2a8] sm:$0xff]
    %v1536 = vld [vmem:[%s7 + $0x2b0] sm:$0xff]
    %v1537 = vld [vmem:[%s7 + $0x2b8] sm:$0xff]
    %v1538 = vld [vmem:[%s7 + $0x2c0] sm:$0xff]
    %v1539 = vld [vmem:[%s7 + $0x2c8] sm:$0xff]
    %v1540 = vld [vmem:[%s7 + $0x2d0] sm:$0xff]
    %v1541 = vld [vmem:[%s7 + $0x2d8] sm:$0xff]
    %v1542 = vld [vmem:[%s7 + $0x2e0] sm:$0xff]
    %v1543 = vld [vmem:[%s7 + $0x2e8] sm:$0xff]
    %v1544 = vld [vmem:[%s7 + $0x2f0] sm:$0xff]
    %v1545 = vld [vmem:[%s7 + $0x2f8] sm:$0xff]
    %v1546 = vld [vmem:[%s7 + $0x300] sm:$0xff]
    %v1547 = vld [vmem:[%s7 + $0x308] sm:$0xff]
    %v1548 = vld [vmem:[%s7 + $0x310] sm:$0xff]
    %v1549 = vld [vmem:[%s7 + $0x318] sm:$0xff]
    %v1550 = vld [vmem:[%s7 + $0x320] sm:$0xff]
    %v1551 = vld [vmem:[%s7 + $0x328] sm:$0xff]
    %v1552 = vld [vmem:[%s7 + $0x330] sm:$0xff]
    %v1553 = vld [vmem:[%s7 + $0x338] sm:$0xff]
    %v1554 = vld [vmem:[%s7 + $0x340] sm:$0xff]
    %v1555 = vld [vmem:[%s7 + $0x348] sm:$0xff]
    %v1556 = vld [vmem:[%s7 + $0x350] sm:$0xff]
    %v1557 = vld [vmem:[%s7 + $0x358] sm:$0xff]
    %v1558 = vld [vmem:[%s7 + $0x360] sm:$0xff]
    %v1559 = vld [vmem:[%s7 + $0x368] sm:$0xff]
    %v1560 = vld [vmem:[%s7 + $0x370] sm:$0xff]
    %v1561 = vld [vmem:[%s7 + $0x378] sm:$0xff]
    %v1562 = vld [vmem:[%s7 + $0x380] sm:$0xff]
    %v1563 = vld [vmem:[%s7 + $0x388] sm:$0xff]
    %v1564 = vld [vmem:[%s7 + $0x390] sm:$0xff]
    %v1565 = vld [vmem:[%s7 + $0x398] sm:$0xff]
    %v1566 = vld [vmem:[%s7 + $0x3a0] sm:$0xff]
    %v1567 = vld [vmem:[%s7 + $0x3a8] sm:$0xff]
    %v1568 = vld [vmem:[%s7 + $0x3b0] sm:$0xff]
    %v1569 = vld [vmem:[%s7 + $0x3b8] sm:$0xff]
    %v1570 = vld [vmem:[%s7 + $0x3c0] sm:$0xff]
    %v1571 = vld [vmem:[%s7 + $0x3c8] sm:$0xff]
    %v1572 = vld [vmem:[%s7 + $0x3d0] sm:$0xff]
    %v1573 = vld [vmem:[%s7 + $0x3d8] sm:$0xff]
    %v1574 = vld [vmem:[%s7 + $0x3e0] sm:$0xff]
    %v1575 = vld [vmem:[%s7 + $0x3e8] sm:$0xff]
    %v1576 = vld [vmem:[%s7 + $0x3f0] sm:$0xff]
    %v1577 = vld [vmem:[%s7 + $0x3f8] sm:$0xff]
    %v1706 = vunpack.c.l.b16 %v1450
    %v1707 = vunpack.c.h.b16 %v1450
    %v1708 = vunpack.c.l.b16 %v1451
    %v1709 = vunpack.c.h.b16 %v1451
    %v1710 = vunpack.c.l.b16 %v1452
    %v1711 = vunpack.c.h.b16 %v1452
    %v1712 = vunpack.c.l.b16 %v1453
    %v1713 = vunpack.c.h.b16 %v1453
    %v1714 = vunpack.c.l.b16 %v1454
    %v1715 = vunpack.c.h.b16 %v1454
    %v1716 = vunpack.c.l.b16 %v1455
    %v1717 = vunpack.c.h.b16 %v1455
    %v1718 = vunpack.c.l.b16 %v1456
    %v1719 = vunpack.c.h.b16 %v1456
    %v1720 = vunpack.c.l.b16 %v1457
    %v1721 = vunpack.c.h.b16 %v1457
    %v1722 = vunpack.c.l.b16 %v1458
    %v1723 = vunpack.c.h.b16 %v1458
    %v1724 = vunpack.c.l.b16 %v1459
    %v1725 = vunpack.c.h.b16 %v1459
    %v1726 = vunpack.c.l.b16 %v1460
    %v1727 = vunpack.c.h.b16 %v1460
    %v1728 = vunpack.c.l.b16 %v1461
    %v1729 = vunpack.c.h.b16 %v1461
    %v1730 = vunpack.c.l.b16 %v1462
    %v1731 = vunpack.c.h.b16 %v1462
    %v1732 = vunpack.c.l.b16 %v1463
    %v1733 = vunpack.c.h.b16 %v1463
    %v1734 = vunpack.c.l.b16 %v1464
    %v1735 = vunpack.c.h.b16 %v1464
    %v1736 = vunpack.c.l.b16 %v1465
    %v1737 = vunpack.c.h.b16 %v1465
    %v1738 = vunpack.c.l.b16 %v1466
    %v1739 = vunpack.c.h.b16 %v1466
    %v1740 = vunpack.c.l.b16 %v1467
    %v1741 = vunpack.c.h.b16 %v1467
    %v1742 = vunpack.c.l.b16 %v1468
    %v1743 = vunpack.c.h.b16 %v1468
    %v1744 = vunpack.c.l.b16 %v1469
    %v1745 = vunpack.c.h.b16 %v1469
    %v1746 = vunpack.c.l.b16 %v1470
    %v1747 = vunpack.c.h.b16 %v1470
    %v1748 = vunpack.c.l.b16 %v1471
    %v1749 = vunpack.c.h.b16 %v1471
    %v1750 = vunpack.c.l.b16 %v1472
    %v1751 = vunpack.c.h.b16 %v1472
    %v1752 = vunpack.c.l.b16 %v1473
    %v1753 = vunpack.c.h.b16 %v1473
    %v1754 = vunpack.c.l.b16 %v1474
    %v1755 = vunpack.c.h.b16 %v1474
    %v1756 = vunpack.c.l.b16 %v1475
    %v1757 = vunpack.c.h.b16 %v1475
    %v1758 = vunpack.c.l.b16 %v1476
    %v1759 = vunpack.c.h.b16 %v1476
    %v1760 = vunpack.c.l.b16 %v1477
    %v1761 = vunpack.c.h.b16 %v1477
    %v1762 = vunpack.c.l.b16 %v1478
    %v1763 = vunpack.c.h.b16 %v1478
    %v1764 = vunpack.c.l.b16 %v1479
    %v1765 = vunpack.c.h.b16 %v1479
    %v1766 = vunpack.c.l.b16 %v1480
    %v1767 = vunpack.c.h.b16 %v1480
    %v1768 = vunpack.c.l.b16 %v1481
    %v1769 = vunpack.c.h.b16 %v1481
    %v1770 = vunpack.c.l.b16 %v1482
    %v1771 = vunpack.c.h.b16 %v1482
    %v1772 = vunpack.c.l.b16 %v1483
    %v1773 = vunpack.c.h.b16 %v1483
    %v1774 = vunpack.c.l.b16 %v1484
    %v1775 = vunpack.c.h.b16 %v1484
    %v1776 = vunpack.c.l.b16 %v1485
    %v1777 = vunpack.c.h.b16 %v1485
    %v1778 = vunpack.c.l.b16 %v1486
    %v1779 = vunpack.c.h.b16 %v1486
    %v1780 = vunpack.c.l.b16 %v1487
    %v1781 = vunpack.c.h.b16 %v1487
    %v1782 = vunpack.c.l.b16 %v1488
    %v1783 = vunpack.c.h.b16 %v1488
    %v1784 = vunpack.c.l.b16 %v1489
    %v1785 = vunpack.c.h.b16 %v1489
    %v1786 = vunpack.c.l.b16 %v1490
    %v1787 = vunpack.c.h.b16 %v1490
    %v1788 = vunpack.c.l.b16 %v1491
    %v1789 = vunpack.c.h.b16 %v1491
    %v1790 = vunpack.c.l.b16 %v1492
    %v1791 = vunpack.c.h.b16 %v1492
    %v1792 = vunpack.c.l.b16 %v1493
    %v1793 = vunpack.c.h.b16 %v1493
    %v1794 = vunpack.c.l.b16 %v1494
    %v1795 = vunpack.c.h.b16 %v1494
    %v1796 = vunpack.c.l.b16 %v1495
    %v1797 = vunpack.c.h.b16 %v1495
    %v1798 = vunpack.c.l.b16 %v1496
    %v1799 = vunpack.c.h.b16 %v1496
    %v1800 = vunpack.c.l.b16 %v1497
    %v1801 = vunpack.c.h.b16 %v1497
    %v1802 = vunpack.c.l.b16 %v1498
    %v1803 = vunpack.c.h.b16 %v1498
    %v1804 = vunpack.c.l.b16 %v1499
    %v1805 = vunpack.c.h.b16 %v1499
    %v1806 = vunpack.c.l.b16 %v1500
    %v1807 = vunpack.c.h.b16 %v1500
    %v1808 = vunpack.c.l.b16 %v1501
    %v1809 = vunpack.c.h.b16 %v1501
    %v1810 = vunpack.c.l.b16 %v1502
    %v1811 = vunpack.c.h.b16 %v1502
    %v1812 = vunpack.c.l.b16 %v1503
    %v1813 = vunpack.c.h.b16 %v1503
    %v1814 = vunpack.c.l.b16 %v1504
    %v1815 = vunpack.c.h.b16 %v1504
    %v1816 = vunpack.c.l.b16 %v1505
    %v1817 = vunpack.c.h.b16 %v1505
    %v1818 = vunpack.c.l.b16 %v1506
    %v1819 = vunpack.c.h.b16 %v1506
    %v1820 = vunpack.c.l.b16 %v1507
    %v1821 = vunpack.c.h.b16 %v1507
    %v1822 = vunpack.c.l.b16 %v1508
    %v1823 = vunpack.c.h.b16 %v1508
    %v1824 = vunpack.c.l.b16 %v1509
    %v1825 = vunpack.c.h.b16 %v1509
    %v1826 = vunpack.c.l.b16 %v1510
    %v1827 = vunpack.c.h.b16 %v1510
    %v1828 = vunpack.c.l.b16 %v1511
    %v1829 = vunpack.c.h.b16 %v1511
    %v1830 = vunpack.c.l.b16 %v1512
    %v1831 = vunpack.c.h.b16 %v1512
    %v1832 = vunpack.c.l.b16 %v1513
    %v1833 = vunpack.c.h.b16 %v1513
    %v1834 = vunpack.c.l.b16 %v1514
    %v1835 = vunpack.c.h.b16 %v1514
    %v1836 = vunpack.c.l.b16 %v1515
    %v1837 = vunpack.c.h.b16 %v1515
    %v1838 = vunpack.c.l.b16 %v1516
    %v1839 = vunpack.c.h.b16 %v1516
    %v1840 = vunpack.c.l.b16 %v1517
    %v1841 = vunpack.c.h.b16 %v1517
    %v1842 = vunpack.c.l.b16 %v1518
    %v1843 = vunpack.c.h.b16 %v1518
    %v1844 = vunpack.c.l.b16 %v1519
    %v1845 = vunpack.c.h.b16 %v1519
    %v1846 = vunpack.c.l.b16 %v1520
    %v1847 = vunpack.c.h.b16 %v1520
    %v1848 = vunpack.c.l.b16 %v1521
    %v1849 = vunpack.c.h.b16 %v1521
    %v1850 = vunpack.c.l.b16 %v1522
    %v1851 = vunpack.c.h.b16 %v1522
    %v1852 = vunpack.c.l.b16 %v1523
    %v1853 = vunpack.c.h.b16 %v1523
    %v1854 = vunpack.c.l.b16 %v1524
    %v1855 = vunpack.c.h.b16 %v1524
    %v1856 = vunpack.c.l.b16 %v1525
    %v1857 = vunpack.c.h.b16 %v1525
    %v1858 = vunpack.c.l.b16 %v1526
    %v1859 = vunpack.c.h.b16 %v1526
    %v1860 = vunpack.c.l.b16 %v1527
    %v1861 = vunpack.c.h.b16 %v1527
    %v1862 = vunpack.c.l.b16 %v1528
    %v1863 = vunpack.c.h.b16 %v1528
    %v1864 = vunpack.c.l.b16 %v1529
    %v1865 = vunpack.c.h.b16 %v1529
    %v1866 = vunpack.c.l.b16 %v1530
    %v1867 = vunpack.c.h.b16 %v1530
    %v1868 = vunpack.c.l.b16 %v1531
    %v1869 = vunpack.c.h.b16 %v1531
    %v1870 = vunpack.c.l.b16 %v1532
    %v1871 = vunpack.c.h.b16 %v1532
    %v1872 = vunpack.c.l.b16 %v1533
    %v1873 = vunpack.c.h.b16 %v1533
    %v1874 = vunpack.c.l.b16 %v1534
    %v1875 = vunpack.c.h.b16 %v1534
    %v1876 = vunpack.c.l.b16 %v1535
    %v1877 = vunpack.c.h.b16 %v1535
    %v1878 = vunpack.c.l.b16 %v1536
    %v1879 = vunpack.c.h.b16 %v1536
    %v1880 = vunpack.c.l.b16 %v1537
    %v1881 = vunpack.c.h.b16 %v1537
    %v1882 = vunpack.c.l.b16 %v1538
    %v1883 = vunpack.c.h.b16 %v1538
    %v1884 = vunpack.c.l.b16 %v1539
    %v1885 = vunpack.c.h.b16 %v1539
    %v1886 = vunpack.c.l.b16 %v1540
    %v1887 = vunpack.c.h.b16 %v1540
    %v1888 = vunpack.c.l.b16 %v1541
    %v1889 = vunpack.c.h.b16 %v1541
    %v1890 = vunpack.c.l.b16 %v1542
    %v1891 = vunpack.c.h.b16 %v1542
    %v1892 = vunpack.c.l.b16 %v1543
    %v1893 = vunpack.c.h.b16 %v1543
    %v1894 = vunpack.c.l.b16 %v1544
    %v1895 = vunpack.c.h.b16 %v1544
    %v1896 = vunpack.c.l.b16 %v1545
    %v1897 = vunpack.c.h.b16 %v1545
    %v1898 = vunpack.c.l.b16 %v1546
    %v1899 = vunpack.c.h.b16 %v1546
    %v1900 = vunpack.c.l.b16 %v1547
    %v1901 = vunpack.c.h.b16 %v1547
    %v1902 = vunpack.c.l.b16 %v1548
    %v1903 = vunpack.c.h.b16 %v1548
    %v1904 = vunpack.c.l.b16 %v1549
    %v1905 = vunpack.c.h.b16 %v1549
    %v1906 = vunpack.c.l.b16 %v1550
    %v1907 = vunpack.c.h.b16 %v1550
    %v1908 = vunpack.c.l.b16 %v1551
    %v1909 = vunpack.c.h.b16 %v1551
    %v1910 = vunpack.c.l.b16 %v1552
    %v1911 = vunpack.c.h.b16 %v1552
    %v1912 = vunpack.c.l.b16 %v1553
    %v1913 = vunpack.c.h.b16 %v1553
    %v1914 = vunpack.c.l.b16 %v1554
    %v1915 = vunpack.c.h.b16 %v1554
    %v1916 = vunpack.c.l.b16 %v1555
    %v1917 = vunpack.c.h.b16 %v1555
    %v1918 = vunpack.c.l.b16 %v1556
    %v1919 = vunpack.c.h.b16 %v1556
    %v1920 = vunpack.c.l.b16 %v1557
    %v1921 = vunpack.c.h.b16 %v1557
    %v1922 = vunpack.c.l.b16 %v1558
    %v1923 = vunpack.c.h.b16 %v1558
    %v1924 = vunpack.c.l.b16 %v1559
    %v1925 = vunpack.c.h.b16 %v1559
    %v1926 = vunpack.c.l.b16 %v1560
    %v1927 = vunpack.c.h.b16 %v1560
    %v1928 = vunpack.c.l.b16 %v1561
    %v1929 = vunpack.c.h.b16 %v1561
    %v1930 = vunpack.c.l.b16 %v1562
    %v1931 = vunpack.c.h.b16 %v1562
    %v1932 = vunpack.c.l.b16 %v1563
    %v1933 = vunpack.c.h.b16 %v1563
    %v1934 = vunpack.c.l.b16 %v1564
    %v1935 = vunpack.c.h.b16 %v1564
    %v1936 = vunpack.c.l.b16 %v1565
    %v1937 = vunpack.c.h.b16 %v1565
    %v1938 = vunpack.c.l.b16 %v1566
    %v1939 = vunpack.c.h.b16 %v1566
    %v1940 = vunpack.c.l.b16 %v1567
    %v1941 = vunpack.c.h.b16 %v1567
    %v1942 = vunpack.c.l.b16 %v1568
    %v1943 = vunpack.c.h.b16 %v1568
    %v1944 = vunpack.c.l.b16 %v1569
    %v1945 = vunpack.c.h.b16 %v1569
    %v1946 = vunpack.c.l.b16 %v1570
    %v1947 = vunpack.c.h.b16 %v1570
    %v1948 = vunpack.c.l.b16 %v1571
    %v1949 = vunpack.c.h.b16 %v1571
    %v1950 = vunpack.c.l.b16 %v1572
    %v1951 = vunpack.c.h.b16 %v1572
    %v1952 = vunpack.c.l.b16 %v1573
    %v1953 = vunpack.c.h.b16 %v1573
    %v1954 = vunpack.c.l.b16 %v1574
    %v1955 = vunpack.c.h.b16 %v1574
    %v1956 = vunpack.c.l.b16 %v1575
    %v1957 = vunpack.c.h.b16 %v1575
    %v1958 = vunpack.c.l.b16 %v1576
    %v1959 = vunpack.c.h.b16 %v1576
    %v1960 = vunpack.c.l.b16 %v1577
    %v1961 = vunpack.c.h.b16 %v1577
    %v1962 = vpack.c.b16 %v1710, %v1706
    %v1963 = vpack.c.b16 %v1711, %v1707
    %v1964 = vpack.c.b16 %v1712, %v1708
    %v1965 = vpack.c.b16 %v1713, %v1709
    %v1966 = vpack.c.b16 %v1718, %v1714
    %v1967 = vpack.c.b16 %v1719, %v1715
    %v1968 = vpack.c.b16 %v1720, %v1716
    %v1969 = vpack.c.b16 %v1721, %v1717
    %v1970 = vpack.c.b16 %v1726, %v1722
    %v1971 = vpack.c.b16 %v1727, %v1723
    %v1972 = vpack.c.b16 %v1728, %v1724
    %v1973 = vpack.c.b16 %v1729, %v1725
    %v1974 = vpack.c.b16 %v1734, %v1730
    %v1975 = vpack.c.b16 %v1735, %v1731
    %v1976 = vpack.c.b16 %v1736, %v1732
    %v1977 = vpack.c.b16 %v1737, %v1733
    %v1978 = vpack.c.b16 %v1742, %v1738
    %v1979 = vpack.c.b16 %v1743, %v1739
    %v1980 = vpack.c.b16 %v1744, %v1740
    %v1981 = vpack.c.b16 %v1745, %v1741
    %v1982 = vpack.c.b16 %v1750, %v1746
    %v1983 = vpack.c.b16 %v1751, %v1747
    %v1984 = vpack.c.b16 %v1752, %v1748
    %v1985 = vpack.c.b16 %v1753, %v1749
    %v1986 = vpack.c.b16 %v1758, %v1754
    %v1987 = vpack.c.b16 %v1759, %v1755
    %v1988 = vpack.c.b16 %v1760, %v1756
    %v1989 = vpack.c.b16 %v1761, %v1757
    %v1990 = vpack.c.b16 %v1766, %v1762
    %v1991 = vpack.c.b16 %v1767, %v1763
    %v1992 = vpack.c.b16 %v1768, %v1764
    %v1993 = vpack.c.b16 %v1769, %v1765
    %v1994 = vpack.c.b16 %v1774, %v1770
    %v1995 = vpack.c.b16 %v1775, %v1771
    %v1996 = vpack.c.b16 %v1776, %v1772
    %v1997 = vpack.c.b16 %v1777, %v1773
    %v1998 = vpack.c.b16 %v1782, %v1778
    %v1999 = vpack.c.b16 %v1783, %v1779
    %v2000 = vpack.c.b16 %v1784, %v1780
    %v2001 = vpack.c.b16 %v1785, %v1781
    %v2002 = vpack.c.b16 %v1790, %v1786
    %v2003 = vpack.c.b16 %v1791, %v1787
    %v2004 = vpack.c.b16 %v1792, %v1788
    %v2005 = vpack.c.b16 %v1793, %v1789
    %v2006 = vpack.c.b16 %v1798, %v1794
    %v2007 = vpack.c.b16 %v1799, %v1795
    %v2008 = vpack.c.b16 %v1800, %v1796
    %v2009 = vpack.c.b16 %v1801, %v1797
    %v2010 = vpack.c.b16 %v1806, %v1802
    %v2011 = vpack.c.b16 %v1807, %v1803
    %v2012 = vpack.c.b16 %v1808, %v1804
    %v2013 = vpack.c.b16 %v1809, %v1805
    %v2014 = vpack.c.b16 %v1814, %v1810
    %v2015 = vpack.c.b16 %v1815, %v1811
    %v2016 = vpack.c.b16 %v1816, %v1812
    %v2017 = vpack.c.b16 %v1817, %v1813
    %v2018 = vpack.c.b16 %v1822, %v1818
    %v2019 = vpack.c.b16 %v1823, %v1819
    %v2020 = vpack.c.b16 %v1824, %v1820
    %v2021 = vpack.c.b16 %v1825, %v1821
    %v2022 = vpack.c.b16 %v1830, %v1826
    %v2023 = vpack.c.b16 %v1831, %v1827
    %v2024 = vpack.c.b16 %v1832, %v1828
    %v2025 = vpack.c.b16 %v1833, %v1829
    %v2026 = vpack.c.b16 %v1838, %v1834
    %v2027 = vpack.c.b16 %v1839, %v1835
    %v2028 = vpack.c.b16 %v1840, %v1836
    %v2029 = vpack.c.b16 %v1841, %v1837
    %v2030 = vpack.c.b16 %v1846, %v1842
    %v2031 = vpack.c.b16 %v1847, %v1843
    %v2032 = vpack.c.b16 %v1848, %v1844
    %v2033 = vpack.c.b16 %v1849, %v1845
    %v2034 = vpack.c.b16 %v1854, %v1850
    %v2035 = vpack.c.b16 %v1855, %v1851
    %v2036 = vpack.c.b16 %v1856, %v1852
    %v2037 = vpack.c.b16 %v1857, %v1853
    %v2038 = vpack.c.b16 %v1862, %v1858
    %v2039 = vpack.c.b16 %v1863, %v1859
    %v2040 = vpack.c.b16 %v1864, %v1860
    %v2041 = vpack.c.b16 %v1865, %v1861
    %v2042 = vpack.c.b16 %v1870, %v1866
    %v2043 = vpack.c.b16 %v1871, %v1867
    %v2044 = vpack.c.b16 %v1872, %v1868
    %v2045 = vpack.c.b16 %v1873, %v1869
    %v2046 = vpack.c.b16 %v1878, %v1874
    %v2047 = vpack.c.b16 %v1879, %v1875
    %v2048 = vpack.c.b16 %v1880, %v1876
    %v2049 = vpack.c.b16 %v1881, %v1877
    %v2050 = vpack.c.b16 %v1886, %v1882
    %v2051 = vpack.c.b16 %v1887, %v1883
    %v2052 = vpack.c.b16 %v1888, %v1884
    %v2053 = vpack.c.b16 %v1889, %v1885
    %v2054 = vpack.c.b16 %v1894, %v1890
    %v2055 = vpack.c.b16 %v1895, %v1891
    %v2056 = vpack.c.b16 %v1896, %v1892
    %v2057 = vpack.c.b16 %v1897, %v1893
    %v2058 = vpack.c.b16 %v1902, %v1898
    %v2059 = vpack.c.b16 %v1903, %v1899
    %v2060 = vpack.c.b16 %v1904, %v1900
    %v2061 = vpack.c.b16 %v1905, %v1901
    %v2062 = vpack.c.b16 %v1910, %v1906
    %v2063 = vpack.c.b16 %v1911, %v1907
    %v2064 = vpack.c.b16 %v1912, %v1908
    %v2065 = vpack.c.b16 %v1913, %v1909
    %v2066 = vpack.c.b16 %v1918, %v1914
    %v2067 = vpack.c.b16 %v1919, %v1915
    %v2068 = vpack.c.b16 %v1920, %v1916
    %v2069 = vpack.c.b16 %v1921, %v1917
    %v2070 = vpack.c.b16 %v1926, %v1922
    %v2071 = vpack.c.b16 %v1927, %v1923
    %v2072 = vpack.c.b16 %v1928, %v1924
    %v2073 = vpack.c.b16 %v1929, %v1925
    %v2074 = vpack.c.b16 %v1934, %v1930
    %v2075 = vpack.c.b16 %v1935, %v1931
    %v2076 = vpack.c.b16 %v1936, %v1932
    %v2077 = vpack.c.b16 %v1937, %v1933
    %v2078 = vpack.c.b16 %v1942, %v1938
    %v2079 = vpack.c.b16 %v1943, %v1939
    %v2080 = vpack.c.b16 %v1944, %v1940
    %v2081 = vpack.c.b16 %v1945, %v1941
    %v2082 = vpack.c.b16 %v1950, %v1946
    %v2083 = vpack.c.b16 %v1951, %v1947
    %v2084 = vpack.c.b16 %v1952, %v1948
    %v2085 = vpack.c.b16 %v1953, %v1949
    %v2086 = vpack.c.b16 %v1958, %v1954
    %v2087 = vpack.c.b16 %v1959, %v1955
    %v2088 = vpack.c.b16 %v1960, %v1956
    %v2089 = vpack.c.b16 %v1961, %v1957
    %2218 = vmatprep.subr.bf16.mxu0 %v1963
    %2219 = vmatpush1.bf16.msra.mxu0 %v1962
    %2220 = vmatprep.subr.bf16.mxu0 %v1967
    %2221 = vmatpush1.bf16.msra.mxu0 %v1966
    %2222 = vmatprep.subr.bf16.mxu0 %v1971
    %2223 = vmatpush1.bf16.msra.mxu0 %v1970
    %2224 = vmatprep.subr.bf16.mxu0 %v1975
    %2225 = vmatpush1.bf16.msra.mxu0 %v1974
    %2226 = vmatprep.subr.bf16.mxu0 %v1979
    %2227 = vmatpush1.bf16.msra.mxu0 %v1978
    %2228 = vmatprep.subr.bf16.mxu0 %v1983
    %2229 = vmatpush1.bf16.msra.mxu0 %v1982
    %2230 = vmatprep.subr.bf16.mxu0 %v1987
    %2231 = vmatpush1.bf16.msra.mxu0 %v1986
    %2232 = vmatprep.subr.bf16.mxu0 %v1991
    %2233 = vmatpush1.bf16.msra.mxu0 %v1990
    %2234 = vmatprep.subr.bf16.mxu0 %v1995
    %2235 = vmatpush1.bf16.msra.mxu0 %v1994
    %2236 = vmatprep.subr.bf16.mxu0 %v1999
    %2237 = vmatpush1.bf16.msra.mxu0 %v1998
    %2238 = vmatprep.subr.bf16.mxu0 %v2003
    %2239 = vmatpush1.bf16.msra.mxu0 %v2002
    %2240 = vmatprep.subr.bf16.mxu0 %v2007
    %2241 = vmatpush1.bf16.msra.mxu0 %v2006
    %2242 = vmatprep.subr.bf16.mxu0 %v2011
    %2243 = vmatpush1.bf16.msra.mxu0 %v2010
    %2244 = vmatprep.subr.bf16.mxu0 %v2015
    %2245 = vmatpush1.bf16.msra.mxu0 %v2014
    %2246 = vmatprep.subr.bf16.mxu0 %v2019
    %2247 = vmatpush1.bf16.msra.mxu0 %v2018
    %2248 = vmatprep.subr.bf16.mxu0 %v2023
    %2249 = vmatpush1.bf16.msra.mxu0 %v2022
    %2250 = vmatprep.mubr.bf16.mxu0 %v1447
    %2251 = vmatmul.mubr.bf16.gmra.mrb[0].mxu0 %v1446
    %v2252 = vpop.f32.mrb[0].mxu0
    %v2253 = vadd.f32 0.0, %v2252
    %v2254 = vpop.f32.mrb[0].mxu0
    %v2255 = vadd.f32 0.0, %v2254
    %v2256 = vpop.f32.mrb[0].mxu0
    %v2257 = vpop.f32.mrb[0].mxu0
    %2258 = vdwg.mxu0
    %2259 = vmatprep.subr.bf16.mxu0 %v2027
    %2260 = vmatpush1.bf16.msra.mxu0 %v2026
    %2261 = vmatprep.subr.bf16.mxu0 %v2031
    %2262 = vmatpush1.bf16.msra.mxu0 %v2030
    %2263 = vmatprep.subr.bf16.mxu0 %v2035
    %2264 = vmatpush1.bf16.msra.mxu0 %v2034
    %2265 = vmatprep.subr.bf16.mxu0 %v2039
    %2266 = vmatpush1.bf16.msra.mxu0 %v2038
    %2267 = vmatprep.subr.bf16.mxu0 %v2043
    %2268 = vmatpush1.bf16.msra.mxu0 %v2042
    %2269 = vmatprep.subr.bf16.mxu0 %v2047
    %2270 = vmatpush1.bf16.msra.mxu0 %v2046
    %2271 = vmatprep.subr.bf16.mxu0 %v2051
    %2272 = vmatpush1.bf16.msra.mxu0 %v2050
    %2273 = vmatprep.subr.bf16.mxu0 %v2055
    %2274 = vmatpush1.bf16.msra.mxu0 %v2054
    %2275 = vmatprep.subr.bf16.mxu0 %v2059
    %2276 = vmatpush1.bf16.msra.mxu0 %v2058
    %2277 = vmatprep.subr.bf16.mxu0 %v2063
    %2278 = vmatpush1.bf16.msra.mxu0 %v2062
    %2279 = vmatprep.subr.bf16.mxu0 %v2067
    %2280 = vmatpush1.bf16.msra.mxu0 %v2066
    %2281 = vmatprep.subr.bf16.mxu0 %v2071
    %2282 = vmatpush1.bf16.msra.mxu0 %v2070
    %2283 = vmatprep.subr.bf16.mxu0 %v2075
    %2284 = vmatpush1.bf16.msra.mxu0 %v2074
    %2285 = vmatprep.subr.bf16.mxu0 %v2079
    %2286 = vmatpush1.bf16.msra.mxu0 %v2078
    %2287 = vmatprep.subr.bf16.mxu0 %v2083
    %2288 = vmatpush1.bf16.msra.mxu0 %v2082
    %2289 = vmatprep.subr.bf16.mxu0 %v2087
    %2290 = vmatpush1.bf16.msra.mxu0 %v2086
    %2291 = vmatprep.mubr.bf16.mxu0 %v1449
    %2292 = vmatmul.mubr.bf16.gmra.mrb[0].mxu0 %v1448
    %v2293 = vpop.f32.mrb[0].mxu0
    %v2294 = vadd.f32 %v2253, %v2293
    %v2295 = vpop.f32.mrb[0].mxu0
    %v2296 = vadd.f32 %v2255, %v2295
    %v2297 = vpop.f32.mrb[0].mxu0
    %v2298 = vpop.f32.mrb[0].mxu0
    %2299 = vdwg.mxu0
    %2300 = vmatprep.subr.bf16.mxu0 %v1965
    %2301 = vmatpush1.bf16.msra.mxu0 %v1964
    %2302 = vmatprep.subr.bf16.mxu0 %v1969
    %2303 = vmatpush1.bf16.msra.mxu0 %v1968
    %2304 = vmatprep.subr.bf16.mxu0 %v1973
    %2305 = vmatpush1.bf16.msra.mxu0 %v1972
    %2306 = vmatprep.subr.bf16.mxu0 %v1977
    %2307 = vmatpush1.bf16.msra.mxu0 %v1976
    %2308 = vmatprep.subr.bf16.mxu0 %v1981
    %2309 = vmatpush1.bf16.msra.mxu0 %v1980
    %2310 = vmatprep.subr.bf16.mxu0 %v1985
    %2311 = vmatpush1.bf16.msra.mxu0 %v1984
    %2312 = vmatprep.subr.bf16.mxu0 %v1989
    %2313 = vmatpush1.bf16.msra.mxu0 %v1988
    %2314 = vmatprep.subr.bf16.mxu0 %v1993
    %2315 = vmatpush1.bf16.msra.mxu0 %v1992
    %2316 = vmatprep.subr.bf16.mxu0 %v1997
    %2317 = vmatpush1.bf16.msra.mxu0 %v1996
    %2318 = vmatprep.subr.bf16.mxu0 %v2001
    %2319 = vmatpush1.bf16.msra.mxu0 %v2000
    %2320 = vmatprep.subr.bf16.mxu0 %v2005
    %2321 = vmatpush1.bf16.msra.mxu0 %v2004
    %2322 = vmatprep.subr.bf16.mxu0 %v2009
    %2323 = vmatpush1.bf16.msra.mxu0 %v2008
    %2324 = vmatprep.subr.bf16.mxu0 %v2013
    %2325 = vmatpush1.bf16.msra.mxu0 %v2012
    %2326 = vmatprep.subr.bf16.mxu0 %v2017
    %2327 = vmatpush1.bf16.msra.mxu0 %v2016
    %2328 = vmatprep.subr.bf16.mxu0 %v2021
    %2329 = vmatpush1.bf16.msra.mxu0 %v2020
    %2330 = vmatprep.subr.bf16.mxu0 %v2025
    %2331 = vmatpush1.bf16.msra.mxu0 %v2024
    %2332 = vmatprep.mubr.bf16.mxu0 %v1447
    %2333 = vmatmul.mubr.bf16.gmra.mrb[0].mxu0 %v1446
    %v2334 = vpop.f32.mrb[0].mxu0
    %v2335 = vadd.f32 0.0, %v2334
    %v2336 = vpop.f32.mrb[0].mxu0
    %v2337 = vadd.f32 0.0, %v2336
    %v2338 = vpop.f32.mrb[0].mxu0
    %v2339 = vpop.f32.mrb[0].mxu0
    %2340 = vdwg.mxu0
    %2341 = vmatprep.subr.bf16.mxu0 %v2029
    %2342 = vmatpush1.bf16.msra.mxu0 %v2028
    %2343 = vmatprep.subr.bf16.mxu0 %v2033
    %2344 = vmatpush1.bf16.msra.mxu0 %v2032
    %2345 = vmatprep.subr.bf16.mxu0 %v2037
    %2346 = vmatpush1.bf16.msra.mxu0 %v2036
    %2347 = vmatprep.subr.bf16.mxu0 %v2041
    %2348 = vmatpush1.bf16.msra.mxu0 %v2040
    %2349 = vmatprep.subr.bf16.mxu0 %v2045
    %2350 = vmatpush1.bf16.msra.mxu0 %v2044
    %2351 = vmatprep.subr.bf16.mxu0 %v2049
    %2352 = vmatpush1.bf16.msra.mxu0 %v2048
    %2353 = vmatprep.subr.bf16.mxu0 %v2053
    %2354 = vmatpush1.bf16.msra.mxu0 %v2052
    %2355 = vmatprep.subr.bf16.mxu0 %v2057
    %2356 = vmatpush1.bf16.msra.mxu0 %v2056
    %2357 = vmatprep.subr.bf16.mxu0 %v2061
    %2358 = vmatpush1.bf16.msra.mxu0 %v2060
    %2359 = vmatprep.subr.bf16.mxu0 %v2065
    %2360 = vmatpush1.bf16.msra.mxu0 %v2064
    %2361 = vmatprep.subr.bf16.mxu0 %v2069
    %2362 = vmatpush1.bf16.msra.mxu0 %v2068
    %2363 = vmatprep.subr.bf16.mxu0 %v2073
    %2364 = vmatpush1.bf16.msra.mxu0 %v2072
    %2365 = vmatprep.subr.bf16.mxu0 %v2077
    %2366 = vmatpush1.bf16.msra.mxu0 %v2076
    %2367 = vmatprep.subr.bf16.mxu0 %v2081
    %2368 = vmatpush1.bf16.msra.mxu0 %v2080
    %2369 = vmatprep.subr.bf16.mxu0 %v2085
    %2370 = vmatpush1.bf16.msra.mxu0 %v2084
    %2371 = vmatprep.subr.bf16.mxu0 %v2089
    %2372 = vmatpush1.bf16.msra.mxu0 %v2088
    %2373 = vmatprep.mubr.bf16.mxu0 %v1449
    %2374 = vmatmul.mubr.bf16.gmra.mrb[0].mxu0 %v1448
    %v2375 = vpop.f32.mrb[0].mxu0
    %v2376 = vadd.f32 %v2335, %v2375
    %v2377 = vpop.f32.mrb[0].mxu0
    %v2378 = vadd.f32 %v2337, %v2377
    %v2379 = vpop.f32.mrb[0].mxu0
    %v2380 = vpop.f32.mrb[0].mxu0
    %2381 = vdwg.mxu0
    %v2382 = vpack.c.bf16 %v2294, %v2294
    %v2383 = vpack.c.bf16 %v2296, %v2296
    %v2384 = vpack.c.bf16 %v2376, %v2376
    %v2385 = vpack.c.bf16 %v2378, %v2378
    %v2386 = vld [vmem:[%s8] sm:$0xf]
    %v2389 = vunpack.c.l.s4 1966171168
    %v2390 = vunpack.c.0.s8 %v2389
    %v2391 = vlaneseq
    %v2392 = vshrl.u32 %v2391, 7
    %v2393 = vsub.s32 %v2390, %v2392
    %v2394 = vrot.slane %v2386, %v2393
    %v2395 = vcombine.high %v2394, %v2394
    %v2397 = vunpack.c.l.s4 1966171168
    %v2398 = vunpack.c.0.s8 %v2397
    %v2399 = vlaneseq
    %v2400 = vshrl.u32 %v2399, 7
    %v2401 = vsub.s32 %v2398, %v2400
    %v2402 = vrot.slane %v2394, %v2401
    %v2404 = vunpack.c.l.s4 1966171168
    %v2405 = vunpack.c.0.s8 %v2404
    %v2406 = vlaneseq
    %v2407 = vshrl.u32 %v2406, 7
    %v2408 = vsub.s32 %v2405, %v2407
    %v2409 = vrot.slane %v2395, %v2408
    %v2410 = vcombine.high %v2402, %v2402
    %v2411 = vcombine.high %v2409, %v2409
    %v2413 = vpack.i.b16 %v2402, %v2402
    %v2415 = vlaneseq
    %v2416 = vshrl.u32 %v2415, 7
    %v2417 = vsub.s32 0, %v2416
    %v2418 = vrot.slane %v2413, %v2417
    %v2420 = vpack.i.b16 %v2409, %v2409
    %v2422 = vlaneseq
    %v2423 = vshrl.u32 %v2422, 7
    %v2424 = vsub.s32 0, %v2423
    %v2425 = vrot.slane %v2420, %v2424
    %v2427 = vpack.i.b16 %v2410, %v2410
    %v2429 = vlaneseq
    %v2430 = vshrl.u32 %v2429, 7
    %v2431 = vsub.s32 0, %v2430
    %v2432 = vrot.slane %v2427, %v2431
    %v2434 = vpack.i.b16 %v2411, %v2411
    %v2436 = vlaneseq
    %v2437 = vshrl.u32 %v2436, 7
    %v2438 = vsub.s32 0, %v2437
    %v2439 = vrot.slane %v2434, %v2438
    %v2440 = vadd.bf16 %v2382, %v2418
    %v2441 = vadd.bf16 %v2383, %v2425
    %v2442 = vadd.bf16 %v2384, %v2432
    %v2443 = vadd.bf16 %v2385, %v2439
    %vm2444 = vcmp.gt.bf16.partialorder %v2440, 0
    %vm2445 = vcmp.gt.bf16.partialorder %v2441, 0
    %vm2446 = vcmp.gt.bf16.partialorder %v2442, 0
    %vm2447 = vcmp.gt.bf16.partialorder %v2443, 0
    %v2448 = vmul.bf16 %v2440, 1009007652
    %v2449 = vmul.bf16 %v2441, 1009007652
    %v2450 = vmul.bf16 %v2442, 1009007652
    %v2451 = vmul.bf16 %v2443, 1009007652
    %v2452 = vsel %vm2444, %v2440, %v2448
    %v2453 = vsel %vm2445, %v2441, %v2449
    %v2454 = vsel %vm2446, %v2442, %v2450
    %v2455 = vsel %vm2447, %v2443, %v2451
    %v2456 = vld [vmem:[%s9] sm:$0xff]
    %v2457 = vld [vmem:[%s9 + $0x8] sm:$0xff]
    %v2458 = vld [vmem:[%s9 + $0x10] sm:$0xf]
    %v2459 = vld [vmem:[%s9 + $0x14] sm:$0xff]
    %v2460 = vld [vmem:[%s9 + $0x1c] sm:$0xff]
    %v2461 = vld [vmem:[%s9 + $0x24] sm:$0xf]
    %v2462 = vld [vmem:[%s9 + $0x28] sm:$0xff]
    %v2463 = vld [vmem:[%s9 + $0x30] sm:$0xff]
    %v2464 = vld [vmem:[%s9 + $0x38] sm:$0xf]
    %v2465 = vld [vmem:[%s9 + $0x3c] sm:$0xff]
    %v2466 = vld [vmem:[%s9 + $0x44] sm:$0xff]
    %v2467 = vld [vmem:[%s9 + $0x4c] sm:$0xf]
    %v2468 = vld [vmem:[%s9 + $0x50] sm:$0xff]
    %v2469 = vld [vmem:[%s9 + $0x58] sm:$0xff]
    %v2470 = vld [vmem:[%s9 + $0x60] sm:$0xf]
    %v2471 = vld [vmem:[%s9 + $0x64] sm:$0xff]
    %v2472 = vld [vmem:[%s9 + $0x6c] sm:$0xff]
    %v2473 = vld [vmem:[%s9 + $0x74] sm:$0xf]
    %v2474 = vld [vmem:[%s9 + $0x78] sm:$0xff]
    %v2475 = vld [vmem:[%s9 + $0x80] sm:$0xff]
    %v2476 = vld [vmem:[%s9 + $0x88] sm:$0xf]
    %v2477 = vld [vmem:[%s9 + $0x8c] sm:$0xff]
    %v2478 = vld [vmem:[%s9 + $0x94] sm:$0xff]
    %v2479 = vld [vmem:[%s9 + $0x9c] sm:$0xf]
    %v2480 = vld [vmem:[%s9 + $0xa0] sm:$0xff]
    %v2481 = vld [vmem:[%s9 + $0xa8] sm:$0xff]
    %v2482 = vld [vmem:[%s9 + $0xb0] sm:$0xf]
    %v2483 = vld [vmem:[%s9 + $0xb4] sm:$0xff]
    %v2484 = vld [vmem:[%s9 + $0xbc] sm:$0xff]
    %v2485 = vld [vmem:[%s9 + $0xc4] sm:$0xf]
    %v2486 = vld [vmem:[%s9 + $0xc8] sm:$0xff]
    %v2487 = vld [vmem:[%s9 + $0xd0] sm:$0xff]
    %v2488 = vld [vmem:[%s9 + $0xd8] sm:$0xf]
    %v2489 = vld [vmem:[%s9 + $0xdc] sm:$0xff]
    %v2490 = vld [vmem:[%s9 + $0xe4] sm:$0xff]
    %v2491 = vld [vmem:[%s9 + $0xec] sm:$0xf]
    %v2492 = vld [vmem:[%s9 + $0xf0] sm:$0xff]
    %v2493 = vld [vmem:[%s9 + $0xf8] sm:$0xff]
    %v2494 = vld [vmem:[%s9 + $0x100] sm:$0xf]
    %v2495 = vld [vmem:[%s9 + $0x104] sm:$0xff]
    %v2496 = vld [vmem:[%s9 + $0x10c] sm:$0xff]
    %v2497 = vld [vmem:[%s9 + $0x114] sm:$0xf]
    %v2498 = vld [vmem:[%s9 + $0x118] sm:$0xff]
    %v2499 = vld [vmem:[%s9 + $0x120] sm:$0xff]
    %v2500 = vld [vmem:[%s9 + $0x128] sm:$0xf]
    %v2501 = vld [vmem:[%s9 + $0x12c] sm:$0xff]
    %v2502 = vld [vmem:[%s9 + $0x134] sm:$0xff]
    %v2503 = vld [vmem:[%s9 + $0x13c] sm:$0xf]
    %v2504 = vld [vmem:[%s9 + $0x140] sm:$0xff]
    %v2505 = vld [vmem:[%s9 + $0x148] sm:$0xff]
    %v2506 = vld [vmem:[%s9 + $0x150] sm:$0xf]
    %v2507 = vld [vmem:[%s9 + $0x154] sm:$0xff]
    %v2508 = vld [vmem:[%s9 + $0x15c] sm:$0xff]
    %v2509 = vld [vmem:[%s9 + $0x164] sm:$0xf]
    %v2510 = vld [vmem:[%s9 + $0x168] sm:$0xff]
    %v2511 = vld [vmem:[%s9 + $0x170] sm:$0xff]
    %v2512 = vld [vmem:[%s9 + $0x178] sm:$0xf]
    %v2513 = vld [vmem:[%s9 + $0x17c] sm:$0xff]
    %v2514 = vld [vmem:[%s9 + $0x184] sm:$0xff]
    %v2515 = vld [vmem:[%s9 + $0x18c] sm:$0xf]
    %v2516 = vld [vmem:[%s9 + $0x190] sm:$0xff]
    %v2517 = vld [vmem:[%s9 + $0x198] sm:$0xff]
    %v2518 = vld [vmem:[%s9 + $0x1a0] sm:$0xf]
    %v2519 = vld [vmem:[%s9 + $0x1a4] sm:$0xff]
    %v2520 = vld [vmem:[%s9 + $0x1ac] sm:$0xff]
    %v2521 = vld [vmem:[%s9 + $0x1b4] sm:$0xf]
    %v2522 = vld [vmem:[%s9 + $0x1b8] sm:$0xff]
    %v2523 = vld [vmem:[%s9 + $0x1c0] sm:$0xff]
    %v2524 = vld [vmem:[%s9 + $0x1c8] sm:$0xf]
    %v2525 = vld [vmem:[%s9 + $0x1cc] sm:$0xff]
    %v2526 = vld [vmem:[%s9 + $0x1d4] sm:$0xff]
    %v2527 = vld [vmem:[%s9 + $0x1dc] sm:$0xf]
    %v2528 = vld [vmem:[%s9 + $0x1e0] sm:$0xff]
    %v2529 = vld [vmem:[%s9 + $0x1e8] sm:$0xff]
    %v2530 = vld [vmem:[%s9 + $0x1f0] sm:$0xf]
    %v2531 = vld [vmem:[%s9 + $0x1f4] sm:$0xff]
    %v2532 = vld [vmem:[%s9 + $0x1fc] sm:$0xff]
    %v2533 = vld [vmem:[%s9 + $0x204] sm:$0xf]
    %v2534 = vld [vmem:[%s9 + $0x208] sm:$0xff]
    %v2535 = vld [vmem:[%s9 + $0x210] sm:$0xff]
    %v2536 = vld [vmem:[%s9 + $0x218] sm:$0xf]
    %v2537 = vld [vmem:[%s9 + $0x21c] sm:$0xff]
    %v2538 = vld [vmem:[%s9 + $0x224] sm:$0xff]
    %v2539 = vld [vmem:[%s9 + $0x22c] sm:$0xf]
    %v2540 = vld [vmem:[%s9 + $0x230] sm:$0xff]
    %v2541 = vld [vmem:[%s9 + $0x238] sm:$0xff]
    %v2542 = vld [vmem:[%s9 + $0x240] sm:$0xf]
    %v2543 = vld [vmem:[%s9 + $0x244] sm:$0xff]
    %v2544 = vld [vmem:[%s9 + $0x24c] sm:$0xff]
    %v2545 = vld [vmem:[%s9 + $0x254] sm:$0xf]
    %v2546 = vld [vmem:[%s9 + $0x258] sm:$0xff]
    %v2547 = vld [vmem:[%s9 + $0x260] sm:$0xff]
    %v2548 = vld [vmem:[%s9 + $0x268] sm:$0xf]
    %v2549 = vld [vmem:[%s9 + $0x26c] sm:$0xff]
    %v2550 = vld [vmem:[%s9 + $0x274] sm:$0xff]
    %v2551 = vld [vmem:[%s9 + $0x27c] sm:$0xf]
    %v2552 = vld [vmem:[%s9 + $0x280] sm:$0xff]
    %v2553 = vld [vmem:[%s9 + $0x288] sm:$0xff]
    %v2554 = vld [vmem:[%s9 + $0x290] sm:$0xf]
    %v2555 = vld [vmem:[%s9 + $0x294] sm:$0xff]
    %v2556 = vld [vmem:[%s9 + $0x29c] sm:$0xff]
    %v2557 = vld [vmem:[%s9 + $0x2a4] sm:$0xf]
    %v2558 = vld [vmem:[%s9 + $0x2a8] sm:$0xff]
    %v2559 = vld [vmem:[%s9 + $0x2b0] sm:$0xff]
    %v2560 = vld [vmem:[%s9 + $0x2b8] sm:$0xf]
    %v2561 = vld [vmem:[%s9 + $0x2bc] sm:$0xff]
    %v2562 = vld [vmem:[%s9 + $0x2c4] sm:$0xff]
    %v2563 = vld [vmem:[%s9 + $0x2cc] sm:$0xf]
    %v2564 = vld [vmem:[%s9 + $0x2d0] sm:$0xff]
    %v2565 = vld [vmem:[%s9 + $0x2d8] sm:$0xff]
    %v2566 = vld [vmem:[%s9 + $0x2e0] sm:$0xf]
    %v2567 = vld [vmem:[%s9 + $0x2e4] sm:$0xff]
    %v2568 = vld [vmem:[%s9 + $0x2ec] sm:$0xff]
    %v2569 = vld [vmem:[%s9 + $0x2f4] sm:$0xf]
    %v2570 = vld [vmem:[%s9 + $0x2f8] sm:$0xff]
    %v2571 = vld [vmem:[%s9 + $0x300] sm:$0xff]
    %v2572 = vld [vmem:[%s9 + $0x308] sm:$0xf]
    %v2573 = vld [vmem:[%s9 + $0x30c] sm:$0xff]
    %v2574 = vld [vmem:[%s9 + $0x314] sm:$0xff]
    %v2575 = vld [vmem:[%s9 + $0x31c] sm:$0xf]
    %v2576 = vld [vmem:[%s9 + $0x320] sm:$0xff]
    %v2577 = vld [vmem:[%s9 + $0x328] sm:$0xff]
    %v2578 = vld [vmem:[%s9 + $0x330] sm:$0xf]
    %v2579 = vld [vmem:[%s9 + $0x334] sm:$0xff]
    %v2580 = vld [vmem:[%s9 + $0x33c] sm:$0xff]
    %v2581 = vld [vmem:[%s9 + $0x344] sm:$0xf]
    %v2582 = vld [vmem:[%s9 + $0x348] sm:$0xff]
    %v2583 = vld [vmem:[%s9 + $0x350] sm:$0xff]
    %v2584 = vld [vmem:[%s9 + $0x358] sm:$0xf]
    %v2585 = vld [vmem:[%s9 + $0x35c] sm:$0xff]
    %v2586 = vld [vmem:[%s9 + $0x364] sm:$0xff]
    %v2587 = vld [vmem:[%s9 + $0x36c] sm:$0xf]
    %v2588 = vld [vmem:[%s9 + $0x370] sm:$0xff]
    %v2589 = vld [vmem:[%s9 + $0x378] sm:$0xff]
    %v2590 = vld [vmem:[%s9 + $0x380] sm:$0xf]
    %v2591 = vld [vmem:[%s9 + $0x384] sm:$0xff]
    %v2592 = vld [vmem:[%s9 + $0x38c] sm:$0xff]
    %v2593 = vld [vmem:[%s9 + $0x394] sm:$0xf]
    %v2594 = vld [vmem:[%s9 + $0x398] sm:$0xff]
    %v2595 = vld [vmem:[%s9 + $0x3a0] sm:$0xff]
    %v2596 = vld [vmem:[%s9 + $0x3a8] sm:$0xf]
    %v2597 = vld [vmem:[%s9 + $0x3ac] sm:$0xff]
    %v2598 = vld [vmem:[%s9 + $0x3b4] sm:$0xff]
    %v2599 = vld [vmem:[%s9 + $0x3bc] sm:$0xf]
    %v2600 = vld [vmem:[%s9 + $0x3c0] sm:$0xff]
    %v2601 = vld [vmem:[%s9 + $0x3c8] sm:$0xff]
    %v2602 = vld [vmem:[%s9 + $0x3d0] sm:$0xf]
    %v2603 = vld [vmem:[%s9 + $0x3d4] sm:$0xff]
    %v2604 = vld [vmem:[%s9 + $0x3dc] sm:$0xff]
    %v2605 = vld [vmem:[%s9 + $0x3e4] sm:$0xf]
    %v2606 = vld [vmem:[%s9 + $0x3e8] sm:$0xff]
    %v2607 = vld [vmem:[%s9 + $0x3f0] sm:$0xff]
    %v2608 = vld [vmem:[%s9 + $0x3f8] sm:$0xf]
    %v2609 = vld [vmem:[%s9 + $0x3fc] sm:$0xff]
    %v2610 = vld [vmem:[%s9 + $0x404] sm:$0xff]
    %v2611 = vld [vmem:[%s9 + $0x40c] sm:$0xf]
    %v2612 = vld [vmem:[%s9 + $0x410] sm:$0xff]
    %v2613 = vld [vmem:[%s9 + $0x418] sm:$0xff]
    %v2614 = vld [vmem:[%s9 + $0x420] sm:$0xf]
    %v2615 = vld [vmem:[%s9 + $0x424] sm:$0xff]
    %v2616 = vld [vmem:[%s9 + $0x42c] sm:$0xff]
    %v2617 = vld [vmem:[%s9 + $0x434] sm:$0xf]
    %v2618 = vld [vmem:[%s9 + $0x438] sm:$0xff]
    %v2619 = vld [vmem:[%s9 + $0x440] sm:$0xff]
    %v2620 = vld [vmem:[%s9 + $0x448] sm:$0xf]
    %v2621 = vld [vmem:[%s9 + $0x44c] sm:$0xff]
    %v2622 = vld [vmem:[%s9 + $0x454] sm:$0xff]
    %v2623 = vld [vmem:[%s9 + $0x45c] sm:$0xf]
    %v2624 = vld [vmem:[%s9 + $0x460] sm:$0xff]
    %v2625 = vld [vmem:[%s9 + $0x468] sm:$0xff]
    %v2626 = vld [vmem:[%s9 + $0x470] sm:$0xf]
    %v2627 = vld [vmem:[%s9 + $0x474] sm:$0xff]
    %v2628 = vld [vmem:[%s9 + $0x47c] sm:$0xff]
    %v2629 = vld [vmem:[%s9 + $0x484] sm:$0xf]
    %v2630 = vld [vmem:[%s9 + $0x488] sm:$0xff]
    %v2631 = vld [vmem:[%s9 + $0x490] sm:$0xff]
    %v2632 = vld [vmem:[%s9 + $0x498] sm:$0xf]
    %v2633 = vld [vmem:[%s9 + $0x49c] sm:$0xff]
    %v2634 = vld [vmem:[%s9 + $0x4a4] sm:$0xff]
    %v2635 = vld [vmem:[%s9 + $0x4ac] sm:$0xf]
    %v2636 = vld [vmem:[%s9 + $0x4b0] sm:$0xff]
    %v2637 = vld [vmem:[%s9 + $0x4b8] sm:$0xff]
    %v2638 = vld [vmem:[%s9 + $0x4c0] sm:$0xf]
    %v2639 = vld [vmem:[%s9 + $0x4c4] sm:$0xff]
    %v2640 = vld [vmem:[%s9 + $0x4cc] sm:$0xff]
    %v2641 = vld [vmem:[%s9 + $0x4d4] sm:$0xf]
    %v2642 = vld [vmem:[%s9 + $0x4d8] sm:$0xff]
    %v2643 = vld [vmem:[%s9 + $0x4e0] sm:$0xff]
    %v2644 = vld [vmem:[%s9 + $0x4e8] sm:$0xf]
    %v2645 = vld [vmem:[%s9 + $0x4ec] sm:$0xff]
    %v2646 = vld [vmem:[%s9 + $0x4f4] sm:$0xff]
    %v2647 = vld [vmem:[%s9 + $0x4fc] sm:$0xf]
    %v2840 = vunpack.c.l.b16 %v2456
    %v2841 = vunpack.c.h.b16 %v2456
    %v2842 = vunpack.c.l.b16 %v2457
    %v2843 = vunpack.c.h.b16 %v2457
    %v2844 = vunpack.c.l.b16 %v2458
    %v2845 = vunpack.c.l.b16 %v2459
    %v2846 = vunpack.c.h.b16 %v2459
    %v2847 = vunpack.c.l.b16 %v2460
    %v2848 = vunpack.c.h.b16 %v2460
    %v2849 = vunpack.c.l.b16 %v2461
    %v2850 = vunpack.c.l.b16 %v2462
    %v2851 = vunpack.c.h.b16 %v2462
    %v2852 = vunpack.c.l.b16 %v2463
    %v2853 = vunpack.c.h.b16 %v2463
    %v2854 = vunpack.c.l.b16 %v2464
    %v2855 = vunpack.c.l.b16 %v2465
    %v2856 = vunpack.c.h.b16 %v2465
    %v2857 = vunpack.c.l.b16 %v2466
    %v2858 = vunpack.c.h.b16 %v2466
    %v2859 = vunpack.c.l.b16 %v2467
    %v2860 = vunpack.c.l.b16 %v2468
    %v2861 = vunpack.c.h.b16 %v2468
    %v2862 = vunpack.c.l.b16 %v2469
    %v2863 = vunpack.c.h.b16 %v2469
    %v2864 = vunpack.c.l.b16 %v2470
    %v2865 = vunpack.c.l.b16 %v2471
    %v2866 = vunpack.c.h.b16 %v2471
    %v2867 = vunpack.c.l.b16 %v2472
    %v2868 = vunpack.c.h.b16 %v2472
    %v2869 = vunpack.c.l.b16 %v2473
    %v2870 = vunpack.c.l.b16 %v2474
    %v2871 = vunpack.c.h.b16 %v2474
    %v2872 = vunpack.c.l.b16 %v2475
    %v2873 = vunpack.c.h.b16 %v2475
    %v2874 = vunpack.c.l.b16 %v2476
    %v2875 = vunpack.c.l.b16 %v2477
    %v2876 = vunpack.c.h.b16 %v2477
    %v2877 = vunpack.c.l.b16 %v2478
    %v2878 = vunpack.c.h.b16 %v2478
    %v2879 = vunpack.c.l.b16 %v2479
    %v2880 = vunpack.c.l.b16 %v2480
    %v2881 = vunpack.c.h.b16 %v2480
    %v2882 = vunpack.c.l.b16 %v2481
    %v2883 = vunpack.c.h.b16 %v2481
    %v2884 = vunpack.c.l.b16 %v2482
    %v2885 = vunpack.c.l.b16 %v2483
    %v2886 = vunpack.c.h.b16 %v2483
    %v2887 = vunpack.c.l.b16 %v2484
    %v2888 = vunpack.c.h.b16 %v2484
    %v2889 = vunpack.c.l.b16 %v2485
    %v2890 = vunpack.c.l.b16 %v2486
    %v2891 = vunpack.c.h.b16 %v2486
    %v2892 = vunpack.c.l.b16 %v2487
    %v2893 = vunpack.c.h.b16 %v2487
    %v2894 = vunpack.c.l.b16 %v2488
    %v2895 = vunpack.c.l.b16 %v2489
    %v2896 = vunpack.c.h.b16 %v2489
    %v2897 = vunpack.c.l.b16 %v2490
    %v2898 = vunpack.c.h.b16 %v2490
    %v2899 = vunpack.c.l.b16 %v2491
    %v2900 = vunpack.c.l.b16 %v2492
    %v2901 = vunpack.c.h.b16 %v2492
    %v2902 = vunpack.c.l.b16 %v2493
    %v2903 = vunpack.c.h.b16 %v2493
    %v2904 = vunpack.c.l.b16 %v2494
    %v2905 = vunpack.c.l.b16 %v2495
    %v2906 = vunpack.c.h.b16 %v2495
    %v2907 = vunpack.c.l.b16 %v2496
    %v2908 = vunpack.c.h.b16 %v2496
    %v2909 = vunpack.c.l.b16 %v2497
    %v2910 = vunpack.c.l.b16 %v2498
    %v2911 = vunpack.c.h.b16 %v2498
    %v2912 = vunpack.c.l.b16 %v2499
    %v2913 = vunpack.c.h.b16 %v2499
    %v2914 = vunpack.c.l.b16 %v2500
    %v2915 = vunpack.c.l.b16 %v2501
    %v2916 = vunpack.c.h.b16 %v2501
    %v2917 = vunpack.c.l.b16 %v2502
    %v2918 = vunpack.c.h.b16 %v2502
    %v2919 = vunpack.c.l.b16 %v2503
    %v2920 = vunpack.c.l.b16 %v2504
    %v2921 = vunpack.c.h.b16 %v2504
    %v2922 = vunpack.c.l.b16 %v2505
    %v2923 = vunpack.c.h.b16 %v2505
    %v2924 = vunpack.c.l.b16 %v2506
    %v2925 = vunpack.c.l.b16 %v2507
    %v2926 = vunpack.c.h.b16 %v2507
    %v2927 = vunpack.c.l.b16 %v2508
    %v2928 = vunpack.c.h.b16 %v2508
    %v2929 = vunpack.c.l.b16 %v2509
    %v2930 = vunpack.c.l.b16 %v2510
    %v2931 = vunpack.c.h.b16 %v2510
    %v2932 = vunpack.c.l.b16 %v2511
    %v2933 = vunpack.c.h.b16 %v2511
    %v2934 = vunpack.c.l.b16 %v2512
    %v2935 = vunpack.c.l.b16 %v2513
    %v2936 = vunpack.c.h.b16 %v2513
    %v2937 = vunpack.c.l.b16 %v2514
    %v2938 = vunpack.c.h.b16 %v2514
    %v2939 = vunpack.c.l.b16 %v2515
    %v2940 = vunpack.c.l.b16 %v2516
    %v2941 = vunpack.c.h.b16 %v2516
    %v2942 = vunpack.c.l.b16 %v2517
    %v2943 = vunpack.c.h.b16 %v2517
    %v2944 = vunpack.c.l.b16 %v2518
    %v2945 = vunpack.c.l.b16 %v2519
    %v2946 = vunpack.c.h.b16 %v2519
    %v2947 = vunpack.c.l.b16 %v2520
    %v2948 = vunpack.c.h.b16 %v2520
    %v2949 = vunpack.c.l.b16 %v2521
    %v2950 = vunpack.c.l.b16 %v2522
    %v2951 = vunpack.c.h.b16 %v2522
    %v2952 = vunpack.c.l.b16 %v2523
    %v2953 = vunpack.c.h.b16 %v2523
    %v2954 = vunpack.c.l.b16 %v2524
    %v2955 = vunpack.c.l.b16 %v2525
    %v2956 = vunpack.c.h.b16 %v2525
    %v2957 = vunpack.c.l.b16 %v2526
    %v2958 = vunpack.c.h.b16 %v2526
    %v2959 = vunpack.c.l.b16 %v2527
    %v2960 = vunpack.c.l.b16 %v2528
    %v2961 = vunpack.c.h.b16 %v2528
    %v2962 = vunpack.c.l.b16 %v2529
    %v2963 = vunpack.c.h.b16 %v2529
    %v2964 = vunpack.c.l.b16 %v2530
    %v2965 = vunpack.c.l.b16 %v2531
    %v2966 = vunpack.c.h.b16 %v2531
    %v2967 = vunpack.c.l.b16 %v2532
    %v2968 = vunpack.c.h.b16 %v2532
    %v2969 = vunpack.c.l.b16 %v2533
    %v2970 = vunpack.c.l.b16 %v2534
    %v2971 = vunpack.c.h.b16 %v2534
    %v2972 = vunpack.c.l.b16 %v2535
    %v2973 = vunpack.c.h.b16 %v2535
    %v2974 = vunpack.c.l.b16 %v2536
    %v2975 = vunpack.c.l.b16 %v2537
    %v2976 = vunpack.c.h.b16 %v2537
    %v2977 = vunpack.c.l.b16 %v2538
    %v2978 = vunpack.c.h.b16 %v2538
    %v2979 = vunpack.c.l.b16 %v2539
    %v2980 = vunpack.c.l.b16 %v2540
    %v2981 = vunpack.c.h.b16 %v2540
    %v2982 = vunpack.c.l.b16 %v2541
    %v2983 = vunpack.c.h.b16 %v2541
    %v2984 = vunpack.c.l.b16 %v2542
    %v2985 = vunpack.c.l.b16 %v2543
    %v2986 = vunpack.c.h.b16 %v2543
    %v2987 = vunpack.c.l.b16 %v2544
    %v2988 = vunpack.c.h.b16 %v2544
    %v2989 = vunpack.c.l.b16 %v2545
    %v2990 = vunpack.c.l.b16 %v2546
    %v2991 = vunpack.c.h.b16 %v2546
    %v2992 = vunpack.c.l.b16 %v2547
    %v2993 = vunpack.c.h.b16 %v2547
    %v2994 = vunpack.c.l.b16 %v2548
    %v2995 = vunpack.c.l.b16 %v2549
    %v2996 = vunpack.c.h.b16 %v2549
    %v2997 = vunpack.c.l.b16 %v2550
    %v2998 = vunpack.c.h.b16 %v2550
    %v2999 = vunpack.c.l.b16 %v2551
    %v3000 = vunpack.c.l.b16 %v2552
    %v3001 = vunpack.c.h.b16 %v2552
    %v3002 = vunpack.c.l.b16 %v2553
    %v3003 = vunpack.c.h.b16 %v2553
    %v3004 = vunpack.c.l.b16 %v2554
    %v3005 = vunpack.c.l.b16 %v2555
    %v3006 = vunpack.c.h.b16 %v2555
    %v3007 = vunpack.c.l.b16 %v2556
    %v3008 = vunpack.c.h.b16 %v2556
    %v3009 = vunpack.c.l.b16 %v2557
    %v3010 = vunpack.c.l.b16 %v2558
    %v3011 = vunpack.c.h.b16 %v2558
    %v3012 = vunpack.c.l.b16 %v2559
    %v3013 = vunpack.c.h.b16 %v2559
    %v3014 = vunpack.c.l.b16 %v2560
    %v3015 = vunpack.c.l.b16 %v2561
    %v3016 = vunpack.c.h.b16 %v2561
    %v3017 = vunpack.c.l.b16 %v2562
    %v3018 = vunpack.c.h.b16 %v2562
    %v3019 = vunpack.c.l.b16 %v2563
    %v3020 = vunpack.c.l.b16 %v2564
    %v3021 = vunpack.c.h.b16 %v2564
    %v3022 = vunpack.c.l.b16 %v2565
    %v3023 = vunpack.c.h.b16 %v2565
    %v3024 = vunpack.c.l.b16 %v2566
    %v3025 = vunpack.c.l.b16 %v2567
    %v3026 = vunpack.c.h.b16 %v2567
    %v3027 = vunpack.c.l.b16 %v2568
    %v3028 = vunpack.c.h.b16 %v2568
    %v3029 = vunpack.c.l.b16 %v2569
    %v3030 = vunpack.c.l.b16 %v2570
    %v3031 = vunpack.c.h.b16 %v2570
    %v3032 = vunpack.c.l.b16 %v2571
    %v3033 = vunpack.c.h.b16 %v2571
    %v3034 = vunpack.c.l.b16 %v2572
    %v3035 = vunpack.c.l.b16 %v2573
    %v3036 = vunpack.c.h.b16 %v2573
    %v3037 = vunpack.c.l.b16 %v2574
    %v3038 = vunpack.c.h.b16 %v2574
    %v3039 = vunpack.c.l.b16 %v2575
    %v3040 = vunpack.c.l.b16 %v2576
    %v3041 = vunpack.c.h.b16 %v2576
    %v3042 = vunpack.c.l.b16 %v2577
    %v3043 = vunpack.c.h.b16 %v2577
    %v3044 = vunpack.c.l.b16 %v2578
    %v3045 = vunpack.c.l.b16 %v2579
    %v3046 = vunpack.c.h.b16 %v2579
    %v3047 = vunpack.c.l.b16 %v2580
    %v3048 = vunpack.c.h.b16 %v2580
    %v3049 = vunpack.c.l.b16 %v2581
    %v3050 = vunpack.c.l.b16 %v2582
    %v3051 = vunpack.c.h.b16 %v2582
    %v3052 = vunpack.c.l.b16 %v2583
    %v3053 = vunpack.c.h.b16 %v2583
    %v3054 = vunpack.c.l.b16 %v2584
    %v3055 = vunpack.c.l.b16 %v2585
    %v3056 = vunpack.c.h.b16 %v2585
    %v3057 = vunpack.c.l.b16 %v2586
    %v3058 = vunpack.c.h.b16 %v2586
    %v3059 = vunpack.c.l.b16 %v2587
    %v3060 = vunpack.c.l.b16 %v2588
    %v3061 = vunpack.c.h.b16 %v2588
    %v3062 = vunpack.c.l.b16 %v2589
    %v3063 = vunpack.c.h.b16 %v2589
    %v3064 = vunpack.c.l.b16 %v2590
    %v3065 = vunpack.c.l.b16 %v2591
    %v3066 = vunpack.c.h.b16 %v2591
    %v3067 = vunpack.c.l.b16 %v2592
    %v3068 = vunpack.c.h.b16 %v2592
    %v3069 = vunpack.c.l.b16 %v2593
    %v3070 = vunpack.c.l.b16 %v2594
    %v3071 = vunpack.c.h.b16 %v2594
    %v3072 = vunpack.c.l.b16 %v2595
    %v3073 = vunpack.c.h.b16 %v2595
    %v3074 = vunpack.c.l.b16 %v2596
    %v3075 = vunpack.c.l.b16 %v2597
    %v3076 = vunpack.c.h.b16 %v2597
    %v3077 = vunpack.c.l.b16 %v2598
    %v3078 = vunpack.c.h.b16 %v2598
    %v3079 = vunpack.c.l.b16 %v2599
    %v3080 = vunpack.c.l.b16 %v2600
    %v3081 = vunpack.c.h.b16 %v2600
    %v3082 = vunpack.c.l.b16 %v2601
    %v3083 = vunpack.c.h.b16 %v2601
    %v3084 = vunpack.c.l.b16 %v2602
    %v3085 = vunpack.c.l.b16 %v2603
    %v3086 = vunpack.c.h.b16 %v2603
    %v3087 = vunpack.c.l.b16 %v2604
    %v3088 = vunpack.c.h.b16 %v2604
    %v3089 = vunpack.c.l.b16 %v2605
    %v3090 = vunpack.c.l.b16 %v2606
    %v3091 = vunpack.c.h.b16 %v2606
    %v3092 = vunpack.c.l.b16 %v2607
    %v3093 = vunpack.c.h.b16 %v2607
    %v3094 = vunpack.c.l.b16 %v2608
    %v3095 = vunpack.c.l.b16 %v2609
    %v3096 = vunpack.c.h.b16 %v2609
    %v3097 = vunpack.c.l.b16 %v2610
    %v3098 = vunpack.c.h.b16 %v2610
    %v3099 = vunpack.c.l.b16 %v2611
    %v3100 = vunpack.c.l.b16 %v2612
    %v3101 = vunpack.c.h.b16 %v2612
    %v3102 = vunpack.c.l.b16 %v2613
    %v3103 = vunpack.c.h.b16 %v2613
    %v3104 = vunpack.c.l.b16 %v2614
    %v3105 = vunpack.c.l.b16 %v2615
    %v3106 = vunpack.c.h.b16 %v2615
    %v3107 = vunpack.c.l.b16 %v2616
    %v3108 = vunpack.c.h.b16 %v2616
    %v3109 = vunpack.c.l.b16 %v2617
    %v3110 = vunpack.c.l.b16 %v2618
    %v3111 = vunpack.c.h.b16 %v2618
    %v3112 = vunpack.c.l.b16 %v2619
    %v3113 = vunpack.c.h.b16 %v2619
    %v3114 = vunpack.c.l.b16 %v2620
    %v3115 = vunpack.c.l.b16 %v2621
    %v3116 = vunpack.c.h.b16 %v2621
    %v3117 = vunpack.c.l.b16 %v2622
    %v3118 = vunpack.c.h.b16 %v2622
    %v3119 = vunpack.c.l.b16 %v2623
    %v3120 = vunpack.c.l.b16 %v2624
    %v3121 = vunpack.c.h.b16 %v2624
    %v3122 = vunpack.c.l.b16 %v2625
    %v3123 = vunpack.c.h.b16 %v2625
    %v3124 = vunpack.c.l.b16 %v2626
    %v3125 = vunpack.c.l.b16 %v2627
    %v3126 = vunpack.c.h.b16 %v2627
    %v3127 = vunpack.c.l.b16 %v2628
    %v3128 = vunpack.c.h.b16 %v2628
    %v3129 = vunpack.c.l.b16 %v2629
    %v3130 = vunpack.c.l.b16 %v2630
    %v3131 = vunpack.c.h.b16 %v2630
    %v3132 = vunpack.c.l.b16 %v2631
    %v3133 = vunpack.c.h.b16 %v2631
    %v3134 = vunpack.c.l.b16 %v2632
    %v3135 = vunpack.c.l.b16 %v2633
    %v3136 = vunpack.c.h.b16 %v2633
    %v3137 = vunpack.c.l.b16 %v2634
    %v3138 = vunpack.c.h.b16 %v2634
    %v3139 = vunpack.c.l.b16 %v2635
    %v3140 = vunpack.c.l.b16 %v2636
    %v3141 = vunpack.c.h.b16 %v2636
    %v3142 = vunpack.c.l.b16 %v2637
    %v3143 = vunpack.c.h.b16 %v2637
    %v3144 = vunpack.c.l.b16 %v2638
    %v3145 = vunpack.c.l.b16 %v2639
    %v3146 = vunpack.c.h.b16 %v2639
    %v3147 = vunpack.c.l.b16 %v2640
    %v3148 = vunpack.c.h.b16 %v2640
    %v3149 = vunpack.c.l.b16 %v2641
    %v3150 = vunpack.c.l.b16 %v2642
    %v3151 = vunpack.c.h.b16 %v2642
    %v3152 = vunpack.c.l.b16 %v2643
    %v3153 = vunpack.c.h.b16 %v2643
    %v3154 = vunpack.c.l.b16 %v2644
    %v3155 = vunpack.c.l.b16 %v2645
    %v3156 = vunpack.c.h.b16 %v2645
    %v3157 = vunpack.c.l.b16 %v2646
    %v3158 = vunpack.c.h.b16 %v2646
    %v3159 = vunpack.c.l.b16 %v2647
    %v3160 = vpack.c.b16 %v2845, %v2840
    %v3161 = vpack.c.b16 %v2846, %v2841
    %v3162 = vpack.c.b16 %v2847, %v2842
    %v3163 = vpack.c.b16 %v2848, %v2843
    %v3164 = vpack.c.b16 %v2849, %v2844
    %v3165 = vpack.c.b16 %v2855, %v2850
    %v3166 = vpack.c.b16 %v2856, %v2851
    %v3167 = vpack.c.b16 %v2857, %v2852
    %v3168 = vpack.c.b16 %v2858, %v2853
    %v3169 = vpack.c.b16 %v2859, %v2854
    %v3170 = vpack.c.b16 %v2865, %v2860
    %v3171 = vpack.c.b16 %v2866, %v2861
    %v3172 = vpack.c.b16 %v2867, %v2862
    %v3173 = vpack.c.b16 %v2868, %v2863
    %v3174 = vpack.c.b16 %v2869, %v2864
    %v3175 = vpack.c.b16 %v2875, %v2870
    %v3176 = vpack.c.b16 %v2876, %v2871
    %v3177 = vpack.c.b16 %v2877, %v2872
    %v3178 = vpack.c.b16 %v2878, %v2873
    %v3179 = vpack.c.b16 %v2879, %v2874
    %v3180 = vpack.c.b16 %v2885, %v2880
    %v3181 = vpack.c.b16 %v2886, %v2881
    %v3182 = vpack.c.b16 %v2887, %v2882
    %v3183 = vpack.c.b16 %v2888, %v2883
    %v3184 = vpack.c.b16 %v2889, %v2884
    %v3185 = vpack.c.b16 %v2895, %v2890
    %v3186 = vpack.c.b16 %v2896, %v2891
    %v3187 = vpack.c.b16 %v2897, %v2892
    %v3188 = vpack.c.b16 %v2898, %v2893
    %v3189 = vpack.c.b16 %v2899, %v2894
    %v3190 = vpack.c.b16 %v2905, %v2900
    %v3191 = vpack.c.b16 %v2906, %v2901
    %v3192 = vpack.c.b16 %v2907, %v2902
    %v3193 = vpack.c.b16 %v2908, %v2903
    %v3194 = vpack.c.b16 %v2909, %v2904
    %v3195 = vpack.c.b16 %v2915, %v2910
    %v3196 = vpack.c.b16 %v2916, %v2911
    %v3197 = vpack.c.b16 %v2917, %v2912
    %v3198 = vpack.c.b16 %v2918, %v2913
    %v3199 = vpack.c.b16 %v2919, %v2914
    %v3200 = vpack.c.b16 %v2925, %v2920
    %v3201 = vpack.c.b16 %v2926, %v2921
    %v3202 = vpack.c.b16 %v2927, %v2922
    %v3203 = vpack.c.b16 %v2928, %v2923
    %v3204 = vpack.c.b16 %v2929, %v2924
    %v3205 = vpack.c.b16 %v2935, %v2930
    %v3206 = vpack.c.b16 %v2936, %v2931
    %v3207 = vpack.c.b16 %v2937, %v2932
    %v3208 = vpack.c.b16 %v2938, %v2933
    %v3209 = vpack.c.b16 %v2939, %v2934
    %v3210 = vpack.c.b16 %v2945, %v2940
    %v3211 = vpack.c.b16 %v2946, %v2941
    %v3212 = vpack.c.b16 %v2947, %v2942
    %v3213 = vpack.c.b16 %v2948, %v2943
    %v3214 = vpack.c.b16 %v2949, %v2944
    %v3215 = vpack.c.b16 %v2955, %v2950
    %v3216 = vpack.c.b16 %v2956, %v2951
    %v3217 = vpack.c.b16 %v2957, %v2952
    %v3218 = vpack.c.b16 %v2958, %v2953
    %v3219 = vpack.c.b16 %v2959, %v2954
    %v3220 = vpack.c.b16 %v2965, %v2960
    %v3221 = vpack.c.b16 %v2966, %v2961
    %v3222 = vpack.c.b16 %v2967, %v2962
    %v3223 = vpack.c.b16 %v2968, %v2963
    %v3224 = vpack.c.b16 %v2969, %v2964
    %v3225 = vpack.c.b16 %v2975, %v2970
    %v3226 = vpack.c.b16 %v2976, %v2971
    %v3227 = vpack.c.b16 %v2977, %v2972
    %v3228 = vpack.c.b16 %v2978, %v2973
    %v3229 = vpack.c.b16 %v2979, %v2974
    %v3230 = vpack.c.b16 %v2985, %v2980
    %v3231 = vpack.c.b16 %v2986, %v2981
    %v3232 = vpack.c.b16 %v2987, %v2982
    %v3233 = vpack.c.b16 %v2988, %v2983
    %v3234 = vpack.c.b16 %v2989, %v2984
    %v3235 = vpack.c.b16 %v2995, %v2990
    %v3236 = vpack.c.b16 %v2996, %v2991
    %v3237 = vpack.c.b16 %v2997, %v2992
    %v3238 = vpack.c.b16 %v2998, %v2993
    %v3239 = vpack.c.b16 %v2999, %v2994
    %v3240 = vpack.c.b16 %v3005, %v3000
    %v3241 = vpack.c.b16 %v3006, %v3001
    %v3242 = vpack.c.b16 %v3007, %v3002
    %v3243 = vpack.c.b16 %v3008, %v3003
    %v3244 = vpack.c.b16 %v3009, %v3004
    %v3245 = vpack.c.b16 %v3015, %v3010
    %v3246 = vpack.c.b16 %v3016, %v3011
    %v3247 = vpack.c.b16 %v3017, %v3012
    %v3248 = vpack.c.b16 %v3018, %v3013
    %v3249 = vpack.c.b16 %v3019, %v3014
    %v3250 = vpack.c.b16 %v3025, %v3020
    %v3251 = vpack.c.b16 %v3026, %v3021
    %v3252 = vpack.c.b16 %v3027, %v3022
    %v3253 = vpack.c.b16 %v3028, %v3023
    %v3254 = vpack.c.b16 %v3029, %v3024
    %v3255 = vpack.c.b16 %v3035, %v3030
    %v3256 = vpack.c.b16 %v3036, %v3031
    %v3257 = vpack.c.b16 %v3037, %v3032
    %v3258 = vpack.c.b16 %v3038, %v3033
    %v3259 = vpack.c.b16 %v3039, %v3034
    %v3260 = vpack.c.b16 %v3045, %v3040
    %v3261 = vpack.c.b16 %v3046, %v3041
    %v3262 = vpack.c.b16 %v3047, %v3042
    %v3263 = vpack.c.b16 %v3048, %v3043
    %v3264 = vpack.c.b16 %v3049, %v3044
    %v3265 = vpack.c.b16 %v3055, %v3050
    %v3266 = vpack.c.b16 %v3056, %v3051
    %v3267 = vpack.c.b16 %v3057, %v3052
    %v3268 = vpack.c.b16 %v3058, %v3053
    %v3269 = vpack.c.b16 %v3059, %v3054
    %v3270 = vpack.c.b16 %v3065, %v3060
    %v3271 = vpack.c.b16 %v3066, %v3061
    %v3272 = vpack.c.b16 %v3067, %v3062
    %v3273 = vpack.c.b16 %v3068, %v3063
    %v3274 = vpack.c.b16 %v3069, %v3064
    %v3275 = vpack.c.b16 %v3075, %v3070
    %v3276 = vpack.c.b16 %v3076, %v3071
    %v3277 = vpack.c.b16 %v3077, %v3072
    %v3278 = vpack.c.b16 %v3078, %v3073
    %v3279 = vpack.c.b16 %v3079, %v3074
    %v3280 = vpack.c.b16 %v3085, %v3080
    %v3281 = vpack.c.b16 %v3086, %v3081
    %v3282 = vpack.c.b16 %v3087, %v3082
    %v3283 = vpack.c.b16 %v3088, %v3083
    %v3284 = vpack.c.b16 %v3089, %v3084
    %v3285 = vpack.c.b16 %v3095, %v3090
    %v3286 = vpack.c.b16 %v3096, %v3091
    %v3287 = vpack.c.b16 %v3097, %v3092
    %v3288 = vpack.c.b16 %v3098, %v3093
    %v3289 = vpack.c.b16 %v3099, %v3094
    %v3290 = vpack.c.b16 %v3105, %v3100
    %v3291 = vpack.c.b16 %v3106, %v3101
    %v3292 = vpack.c.b16 %v3107, %v3102
    %v3293 = vpack.c.b16 %v3108, %v3103
    %v3294 = vpack.c.b16 %v3109, %v3104
    %v3295 = vpack.c.b16 %v3115, %v3110
    %v3296 = vpack.c.b16 %v3116, %v3111
    %v3297 = vpack.c.b16 %v3117, %v3112
    %v3298 = vpack.c.b16 %v3118, %v3113
    %v3299 = vpack.c.b16 %v3119, %v3114
    %v3300 = vpack.c.b16 %v3125, %v3120
    %v3301 = vpack.c.b16 %v3126, %v3121
    %v3302 = vpack.c.b16 %v3127, %v3122
    %v3303 = vpack.c.b16 %v3128, %v3123
    %v3304 = vpack.c.b16 %v3129, %v3124
    %v3305 = vpack.c.b16 %v3135, %v3130
    %v3306 = vpack.c.b16 %v3136, %v3131
    %v3307 = vpack.c.b16 %v3137, %v3132
    %v3308 = vpack.c.b16 %v3138, %v3133
    %v3309 = vpack.c.b16 %v3139, %v3134
    %v3310 = vpack.c.b16 %v3145, %v3140
    %v3311 = vpack.c.b16 %v3146, %v3141
    %v3312 = vpack.c.b16 %v3147, %v3142
    %v3313 = vpack.c.b16 %v3148, %v3143
    %v3314 = vpack.c.b16 %v3149, %v3144
    %v3315 = vpack.c.b16 %v3155, %v3150
    %v3316 = vpack.c.b16 %v3156, %v3151
    %v3317 = vpack.c.b16 %v3157, %v3152
    %v3318 = vpack.c.b16 %v3158, %v3153
    %v3319 = vpack.c.b16 %v3159, %v3154
    %3480 = vmatprep.subr.bf16.mxu0 %v3161
    %3481 = vmatpush1.bf16.msra.mxu0 %v3160
    %3482 = vmatprep.subr.bf16.mxu0 %v3166
    %3483 = vmatpush1.bf16.msra.mxu0 %v3165
    %3484 = vmatprep.subr.bf16.mxu0 %v3171
    %3485 = vmatpush1.bf16.msra.mxu0 %v3170
    %3486 = vmatprep.subr.bf16.mxu0 %v3176
    %3487 = vmatpush1.bf16.msra.mxu0 %v3175
    %3488 = vmatprep.subr.bf16.mxu0 %v3181
    %3489 = vmatpush1.bf16.msra.mxu0 %v3180
    %3490 = vmatprep.subr.bf16.mxu0 %v3186
    %3491 = vmatpush1.bf16.msra.mxu0 %v3185
    %3492 = vmatprep.subr.bf16.mxu0 %v3191
    %3493 = vmatpush1.bf16.msra.mxu0 %v3190
    %3494 = vmatprep.subr.bf16.mxu0 %v3196
    %3495 = vmatpush1.bf16.msra.mxu0 %v3195
    %3496 = vmatprep.subr.bf16.mxu0 %v3201
    %3497 = vmatpush1.bf16.msra.mxu0 %v3200
    %3498 = vmatprep.subr.bf16.mxu0 %v3206
    %3499 = vmatpush1.bf16.msra.mxu0 %v3205
    %3500 = vmatprep.subr.bf16.mxu0 %v3211
    %3501 = vmatpush1.bf16.msra.mxu0 %v3210
    %3502 = vmatprep.subr.bf16.mxu0 %v3216
    %3503 = vmatpush1.bf16.msra.mxu0 %v3215
    %3504 = vmatprep.subr.bf16.mxu0 %v3221
    %3505 = vmatpush1.bf16.msra.mxu0 %v3220
    %3506 = vmatprep.subr.bf16.mxu0 %v3226
    %3507 = vmatpush1.bf16.msra.mxu0 %v3225
    %3508 = vmatprep.subr.bf16.mxu0 %v3231
    %3509 = vmatpush1.bf16.msra.mxu0 %v3230
    %3510 = vmatprep.subr.bf16.mxu0 %v3236
    %3511 = vmatpush1.bf16.msra.mxu0 %v3235
    %3512 = vmatprep.mubr.bf16.mxu0 %v2453
    %3513 = vmatmul.mubr.bf16.gmra.mrb[0].mxu0 %v2452
    %v3514 = vpop.f32.mrb[0].mxu0
    %v3515 = vadd.f32 0.0, %v3514
    %v3516 = vpop.f32.mrb[0].mxu0
    %v3517 = vadd.f32 0.0, %v3516
    %v3518 = vpop.f32.mrb[0].mxu0
    %v3519 = vpop.f32.mrb[0].mxu0
    %3520 = vdwg.mxu0
    %3521 = vmatprep.subr.bf16.mxu0 %v3241
    %3522 = vmatpush1.bf16.msra.mxu0 %v3240
    %3523 = vmatprep.subr.bf16.mxu0 %v3246
    %3524 = vmatpush1.bf16.msra.mxu0 %v3245
    %3525 = vmatprep.subr.bf16.mxu0 %v3251
    %3526 = vmatpush1.bf16.msra.mxu0 %v3250
    %3527 = vmatprep.subr.bf16.mxu0 %v3256
    %3528 = vmatpush1.bf16.msra.mxu0 %v3255
    %3529 = vmatprep.subr.bf16.mxu0 %v3261
    %3530 = vmatpush1.bf16.msra.mxu0 %v3260
    %3531 = vmatprep.subr.bf16.mxu0 %v3266
    %3532 = vmatpush1.bf16.msra.mxu0 %v3265
    %3533 = vmatprep.subr.bf16.mxu0 %v3271
    %3534 = vmatpush1.bf16.msra.mxu0 %v3270
    %3535 = vmatprep.subr.bf16.mxu0 %v3276
    %3536 = vmatpush1.bf16.msra.mxu0 %v3275
    %3537 = vmatprep.subr.bf16.mxu0 %v3281
    %3538 = vmatpush1.bf16.msra.mxu0 %v3280
    %3539 = vmatprep.subr.bf16.mxu0 %v3286
    %3540 = vmatpush1.bf16.msra.mxu0 %v3285
    %3541 = vmatprep.subr.bf16.mxu0 %v3291
    %3542 = vmatpush1.bf16.msra.mxu0 %v3290
    %3543 = vmatprep.subr.bf16.mxu0 %v3296
    %3544 = vmatpush1.bf16.msra.mxu0 %v3295
    %3545 = vmatprep.subr.bf16.mxu0 %v3301
    %3546 = vmatpush1.bf16.msra.mxu0 %v3300
    %3547 = vmatprep.subr.bf16.mxu0 %v3306
    %3548 = vmatpush1.bf16.msra.mxu0 %v3305
    %3549 = vmatprep.subr.bf16.mxu0 %v3311
    %3550 = vmatpush1.bf16.msra.mxu0 %v3310
    %3551 = vmatprep.subr.bf16.mxu0 %v3316
    %3552 = vmatpush1.bf16.msra.mxu0 %v3315
    %3553 = vmatprep.mubr.bf16.mxu0 %v2455
    %3554 = vmatmul.mubr.bf16.gmra.mrb[0].mxu0 %v2454
    %v3555 = vpop.f32.mrb[0].mxu0
    %v3556 = vadd.f32 %v3515, %v3555
    %v3557 = vpop.f32.mrb[0].mxu0
    %v3558 = vadd.f32 %v3517, %v3557
    %v3559 = vpop.f32.mrb[0].mxu0
    %v3560 = vpop.f32.mrb[0].mxu0
    %3561 = vdwg.mxu0
    %3562 = vmatprep.subr.bf16.mxu0 %v3163
    %3563 = vmatpush1.bf16.msra.mxu0 %v3162
    %3564 = vmatprep.subr.bf16.mxu0 %v3168
    %3565 = vmatpush1.bf16.msra.mxu0 %v3167
    %3566 = vmatprep.subr.bf16.mxu0 %v3173
    %3567 = vmatpush1.bf16.msra.mxu0 %v3172
    %3568 = vmatprep.subr.bf16.mxu0 %v3178
    %3569 = vmatpush1.bf16.msra.mxu0 %v3177
    %3570 = vmatprep.subr.bf16.mxu0 %v3183
    %3571 = vmatpush1.bf16.msra.mxu0 %v3182
    %3572 = vmatprep.subr.bf16.mxu0 %v3188
    %3573 = vmatpush1.bf16.msra.mxu0 %v3187
    %3574 = vmatprep.subr.bf16.mxu0 %v3193
    %3575 = vmatpush1.bf16.msra.mxu0 %v3192
    %3576 = vmatprep.subr.bf16.mxu0 %v3198
    %3577 = vmatpush1.bf16.msra.mxu0 %v3197
    %3578 = vmatprep.subr.bf16.mxu0 %v3203
    %3579 = vmatpush1.bf16.msra.mxu0 %v3202
    %3580 = vmatprep.subr.bf16.mxu0 %v3208
    %3581 = vmatpush1.bf16.msra.mxu0 %v3207
    %3582 = vmatprep.subr.bf16.mxu0 %v3213
    %3583 = vmatpush1.bf16.msra.mxu0 %v3212
    %3584 = vmatprep.subr.bf16.mxu0 %v3218
    %3585 = vmatpush1.bf16.msra.mxu0 %v3217
    %3586 = vmatprep.subr.bf16.mxu0 %v3223
    %3587 = vmatpush1.bf16.msra.mxu0 %v3222
    %3588 = vmatprep.subr.bf16.mxu0 %v3228
    %3589 = vmatpush1.bf16.msra.mxu0 %v3227
    %3590 = vmatprep.subr.bf16.mxu0 %v3233
    %3591 = vmatpush1.bf16.msra.mxu0 %v3232
    %3592 = vmatprep.subr.bf16.mxu0 %v3238
    %3593 = vmatpush1.bf16.msra.mxu0 %v3237
    %3594 = vmatprep.mubr.bf16.mxu0 %v2453
    %3595 = vmatmul.mubr.bf16.gmra.mrb[0].mxu0 %v2452
    %v3596 = vpop.f32.mrb[0].mxu0
    %v3597 = vadd.f32 0.0, %v3596
    %v3598 = vpop.f32.mrb[0].mxu0
    %v3599 = vadd.f32 0.0, %v3598
    %v3600 = vpop.f32.mrb[0].mxu0
    %v3601 = vpop.f32.mrb[0].mxu0
    %3602 = vdwg.mxu0
    %3603 = vmatprep.subr.bf16.mxu0 %v3243
    %3604 = vmatpush1.bf16.msra.mxu0 %v3242
    %3605 = vmatprep.subr.bf16.mxu0 %v3248
    %3606 = vmatpush1.bf16.msra.mxu0 %v3247
    %3607 = vmatprep.subr.bf16.mxu0 %v3253
    %3608 = vmatpush1.bf16.msra.mxu0 %v3252
    %3609 = vmatprep.subr.bf16.mxu0 %v3258
    %3610 = vmatpush1.bf16.msra.mxu0 %v3257
    %3611 = vmatprep.subr.bf16.mxu0 %v3263
    %3612 = vmatpush1.bf16.msra.mxu0 %v3262
    %3613 = vmatprep.subr.bf16.mxu0 %v3268
    %3614 = vmatpush1.bf16.msra.mxu0 %v3267
    %3615 = vmatprep.subr.bf16.mxu0 %v3273
    %3616 = vmatpush1.bf16.msra.mxu0 %v3272
    %3617 = vmatprep.subr.bf16.mxu0 %v3278
    %3618 = vmatpush1.bf16.msra.mxu0 %v3277
    %3619 = vmatprep.subr.bf16.mxu0 %v3283
    %3620 = vmatpush1.bf16.msra.mxu0 %v3282
    %3621 = vmatprep.subr.bf16.mxu0 %v3288
    %3622 = vmatpush1.bf16.msra.mxu0 %v3287
    %3623 = vmatprep.subr.bf16.mxu0 %v3293
    %3624 = vmatpush1.bf16.msra.mxu0 %v3292
    %3625 = vmatprep.subr.bf16.mxu0 %v3298
    %3626 = vmatpush1.bf16.msra.mxu0 %v3297
    %3627 = vmatprep.subr.bf16.mxu0 %v3303
    %3628 = vmatpush1.bf16.msra.mxu0 %v3302
    %3629 = vmatprep.subr.bf16.mxu0 %v3308
    %3630 = vmatpush1.bf16.msra.mxu0 %v3307
    %3631 = vmatprep.subr.bf16.mxu0 %v3313
    %3632 = vmatpush1.bf16.msra.mxu0 %v3312
    %3633 = vmatprep.subr.bf16.mxu0 %v3318
    %3634 = vmatpush1.bf16.msra.mxu0 %v3317
    %3635 = vmatprep.mubr.bf16.mxu0 %v2455
    %3636 = vmatmul.mubr.bf16.gmra.mrb[0].mxu0 %v2454
    %v3637 = vpop.f32.mrb[0].mxu0
    %v3638 = vadd.f32 %v3597, %v3637
    %v3639 = vpop.f32.mrb[0].mxu0
    %v3640 = vadd.f32 %v3599, %v3639
    %v3641 = vpop.f32.mrb[0].mxu0
    %v3642 = vpop.f32.mrb[0].mxu0
    %3643 = vdwg.mxu0
    %3644 = vmatprep.subr.bf16.mxu0 0
    %3645 = vmatpush1.bf16.msra.mxu0 %v3164
    %3646 = vmatprep.subr.bf16.mxu0 0
    %3647 = vmatpush1.bf16.msra.mxu0 %v3169
    %3648 = vmatprep.subr.bf16.mxu0 0
    %3649 = vmatpush1.bf16.msra.mxu0 %v3174
    %3650 = vmatprep.subr.bf16.mxu0 0
    %3651 = vmatpush1.bf16.msra.mxu0 %v3179
    %3652 = vmatprep.subr.bf16.mxu0 0
    %3653 = vmatpush1.bf16.msra.mxu0 %v3184
    %3654 = vmatprep.subr.bf16.mxu0 0
    %3655 = vmatpush1.bf16.msra.mxu0 %v3189
    %3656 = vmatprep.subr.bf16.mxu0 0
    %3657 = vmatpush1.bf16.msra.mxu0 %v3194
    %3658 = vmatprep.subr.bf16.mxu0 0
    %3659 = vmatpush1.bf16.msra.mxu0 %v3199
    %3660 = vmatprep.subr.bf16.mxu0 0
    %3661 = vmatpush1.bf16.msra.mxu0 %v3204
    %3662 = vmatprep.subr.bf16.mxu0 0
    %3663 = vmatpush1.bf16.msra.mxu0 %v3209
    %3664 = vmatprep.subr.bf16.mxu0 0
    %3665 = vmatpush1.bf16.msra.mxu0 %v3214
    %3666 = vmatprep.subr.bf16.mxu0 0
    %3667 = vmatpush1.bf16.msra.mxu0 %v3219
    %3668 = vmatprep.subr.bf16.mxu0 0
    %3669 = vmatpush1.bf16.msra.mxu0 %v3224
    %3670 = vmatprep.subr.bf16.mxu0 0
    %3671 = vmatpush1.bf16.msra.mxu0 %v3229
    %3672 = vmatprep.subr.bf16.mxu0 0
    %3673 = vmatpush1.bf16.msra.mxu0 %v3234
    %3674 = vmatprep.subr.bf16.mxu0 0
    %3675 = vmatpush1.bf16.msra.mxu0 %v3239
    %3676 = vmatprep.mubr.bf16.mxu0 %v2453
    %3677 = vmatmul.mubr.bf16.gmra.mrb[0].mxu0 %v2452
    %v3678 = vpop.f32.mrb[0].mxu0
    %v3679 = vadd.f32 0.0, %v3678
    %v3680 = vpop.f32.mrb[0].mxu0
    %v3681 = vpop.f32.mrb[0].mxu0
    %v3682 = vpop.f32.mrb[0].mxu0
    %3683 = vdwg.mxu0
    %3684 = vmatprep.subr.bf16.mxu0 0
    %3685 = vmatpush1.bf16.msra.mxu0 %v3244
    %3686 = vmatprep.subr.bf16.mxu0 0
    %3687 = vmatpush1.bf16.msra.mxu0 %v3249
    %3688 = vmatprep.subr.bf16.mxu0 0
    %3689 = vmatpush1.bf16.msra.mxu0 %v3254
    %3690 = vmatprep.subr.bf16.mxu0 0
    %3691 = vmatpush1.bf16.msra.mxu0 %v3259
    %3692 = vmatprep.subr.bf16.mxu0 0
    %3693 = vmatpush1.bf16.msra.mxu0 %v3264
    %3694 = vmatprep.subr.bf16.mxu0 0
    %3695 = vmatpush1.bf16.msra.mxu0 %v3269
    %3696 = vmatprep.subr.bf16.mxu0 0
    %3697 = vmatpush1.bf16.msra.mxu0 %v3274
    %3698 = vmatprep.subr.bf16.mxu0 0
    %3699 = vmatpush1.bf16.msra.mxu0 %v3279
    %3700 = vmatprep.subr.bf16.mxu0 0
    %3701 = vmatpush1.bf16.msra.mxu0 %v3284
    %3702 = vmatprep.subr.bf16.mxu0 0
    %3703 = vmatpush1.bf16.msra.mxu0 %v3289
    %3704 = vmatprep.subr.bf16.mxu0 0
    %3705 = vmatpush1.bf16.msra.mxu0 %v3294
    %3706 = vmatprep.subr.bf16.mxu0 0
    %3707 = vmatpush1.bf16.msra.mxu0 %v3299
    %3708 = vmatprep.subr.bf16.mxu0 0
    %3709 = vmatpush1.bf16.msra.mxu0 %v3304
    %3710 = vmatprep.subr.bf16.mxu0 0
    %3711 = vmatpush1.bf16.msra.mxu0 %v3309
    %3712 = vmatprep.subr.bf16.mxu0 0
    %3713 = vmatpush1.bf16.msra.mxu0 %v3314
    %3714 = vmatprep.subr.bf16.mxu0 0
    %3715 = vmatpush1.bf16.msra.mxu0 %v3319
    %3716 = vmatprep.mubr.bf16.mxu0 %v2455
    %3717 = vmatmul.mubr.bf16.gmra.mrb[0].mxu0 %v2454
    %v3718 = vpop.f32.mrb[0].mxu0
    %v3719 = vadd.f32 %v3679, %v3718
    %v3720 = vpop.f32.mrb[0].mxu0
    %v3721 = vpop.f32.mrb[0].mxu0
    %v3722 = vpop.f32.mrb[0].mxu0
    %3723 = vdwg.mxu0
    %v3724 = vpack.c.bf16 %v3556, %v3556
    %v3725 = vpack.c.bf16 %v3558, %v3558
    %v3726 = vpack.c.bf16 %v3638, %v3638
    %v3727 = vpack.c.bf16 %v3640, %v3640
    %v3728 = vpack.c.bf16 %v3719, %v3719
    %v3729 = vld [vmem:[%s10] sm:$0x1f]
    %v3731 = vcombine.high %v3729, %v3729
    %v3733 = vunpack.c.l.s4 1966171168
    %v3734 = vunpack.c.0.s8 %v3733
    %v3735 = vlaneseq
    %v3736 = vshrl.u32 %v3735, 7
    %v3737 = vsub.s32 %v3734, %v3736
    %v3738 = vrot.slane %v3729, %v3737
    %v3740 = vunpack.c.l.s4 1966171168
    %v3741 = vunpack.c.0.s8 %v3740
    %v3742 = vlaneseq
    %v3743 = vshrl.u32 %v3742, 7
    %v3744 = vsub.s32 %v3741, %v3743
    %v3745 = vrot.slane %v3731, %v3744
    %v3746 = vcombine.high %v3738, %v3738
    %v3748 = vunpack.c.l.s4 1966171168
    %v3749 = vunpack.c.0.s8 %v3748
    %v3750 = vlaneseq
    %v3751 = vshrl.u32 %v3750, 7
    %v3752 = vsub.s32 %v3749, %v3751
    %v3753 = vrot.slane %v3738, %v3752
    %v3755 = vunpack.c.l.s4 1966171168
    %v3756 = vunpack.c.0.s8 %v3755
    %v3757 = vlaneseq
    %v3758 = vshrl.u32 %v3757, 7
    %v3759 = vsub.s32 %v3756, %v3758
    %v3760 = vrot.slane %v3745, %v3759
    %v3762 = vunpack.c.l.s4 1966171168
    %v3763 = vunpack.c.0.s8 %v3762
    %v3764 = vlaneseq
    %v3765 = vshrl.u32 %v3764, 7
    %v3766 = vsub.s32 %v3763, %v3765
    %v3767 = vrot.slane %v3746, %v3766
    %v3768 = vcombine.high %v3753, %v3753
    %v3769 = vcombine.high %v3767, %v3767
    %v3771 = vpack.i.b16 %v3753, %v3753
    %v3773 = vlaneseq
    %v3774 = vshrl.u32 %v3773, 7
    %v3775 = vsub.s32 0, %v3774
    %v3776 = vrot.slane %v3771, %v3775
    %v3778 = vpack.i.b16 %v3767, %v3767
    %v3780 = vlaneseq
    %v3781 = vshrl.u32 %v3780, 7
    %v3782 = vsub.s32 0, %v3781
    %v3783 = vrot.slane %v3778, %v3782
    %v3785 = vpack.i.b16 %v3768, %v3768
    %v3787 = vlaneseq
    %v3788 = vshrl.u32 %v3787, 7
    %v3789 = vsub.s32 0, %v3788
    %v3790 = vrot.slane %v3785, %v3789
    %v3792 = vpack.i.b16 %v3769, %v3769
    %v3794 = vlaneseq
    %v3795 = vshrl.u32 %v3794, 7
    %v3796 = vsub.s32 0, %v3795
    %v3797 = vrot.slane %v3792, %v3796
    %v3799 = vpack.i.b16 %v3760, %v3760
    %v3801 = vlaneseq
    %v3802 = vshrl.u32 %v3801, 7
    %v3803 = vsub.s32 0, %v3802
    %v3804 = vrot.slane %v3799, %v3803
    %v3805 = vadd.bf16 %v3724, %v3776
    %v3806 = vadd.bf16 %v3725, %v3783
    %v3807 = vadd.bf16 %v3726, %v3790
    %v3808 = vadd.bf16 %v3727, %v3797
    %v3809 = vadd.bf16 %v3728, %v3804
    %vm3810 = vcmp.gt.bf16.partialorder %v3805, 0
    %vm3811 = vcmp.gt.bf16.partialorder %v3806, 0
    %vm3812 = vcmp.gt.bf16.partialorder %v3807, 0
    %vm3813 = vcmp.gt.bf16.partialorder %v3808, 0
    %vm3814 = vcmp.gt.bf16.partialorder %v3809, 0
    %v3815 = vmul.bf16 %v3805, 1009007652
    %v3816 = vmul.bf16 %v3806, 1009007652
    %v3817 = vmul.bf16 %v3807, 1009007652
    %v3818 = vmul.bf16 %v3808, 1009007652
    %v3819 = vmul.bf16 %v3809, 1009007652
    %v3820 = vsel %vm3810, %v3805, %v3815
    %v3821 = vsel %vm3811, %v3806, %v3816
    %v3822 = vsel %vm3812, %v3807, %v3817
    %v3823 = vsel %vm3813, %v3808, %v3818
    %v3824 = vsel %vm3814, %v3809, %v3819
    %v3825 = vld [vmem:[%s11] sm:$0xff]
    %v3826 = vld [vmem:[%s11 + $0x8] sm:$0xff]
    %v3827 = vld [vmem:[%s11 + $0x10] sm:$0xff]
    %v3828 = vld [vmem:[%s11 + $0x18] sm:$0xff]
    %v3829 = vld [vmem:[%s11 + $0x20] sm:$0xff]
    %v3830 = vld [vmem:[%s11 + $0x28] sm:$0xff]
    %v3831 = vld [vmem:[%s11 + $0x30] sm:$0xff]
    %v3832 = vld [vmem:[%s11 + $0x38] sm:$0xff]
    %v3833 = vld [vmem:[%s11 + $0x40] sm:$0xff]
    %v3834 = vld [vmem:[%s11 + $0x48] sm:$0xff]
    %v3835 = vld [vmem:[%s11 + $0x50] sm:$0xff]
    %v3836 = vld [vmem:[%s11 + $0x58] sm:$0xff]
    %v3837 = vld [vmem:[%s11 + $0x60] sm:$0xff]
    %v3838 = vld [vmem:[%s11 + $0x68] sm:$0xff]
    %v3839 = vld [vmem:[%s11 + $0x70] sm:$0xff]
    %v3840 = vld [vmem:[%s11 + $0x78] sm:$0xff]
    %v3841 = vld [vmem:[%s11 + $0x80] sm:$0xff]
    %v3842 = vld [vmem:[%s11 + $0x88] sm:$0xff]
    %v3843 = vld [vmem:[%s11 + $0x90] sm:$0xff]
    %v3844 = vld [vmem:[%s11 + $0x98] sm:$0xff]
    %v3845 = vld [vmem:[%s11 + $0xa0] sm:$0xff]
    %v3846 = vld [vmem:[%s11 + $0xa8] sm:$0xff]
    %v3847 = vld [vmem:[%s11 + $0xb0] sm:$0xff]
    %v3848 = vld [vmem:[%s11 + $0xb8] sm:$0xff]
    %v3849 = vld [vmem:[%s11 + $0xc0] sm:$0xff]
    %v3850 = vld [vmem:[%s11 + $0xc8] sm:$0xff]
    %v3851 = vld [vmem:[%s11 + $0xd0] sm:$0xff]
    %v3852 = vld [vmem:[%s11 + $0xd8] sm:$0xff]
    %v3853 = vld [vmem:[%s11 + $0xe0] sm:$0xff]
    %v3854 = vld [vmem:[%s11 + $0xe8] sm:$0xff]
    %v3855 = vld [vmem:[%s11 + $0xf0] sm:$0xff]
    %v3856 = vld [vmem:[%s11 + $0xf8] sm:$0xff]
    %v3857 = vld [vmem:[%s11 + $0x100] sm:$0xff]
    %v3858 = vld [vmem:[%s11 + $0x108] sm:$0xff]
    %v3859 = vld [vmem:[%s11 + $0x110] sm:$0xff]
    %v3860 = vld [vmem:[%s11 + $0x118] sm:$0xff]
    %v3861 = vld [vmem:[%s11 + $0x120] sm:$0xff]
    %v3862 = vld [vmem:[%s11 + $0x128] sm:$0xff]
    %v3863 = vld [vmem:[%s11 + $0x130] sm:$0xff]
    %v3864 = vld [vmem:[%s11 + $0x138] sm:$0xff]
    %v3865 = vld [vmem:[%s11 + $0x140] sm:$0xff]
    %v3866 = vld [vmem:[%s11 + $0x148] sm:$0xff]
    %v3867 = vld [vmem:[%s11 + $0x150] sm:$0xff]
    %v3868 = vld [vmem:[%s11 + $0x158] sm:$0xff]
    %v3869 = vld [vmem:[%s11 + $0x160] sm:$0xff]
    %v3870 = vld [vmem:[%s11 + $0x168] sm:$0xff]
    %v3871 = vld [vmem:[%s11 + $0x170] sm:$0xff]
    %v3872 = vld [vmem:[%s11 + $0x178] sm:$0xff]
    %v3873 = vld [vmem:[%s11 + $0x180] sm:$0xff]
    %v3874 = vld [vmem:[%s11 + $0x188] sm:$0xff]
    %v3875 = vld [vmem:[%s11 + $0x190] sm:$0xff]
    %v3876 = vld [vmem:[%s11 + $0x198] sm:$0xff]
    %v3877 = vld [vmem:[%s11 + $0x1a0] sm:$0xff]
    %v3878 = vld [vmem:[%s11 + $0x1a8] sm:$0xff]
    %v3879 = vld [vmem:[%s11 + $0x1b0] sm:$0xff]
    %v3880 = vld [vmem:[%s11 + $0x1b8] sm:$0xff]
    %v3881 = vld [vmem:[%s11 + $0x1c0] sm:$0xff]
    %v3882 = vld [vmem:[%s11 + $0x1c8] sm:$0xff]
    %v3883 = vld [vmem:[%s11 + $0x1d0] sm:$0xff]
    %v3884 = vld [vmem:[%s11 + $0x1d8] sm:$0xff]
    %v3885 = vld [vmem:[%s11 + $0x1e0] sm:$0xff]
    %v3886 = vld [vmem:[%s11 + $0x1e8] sm:$0xff]
    %v3887 = vld [vmem:[%s11 + $0x1f0] sm:$0xff]
    %v3888 = vld [vmem:[%s11 + $0x1f8] sm:$0xff]
    %v3889 = vld [vmem:[%s11 + $0x200] sm:$0xff]
    %v3890 = vld [vmem:[%s11 + $0x208] sm:$0xff]
    %v3891 = vld [vmem:[%s11 + $0x210] sm:$0xff]
    %v3892 = vld [vmem:[%s11 + $0x218] sm:$0xff]
    %v3893 = vld [vmem:[%s11 + $0x220] sm:$0xff]
    %v3894 = vld [vmem:[%s11 + $0x228] sm:$0xff]
    %v3895 = vld [vmem:[%s11 + $0x230] sm:$0xff]
    %v3896 = vld [vmem:[%s11 + $0x238] sm:$0xff]
    %v3897 = vld [vmem:[%s11 + $0x240] sm:$0xff]
    %v3898 = vld [vmem:[%s11 + $0x248] sm:$0xff]
    %v3899 = vld [vmem:[%s11 + $0x250] sm:$0xff]
    %v3900 = vld [vmem:[%s11 + $0x258] sm:$0xff]
    %v3901 = vld [vmem:[%s11 + $0x260] sm:$0xff]
    %v3902 = vld [vmem:[%s11 + $0x268] sm:$0xff]
    %v3903 = vld [vmem:[%s11 + $0x270] sm:$0xff]
    %v3904 = vld [vmem:[%s11 + $0x278] sm:$0xff]
    %v3905 = vld [vmem:[%s11 + $0x280] sm:$0xff]
    %v3906 = vld [vmem:[%s11 + $0x288] sm:$0xff]
    %v3907 = vld [vmem:[%s11 + $0x290] sm:$0xff]
    %v3908 = vld [vmem:[%s11 + $0x298] sm:$0xff]
    %v3909 = vld [vmem:[%s11 + $0x2a0] sm:$0xff]
    %v3910 = vld [vmem:[%s11 + $0x2a8] sm:$0xff]
    %v3911 = vld [vmem:[%s11 + $0x2b0] sm:$0xff]
    %v3912 = vld [vmem:[%s11 + $0x2b8] sm:$0xff]
    %v3913 = vld [vmem:[%s11 + $0x2c0] sm:$0xff]
    %v3914 = vld [vmem:[%s11 + $0x2c8] sm:$0xff]
    %v3915 = vld [vmem:[%s11 + $0x2d0] sm:$0xff]
    %v3916 = vld [vmem:[%s11 + $0x2d8] sm:$0xff]
    %v3917 = vld [vmem:[%s11 + $0x2e0] sm:$0xff]
    %v3918 = vld [vmem:[%s11 + $0x2e8] sm:$0xff]
    %v3919 = vld [vmem:[%s11 + $0x2f0] sm:$0xff]
    %v3920 = vld [vmem:[%s11 + $0x2f8] sm:$0xff]
    %v3921 = vld [vmem:[%s11 + $0x300] sm:$0xff]
    %v3922 = vld [vmem:[%s11 + $0x308] sm:$0xff]
    %v3923 = vld [vmem:[%s11 + $0x310] sm:$0xff]
    %v3924 = vld [vmem:[%s11 + $0x318] sm:$0xff]
    %v3925 = vld [vmem:[%s11 + $0x320] sm:$0xff]
    %v3926 = vld [vmem:[%s11 + $0x328] sm:$0xff]
    %v3927 = vld [vmem:[%s11 + $0x330] sm:$0xff]
    %v3928 = vld [vmem:[%s11 + $0x338] sm:$0xff]
    %v3929 = vld [vmem:[%s11 + $0x340] sm:$0xff]
    %v3930 = vld [vmem:[%s11 + $0x348] sm:$0xff]
    %v3931 = vld [vmem:[%s11 + $0x350] sm:$0xff]
    %v3932 = vld [vmem:[%s11 + $0x358] sm:$0xff]
    %v3933 = vld [vmem:[%s11 + $0x360] sm:$0xff]
    %v3934 = vld [vmem:[%s11 + $0x368] sm:$0xff]
    %v3935 = vld [vmem:[%s11 + $0x370] sm:$0xff]
    %v3936 = vld [vmem:[%s11 + $0x378] sm:$0xff]
    %v3937 = vld [vmem:[%s11 + $0x380] sm:$0xff]
    %v3938 = vld [vmem:[%s11 + $0x388] sm:$0xff]
    %v3939 = vld [vmem:[%s11 + $0x390] sm:$0xff]
    %v3940 = vld [vmem:[%s11 + $0x398] sm:$0xff]
    %v3941 = vld [vmem:[%s11 + $0x3a0] sm:$0xff]
    %v3942 = vld [vmem:[%s11 + $0x3a8] sm:$0xff]
    %v3943 = vld [vmem:[%s11 + $0x3b0] sm:$0xff]
    %v3944 = vld [vmem:[%s11 + $0x3b8] sm:$0xff]
    %v3945 = vld [vmem:[%s11 + $0x3c0] sm:$0xff]
    %v3946 = vld [vmem:[%s11 + $0x3c8] sm:$0xff]
    %v3947 = vld [vmem:[%s11 + $0x3d0] sm:$0xff]
    %v3948 = vld [vmem:[%s11 + $0x3d8] sm:$0xff]
    %v3949 = vld [vmem:[%s11 + $0x3e0] sm:$0xff]
    %v3950 = vld [vmem:[%s11 + $0x3e8] sm:$0xff]
    %v3951 = vld [vmem:[%s11 + $0x3f0] sm:$0xff]
    %v3952 = vld [vmem:[%s11 + $0x3f8] sm:$0xff]
    %v3953 = vld [vmem:[%s11 + $0x400] sm:$0xff]
    %v3954 = vld [vmem:[%s11 + $0x408] sm:$0xff]
    %v3955 = vld [vmem:[%s11 + $0x410] sm:$0xff]
    %v3956 = vld [vmem:[%s11 + $0x418] sm:$0xff]
    %v3957 = vld [vmem:[%s11 + $0x420] sm:$0xff]
    %v3958 = vld [vmem:[%s11 + $0x428] sm:$0xff]
    %v3959 = vld [vmem:[%s11 + $0x430] sm:$0xff]
    %v3960 = vld [vmem:[%s11 + $0x438] sm:$0xff]
    %v3961 = vld [vmem:[%s11 + $0x440] sm:$0xff]
    %v3962 = vld [vmem:[%s11 + $0x448] sm:$0xff]
    %v3963 = vld [vmem:[%s11 + $0x450] sm:$0xff]
    %v3964 = vld [vmem:[%s11 + $0x458] sm:$0xff]
    %v3965 = vld [vmem:[%s11 + $0x460] sm:$0xff]
    %v3966 = vld [vmem:[%s11 + $0x468] sm:$0xff]
    %v3967 = vld [vmem:[%s11 + $0x470] sm:$0xff]
    %v3968 = vld [vmem:[%s11 + $0x478] sm:$0xff]
    %v3969 = vld [vmem:[%s11 + $0x480] sm:$0xff]
    %v3970 = vld [vmem:[%s11 + $0x488] sm:$0xff]
    %v3971 = vld [vmem:[%s11 + $0x490] sm:$0xff]
    %v3972 = vld [vmem:[%s11 + $0x498] sm:$0xff]
    %v3973 = vld [vmem:[%s11 + $0x4a0] sm:$0xff]
    %v3974 = vld [vmem:[%s11 + $0x4a8] sm:$0xff]
    %v3975 = vld [vmem:[%s11 + $0x4b0] sm:$0xff]
    %v3976 = vld [vmem:[%s11 + $0x4b8] sm:$0xff]
    %v3977 = vld [vmem:[%s11 + $0x4c0] sm:$0xff]
    %v3978 = vld [vmem:[%s11 + $0x4c8] sm:$0xff]
    %v3979 = vld [vmem:[%s11 + $0x4d0] sm:$0xff]
    %v3980 = vld [vmem:[%s11 + $0x4d8] sm:$0xff]
    %v3981 = vld [vmem:[%s11 + $0x4e0] sm:$0xff]
    %v3982 = vld [vmem:[%s11 + $0x4e8] sm:$0xff]
    %v3983 = vld [vmem:[%s11 + $0x4f0] sm:$0xff]
    %v3984 = vld [vmem:[%s11 + $0x4f8] sm:$0xff]
    %v3985 = vld [vmem:[%s11 + $0x500] sm:$0xff]
    %v3986 = vld [vmem:[%s11 + $0x508] sm:$0xff]
    %v3987 = vld [vmem:[%s11 + $0x510] sm:$0xff]
    %v3988 = vld [vmem:[%s11 + $0x518] sm:$0xff]
    %v3989 = vld [vmem:[%s11 + $0x520] sm:$0xff]
    %v3990 = vld [vmem:[%s11 + $0x528] sm:$0xff]
    %v3991 = vld [vmem:[%s11 + $0x530] sm:$0xff]
    %v3992 = vld [vmem:[%s11 + $0x538] sm:$0xff]
    %v3993 = vld [vmem:[%s11 + $0x540] sm:$0xff]
    %v3994 = vld [vmem:[%s11 + $0x548] sm:$0xff]
    %v3995 = vld [vmem:[%s11 + $0x550] sm:$0xff]
    %v3996 = vld [vmem:[%s11 + $0x558] sm:$0xff]
    %v3997 = vld [vmem:[%s11 + $0x560] sm:$0xff]
    %v3998 = vld [vmem:[%s11 + $0x568] sm:$0xff]
    %v3999 = vld [vmem:[%s11 + $0x570] sm:$0xff]
    %v4000 = vld [vmem:[%s11 + $0x578] sm:$0xff]
    %v4001 = vld [vmem:[%s11 + $0x580] sm:$0xff]
    %v4002 = vld [vmem:[%s11 + $0x588] sm:$0xff]
    %v4003 = vld [vmem:[%s11 + $0x590] sm:$0xff]
    %v4004 = vld [vmem:[%s11 + $0x598] sm:$0xff]
    %v4005 = vld [vmem:[%s11 + $0x5a0] sm:$0xff]
    %v4006 = vld [vmem:[%s11 + $0x5a8] sm:$0xff]
    %v4007 = vld [vmem:[%s11 + $0x5b0] sm:$0xff]
    %v4008 = vld [vmem:[%s11 + $0x5b8] sm:$0xff]
    %v4009 = vld [vmem:[%s11 + $0x5c0] sm:$0xff]
    %v4010 = vld [vmem:[%s11 + $0x5c8] sm:$0xff]
    %v4011 = vld [vmem:[%s11 + $0x5d0] sm:$0xff]
    %v4012 = vld [vmem:[%s11 + $0x5d8] sm:$0xff]
    %v4013 = vld [vmem:[%s11 + $0x5e0] sm:$0xff]
    %v4014 = vld [vmem:[%s11 + $0x5e8] sm:$0xff]
    %v4015 = vld [vmem:[%s11 + $0x5f0] sm:$0xff]
    %v4016 = vld [vmem:[%s11 + $0x5f8] sm:$0xff]
    %v4017 = vld [vmem:[%s11 + $0x600] sm:$0xff]
    %v4018 = vld [vmem:[%s11 + $0x608] sm:$0xff]
    %v4019 = vld [vmem:[%s11 + $0x610] sm:$0xff]
    %v4020 = vld [vmem:[%s11 + $0x618] sm:$0xff]
    %v4021 = vld [vmem:[%s11 + $0x620] sm:$0xff]
    %v4022 = vld [vmem:[%s11 + $0x628] sm:$0xff]
    %v4023 = vld [vmem:[%s11 + $0x630] sm:$0xff]
    %v4024 = vld [vmem:[%s11 + $0x638] sm:$0xff]
    %v4025 = vld [vmem:[%s11 + $0x640] sm:$0xff]
    %v4026 = vld [vmem:[%s11 + $0x648] sm:$0xff]
    %v4027 = vld [vmem:[%s11 + $0x650] sm:$0xff]
    %v4028 = vld [vmem:[%s11 + $0x658] sm:$0xff]
    %v4029 = vld [vmem:[%s11 + $0x660] sm:$0xff]
    %v4030 = vld [vmem:[%s11 + $0x668] sm:$0xff]
    %v4031 = vld [vmem:[%s11 + $0x670] sm:$0xff]
    %v4032 = vld [vmem:[%s11 + $0x678] sm:$0xff]
    %v4033 = vld [vmem:[%s11 + $0x680] sm:$0xff]
    %v4034 = vld [vmem:[%s11 + $0x688] sm:$0xff]
    %v4035 = vld [vmem:[%s11 + $0x690] sm:$0xff]
    %v4036 = vld [vmem:[%s11 + $0x698] sm:$0xff]
    %v4037 = vld [vmem:[%s11 + $0x6a0] sm:$0xff]
    %v4038 = vld [vmem:[%s11 + $0x6a8] sm:$0xff]
    %v4039 = vld [vmem:[%s11 + $0x6b0] sm:$0xff]
    %v4040 = vld [vmem:[%s11 + $0x6b8] sm:$0xff]
    %v4041 = vld [vmem:[%s11 + $0x6c0] sm:$0xff]
    %v4042 = vld [vmem:[%s11 + $0x6c8] sm:$0xff]
    %v4043 = vld [vmem:[%s11 + $0x6d0] sm:$0xff]
    %v4044 = vld [vmem:[%s11 + $0x6d8] sm:$0xff]
    %v4045 = vld [vmem:[%s11 + $0x6e0] sm:$0xff]
    %v4046 = vld [vmem:[%s11 + $0x6e8] sm:$0xff]
    %v4047 = vld [vmem:[%s11 + $0x6f0] sm:$0xff]
    %v4048 = vld [vmem:[%s11 + $0x6f8] sm:$0xff]
    %v4049 = vld [vmem:[%s11 + $0x700] sm:$0xff]
    %v4050 = vld [vmem:[%s11 + $0x708] sm:$0xff]
    %v4051 = vld [vmem:[%s11 + $0x710] sm:$0xff]
    %v4052 = vld [vmem:[%s11 + $0x718] sm:$0xff]
    %v4053 = vld [vmem:[%s11 + $0x720] sm:$0xff]
    %v4054 = vld [vmem:[%s11 + $0x728] sm:$0xff]
    %v4055 = vld [vmem:[%s11 + $0x730] sm:$0xff]
    %v4056 = vld [vmem:[%s11 + $0x738] sm:$0xff]
    %v4057 = vld [vmem:[%s11 + $0x740] sm:$0xff]
    %v4058 = vld [vmem:[%s11 + $0x748] sm:$0xff]
    %v4059 = vld [vmem:[%s11 + $0x750] sm:$0xff]
    %v4060 = vld [vmem:[%s11 + $0x758] sm:$0xff]
    %v4061 = vld [vmem:[%s11 + $0x760] sm:$0xff]
    %v4062 = vld [vmem:[%s11 + $0x768] sm:$0xff]
    %v4063 = vld [vmem:[%s11 + $0x770] sm:$0xff]
    %v4064 = vld [vmem:[%s11 + $0x778] sm:$0xff]
    %v4305 = vunpack.c.l.b16 %v3825
    %v4306 = vunpack.c.h.b16 %v3825
    %v4307 = vunpack.c.l.b16 %v3826
    %v4308 = vunpack.c.h.b16 %v3826
    %v4309 = vunpack.c.l.b16 %v3827
    %v4310 = vunpack.c.h.b16 %v3827
    %v4311 = vunpack.c.l.b16 %v3828
    %v4312 = vunpack.c.h.b16 %v3828
    %v4313 = vunpack.c.l.b16 %v3829
    %v4314 = vunpack.c.h.b16 %v3829
    %v4315 = vunpack.c.l.b16 %v3830
    %v4316 = vunpack.c.h.b16 %v3830
    %v4317 = vunpack.c.l.b16 %v3831
    %v4318 = vunpack.c.h.b16 %v3831
    %v4319 = vunpack.c.l.b16 %v3832
    %v4320 = vunpack.c.h.b16 %v3832
    %v4321 = vunpack.c.l.b16 %v3833
    %v4322 = vunpack.c.h.b16 %v3833
    %v4323 = vunpack.c.l.b16 %v3834
    %v4324 = vunpack.c.h.b16 %v3834
    %v4325 = vunpack.c.l.b16 %v3835
    %v4326 = vunpack.c.h.b16 %v3835
    %v4327 = vunpack.c.l.b16 %v3836
    %v4328 = vunpack.c.h.b16 %v3836
    %v4329 = vunpack.c.l.b16 %v3837
    %v4330 = vunpack.c.h.b16 %v3837
    %v4331 = vunpack.c.l.b16 %v3838
    %v4332 = vunpack.c.h.b16 %v3838
    %v4333 = vunpack.c.l.b16 %v3839
    %v4334 = vunpack.c.h.b16 %v3839
    %v4335 = vunpack.c.l.b16 %v3840
    %v4336 = vunpack.c.h.b16 %v3840
    %v4337 = vunpack.c.l.b16 %v3841
    %v4338 = vunpack.c.h.b16 %v3841
    %v4339 = vunpack.c.l.b16 %v3842
    %v4340 = vunpack.c.h.b16 %v3842
    %v4341 = vunpack.c.l.b16 %v3843
    %v4342 = vunpack.c.h.b16 %v3843
    %v4343 = vunpack.c.l.b16 %v3844
    %v4344 = vunpack.c.h.b16 %v3844
    %v4345 = vunpack.c.l.b16 %v3845
    %v4346 = vunpack.c.h.b16 %v3845
    %v4347 = vunpack.c.l.b16 %v3846
    %v4348 = vunpack.c.h.b16 %v3846
    %v4349 = vunpack.c.l.b16 %v3847
    %v4350 = vunpack.c.h.b16 %v3847
    %v4351 = vunpack.c.l.b16 %v3848
    %v4352 = vunpack.c.h.b16 %v3848
    %v4353 = vunpack.c.l.b16 %v3849
    %v4354 = vunpack.c.h.b16 %v3849
    %v4355 = vunpack.c.l.b16 %v3850
    %v4356 = vunpack.c.h.b16 %v3850
    %v4357 = vunpack.c.l.b16 %v3851
    %v4358 = vunpack.c.h.b16 %v3851
    %v4359 = vunpack.c.l.b16 %v3852
    %v4360 = vunpack.c.h.b16 %v3852
    %v4361 = vunpack.c.l.b16 %v3853
    %v4362 = vunpack.c.h.b16 %v3853
    %v4363 = vunpack.c.l.b16 %v3854
    %v4364 = vunpack.c.h.b16 %v3854
    %v4365 = vunpack.c.l.b16 %v3855
    %v4366 = vunpack.c.h.b16 %v3855
    %v4367 = vunpack.c.l.b16 %v3856
    %v4368 = vunpack.c.h.b16 %v3856
    %v4369 = vunpack.c.l.b16 %v3857
    %v4370 = vunpack.c.h.b16 %v3857
    %v4371 = vunpack.c.l.b16 %v3858
    %v4372 = vunpack.c.h.b16 %v3858
    %v4373 = vunpack.c.l.b16 %v3859
    %v4374 = vunpack.c.h.b16 %v3859
    %v4375 = vunpack.c.l.b16 %v3860
    %v4376 = vunpack.c.h.b16 %v3860
    %v4377 = vunpack.c.l.b16 %v3861
    %v4378 = vunpack.c.h.b16 %v3861
    %v4379 = vunpack.c.l.b16 %v3862
    %v4380 = vunpack.c.h.b16 %v3862
    %v4381 = vunpack.c.l.b16 %v3863
    %v4382 = vunpack.c.h.b16 %v3863
    %v4383 = vunpack.c.l.b16 %v3864
    %v4384 = vunpack.c.h.b16 %v3864
    %v4385 = vunpack.c.l.b16 %v3865
    %v4386 = vunpack.c.h.b16 %v3865
    %v4387 = vunpack.c.l.b16 %v3866
    %v4388 = vunpack.c.h.b16 %v3866
    %v4389 = vunpack.c.l.b16 %v3867
    %v4390 = vunpack.c.h.b16 %v3867
    %v4391 = vunpack.c.l.b16 %v3868
    %v4392 = vunpack.c.h.b16 %v3868
    %v4393 = vunpack.c.l.b16 %v3869
    %v4394 = vunpack.c.h.b16 %v3869
    %v4395 = vunpack.c.l.b16 %v3870
    %v4396 = vunpack.c.h.b16 %v3870
    %v4397 = vunpack.c.l.b16 %v3871
    %v4398 = vunpack.c.h.b16 %v3871
    %v4399 = vunpack.c.l.b16 %v3872
    %v4400 = vunpack.c.h.b16 %v3872
    %v4401 = vunpack.c.l.b16 %v3873
    %v4402 = vunpack.c.h.b16 %v3873
    %v4403 = vunpack.c.l.b16 %v3874
    %v4404 = vunpack.c.h.b16 %v3874
    %v4405 = vunpack.c.l.b16 %v3875
    %v4406 = vunpack.c.h.b16 %v3875
    %v4407 = vunpack.c.l.b16 %v3876
    %v4408 = vunpack.c.h.b16 %v3876
    %v4409 = vunpack.c.l.b16 %v3877
    %v4410 = vunpack.c.h.b16 %v3877
    %v4411 = vunpack.c.l.b16 %v3878
    %v4412 = vunpack.c.h.b16 %v3878
    %v4413 = vunpack.c.l.b16 %v3879
    %v4414 = vunpack.c.h.b16 %v3879
    %v4415 = vunpack.c.l.b16 %v3880
    %v4416 = vunpack.c.h.b16 %v3880
    %v4417 = vunpack.c.l.b16 %v3881
    %v4418 = vunpack.c.h.b16 %v3881
    %v4419 = vunpack.c.l.b16 %v3882
    %v4420 = vunpack.c.h.b16 %v3882
    %v4421 = vunpack.c.l.b16 %v3883
    %v4422 = vunpack.c.h.b16 %v3883
    %v4423 = vunpack.c.l.b16 %v3884
    %v4424 = vunpack.c.h.b16 %v3884
    %v4425 = vunpack.c.l.b16 %v3885
    %v4426 = vunpack.c.h.b16 %v3885
    %v4427 = vunpack.c.l.b16 %v3886
    %v4428 = vunpack.c.h.b16 %v3886
    %v4429 = vunpack.c.l.b16 %v3887
    %v4430 = vunpack.c.h.b16 %v3887
    %v4431 = vunpack.c.l.b16 %v3888
    %v4432 = vunpack.c.h.b16 %v3888
    %v4433 = vunpack.c.l.b16 %v3889
    %v4434 = vunpack.c.h.b16 %v3889
    %v4435 = vunpack.c.l.b16 %v3890
    %v4436 = vunpack.c.h.b16 %v3890
    %v4437 = vunpack.c.l.b16 %v3891
    %v4438 = vunpack.c.h.b16 %v3891
    %v4439 = vunpack.c.l.b16 %v3892
    %v4440 = vunpack.c.h.b16 %v3892
    %v4441 = vunpack.c.l.b16 %v3893
    %v4442 = vunpack.c.h.b16 %v3893
    %v4443 = vunpack.c.l.b16 %v3894
    %v4444 = vunpack.c.h.b16 %v3894
    %v4445 = vunpack.c.l.b16 %v3895
    %v4446 = vunpack.c.h.b16 %v3895
    %v4447 = vunpack.c.l.b16 %v3896
    %v4448 = vunpack.c.h.b16 %v3896
    %v4449 = vunpack.c.l.b16 %v3897
    %v4450 = vunpack.c.h.b16 %v3897
    %v4451 = vunpack.c.l.b16 %v3898
    %v4452 = vunpack.c.h.b16 %v3898
    %v4453 = vunpack.c.l.b16 %v3899
    %v4454 = vunpack.c.h.b16 %v3899
    %v4455 = vunpack.c.l.b16 %v3900
    %v4456 = vunpack.c.h.b16 %v3900
    %v4457 = vunpack.c.l.b16 %v3901
    %v4458 = vunpack.c.h.b16 %v3901
    %v4459 = vunpack.c.l.b16 %v3902
    %v4460 = vunpack.c.h.b16 %v3902
    %v4461 = vunpack.c.l.b16 %v3903
    %v4462 = vunpack.c.h.b16 %v3903
    %v4463 = vunpack.c.l.b16 %v3904
    %v4464 = vunpack.c.h.b16 %v3904
    %v4465 = vunpack.c.l.b16 %v3905
    %v4466 = vunpack.c.h.b16 %v3905
    %v4467 = vunpack.c.l.b16 %v3906
    %v4468 = vunpack.c.h.b16 %v3906
    %v4469 = vunpack.c.l.b16 %v3907
    %v4470 = vunpack.c.h.b16 %v3907
    %v4471 = vunpack.c.l.b16 %v3908
    %v4472 = vunpack.c.h.b16 %v3908
    %v4473 = vunpack.c.l.b16 %v3909
    %v4474 = vunpack.c.h.b16 %v3909
    %v4475 = vunpack.c.l.b16 %v3910
    %v4476 = vunpack.c.h.b16 %v3910
    %v4477 = vunpack.c.l.b16 %v3911
    %v4478 = vunpack.c.h.b16 %v3911
    %v4479 = vunpack.c.l.b16 %v3912
    %v4480 = vunpack.c.h.b16 %v3912
    %v4481 = vunpack.c.l.b16 %v3913
    %v4482 = vunpack.c.h.b16 %v3913
    %v4483 = vunpack.c.l.b16 %v3914
    %v4484 = vunpack.c.h.b16 %v3914
    %v4485 = vunpack.c.l.b16 %v3915
    %v4486 = vunpack.c.h.b16 %v3915
    %v4487 = vunpack.c.l.b16 %v3916
    %v4488 = vunpack.c.h.b16 %v3916
    %v4489 = vunpack.c.l.b16 %v3917
    %v4490 = vunpack.c.h.b16 %v3917
    %v4491 = vunpack.c.l.b16 %v3918
    %v4492 = vunpack.c.h.b16 %v3918
    %v4493 = vunpack.c.l.b16 %v3919
    %v4494 = vunpack.c.h.b16 %v3919
    %v4495 = vunpack.c.l.b16 %v3920
    %v4496 = vunpack.c.h.b16 %v3920
    %v4497 = vunpack.c.l.b16 %v3921
    %v4498 = vunpack.c.h.b16 %v3921
    %v4499 = vunpack.c.l.b16 %v3922
    %v4500 = vunpack.c.h.b16 %v3922
    %v4501 = vunpack.c.l.b16 %v3923
    %v4502 = vunpack.c.h.b16 %v3923
    %v4503 = vunpack.c.l.b16 %v3924
    %v4504 = vunpack.c.h.b16 %v3924
    %v4505 = vunpack.c.l.b16 %v3925
    %v4506 = vunpack.c.h.b16 %v3925
    %v4507 = vunpack.c.l.b16 %v3926
    %v4508 = vunpack.c.h.b16 %v3926
    %v4509 = vunpack.c.l.b16 %v3927
    %v4510 = vunpack.c.h.b16 %v3927
    %v4511 = vunpack.c.l.b16 %v3928
    %v4512 = vunpack.c.h.b16 %v3928
    %v4513 = vunpack.c.l.b16 %v3929
    %v4514 = vunpack.c.h.b16 %v3929
    %v4515 = vunpack.c.l.b16 %v3930
    %v4516 = vunpack.c.h.b16 %v3930
    %v4517 = vunpack.c.l.b16 %v3931
    %v4518 = vunpack.c.h.b16 %v3931
    %v4519 = vunpack.c.l.b16 %v3932
    %v4520 = vunpack.c.h.b16 %v3932
    %v4521 = vunpack.c.l.b16 %v3933
    %v4522 = vunpack.c.h.b16 %v3933
    %v4523 = vunpack.c.l.b16 %v3934
    %v4524 = vunpack.c.h.b16 %v3934
    %v4525 = vunpack.c.l.b16 %v3935
    %v4526 = vunpack.c.h.b16 %v3935
    %v4527 = vunpack.c.l.b16 %v3936
    %v4528 = vunpack.c.h.b16 %v3936
    %v4529 = vunpack.c.l.b16 %v3937
    %v4530 = vunpack.c.h.b16 %v3937
    %v4531 = vunpack.c.l.b16 %v3938
    %v4532 = vunpack.c.h.b16 %v3938
    %v4533 = vunpack.c.l.b16 %v3939
    %v4534 = vunpack.c.h.b16 %v3939
    %v4535 = vunpack.c.l.b16 %v3940
    %v4536 = vunpack.c.h.b16 %v3940
    %v4537 = vunpack.c.l.b16 %v3941
    %v4538 = vunpack.c.h.b16 %v3941
    %v4539 = vunpack.c.l.b16 %v3942
    %v4540 = vunpack.c.h.b16 %v3942
    %v4541 = vunpack.c.l.b16 %v3943
    %v4542 = vunpack.c.h.b16 %v3943
    %v4543 = vunpack.c.l.b16 %v3944
    %v4544 = vunpack.c.h.b16 %v3944
    %v4545 = vunpack.c.l.b16 %v3945
    %v4546 = vunpack.c.h.b16 %v3945
    %v4547 = vunpack.c.l.b16 %v3946
    %v4548 = vunpack.c.h.b16 %v3946
    %v4549 = vunpack.c.l.b16 %v3947
    %v4550 = vunpack.c.h.b16 %v3947
    %v4551 = vunpack.c.l.b16 %v3948
    %v4552 = vunpack.c.h.b16 %v3948
    %v4553 = vunpack.c.l.b16 %v3949
    %v4554 = vunpack.c.h.b16 %v3949
    %v4555 = vunpack.c.l.b16 %v3950
    %v4556 = vunpack.c.h.b16 %v3950
    %v4557 = vunpack.c.l.b16 %v3951
    %v4558 = vunpack.c.h.b16 %v3951
    %v4559 = vunpack.c.l.b16 %v3952
    %v4560 = vunpack.c.h.b16 %v3952
    %v4561 = vunpack.c.l.b16 %v3953
    %v4562 = vunpack.c.h.b16 %v3953
    %v4563 = vunpack.c.l.b16 %v3954
    %v4564 = vunpack.c.h.b16 %v3954
    %v4565 = vunpack.c.l.b16 %v3955
    %v4566 = vunpack.c.h.b16 %v3955
    %v4567 = vunpack.c.l.b16 %v3956
    %v4568 = vunpack.c.h.b16 %v3956
    %v4569 = vunpack.c.l.b16 %v3957
    %v4570 = vunpack.c.h.b16 %v3957
    %v4571 = vunpack.c.l.b16 %v3958
    %v4572 = vunpack.c.h.b16 %v3958
    %v4573 = vunpack.c.l.b16 %v3959
    %v4574 = vunpack.c.h.b16 %v3959
    %v4575 = vunpack.c.l.b16 %v3960
    %v4576 = vunpack.c.h.b16 %v3960
    %v4577 = vunpack.c.l.b16 %v3961
    %v4578 = vunpack.c.h.b16 %v3961
    %v4579 = vunpack.c.l.b16 %v3962
    %v4580 = vunpack.c.h.b16 %v3962
    %v4581 = vunpack.c.l.b16 %v3963
    %v4582 = vunpack.c.h.b16 %v3963
    %v4583 = vunpack.c.l.b16 %v3964
    %v4584 = vunpack.c.h.b16 %v3964
    %v4585 = vunpack.c.l.b16 %v3965
    %v4586 = vunpack.c.h.b16 %v3965
    %v4587 = vunpack.c.l.b16 %v3966
    %v4588 = vunpack.c.h.b16 %v3966
    %v4589 = vunpack.c.l.b16 %v3967
    %v4590 = vunpack.c.h.b16 %v3967
    %v4591 = vunpack.c.l.b16 %v3968
    %v4592 = vunpack.c.h.b16 %v3968
    %v4593 = vunpack.c.l.b16 %v3969
    %v4594 = vunpack.c.h.b16 %v3969
    %v4595 = vunpack.c.l.b16 %v3970
    %v4596 = vunpack.c.h.b16 %v3970
    %v4597 = vunpack.c.l.b16 %v3971
    %v4598 = vunpack.c.h.b16 %v3971
    %v4599 = vunpack.c.l.b16 %v3972
    %v4600 = vunpack.c.h.b16 %v3972
    %v4601 = vunpack.c.l.b16 %v3973
    %v4602 = vunpack.c.h.b16 %v3973
    %v4603 = vunpack.c.l.b16 %v3974
    %v4604 = vunpack.c.h.b16 %v3974
    %v4605 = vunpack.c.l.b16 %v3975
    %v4606 = vunpack.c.h.b16 %v3975
    %v4607 = vunpack.c.l.b16 %v3976
    %v4608 = vunpack.c.h.b16 %v3976
    %v4609 = vunpack.c.l.b16 %v3977
    %v4610 = vunpack.c.h.b16 %v3977
    %v4611 = vunpack.c.l.b16 %v3978
    %v4612 = vunpack.c.h.b16 %v3978
    %v4613 = vunpack.c.l.b16 %v3979
    %v4614 = vunpack.c.h.b16 %v3979
    %v4615 = vunpack.c.l.b16 %v3980
    %v4616 = vunpack.c.h.b16 %v3980
    %v4617 = vunpack.c.l.b16 %v3981
    %v4618 = vunpack.c.h.b16 %v3981
    %v4619 = vunpack.c.l.b16 %v3982
    %v4620 = vunpack.c.h.b16 %v3982
    %v4621 = vunpack.c.l.b16 %v3983
    %v4622 = vunpack.c.h.b16 %v3983
    %v4623 = vunpack.c.l.b16 %v3984
    %v4624 = vunpack.c.h.b16 %v3984
    %v4625 = vunpack.c.l.b16 %v3985
    %v4626 = vunpack.c.h.b16 %v3985
    %v4627 = vunpack.c.l.b16 %v3986
    %v4628 = vunpack.c.h.b16 %v3986
    %v4629 = vunpack.c.l.b16 %v3987
    %v4630 = vunpack.c.h.b16 %v3987
    %v4631 = vunpack.c.l.b16 %v3988
    %v4632 = vunpack.c.h.b16 %v3988
    %v4633 = vunpack.c.l.b16 %v3989
    %v4634 = vunpack.c.h.b16 %v3989
    %v4635 = vunpack.c.l.b16 %v3990
    %v4636 = vunpack.c.h.b16 %v3990
    %v4637 = vunpack.c.l.b16 %v3991
    %v4638 = vunpack.c.h.b16 %v3991
    %v4639 = vunpack.c.l.b16 %v3992
    %v4640 = vunpack.c.h.b16 %v3992
    %v4641 = vunpack.c.l.b16 %v3993
    %v4642 = vunpack.c.h.b16 %v3993
    %v4643 = vunpack.c.l.b16 %v3994
    %v4644 = vunpack.c.h.b16 %v3994
    %v4645 = vunpack.c.l.b16 %v3995
    %v4646 = vunpack.c.h.b16 %v3995
    %v4647 = vunpack.c.l.b16 %v3996
    %v4648 = vunpack.c.h.b16 %v3996
    %v4649 = vunpack.c.l.b16 %v3997
    %v4650 = vunpack.c.h.b16 %v3997
    %v4651 = vunpack.c.l.b16 %v3998
    %v4652 = vunpack.c.h.b16 %v3998
    %v4653 = vunpack.c.l.b16 %v3999
    %v4654 = vunpack.c.h.b16 %v3999
    %v4655 = vunpack.c.l.b16 %v4000
    %v4656 = vunpack.c.h.b16 %v4000
    %v4657 = vunpack.c.l.b16 %v4001
    %v4658 = vunpack.c.h.b16 %v4001
    %v4659 = vunpack.c.l.b16 %v4002
    %v4660 = vunpack.c.h.b16 %v4002
    %v4661 = vunpack.c.l.b16 %v4003
    %v4662 = vunpack.c.h.b16 %v4003
    %v4663 = vunpack.c.l.b16 %v4004
    %v4664 = vunpack.c.h.b16 %v4004
    %v4665 = vunpack.c.l.b16 %v4005
    %v4666 = vunpack.c.h.b16 %v4005
    %v4667 = vunpack.c.l.b16 %v4006
    %v4668 = vunpack.c.h.b16 %v4006
    %v4669 = vunpack.c.l.b16 %v4007
    %v4670 = vunpack.c.h.b16 %v4007
    %v4671 = vunpack.c.l.b16 %v4008
    %v4672 = vunpack.c.h.b16 %v4008
    %v4673 = vunpack.c.l.b16 %v4009
    %v4674 = vunpack.c.h.b16 %v4009
    %v4675 = vunpack.c.l.b16 %v4010
    %v4676 = vunpack.c.h.b16 %v4010
    %v4677 = vunpack.c.l.b16 %v4011
    %v4678 = vunpack.c.h.b16 %v4011
    %v4679 = vunpack.c.l.b16 %v4012
    %v4680 = vunpack.c.h.b16 %v4012
    %v4681 = vunpack.c.l.b16 %v4013
    %v4682 = vunpack.c.h.b16 %v4013
    %v4683 = vunpack.c.l.b16 %v4014
    %v4684 = vunpack.c.h.b16 %v4014
    %v4685 = vunpack.c.l.b16 %v4015
    %v4686 = vunpack.c.h.b16 %v4015
    %v4687 = vunpack.c.l.b16 %v4016
    %v4688 = vunpack.c.h.b16 %v4016
    %v4689 = vunpack.c.l.b16 %v4017
    %v4690 = vunpack.c.h.b16 %v4017
    %v4691 = vunpack.c.l.b16 %v4018
    %v4692 = vunpack.c.h.b16 %v4018
    %v4693 = vunpack.c.l.b16 %v4019
    %v4694 = vunpack.c.h.b16 %v4019
    %v4695 = vunpack.c.l.b16 %v4020
    %v4696 = vunpack.c.h.b16 %v4020
    %v4697 = vunpack.c.l.b16 %v4021
    %v4698 = vunpack.c.h.b16 %v4021
    %v4699 = vunpack.c.l.b16 %v4022
    %v4700 = vunpack.c.h.b16 %v4022
    %v4701 = vunpack.c.l.b16 %v4023
    %v4702 = vunpack.c.h.b16 %v4023
    %v4703 = vunpack.c.l.b16 %v4024
    %v4704 = vunpack.c.h.b16 %v4024
    %v4705 = vunpack.c.l.b16 %v4025
    %v4706 = vunpack.c.h.b16 %v4025
    %v4707 = vunpack.c.l.b16 %v4026
    %v4708 = vunpack.c.h.b16 %v4026
    %v4709 = vunpack.c.l.b16 %v4027
    %v4710 = vunpack.c.h.b16 %v4027
    %v4711 = vunpack.c.l.b16 %v4028
    %v4712 = vunpack.c.h.b16 %v4028
    %v4713 = vunpack.c.l.b16 %v4029
    %v4714 = vunpack.c.h.b16 %v4029
    %v4715 = vunpack.c.l.b16 %v4030
    %v4716 = vunpack.c.h.b16 %v4030
    %v4717 = vunpack.c.l.b16 %v4031
    %v4718 = vunpack.c.h.b16 %v4031
    %v4719 = vunpack.c.l.b16 %v4032
    %v4720 = vunpack.c.h.b16 %v4032
    %v4721 = vunpack.c.l.b16 %v4033
    %v4722 = vunpack.c.h.b16 %v4033
    %v4723 = vunpack.c.l.b16 %v4034
    %v4724 = vunpack.c.h.b16 %v4034
    %v4725 = vunpack.c.l.b16 %v4035
    %v4726 = vunpack.c.h.b16 %v4035
    %v4727 = vunpack.c.l.b16 %v4036
    %v4728 = vunpack.c.h.b16 %v4036
    %v4729 = vunpack.c.l.b16 %v4037
    %v4730 = vunpack.c.h.b16 %v4037
    %v4731 = vunpack.c.l.b16 %v4038
    %v4732 = vunpack.c.h.b16 %v4038
    %v4733 = vunpack.c.l.b16 %v4039
    %v4734 = vunpack.c.h.b16 %v4039
    %v4735 = vunpack.c.l.b16 %v4040
    %v4736 = vunpack.c.h.b16 %v4040
    %v4737 = vunpack.c.l.b16 %v4041
    %v4738 = vunpack.c.h.b16 %v4041
    %v4739 = vunpack.c.l.b16 %v4042
    %v4740 = vunpack.c.h.b16 %v4042
    %v4741 = vunpack.c.l.b16 %v4043
    %v4742 = vunpack.c.h.b16 %v4043
    %v4743 = vunpack.c.l.b16 %v4044
    %v4744 = vunpack.c.h.b16 %v4044
    %v4745 = vunpack.c.l.b16 %v4045
    %v4746 = vunpack.c.h.b16 %v4045
    %v4747 = vunpack.c.l.b16 %v4046
    %v4748 = vunpack.c.h.b16 %v4046
    %v4749 = vunpack.c.l.b16 %v4047
    %v4750 = vunpack.c.h.b16 %v4047
    %v4751 = vunpack.c.l.b16 %v4048
    %v4752 = vunpack.c.h.b16 %v4048
    %v4753 = vunpack.c.l.b16 %v4049
    %v4754 = vunpack.c.h.b16 %v4049
    %v4755 = vunpack.c.l.b16 %v4050
    %v4756 = vunpack.c.h.b16 %v4050
    %v4757 = vunpack.c.l.b16 %v4051
    %v4758 = vunpack.c.h.b16 %v4051
    %v4759 = vunpack.c.l.b16 %v4052
    %v4760 = vunpack.c.h.b16 %v4052
    %v4761 = vunpack.c.l.b16 %v4053
    %v4762 = vunpack.c.h.b16 %v4053
    %v4763 = vunpack.c.l.b16 %v4054
    %v4764 = vunpack.c.h.b16 %v4054
    %v4765 = vunpack.c.l.b16 %v4055
    %v4766 = vunpack.c.h.b16 %v4055
    %v4767 = vunpack.c.l.b16 %v4056
    %v4768 = vunpack.c.h.b16 %v4056
    %v4769 = vunpack.c.l.b16 %v4057
    %v4770 = vunpack.c.h.b16 %v4057
    %v4771 = vunpack.c.l.b16 %v4058
    %v4772 = vunpack.c.h.b16 %v4058
    %v4773 = vunpack.c.l.b16 %v4059
    %v4774 = vunpack.c.h.b16 %v4059
    %v4775 = vunpack.c.l.b16 %v4060
    %v4776 = vunpack.c.h.b16 %v4060
    %v4777 = vunpack.c.l.b16 %v4061
    %v4778 = vunpack.c.h.b16 %v4061
    %v4779 = vunpack.c.l.b16 %v4062
    %v4780 = vunpack.c.h.b16 %v4062
    %v4781 = vunpack.c.l.b16 %v4063
    %v4782 = vunpack.c.h.b16 %v4063
    %v4783 = vunpack.c.l.b16 %v4064
    %v4784 = vunpack.c.h.b16 %v4064
    %v4785 = vpack.c.b16 %v4311, %v4305
    %v4786 = vpack.c.b16 %v4312, %v4306
    %v4787 = vpack.c.b16 %v4313, %v4307
    %v4788 = vpack.c.b16 %v4314, %v4308
    %v4789 = vpack.c.b16 %v4315, %v4309
    %v4790 = vpack.c.b16 %v4316, %v4310
    %v4791 = vpack.c.b16 %v4323, %v4317
    %v4792 = vpack.c.b16 %v4324, %v4318
    %v4793 = vpack.c.b16 %v4325, %v4319
    %v4794 = vpack.c.b16 %v4326, %v4320
    %v4795 = vpack.c.b16 %v4327, %v4321
    %v4796 = vpack.c.b16 %v4328, %v4322
    %v4797 = vpack.c.b16 %v4335, %v4329
    %v4798 = vpack.c.b16 %v4336, %v4330
    %v4799 = vpack.c.b16 %v4337, %v4331
    %v4800 = vpack.c.b16 %v4338, %v4332
    %v4801 = vpack.c.b16 %v4339, %v4333
    %v4802 = vpack.c.b16 %v4340, %v4334
    %v4803 = vpack.c.b16 %v4347, %v4341
    %v4804 = vpack.c.b16 %v4348, %v4342
    %v4805 = vpack.c.b16 %v4349, %v4343
    %v4806 = vpack.c.b16 %v4350, %v4344
    %v4807 = vpack.c.b16 %v4351, %v4345
    %v4808 = vpack.c.b16 %v4352, %v4346
    %v4809 = vpack.c.b16 %v4359, %v4353
    %v4810 = vpack.c.b16 %v4360, %v4354
    %v4811 = vpack.c.b16 %v4361, %v4355
    %v4812 = vpack.c.b16 %v4362, %v4356
    %v4813 = vpack.c.b16 %v4363, %v4357
    %v4814 = vpack.c.b16 %v4364, %v4358
    %v4815 = vpack.c.b16 %v4371, %v4365
    %v4816 = vpack.c.b16 %v4372, %v4366
    %v4817 = vpack.c.b16 %v4373, %v4367
    %v4818 = vpack.c.b16 %v4374, %v4368
    %v4819 = vpack.c.b16 %v4375, %v4369
    %v4820 = vpack.c.b16 %v4376, %v4370
    %v4821 = vpack.c.b16 %v4383, %v4377
    %v4822 = vpack.c.b16 %v4384, %v4378
    %v4823 = vpack.c.b16 %v4385, %v4379
    %v4824 = vpack.c.b16 %v4386, %v4380
    %v4825 = vpack.c.b16 %v4387, %v4381
    %v4826 = vpack.c.b16 %v4388, %v4382
    %v4827 = vpack.c.b16 %v4395, %v4389
    %v4828 = vpack.c.b16 %v4396, %v4390
    %v4829 = vpack.c.b16 %v4397, %v4391
    %v4830 = vpack.c.b16 %v4398, %v4392
    %v4831 = vpack.c.b16 %v4399, %v4393
    %v4832 = vpack.c.b16 %v4400, %v4394
    %v4833 = vpack.c.b16 %v4407, %v4401
    %v4834 = vpack.c.b16 %v4408, %v4402
    %v4835 = vpack.c.b16 %v4409, %v4403
    %v4836 = vpack.c.b16 %v4410, %v4404
    %v4837 = vpack.c.b16 %v4411, %v4405
    %v4838 = vpack.c.b16 %v4412, %v4406
    %v4839 = vpack.c.b16 %v4419, %v4413
    %v4840 = vpack.c.b16 %v4420, %v4414
    %v4841 = vpack.c.b16 %v4421, %v4415
    %v4842 = vpack.c.b16 %v4422, %v4416
    %v4843 = vpack.c.b16 %v4423, %v4417
    %v4844 = vpack.c.b16 %v4424, %v4418
    %v4845 = vpack.c.b16 %v4431, %v4425
    %v4846 = vpack.c.b16 %v4432, %v4426
    %v4847 = vpack.c.b16 %v4433, %v4427
    %v4848 = vpack.c.b16 %v4434, %v4428
    %v4849 = vpack.c.b16 %v4435, %v4429
    %v4850 = vpack.c.b16 %v4436, %v4430
    %v4851 = vpack.c.b16 %v4443, %v4437
    %v4852 = vpack.c.b16 %v4444, %v4438
    %v4853 = vpack.c.b16 %v4445, %v4439
    %v4854 = vpack.c.b16 %v4446, %v4440
    %v4855 = vpack.c.b16 %v4447, %v4441
    %v4856 = vpack.c.b16 %v4448, %v4442
    %v4857 = vpack.c.b16 %v4455, %v4449
    %v4858 = vpack.c.b16 %v4456, %v4450
    %v4859 = vpack.c.b16 %v4457, %v4451
    %v4860 = vpack.c.b16 %v4458, %v4452
    %v4861 = vpack.c.b16 %v4459, %v4453
    %v4862 = vpack.c.b16 %v4460, %v4454
    %v4863 = vpack.c.b16 %v4467, %v4461
    %v4864 = vpack.c.b16 %v4468, %v4462
    %v4865 = vpack.c.b16 %v4469, %v4463
    %v4866 = vpack.c.b16 %v4470, %v4464
    %v4867 = vpack.c.b16 %v4471, %v4465
    %v4868 = vpack.c.b16 %v4472, %v4466
    %v4869 = vpack.c.b16 %v4479, %v4473
    %v4870 = vpack.c.b16 %v4480, %v4474
    %v4871 = vpack.c.b16 %v4481, %v4475
    %v4872 = vpack.c.b16 %v4482, %v4476
    %v4873 = vpack.c.b16 %v4483, %v4477
    %v4874 = vpack.c.b16 %v4484, %v4478
    %v4875 = vpack.c.b16 %v4491, %v4485
    %v4876 = vpack.c.b16 %v4492, %v4486
    %v4877 = vpack.c.b16 %v4493, %v4487
    %v4878 = vpack.c.b16 %v4494, %v4488
    %v4879 = vpack.c.b16 %v4495, %v4489
    %v4880 = vpack.c.b16 %v4496, %v4490
    %v4881 = vpack.c.b16 %v4503, %v4497
    %v4882 = vpack.c.b16 %v4504, %v4498
    %v4883 = vpack.c.b16 %v4505, %v4499
    %v4884 = vpack.c.b16 %v4506, %v4500
    %v4885 = vpack.c.b16 %v4507, %v4501
    %v4886 = vpack.c.b16 %v4508, %v4502
    %v4887 = vpack.c.b16 %v4515, %v4509
    %v4888 = vpack.c.b16 %v4516, %v4510
    %v4889 = vpack.c.b16 %v4517, %v4511
    %v4890 = vpack.c.b16 %v4518, %v4512
    %v4891 = vpack.c.b16 %v4519, %v4513
    %v4892 = vpack.c.b16 %v4520, %v4514
    %v4893 = vpack.c.b16 %v4527, %v4521
    %v4894 = vpack.c.b16 %v4528, %v4522
    %v4895 = vpack.c.b16 %v4529, %v4523
    %v4896 = vpack.c.b16 %v4530, %v4524
    %v4897 = vpack.c.b16 %v4531, %v4525
    %v4898 = vpack.c.b16 %v4532, %v4526
    %v4899 = vpack.c.b16 %v4539, %v4533
    %v4900 = vpack.c.b16 %v4540, %v4534
    %v4901 = vpack.c.b16 %v4541, %v4535
    %v4902 = vpack.c.b16 %v4542, %v4536
    %v4903 = vpack.c.b16 %v4543, %v4537
    %v4904 = vpack.c.b16 %v4544, %v4538
    %v4905 = vpack.c.b16 %v4551, %v4545
    %v4906 = vpack.c.b16 %v4552, %v4546
    %v4907 = vpack.c.b16 %v4553, %v4547
    %v4908 = vpack.c.b16 %v4554, %v4548
    %v4909 = vpack.c.b16 %v4555, %v4549
    %v4910 = vpack.c.b16 %v4556, %v4550
    %v4911 = vpack.c.b16 %v4563, %v4557
    %v4912 = vpack.c.b16 %v4564, %v4558
    %v4913 = vpack.c.b16 %v4565, %v4559
    %v4914 = vpack.c.b16 %v4566, %v4560
    %v4915 = vpack.c.b16 %v4567, %v4561
    %v4916 = vpack.c.b16 %v4568, %v4562
    %v4917 = vpack.c.b16 %v4575, %v4569
    %v4918 = vpack.c.b16 %v4576, %v4570
    %v4919 = vpack.c.b16 %v4577, %v4571
    %v4920 = vpack.c.b16 %v4578, %v4572
    %v4921 = vpack.c.b16 %v4579, %v4573
    %v4922 = vpack.c.b16 %v4580, %v4574
    %v4923 = vpack.c.b16 %v4587, %v4581
    %v4924 = vpack.c.b16 %v4588, %v4582
    %v4925 = vpack.c.b16 %v4589, %v4583
    %v4926 = vpack.c.b16 %v4590, %v4584
    %v4927 = vpack.c.b16 %v4591, %v4585
    %v4928 = vpack.c.b16 %v4592, %v4586
    %v4929 = vpack.c.b16 %v4599, %v4593
    %v4930 = vpack.c.b16 %v4600, %v4594
    %v4931 = vpack.c.b16 %v4601, %v4595
    %v4932 = vpack.c.b16 %v4602, %v4596
    %v4933 = vpack.c.b16 %v4603, %v4597
    %v4934 = vpack.c.b16 %v4604, %v4598
    %v4935 = vpack.c.b16 %v4611, %v4605
    %v4936 = vpack.c.b16 %v4612, %v4606
    %v4937 = vpack.c.b16 %v4613, %v4607
    %v4938 = vpack.c.b16 %v4614, %v4608
    %v4939 = vpack.c.b16 %v4615, %v4609
    %v4940 = vpack.c.b16 %v4616, %v4610
    %v4941 = vpack.c.b16 %v4623, %v4617
    %v4942 = vpack.c.b16 %v4624, %v4618
    %v4943 = vpack.c.b16 %v4625, %v4619
    %v4944 = vpack.c.b16 %v4626, %v4620
    %v4945 = vpack.c.b16 %v4627, %v4621
    %v4946 = vpack.c.b16 %v4628, %v4622
    %v4947 = vpack.c.b16 %v4635, %v4629
    %v4948 = vpack.c.b16 %v4636, %v4630
    %v4949 = vpack.c.b16 %v4637, %v4631
    %v4950 = vpack.c.b16 %v4638, %v4632
    %v4951 = vpack.c.b16 %v4639, %v4633
    %v4952 = vpack.c.b16 %v4640, %v4634
    %v4953 = vpack.c.b16 %v4647, %v4641
    %v4954 = vpack.c.b16 %v4648, %v4642
    %v4955 = vpack.c.b16 %v4649, %v4643
    %v4956 = vpack.c.b16 %v4650, %v4644
    %v4957 = vpack.c.b16 %v4651, %v4645
    %v4958 = vpack.c.b16 %v4652, %v4646
    %v4959 = vpack.c.b16 %v4659, %v4653
    %v4960 = vpack.c.b16 %v4660, %v4654
    %v4961 = vpack.c.b16 %v4661, %v4655
    %v4962 = vpack.c.b16 %v4662, %v4656
    %v4963 = vpack.c.b16 %v4663, %v4657
    %v4964 = vpack.c.b16 %v4664, %v4658
    %v4965 = vpack.c.b16 %v4671, %v4665
    %v4966 = vpack.c.b16 %v4672, %v4666
    %v4967 = vpack.c.b16 %v4673, %v4667
    %v4968 = vpack.c.b16 %v4674, %v4668
    %v4969 = vpack.c.b16 %v4675, %v4669
    %v4970 = vpack.c.b16 %v4676, %v4670
    %v4971 = vpack.c.b16 %v4683, %v4677
    %v4972 = vpack.c.b16 %v4684, %v4678
    %v4973 = vpack.c.b16 %v4685, %v4679
    %v4974 = vpack.c.b16 %v4686, %v4680
    %v4975 = vpack.c.b16 %v4687, %v4681
    %v4976 = vpack.c.b16 %v4688, %v4682
    %v4977 = vpack.c.b16 %v4695, %v4689
    %v4978 = vpack.c.b16 %v4696, %v4690
    %v4979 = vpack.c.b16 %v4697, %v4691
    %v4980 = vpack.c.b16 %v4698, %v4692
    %v4981 = vpack.c.b16 %v4699, %v4693
    %v4982 = vpack.c.b16 %v4700, %v4694
    %v4983 = vpack.c.b16 %v4707, %v4701
    %v4984 = vpack.c.b16 %v4708, %v4702
    %v4985 = vpack.c.b16 %v4709, %v4703
    %v4986 = vpack.c.b16 %v4710, %v4704
    %v4987 = vpack.c.b16 %v4711, %v4705
    %v4988 = vpack.c.b16 %v4712, %v4706
    %v4989 = vpack.c.b16 %v4719, %v4713
    %v4990 = vpack.c.b16 %v4720, %v4714
    %v4991 = vpack.c.b16 %v4721, %v4715
    %v4992 = vpack.c.b16 %v4722, %v4716
    %v4993 = vpack.c.b16 %v4723, %v4717
    %v4994 = vpack.c.b16 %v4724, %v4718
    %v4995 = vpack.c.b16 %v4731, %v4725
    %v4996 = vpack.c.b16 %v4732, %v4726
    %v4997 = vpack.c.b16 %v4733, %v4727
    %v4998 = vpack.c.b16 %v4734, %v4728
    %v4999 = vpack.c.b16 %v4735, %v4729
    %v5000 = vpack.c.b16 %v4736, %v4730
    %v5001 = vpack.c.b16 %v4743, %v4737
    %v5002 = vpack.c.b16 %v4744, %v4738
    %v5003 = vpack.c.b16 %v4745, %v4739
    %v5004 = vpack.c.b16 %v4746, %v4740
    %v5005 = vpack.c.b16 %v4747, %v4741
    %v5006 = vpack.c.b16 %v4748, %v4742
    %v5007 = vpack.c.b16 %v4755, %v4749
    %v5008 = vpack.c.b16 %v4756, %v4750
    %v5009 = vpack.c.b16 %v4757, %v4751
    %v5010 = vpack.c.b16 %v4758, %v4752
    %v5011 = vpack.c.b16 %v4759, %v4753
    %v5012 = vpack.c.b16 %v4760, %v4754
    %v5013 = vpack.c.b16 %v4767, %v4761
    %v5014 = vpack.c.b16 %v4768, %v4762
    %v5015 = vpack.c.b16 %v4769, %v4763
    %v5016 = vpack.c.b16 %v4770, %v4764
    %v5017 = vpack.c.b16 %v4771, %v4765
    %v5018 = vpack.c.b16 %v4772, %v4766
    %v5019 = vpack.c.b16 %v4779, %v4773
    %v5020 = vpack.c.b16 %v4780, %v4774
    %v5021 = vpack.c.b16 %v4781, %v4775
    %v5022 = vpack.c.b16 %v4782, %v4776
    %v5023 = vpack.c.b16 %v4783, %v4777
    %v5024 = vpack.c.b16 %v4784, %v4778
    %5265 = vmatprep.subr.bf16.mxu0 %v4786
    %5266 = vmatpush1.bf16.msra.mxu0 %v4785
    %5267 = vmatprep.subr.bf16.mxu0 %v4792
    %5268 = vmatpush1.bf16.msra.mxu0 %v4791
    %5269 = vmatprep.subr.bf16.mxu0 %v4798
    %5270 = vmatpush1.bf16.msra.mxu0 %v4797
    %5271 = vmatprep.subr.bf16.mxu0 %v4804
    %5272 = vmatpush1.bf16.msra.mxu0 %v4803
    %5273 = vmatprep.subr.bf16.mxu0 %v4810
    %5274 = vmatpush1.bf16.msra.mxu0 %v4809
    %5275 = vmatprep.subr.bf16.mxu0 %v4816
    %5276 = vmatpush1.bf16.msra.mxu0 %v4815
    %5277 = vmatprep.subr.bf16.mxu0 %v4822
    %5278 = vmatpush1.bf16.msra.mxu0 %v4821
    %5279 = vmatprep.subr.bf16.mxu0 %v4828
    %5280 = vmatpush1.bf16.msra.mxu0 %v4827
    %5281 = vmatprep.subr.bf16.mxu0 %v4834
    %5282 = vmatpush1.bf16.msra.mxu0 %v4833
    %5283 = vmatprep.subr.bf16.mxu0 %v4840
    %5284 = vmatpush1.bf16.msra.mxu0 %v4839
    %5285 = vmatprep.subr.bf16.mxu0 %v4846
    %5286 = vmatpush1.bf16.msra.mxu0 %v4845
    %5287 = vmatprep.subr.bf16.mxu0 %v4852
    %5288 = vmatpush1.bf16.msra.mxu0 %v4851
    %5289 = vmatprep.subr.bf16.mxu0 %v4858
    %5290 = vmatpush1.bf16.msra.mxu0 %v4857
    %5291 = vmatprep.subr.bf16.mxu0 %v4864
    %5292 = vmatpush1.bf16.msra.mxu0 %v4863
    %5293 = vmatprep.subr.bf16.mxu0 %v4870
    %5294 = vmatpush1.bf16.msra.mxu0 %v4869
    %5295 = vmatprep.subr.bf16.mxu0 %v4876
    %5296 = vmatpush1.bf16.msra.mxu0 %v4875
    %5297 = vmatprep.mubr.bf16.mxu0 %v3821
    %5298 = vmatmul.mubr.bf16.gmra.mrb[0].mxu0 %v3820
    %v5299 = vpop.f32.mrb[0].mxu0
    %v5300 = vadd.f32 0.0, %v5299
    %v5301 = vpop.f32.mrb[0].mxu0
    %v5302 = vadd.f32 0.0, %v5301
    %v5303 = vpop.f32.mrb[0].mxu0
    %v5304 = vpop.f32.mrb[0].mxu0
    %5305 = vdwg.mxu0
    %5306 = vmatprep.subr.bf16.mxu0 %v4882
    %5307 = vmatpush1.bf16.msra.mxu0 %v4881
    %5308 = vmatprep.subr.bf16.mxu0 %v4888
    %5309 = vmatpush1.bf16.msra.mxu0 %v4887
    %5310 = vmatprep.subr.bf16.mxu0 %v4894
    %5311 = vmatpush1.bf16.msra.mxu0 %v4893
    %5312 = vmatprep.subr.bf16.mxu0 %v4900
    %5313 = vmatpush1.bf16.msra.mxu0 %v4899
    %5314 = vmatprep.subr.bf16.mxu0 %v4906
    %5315 = vmatpush1.bf16.msra.mxu0 %v4905
    %5316 = vmatprep.subr.bf16.mxu0 %v4912
    %5317 = vmatpush1.bf16.msra.mxu0 %v4911
    %5318 = vmatprep.subr.bf16.mxu0 %v4918
    %5319 = vmatpush1.bf16.msra.mxu0 %v4917
    %5320 = vmatprep.subr.bf16.mxu0 %v4924
    %5321 = vmatpush1.bf16.msra.mxu0 %v4923
    %5322 = vmatprep.subr.bf16.mxu0 %v4930
    %5323 = vmatpush1.bf16.msra.mxu0 %v4929
    %5324 = vmatprep.subr.bf16.mxu0 %v4936
    %5325 = vmatpush1.bf16.msra.mxu0 %v4935
    %5326 = vmatprep.subr.bf16.mxu0 %v4942
    %5327 = vmatpush1.bf16.msra.mxu0 %v4941
    %5328 = vmatprep.subr.bf16.mxu0 %v4948
    %5329 = vmatpush1.bf16.msra.mxu0 %v4947
    %5330 = vmatprep.subr.bf16.mxu0 %v4954
    %5331 = vmatpush1.bf16.msra.mxu0 %v4953
    %5332 = vmatprep.subr.bf16.mxu0 %v4960
    %5333 = vmatpush1.bf16.msra.mxu0 %v4959
    %5334 = vmatprep.subr.bf16.mxu0 %v4966
    %5335 = vmatpush1.bf16.msra.mxu0 %v4965
    %5336 = vmatprep.subr.bf16.mxu0 %v4972
    %5337 = vmatpush1.bf16.msra.mxu0 %v4971
    %5338 = vmatprep.mubr.bf16.mxu0 %v3823
    %5339 = vmatmul.mubr.bf16.gmra.mrb[0].mxu0 %v3822
    %v5340 = vpop.f32.mrb[0].mxu0
    %v5341 = vadd.f32 %v5300, %v5340
    %v5342 = vpop.f32.mrb[0].mxu0
    %v5343 = vadd.f32 %v5302, %v5342
    %v5344 = vpop.f32.mrb[0].mxu0
    %v5345 = vpop.f32.mrb[0].mxu0
    %5346 = vdwg.mxu0
    %5347 = vmatprep.subr.bf16.mxu0 %v4978
    %5348 = vmatpush1.bf16.msra.mxu0 %v4977
    %5349 = vmatprep.subr.bf16.mxu0 %v4984
    %5350 = vmatpush1.bf16.msra.mxu0 %v4983
    %5351 = vmatprep.subr.bf16.mxu0 %v4990
    %5352 = vmatpush1.bf16.msra.mxu0 %v4989
    %5353 = vmatprep.subr.bf16.mxu0 %v4996
    %5354 = vmatpush1.bf16.msra.mxu0 %v4995
    %5355 = vmatprep.subr.bf16.mxu0 %v5002
    %5356 = vmatpush1.bf16.msra.mxu0 %v5001
    %5357 = vmatprep.subr.bf16.mxu0 %v5008
    %5358 = vmatpush1.bf16.msra.mxu0 %v5007
    %5359 = vmatprep.subr.bf16.mxu0 %v5014
    %5360 = vmatpush1.bf16.msra.mxu0 %v5013
    %5361 = vmatprep.subr.bf16.mxu0 %v5020
    %5362 = vmatpush1.bf16.msra.mxu0 %v5019
    %5363 = vmatprep.subr.bf16.mxu0 0
    %5364 = vmatpush1.bf16.msra.mxu0 0
    %5365 = vmatprep.subr.bf16.mxu0 0
    %5366 = vmatpush1.bf16.msra.mxu0 0
    %5367 = vmatprep.subr.bf16.mxu0 0
    %5368 = vmatpush1.bf16.msra.mxu0 0
    %5369 = vmatprep.subr.bf16.mxu0 0
    %5370 = vmatpush1.bf16.msra.mxu0 0
    %5371 = vmatprep.subr.bf16.mxu0 0
    %5372 = vmatpush1.bf16.msra.mxu0 0
    %5373 = vmatprep.subr.bf16.mxu0 0
    %5374 = vmatpush1.bf16.msra.mxu0 0
    %5375 = vmatprep.subr.bf16.mxu0 0
    %5376 = vmatpush1.bf16.msra.mxu0 0
    %5377 = vmatprep.subr.bf16.mxu0 0
    %5378 = vmatpush1.bf16.msra.mxu0 0
    %5379 = vmatprep.mubr.bf16.mxu0 0
    %5380 = vmatmul.mubr.bf16.gmra.mrb[0].mxu0 %v3824
    %v5381 = vpop.f32.mrb[0].mxu0
    %v5382 = vadd.f32 %v5341, %v5381
    %v5383 = vpop.f32.mrb[0].mxu0
    %v5384 = vadd.f32 %v5343, %v5383
    %v5385 = vpop.f32.mrb[0].mxu0
    %v5386 = vpop.f32.mrb[0].mxu0
    %5387 = vdwg.mxu0
    %5388 = vmatprep.subr.bf16.mxu0 %v4788
    %5389 = vmatpush1.bf16.msra.mxu0 %v4787
    %5390 = vmatprep.subr.bf16.mxu0 %v4794
    %5391 = vmatpush1.bf16.msra.mxu0 %v4793
    %5392 = vmatprep.subr.bf16.mxu0 %v4800
    %5393 = vmatpush1.bf16.msra.mxu0 %v4799
    %5394 = vmatprep.subr.bf16.mxu0 %v4806
    %5395 = vmatpush1.bf16.msra.mxu0 %v4805
    %5396 = vmatprep.subr.bf16.mxu0 %v4812
    %5397 = vmatpush1.bf16.msra.mxu0 %v4811
    %5398 = vmatprep.subr.bf16.mxu0 %v4818
    %5399 = vmatpush1.bf16.msra.mxu0 %v4817
    %5400 = vmatprep.subr.bf16.mxu0 %v4824
    %5401 = vmatpush1.bf16.msra.mxu0 %v4823
    %5402 = vmatprep.subr.bf16.mxu0 %v4830
    %5403 = vmatpush1.bf16.msra.mxu0 %v4829
    %5404 = vmatprep.subr.bf16.mxu0 %v4836
    %5405 = vmatpush1.bf16.msra.mxu0 %v4835
    %5406 = vmatprep.subr.bf16.mxu0 %v4842
    %5407 = vmatpush1.bf16.msra.mxu0 %v4841
    %5408 = vmatprep.subr.bf16.mxu0 %v4848
    %5409 = vmatpush1.bf16.msra.mxu0 %v4847
    %5410 = vmatprep.subr.bf16.mxu0 %v4854
    %5411 = vmatpush1.bf16.msra.mxu0 %v4853
    %5412 = vmatprep.subr.bf16.mxu0 %v4860
    %5413 = vmatpush1.bf16.msra.mxu0 %v4859
    %5414 = vmatprep.subr.bf16.mxu0 %v4866
    %5415 = vmatpush1.bf16.msra.mxu0 %v4865
    %5416 = vmatprep.subr.bf16.mxu0 %v4872
    %5417 = vmatpush1.bf16.msra.mxu0 %v4871
    %5418 = vmatprep.subr.bf16.mxu0 %v4878
    %5419 = vmatpush1.bf16.msra.mxu0 %v4877
    %5420 = vmatprep.mubr.bf16.mxu0 %v3821
    %5421 = vmatmul.mubr.bf16.gmra.mrb[0].mxu0 %v3820
    %v5422 = vpop.f32.mrb[0].mxu0
    %v5423 = vadd.f32 0.0, %v5422
    %v5424 = vpop.f32.mrb[0].mxu0
    %v5425 = vadd.f32 0.0, %v5424
    %v5426 = vpop.f32.mrb[0].mxu0
    %v5427 = vpop.f32.mrb[0].mxu0
    %5428 = vdwg.mxu0
    %5429 = vmatprep.subr.bf16.mxu0 %v4884
    %5430 = vmatpush1.bf16.msra.mxu0 %v4883
    %5431 = vmatprep.subr.bf16.mxu0 %v4890
    %5432 = vmatpush1.bf16.msra.mxu0 %v4889
    %5433 = vmatprep.subr.bf16.mxu0 %v4896
    %5434 = vmatpush1.bf16.msra.mxu0 %v4895
    %5435 = vmatprep.subr.bf16.mxu0 %v4902
    %5436 = vmatpush1.bf16.msra.mxu0 %v4901
    %5437 = vmatprep.subr.bf16.mxu0 %v4908
    %5438 = vmatpush1.bf16.msra.mxu0 %v4907
    %5439 = vmatprep.subr.bf16.mxu0 %v4914
    %5440 = vmatpush1.bf16.msra.mxu0 %v4913
    %5441 = vmatprep.subr.bf16.mxu0 %v4920
    %5442 = vmatpush1.bf16.msra.mxu0 %v4919
    %5443 = vmatprep.subr.bf16.mxu0 %v4926
    %5444 = vmatpush1.bf16.msra.mxu0 %v4925
    %5445 = vmatprep.subr.bf16.mxu0 %v4932
    %5446 = vmatpush1.bf16.msra.mxu0 %v4931
    %5447 = vmatprep.subr.bf16.mxu0 %v4938
    %5448 = vmatpush1.bf16.msra.mxu0 %v4937
    %5449 = vmatprep.subr.bf16.mxu0 %v4944
    %5450 = vmatpush1.bf16.msra.mxu0 %v4943
    %5451 = vmatprep.subr.bf16.mxu0 %v4950
    %5452 = vmatpush1.bf16.msra.mxu0 %v4949
    %5453 = vmatprep.subr.bf16.mxu0 %v4956
    %5454 = vmatpush1.bf16.msra.mxu0 %v4955
    %5455 = vmatprep.subr.bf16.mxu0 %v4962
    %5456 = vmatpush1.bf16.msra.mxu0 %v4961
    %5457 = vmatprep.subr.bf16.mxu0 %v4968
    %5458 = vmatpush1.bf16.msra.mxu0 %v4967
    %5459 = vmatprep.subr.bf16.mxu0 %v4974
    %5460 = vmatpush1.bf16.msra.mxu0 %v4973
    %5461 = vmatprep.mubr.bf16.mxu0 %v3823
    %5462 = vmatmul.mubr.bf16.gmra.mrb[0].mxu0 %v3822
    %v5463 = vpop.f32.mrb[0].mxu0
    %v5464 = vadd.f32 %v5423, %v5463
    %v5465 = vpop.f32.mrb[0].mxu0
    %v5466 = vadd.f32 %v5425, %v5465
    %v5467 = vpop.f32.mrb[0].mxu0
    %v5468 = vpop.f32.mrb[0].mxu0
    %5469 = vdwg.mxu0
    %5470 = vmatprep.subr.bf16.mxu0 %v4980
    %5471 = vmatpush1.bf16.msra.mxu0 %v4979
    %5472 = vmatprep.subr.bf16.mxu0 %v4986
    %5473 = vmatpush1.bf16.msra.mxu0 %v4985
    %5474 = vmatprep.subr.bf16.mxu0 %v4992
    %5475 = vmatpush1.bf16.msra.mxu0 %v4991
    %5476 = vmatprep.subr.bf16.mxu0 %v4998
    %5477 = vmatpush1.bf16.msra.mxu0 %v4997
    %5478 = vmatprep.subr.bf16.mxu0 %v5004
    %5479 = vmatpush1.bf16.msra.mxu0 %v5003
    %5480 = vmatprep.subr.bf16.mxu0 %v5010
    %5481 = vmatpush1.bf16.msra.mxu0 %v5009
    %5482 = vmatprep.subr.bf16.mxu0 %v5016
    %5483 = vmatpush1.bf16.msra.mxu0 %v5015
    %5484 = vmatprep.subr.bf16.mxu0 %v5022
    %5485 = vmatpush1.bf16.msra.mxu0 %v5021
    %5486 = vmatprep.subr.bf16.mxu0 0
    %5487 = vmatpush1.bf16.msra.mxu0 0
    %5488 = vmatprep.subr.bf16.mxu0 0
    %5489 = vmatpush1.bf16.msra.mxu0 0
    %5490 = vmatprep.subr.bf16.mxu0 0
    %5491 = vmatpush1.bf16.msra.mxu0 0
    %5492 = vmatprep.subr.bf16.mxu0 0
    %5493 = vmatpush1.bf16.msra.mxu0 0
    %5494 = vmatprep.subr.bf16.mxu0 0
    %5495 = vmatpush1.bf16.msra.mxu0 0
    %5496 = vmatprep.subr.bf16.mxu0 0
    %5497 = vmatpush1.bf16.msra.mxu0 0
    %5498 = vmatprep.subr.bf16.mxu0 0
    %5499 = vmatpush1.bf16.msra.mxu0 0
    %5500 = vmatprep.subr.bf16.mxu0 0
    %5501 = vmatpush1.bf16.msra.mxu0 0
    %5502 = vmatprep.mubr.bf16.mxu0 0
    %5503 = vmatmul.mubr.bf16.gmra.mrb[0].mxu0 %v3824
    %v5504 = vpop.f32.mrb[0].mxu0
    %v5505 = vadd.f32 %v5464, %v5504
    %v5506 = vpop.f32.mrb[0].mxu0
    %v5507 = vadd.f32 %v5466, %v5506
    %v5508 = vpop.f32.mrb[0].mxu0
    %v5509 = vpop.f32.mrb[0].mxu0
    %5510 = vdwg.mxu0
    %5511 = vmatprep.subr.bf16.mxu0 %v4790
    %5512 = vmatpush1.bf16.msra.mxu0 %v4789
    %5513 = vmatprep.subr.bf16.mxu0 %v4796
    %5514 = vmatpush1.bf16.msra.mxu0 %v4795
    %5515 = vmatprep.subr.bf16.mxu0 %v4802
    %5516 = vmatpush1.bf16.msra.mxu0 %v4801
    %5517 = vmatprep.subr.bf16.mxu0 %v4808
    %5518 = vmatpush1.bf16.msra.mxu0 %v4807
    %5519 = vmatprep.subr.bf16.mxu0 %v4814
    %5520 = vmatpush1.bf16.msra.mxu0 %v4813
    %5521 = vmatprep.subr.bf16.mxu0 %v4820
    %5522 = vmatpush1.bf16.msra.mxu0 %v4819
    %5523 = vmatprep.subr.bf16.mxu0 %v4826
    %5524 = vmatpush1.bf16.msra.mxu0 %v4825
    %5525 = vmatprep.subr.bf16.mxu0 %v4832
    %5526 = vmatpush1.bf16.msra.mxu0 %v4831
    %5527 = vmatprep.subr.bf16.mxu0 %v4838
    %5528 = vmatpush1.bf16.msra.mxu0 %v4837
    %5529 = vmatprep.subr.bf16.mxu0 %v4844
    %5530 = vmatpush1.bf16.msra.mxu0 %v4843
    %5531 = vmatprep.subr.bf16.mxu0 %v4850
    %5532 = vmatpush1.bf16.msra.mxu0 %v4849
    %5533 = vmatprep.subr.bf16.mxu0 %v4856
    %5534 = vmatpush1.bf16.msra.mxu0 %v4855
    %5535 = vmatprep.subr.bf16.mxu0 %v4862
    %5536 = vmatpush1.bf16.msra.mxu0 %v4861
    %5537 = vmatprep.subr.bf16.mxu0 %v4868
    %5538 = vmatpush1.bf16.msra.mxu0 %v4867
    %5539 = vmatprep.subr.bf16.mxu0 %v4874
    %5540 = vmatpush1.bf16.msra.mxu0 %v4873
    %5541 = vmatprep.subr.bf16.mxu0 %v4880
    %5542 = vmatpush1.bf16.msra.mxu0 %v4879
    %5543 = vmatprep.mubr.bf16.mxu0 %v3821
    %5544 = vmatmul.mubr.bf16.gmra.mrb[0].mxu0 %v3820
    %v5545 = vpop.f32.mrb[0].mxu0
    %v5546 = vadd.f32 0.0, %v5545
    %v5547 = vpop.f32.mrb[0].mxu0
    %v5548 = vadd.f32 0.0, %v5547
    %v5549 = vpop.f32.mrb[0].mxu0
    %v5550 = vpop.f32.mrb[0].mxu0
    %5551 = vdwg.mxu0
    %5552 = vmatprep.subr.bf16.mxu0 %v4886
    %5553 = vmatpush1.bf16.msra.mxu0 %v4885
    %5554 = vmatprep.subr.bf16.mxu0 %v4892
    %5555 = vmatpush1.bf16.msra.mxu0 %v4891
    %5556 = vmatprep.subr.bf16.mxu0 %v4898
    %5557 = vmatpush1.bf16.msra.mxu0 %v4897
    %5558 = vmatprep.subr.bf16.mxu0 %v4904
    %5559 = vmatpush1.bf16.msra.mxu0 %v4903
    %5560 = vmatprep.subr.bf16.mxu0 %v4910
    %5561 = vmatpush1.bf16.msra.mxu0 %v4909
    %5562 = vmatprep.subr.bf16.mxu0 %v4916
    %5563 = vmatpush1.bf16.msra.mxu0 %v4915
    %5564 = vmatprep.subr.bf16.mxu0 %v4922
    %5565 = vmatpush1.bf16.msra.mxu0 %v4921
    %5566 = vmatprep.subr.bf16.mxu0 %v4928
    %5567 = vmatpush1.bf16.msra.mxu0 %v4927
    %5568 = vmatprep.subr.bf16.mxu0 %v4934
    %5569 = vmatpush1.bf16.msra.mxu0 %v4933
    %5570 = vmatprep.subr.bf16.mxu0 %v4940
    %5571 = vmatpush1.bf16.msra.mxu0 %v4939
    %5572 = vmatprep.subr.bf16.mxu0 %v4946
    %5573 = vmatpush1.bf16.msra.mxu0 %v4945
    %5574 = vmatprep.subr.bf16.mxu0 %v4952
    %5575 = vmatpush1.bf16.msra.mxu0 %v4951
    %5576 = vmatprep.subr.bf16.mxu0 %v4958
    %5577 = vmatpush1.bf16.msra.mxu0 %v4957
    %5578 = vmatprep.subr.bf16.mxu0 %v4964
    %5579 = vmatpush1.bf16.msra.mxu0 %v4963
    %5580 = vmatprep.subr.bf16.mxu0 %v4970
    %5581 = vmatpush1.bf16.msra.mxu0 %v4969
    %5582 = vmatprep.subr.bf16.mxu0 %v4976
    %5583 = vmatpush1.bf16.msra.mxu0 %v4975
    %5584 = vmatprep.mubr.bf16.mxu0 %v3823
    %5585 = vmatmul.mubr.bf16.gmra.mrb[0].mxu0 %v3822
    %v5586 = vpop.f32.mrb[0].mxu0
    %v5587 = vadd.f32 %v5546, %v5586
    %v5588 = vpop.f32.mrb[0].mxu0
    %v5589 = vadd.f32 %v5548, %v5588
    %v5590 = vpop.f32.mrb[0].mxu0
    %v5591 = vpop.f32.mrb[0].mxu0
    %5592 = vdwg.mxu0
    %5593 = vmatprep.subr.bf16.mxu0 %v4982
    %5594 = vmatpush1.bf16.msra.mxu0 %v4981
    %5595 = vmatprep.subr.bf16.mxu0 %v4988
    %5596 = vmatpush1.bf16.msra.mxu0 %v4987
    %5597 = vmatprep.subr.bf16.mxu0 %v4994
    %5598 = vmatpush1.bf16.msra.mxu0 %v4993
    %5599 = vmatprep.subr.bf16.mxu0 %v5000
    %5600 = vmatpush1.bf16.msra.mxu0 %v4999
    %5601 = vmatprep.subr.bf16.mxu0 %v5006
    %5602 = vmatpush1.bf16.msra.mxu0 %v5005
    %5603 = vmatprep.subr.bf16.mxu0 %v5012
    %5604 = vmatpush1.bf16.msra.mxu0 %v5011
    %5605 = vmatprep.subr.bf16.mxu0 %v5018
    %5606 = vmatpush1.bf16.msra.mxu0 %v5017
    %5607 = vmatprep.subr.bf16.mxu0 %v5024
    %5608 = vmatpush1.bf16.msra.mxu0 %v5023
    %5609 = vmatprep.subr.bf16.mxu0 0
    %5610 = vmatpush1.bf16.msra.mxu0 0
    %5611 = vmatprep.subr.bf16.mxu0 0
    %5612 = vmatpush1.bf16.msra.mxu0 0
    %5613 = vmatprep.subr.bf16.mxu0 0
    %5614 = vmatpush1.bf16.msra.mxu0 0
    %5615 = vmatprep.subr.bf16.mxu0 0
    %5616 = vmatpush1.bf16.msra.mxu0 0
    %5617 = vmatprep.subr.bf16.mxu0 0
    %5618 = vmatpush1.bf16.msra.mxu0 0
    %5619 = vmatprep.subr.bf16.mxu0 0
    %5620 = vmatpush1.bf16.msra.mxu0 0
    %5621 = vmatprep.subr.bf16.mxu0 0
    %5622 = vmatpush1.bf16.msra.mxu0 0
    %5623 = vmatprep.subr.bf16.mxu0 0
    %5624 = vmatpush1.bf16.msra.mxu0 0
    %5625 = vmatprep.mubr.bf16.mxu0 0
    %5626 = vmatmul.mubr.bf16.gmra.mrb[0].mxu0 %v3824
    %v5627 = vpop.f32.mrb[0].mxu0
    %v5628 = vadd.f32 %v5587, %v5627
    %v5629 = vpop.f32.mrb[0].mxu0
    %v5630 = vadd.f32 %v5589, %v5629
    %v5631 = vpop.f32.mrb[0].mxu0
    %v5632 = vpop.f32.mrb[0].mxu0
    %5633 = vdwg.mxu0
    %v5634 = vpack.c.bf16 %v5382, %v5382
    %v5635 = vpack.c.bf16 %v5384, %v5384
    %v5636 = vpack.c.bf16 %v5505, %v5505
    %v5637 = vpack.c.bf16 %v5507, %v5507
    %v5638 = vpack.c.bf16 %v5628, %v5628
    %v5639 = vpack.c.bf16 %v5630, %v5630
    %v5640 = vld [vmem:[%s12] sm:$0x3f]
    %v5642 = vcombine.high %v5640, %v5640
    %v5644 = vunpack.c.l.s4 1966171168
    %v5645 = vunpack.c.0.s8 %v5644
    %v5646 = vlaneseq
    %v5647 = vshrl.u32 %v5646, 7
    %v5648 = vsub.s32 %v5645, %v5647
    %v5649 = vrot.slane %v5640, %v5648
    %v5651 = vunpack.c.l.s4 1966171168
    %v5652 = vunpack.c.0.s8 %v5651
    %v5653 = vlaneseq
    %v5654 = vshrl.u32 %v5653, 7
    %v5655 = vsub.s32 %v5652, %v5654
    %v5656 = vrot.slane %v5642, %v5655
    %v5657 = vcombine.high %v5649, %v5649
    %v5658 = vcombine.high %v5656, %v5656
    %v5660 = vunpack.c.l.s4 1966171168
    %v5661 = vunpack.c.0.s8 %v5660
    %v5662 = vlaneseq
    %v5663 = vshrl.u32 %v5662, 7
    %v5664 = vsub.s32 %v5661, %v5663
    %v5665 = vrot.slane %v5649, %v5664
    %v5667 = vunpack.c.l.s4 1966171168
    %v5668 = vunpack.c.0.s8 %v5667
    %v5669 = vlaneseq
    %v5670 = vshrl.u32 %v5669, 7
    %v5671 = vsub.s32 %v5668, %v5670
    %v5672 = vrot.slane %v5656, %v5671
    %v5674 = vunpack.c.l.s4 1966171168
    %v5675 = vunpack.c.0.s8 %v5674
    %v5676 = vlaneseq
    %v5677 = vshrl.u32 %v5676, 7
    %v5678 = vsub.s32 %v5675, %v5677
    %v5679 = vrot.slane %v5657, %v5678
    %v5681 = vunpack.c.l.s4 1966171168
    %v5682 = vunpack.c.0.s8 %v5681
    %v5683 = vlaneseq
    %v5684 = vshrl.u32 %v5683, 7
    %v5685 = vsub.s32 %v5682, %v5684
    %v5686 = vrot.slane %v5658, %v5685
    %v5687 = vcombine.high %v5665, %v5665
    %v5688 = vcombine.high %v5679, %v5679
    %v5690 = vpack.i.b16 %v5665, %v5665
    %v5692 = vlaneseq
    %v5693 = vshrl.u32 %v5692, 7
    %v5694 = vsub.s32 0, %v5693
    %v5695 = vrot.slane %v5690, %v5694
    %v5697 = vpack.i.b16 %v5679, %v5679
    %v5699 = vlaneseq
    %v5700 = vshrl.u32 %v5699, 7
    %v5701 = vsub.s32 0, %v5700
    %v5702 = vrot.slane %v5697, %v5701
    %v5704 = vpack.i.b16 %v5687, %v5687
    %v5706 = vlaneseq
    %v5707 = vshrl.u32 %v5706, 7
    %v5708 = vsub.s32 0, %v5707
    %v5709 = vrot.slane %v5704, %v5708
    %v5711 = vpack.i.b16 %v5688, %v5688
    %v5713 = vlaneseq
    %v5714 = vshrl.u32 %v5713, 7
    %v5715 = vsub.s32 0, %v5714
    %v5716 = vrot.slane %v5711, %v5715
    %v5718 = vpack.i.b16 %v5672, %v5672
    %v5720 = vlaneseq
    %v5721 = vshrl.u32 %v5720, 7
    %v5722 = vsub.s32 0, %v5721
    %v5723 = vrot.slane %v5718, %v5722
    %v5725 = vpack.i.b16 %v5686, %v5686
    %v5727 = vlaneseq
    %v5728 = vshrl.u32 %v5727, 7
    %v5729 = vsub.s32 0, %v5728
    %v5730 = vrot.slane %v5725, %v5729
    %v5731 = vadd.bf16 %v5634, %v5695
    %v5732 = vadd.bf16 %v5635, %v5702
    %v5733 = vadd.bf16 %v5636, %v5709
    %v5734 = vadd.bf16 %v5637, %v5716
    %v5735 = vadd.bf16 %v5638, %v5723
    %v5736 = vadd.bf16 %v5639, %v5730
    %vm5737 = vcmp.gt.bf16.partialorder %v5731, 0
    %vm5738 = vcmp.gt.bf16.partialorder %v5732, 0
    %vm5739 = vcmp.gt.bf16.partialorder %v5733, 0
    %vm5740 = vcmp.gt.bf16.partialorder %v5734, 0
    %vm5741 = vcmp.gt.bf16.partialorder %v5735, 0
    %vm5742 = vcmp.gt.bf16.partialorder %v5736, 0
    %v5743 = vmul.bf16 %v5731, 1009007652
    %v5744 = vmul.bf16 %v5732, 1009007652
    %v5745 = vmul.bf16 %v5733, 1009007652
    %v5746 = vmul.bf16 %v5734, 1009007652
    %v5747 = vmul.bf16 %v5735, 1009007652
    %v5748 = vmul.bf16 %v5736, 1009007652
    %v5749 = vsel %vm5737, %v5731, %v5743
    %v5750 = vsel %vm5738, %v5732, %v5744
    %v5751 = vsel %vm5739, %v5733, %v5745
    %v5752 = vsel %vm5740, %v5734, %v5746
    %v5753 = vsel %vm5741, %v5735, %v5747
    %v5754 = vsel %vm5742, %v5736, %v5748
    %v5755 = vld [vmem:[%s13] sm:$0xff]
    %v5756 = vld [vmem:[%s13 + $0x8] sm:$0xff]
    %v5757 = vld [vmem:[%s13 + $0x10] sm:$0xff]
    %v5758 = vld [vmem:[%s13 + $0x18] sm:$0xf]
    %v5759 = vld [vmem:[%s13 + $0x1c] sm:$0xff]
    %v5760 = vld [vmem:[%s13 + $0x24] sm:$0xff]
    %v5761 = vld [vmem:[%s13 + $0x2c] sm:$0xff]
    %v5762 = vld [vmem:[%s13 + $0x34] sm:$0xf]
    %v5763 = vld [vmem:[%s13 + $0x38] sm:$0xff]
    %v5764 = vld [vmem:[%s13 + $0x40] sm:$0xff]
    %v5765 = vld [vmem:[%s13 + $0x48] sm:$0xff]
    %v5766 = vld [vmem:[%s13 + $0x50] sm:$0xf]
    %v5767 = vld [vmem:[%s13 + $0x54] sm:$0xff]
    %v5768 = vld [vmem:[%s13 + $0x5c] sm:$0xff]
    %v5769 = vld [vmem:[%s13 + $0x64] sm:$0xff]
    %v5770 = vld [vmem:[%s13 + $0x6c] sm:$0xf]
    %v5771 = vld [vmem:[%s13 + $0x70] sm:$0xff]
    %v5772 = vld [vmem:[%s13 + $0x78] sm:$0xff]
    %v5773 = vld [vmem:[%s13 + $0x80] sm:$0xff]
    %v5774 = vld [vmem:[%s13 + $0x88] sm:$0xf]
    %v5775 = vld [vmem:[%s13 + $0x8c] sm:$0xff]
    %v5776 = vld [vmem:[%s13 + $0x94] sm:$0xff]
    %v5777 = vld [vmem:[%s13 + $0x9c] sm:$0xff]
    %v5778 = vld [vmem:[%s13 + $0xa4] sm:$0xf]
    %v5779 = vld [vmem:[%s13 + $0xa8] sm:$0xff]
    %v5780 = vld [vmem:[%s13 + $0xb0] sm:$0xff]
    %v5781 = vld [vmem:[%s13 + $0xb8] sm:$0xff]
    %v5782 = vld [vmem:[%s13 + $0xc0] sm:$0xf]
    %v5783 = vld [vmem:[%s13 + $0xc4] sm:$0xff]
    %v5784 = vld [vmem:[%s13 + $0xcc] sm:$0xff]
    %v5785 = vld [vmem:[%s13 + $0xd4] sm:$0xff]
    %v5786 = vld [vmem:[%s13 + $0xdc] sm:$0xf]
    %v5787 = vld [vmem:[%s13 + $0xe0] sm:$0xff]
    %v5788 = vld [vmem:[%s13 + $0xe8] sm:$0xff]
    %v5789 = vld [vmem:[%s13 + $0xf0] sm:$0xff]
    %v5790 = vld [vmem:[%s13 + $0xf8] sm:$0xf]
    %v5791 = vld [vmem:[%s13 + $0xfc] sm:$0xff]
    %v5792 = vld [vmem:[%s13 + $0x104] sm:$0xff]
    %v5793 = vld [vmem:[%s13 + $0x10c] sm:$0xff]
    %v5794 = vld [vmem:[%s13 + $0x114] sm:$0xf]
    %v5795 = vld [vmem:[%s13 + $0x118] sm:$0xff]
    %v5796 = vld [vmem:[%s13 + $0x120] sm:$0xff]
    %v5797 = vld [vmem:[%s13 + $0x128] sm:$0xff]
    %v5798 = vld [vmem:[%s13 + $0x130] sm:$0xf]
    %v5799 = vld [vmem:[%s13 + $0x134] sm:$0xff]
    %v5800 = vld [vmem:[%s13 + $0x13c] sm:$0xff]
    %v5801 = vld [vmem:[%s13 + $0x144] sm:$0xff]
    %v5802 = vld [vmem:[%s13 + $0x14c] sm:$0xf]
    %v5803 = vld [vmem:[%s13 + $0x150] sm:$0xff]
    %v5804 = vld [vmem:[%s13 + $0x158] sm:$0xff]
    %v5805 = vld [vmem:[%s13 + $0x160] sm:$0xff]
    %v5806 = vld [vmem:[%s13 + $0x168] sm:$0xf]
    %v5807 = vld [vmem:[%s13 + $0x16c] sm:$0xff]
    %v5808 = vld [vmem:[%s13 + $0x174] sm:$0xff]
    %v5809 = vld [vmem:[%s13 + $0x17c] sm:$0xff]
    %v5810 = vld [vmem:[%s13 + $0x184] sm:$0xf]
    %v5811 = vld [vmem:[%s13 + $0x188] sm:$0xff]
    %v5812 = vld [vmem:[%s13 + $0x190] sm:$0xff]
    %v5813 = vld [vmem:[%s13 + $0x198] sm:$0xff]
    %v5814 = vld [vmem:[%s13 + $0x1a0] sm:$0xf]
    %v5815 = vld [vmem:[%s13 + $0x1a4] sm:$0xff]
    %v5816 = vld [vmem:[%s13 + $0x1ac] sm:$0xff]
    %v5817 = vld [vmem:[%s13 + $0x1b4] sm:$0xff]
    %v5818 = vld [vmem:[%s13 + $0x1bc] sm:$0xf]
    %v5819 = vld [vmem:[%s13 + $0x1c0] sm:$0xff]
    %v5820 = vld [vmem:[%s13 + $0x1c8] sm:$0xff]
    %v5821 = vld [vmem:[%s13 + $0x1d0] sm:$0xff]
    %v5822 = vld [vmem:[%s13 + $0x1d8] sm:$0xf]
    %v5823 = vld [vmem:[%s13 + $0x1dc] sm:$0xff]
    %v5824 = vld [vmem:[%s13 + $0x1e4] sm:$0xff]
    %v5825 = vld [vmem:[%s13 + $0x1ec] sm:$0xff]
    %v5826 = vld [vmem:[%s13 + $0x1f4] sm:$0xf]
    %v5827 = vld [vmem:[%s13 + $0x1f8] sm:$0xff]
    %v5828 = vld [vmem:[%s13 + $0x200] sm:$0xff]
    %v5829 = vld [vmem:[%s13 + $0x208] sm:$0xff]
    %v5830 = vld [vmem:[%s13 + $0x210] sm:$0xf]
    %v5831 = vld [vmem:[%s13 + $0x214] sm:$0xff]
    %v5832 = vld [vmem:[%s13 + $0x21c] sm:$0xff]
    %v5833 = vld [vmem:[%s13 + $0x224] sm:$0xff]
    %v5834 = vld [vmem:[%s13 + $0x22c] sm:$0xf]
    %v5835 = vld [vmem:[%s13 + $0x230] sm:$0xff]
    %v5836 = vld [vmem:[%s13 + $0x238] sm:$0xff]
    %v5837 = vld [vmem:[%s13 + $0x240] sm:$0xff]
    %v5838 = vld [vmem:[%s13 + $0x248] sm:$0xf]
    %v5839 = vld [vmem:[%s13 + $0x24c] sm:$0xff]
    %v5840 = vld [vmem:[%s13 + $0x254] sm:$0xff]
    %v5841 = vld [vmem:[%s13 + $0x25c] sm:$0xff]
    %v5842 = vld [vmem:[%s13 + $0x264] sm:$0xf]
    %v5843 = vld [vmem:[%s13 + $0x268] sm:$0xff]
    %v5844 = vld [vmem:[%s13 + $0x270] sm:$0xff]
    %v5845 = vld [vmem:[%s13 + $0x278] sm:$0xff]
    %v5846 = vld [vmem:[%s13 + $0x280] sm:$0xf]
    %v5847 = vld [vmem:[%s13 + $0x284] sm:$0xff]
    %v5848 = vld [vmem:[%s13 + $0x28c] sm:$0xff]
    %v5849 = vld [vmem:[%s13 + $0x294] sm:$0xff]
    %v5850 = vld [vmem:[%s13 + $0x29c] sm:$0xf]
    %v5851 = vld [vmem:[%s13 + $0x2a0] sm:$0xff]
    %v5852 = vld [vmem:[%s13 + $0x2a8] sm:$0xff]
    %v5853 = vld [vmem:[%s13 + $0x2b0] sm:$0xff]
    %v5854 = vld [vmem:[%s13 + $0x2b8] sm:$0xf]
    %v5855 = vld [vmem:[%s13 + $0x2bc] sm:$0xff]
    %v5856 = vld [vmem:[%s13 + $0x2c4] sm:$0xff]
    %v5857 = vld [vmem:[%s13 + $0x2cc] sm:$0xff]
    %v5858 = vld [vmem:[%s13 + $0x2d4] sm:$0xf]
    %v5859 = vld [vmem:[%s13 + $0x2d8] sm:$0xff]
    %v5860 = vld [vmem:[%s13 + $0x2e0] sm:$0xff]
    %v5861 = vld [vmem:[%s13 + $0x2e8] sm:$0xff]
    %v5862 = vld [vmem:[%s13 + $0x2f0] sm:$0xf]
    %v5863 = vld [vmem:[%s13 + $0x2f4] sm:$0xff]
    %v5864 = vld [vmem:[%s13 + $0x2fc] sm:$0xff]
    %v5865 = vld [vmem:[%s13 + $0x304] sm:$0xff]
    %v5866 = vld [vmem:[%s13 + $0x30c] sm:$0xf]
    %v5867 = vld [vmem:[%s13 + $0x310] sm:$0xff]
    %v5868 = vld [vmem:[%s13 + $0x318] sm:$0xff]
    %v5869 = vld [vmem:[%s13 + $0x320] sm:$0xff]
    %v5870 = vld [vmem:[%s13 + $0x328] sm:$0xf]
    %v5871 = vld [vmem:[%s13 + $0x32c] sm:$0xff]
    %v5872 = vld [vmem:[%s13 + $0x334] sm:$0xff]
    %v5873 = vld [vmem:[%s13 + $0x33c] sm:$0xff]
    %v5874 = vld [vmem:[%s13 + $0x344] sm:$0xf]
    %v5875 = vld [vmem:[%s13 + $0x348] sm:$0xff]
    %v5876 = vld [vmem:[%s13 + $0x350] sm:$0xff]
    %v5877 = vld [vmem:[%s13 + $0x358] sm:$0xff]
    %v5878 = vld [vmem:[%s13 + $0x360] sm:$0xf]
    %v5879 = vld [vmem:[%s13 + $0x364] sm:$0xff]
    %v5880 = vld [vmem:[%s13 + $0x36c] sm:$0xff]
    %v5881 = vld [vmem:[%s13 + $0x374] sm:$0xff]
    %v5882 = vld [vmem:[%s13 + $0x37c] sm:$0xf]
    %v5883 = vld [vmem:[%s13 + $0x380] sm:$0xff]
    %v5884 = vld [vmem:[%s13 + $0x388] sm:$0xff]
    %v5885 = vld [vmem:[%s13 + $0x390] sm:$0xff]
    %v5886 = vld [vmem:[%s13 + $0x398] sm:$0xf]
    %v5887 = vld [vmem:[%s13 + $0x39c] sm:$0xff]
    %v5888 = vld [vmem:[%s13 + $0x3a4] sm:$0xff]
    %v5889 = vld [vmem:[%s13 + $0x3ac] sm:$0xff]
    %v5890 = vld [vmem:[%s13 + $0x3b4] sm:$0xf]
    %v5891 = vld [vmem:[%s13 + $0x3b8] sm:$0xff]
    %v5892 = vld [vmem:[%s13 + $0x3c0] sm:$0xff]
    %v5893 = vld [vmem:[%s13 + $0x3c8] sm:$0xff]
    %v5894 = vld [vmem:[%s13 + $0x3d0] sm:$0xf]
    %v5895 = vld [vmem:[%s13 + $0x3d4] sm:$0xff]
    %v5896 = vld [vmem:[%s13 + $0x3dc] sm:$0xff]
    %v5897 = vld [vmem:[%s13 + $0x3e4] sm:$0xff]
    %v5898 = vld [vmem:[%s13 + $0x3ec] sm:$0xf]
    %v5899 = vld [vmem:[%s13 + $0x3f0] sm:$0xff]
    %v5900 = vld [vmem:[%s13 + $0x3f8] sm:$0xff]
    %v5901 = vld [vmem:[%s13 + $0x400] sm:$0xff]
    %v5902 = vld [vmem:[%s13 + $0x408] sm:$0xf]
    %v5903 = vld [vmem:[%s13 + $0x40c] sm:$0xff]
    %v5904 = vld [vmem:[%s13 + $0x414] sm:$0xff]
    %v5905 = vld [vmem:[%s13 + $0x41c] sm:$0xff]
    %v5906 = vld [vmem:[%s13 + $0x424] sm:$0xf]
    %v5907 = vld [vmem:[%s13 + $0x428] sm:$0xff]
    %v5908 = vld [vmem:[%s13 + $0x430] sm:$0xff]
    %v5909 = vld [vmem:[%s13 + $0x438] sm:$0xff]
    %v5910 = vld [vmem:[%s13 + $0x440] sm:$0xf]
    %v5911 = vld [vmem:[%s13 + $0x444] sm:$0xff]
    %v5912 = vld [vmem:[%s13 + $0x44c] sm:$0xff]
    %v5913 = vld [vmem:[%s13 + $0x454] sm:$0xff]
    %v5914 = vld [vmem:[%s13 + $0x45c] sm:$0xf]
    %v5915 = vld [vmem:[%s13 + $0x460] sm:$0xff]
    %v5916 = vld [vmem:[%s13 + $0x468] sm:$0xff]
    %v5917 = vld [vmem:[%s13 + $0x470] sm:$0xff]
    %v5918 = vld [vmem:[%s13 + $0x478] sm:$0xf]
    %v5919 = vld [vmem:[%s13 + $0x47c] sm:$0xff]
    %v5920 = vld [vmem:[%s13 + $0x484] sm:$0xff]
    %v5921 = vld [vmem:[%s13 + $0x48c] sm:$0xff]
    %v5922 = vld [vmem:[%s13 + $0x494] sm:$0xf]
    %v5923 = vld [vmem:[%s13 + $0x498] sm:$0xff]
    %v5924 = vld [vmem:[%s13 + $0x4a0] sm:$0xff]
    %v5925 = vld [vmem:[%s13 + $0x4a8] sm:$0xff]
    %v5926 = vld [vmem:[%s13 + $0x4b0] sm:$0xf]
    %v5927 = vld [vmem:[%s13 + $0x4b4] sm:$0xff]
    %v5928 = vld [vmem:[%s13 + $0x4bc] sm:$0xff]
    %v5929 = vld [vmem:[%s13 + $0x4c4] sm:$0xff]
    %v5930 = vld [vmem:[%s13 + $0x4cc] sm:$0xf]
    %v5931 = vld [vmem:[%s13 + $0x4d0] sm:$0xff]
    %v5932 = vld [vmem:[%s13 + $0x4d8] sm:$0xff]
    %v5933 = vld [vmem:[%s13 + $0x4e0] sm:$0xff]
    %v5934 = vld [vmem:[%s13 + $0x4e8] sm:$0xf]
    %v5935 = vld [vmem:[%s13 + $0x4ec] sm:$0xff]
    %v5936 = vld [vmem:[%s13 + $0x4f4] sm:$0xff]
    %v5937 = vld [vmem:[%s13 + $0x4fc] sm:$0xff]
    %v5938 = vld [vmem:[%s13 + $0x504] sm:$0xf]
    %v5939 = vld [vmem:[%s13 + $0x508] sm:$0xff]
    %v5940 = vld [vmem:[%s13 + $0x510] sm:$0xff]
    %v5941 = vld [vmem:[%s13 + $0x518] sm:$0xff]
    %v5942 = vld [vmem:[%s13 + $0x520] sm:$0xf]
    %v5943 = vld [vmem:[%s13 + $0x524] sm:$0xff]
    %v5944 = vld [vmem:[%s13 + $0x52c] sm:$0xff]
    %v5945 = vld [vmem:[%s13 + $0x534] sm:$0xff]
    %v5946 = vld [vmem:[%s13 + $0x53c] sm:$0xf]
    %v5947 = vld [vmem:[%s13 + $0x540] sm:$0xff]
    %v5948 = vld [vmem:[%s13 + $0x548] sm:$0xff]
    %v5949 = vld [vmem:[%s13 + $0x550] sm:$0xff]
    %v5950 = vld [vmem:[%s13 + $0x558] sm:$0xf]
    %v5951 = vld [vmem:[%s13 + $0x55c] sm:$0xff]
    %v5952 = vld [vmem:[%s13 + $0x564] sm:$0xff]
    %v5953 = vld [vmem:[%s13 + $0x56c] sm:$0xff]
    %v5954 = vld [vmem:[%s13 + $0x574] sm:$0xf]
    %v5955 = vld [vmem:[%s13 + $0x578] sm:$0xff]
    %v5956 = vld [vmem:[%s13 + $0x580] sm:$0xff]
    %v5957 = vld [vmem:[%s13 + $0x588] sm:$0xff]
    %v5958 = vld [vmem:[%s13 + $0x590] sm:$0xf]
    %v5959 = vld [vmem:[%s13 + $0x594] sm:$0xff]
    %v5960 = vld [vmem:[%s13 + $0x59c] sm:$0xff]
    %v5961 = vld [vmem:[%s13 + $0x5a4] sm:$0xff]
    %v5962 = vld [vmem:[%s13 + $0x5ac] sm:$0xf]
    %v5963 = vld [vmem:[%s13 + $0x5b0] sm:$0xff]
    %v5964 = vld [vmem:[%s13 + $0x5b8] sm:$0xff]
    %v5965 = vld [vmem:[%s13 + $0x5c0] sm:$0xff]
    %v5966 = vld [vmem:[%s13 + $0x5c8] sm:$0xf]
    %v5967 = vld [vmem:[%s13 + $0x5cc] sm:$0xff]
    %v5968 = vld [vmem:[%s13 + $0x5d4] sm:$0xff]
    %v5969 = vld [vmem:[%s13 + $0x5dc] sm:$0xff]
    %v5970 = vld [vmem:[%s13 + $0x5e4] sm:$0xf]
    %v5971 = vld [vmem:[%s13 + $0x5e8] sm:$0xff]
    %v5972 = vld [vmem:[%s13 + $0x5f0] sm:$0xff]
    %v5973 = vld [vmem:[%s13 + $0x5f8] sm:$0xff]
    %v5974 = vld [vmem:[%s13 + $0x600] sm:$0xf]
    %v5975 = vld [vmem:[%s13 + $0x604] sm:$0xff]
    %v5976 = vld [vmem:[%s13 + $0x60c] sm:$0xff]
    %v5977 = vld [vmem:[%s13 + $0x614] sm:$0xff]
    %v5978 = vld [vmem:[%s13 + $0x61c] sm:$0xf]
    %v5979 = vld [vmem:[%s13 + $0x620] sm:$0xff]
    %v5980 = vld [vmem:[%s13 + $0x628] sm:$0xff]
    %v5981 = vld [vmem:[%s13 + $0x630] sm:$0xff]
    %v5982 = vld [vmem:[%s13 + $0x638] sm:$0xf]
    %v5983 = vld [vmem:[%s13 + $0x63c] sm:$0xff]
    %v5984 = vld [vmem:[%s13 + $0x644] sm:$0xff]
    %v5985 = vld [vmem:[%s13 + $0x64c] sm:$0xff]
    %v5986 = vld [vmem:[%s13 + $0x654] sm:$0xf]
    %v5987 = vld [vmem:[%s13 + $0x658] sm:$0xff]
    %v5988 = vld [vmem:[%s13 + $0x660] sm:$0xff]
    %v5989 = vld [vmem:[%s13 + $0x668] sm:$0xff]
    %v5990 = vld [vmem:[%s13 + $0x670] sm:$0xf]
    %v5991 = vld [vmem:[%s13 + $0x674] sm:$0xff]
    %v5992 = vld [vmem:[%s13 + $0x67c] sm:$0xff]
    %v5993 = vld [vmem:[%s13 + $0x684] sm:$0xff]
    %v5994 = vld [vmem:[%s13 + $0x68c] sm:$0xf]
    %v5995 = vld [vmem:[%s13 + $0x690] sm:$0xff]
    %v5996 = vld [vmem:[%s13 + $0x698] sm:$0xff]
    %v5997 = vld [vmem:[%s13 + $0x6a0] sm:$0xff]
    %v5998 = vld [vmem:[%s13 + $0x6a8] sm:$0xf]
    %v5999 = vld [vmem:[%s13 + $0x6ac] sm:$0xff]
    %v6000 = vld [vmem:[%s13 + $0x6b4] sm:$0xff]
    %v6001 = vld [vmem:[%s13 + $0x6bc] sm:$0xff]
    %v6002 = vld [vmem:[%s13 + $0x6c4] sm:$0xf]
    %v6003 = vld [vmem:[%s13 + $0x6c8] sm:$0xff]
    %v6004 = vld [vmem:[%s13 + $0x6d0] sm:$0xff]
    %v6005 = vld [vmem:[%s13 + $0x6d8] sm:$0xff]
    %v6006 = vld [vmem:[%s13 + $0x6e0] sm:$0xf]
    %v6007 = vld [vmem:[%s13 + $0x6e4] sm:$0xff]
    %v6008 = vld [vmem:[%s13 + $0x6ec] sm:$0xff]
    %v6009 = vld [vmem:[%s13 + $0x6f4] sm:$0xff]
    %v6010 = vld [vmem:[%s13 + $0x6fc] sm:$0xf]
    %v6011 = vld [vmem:[%s13 + $0x700] sm:$0xff]
    %v6012 = vld [vmem:[%s13 + $0x708] sm:$0xff]
    %v6013 = vld [vmem:[%s13 + $0x710] sm:$0xff]
    %v6014 = vld [vmem:[%s13 + $0x718] sm:$0xf]
    %v6015 = vld [vmem:[%s13 + $0x71c] sm:$0xff]
    %v6016 = vld [vmem:[%s13 + $0x724] sm:$0xff]
    %v6017 = vld [vmem:[%s13 + $0x72c] sm:$0xff]
    %v6018 = vld [vmem:[%s13 + $0x734] sm:$0xf]
    %v6019 = vld [vmem:[%s13 + $0x738] sm:$0xff]
    %v6020 = vld [vmem:[%s13 + $0x740] sm:$0xff]
    %v6021 = vld [vmem:[%s13 + $0x748] sm:$0xff]
    %v6022 = vld [vmem:[%s13 + $0x750] sm:$0xf]
    %v6023 = vld [vmem:[%s13 + $0x754] sm:$0xff]
    %v6024 = vld [vmem:[%s13 + $0x75c] sm:$0xff]
    %v6025 = vld [vmem:[%s13 + $0x764] sm:$0xff]
    %v6026 = vld [vmem:[%s13 + $0x76c] sm:$0xf]
    %v6027 = vld [vmem:[%s13 + $0x770] sm:$0xff]
    %v6028 = vld [vmem:[%s13 + $0x778] sm:$0xff]
    %v6029 = vld [vmem:[%s13 + $0x780] sm:$0xff]
    %v6030 = vld [vmem:[%s13 + $0x788] sm:$0xf]
    %v6031 = vld [vmem:[%s13 + $0x78c] sm:$0xff]
    %v6032 = vld [vmem:[%s13 + $0x794] sm:$0xff]
    %v6033 = vld [vmem:[%s13 + $0x79c] sm:$0xff]
    %v6034 = vld [vmem:[%s13 + $0x7a4] sm:$0xf]
    %v6035 = vld [vmem:[%s13 + $0x7a8] sm:$0xff]
    %v6036 = vld [vmem:[%s13 + $0x7b0] sm:$0xff]
    %v6037 = vld [vmem:[%s13 + $0x7b8] sm:$0xff]
    %v6038 = vld [vmem:[%s13 + $0x7c0] sm:$0xf]
    %v6039 = vld [vmem:[%s13 + $0x7c4] sm:$0xff]
    %v6040 = vld [vmem:[%s13 + $0x7cc] sm:$0xff]
    %v6041 = vld [vmem:[%s13 + $0x7d4] sm:$0xff]
    %v6042 = vld [vmem:[%s13 + $0x7dc] sm:$0xf]
    %v6043 = vld [vmem:[%s13 + $0x7e0] sm:$0xff]
    %v6044 = vld [vmem:[%s13 + $0x7e8] sm:$0xff]
    %v6045 = vld [vmem:[%s13 + $0x7f0] sm:$0xff]
    %v6046 = vld [vmem:[%s13 + $0x7f8] sm:$0xf]
    %v6047 = vld [vmem:[%s13 + $0x7fc] sm:$0xff]
    %v6048 = vld [vmem:[%s13 + $0x804] sm:$0xff]
    %v6049 = vld [vmem:[%s13 + $0x80c] sm:$0xff]
    %v6050 = vld [vmem:[%s13 + $0x814] sm:$0xf]
    %v6051 = vld [vmem:[%s13 + $0x818] sm:$0xff]
    %v6052 = vld [vmem:[%s13 + $0x820] sm:$0xff]
    %v6053 = vld [vmem:[%s13 + $0x828] sm:$0xff]
    %v6054 = vld [vmem:[%s13 + $0x830] sm:$0xf]
    %v6055 = vld [vmem:[%s13 + $0x834] sm:$0xff]
    %v6056 = vld [vmem:[%s13 + $0x83c] sm:$0xff]
    %v6057 = vld [vmem:[%s13 + $0x844] sm:$0xff]
    %v6058 = vld [vmem:[%s13 + $0x84c] sm:$0xf]
    %v6059 = vld [vmem:[%s13 + $0x850] sm:$0xff]
    %v6060 = vld [vmem:[%s13 + $0x858] sm:$0xff]
    %v6061 = vld [vmem:[%s13 + $0x860] sm:$0xff]
    %v6062 = vld [vmem:[%s13 + $0x868] sm:$0xf]
    %v6063 = vld [vmem:[%s13 + $0x86c] sm:$0xff]
    %v6064 = vld [vmem:[%s13 + $0x874] sm:$0xff]
    %v6065 = vld [vmem:[%s13 + $0x87c] sm:$0xff]
    %v6066 = vld [vmem:[%s13 + $0x884] sm:$0xf]
    %v6067 = vld [vmem:[%s13 + $0x888] sm:$0xff]
    %v6068 = vld [vmem:[%s13 + $0x890] sm:$0xff]
    %v6069 = vld [vmem:[%s13 + $0x898] sm:$0xff]
    %v6070 = vld [vmem:[%s13 + $0x8a0] sm:$0xf]
    %v6071 = vld [vmem:[%s13 + $0x8a4] sm:$0xff]
    %v6072 = vld [vmem:[%s13 + $0x8ac] sm:$0xff]
    %v6073 = vld [vmem:[%s13 + $0x8b4] sm:$0xff]
    %v6074 = vld [vmem:[%s13 + $0x8bc] sm:$0xf]
    %v6075 = vld [vmem:[%s13 + $0x8c0] sm:$0xff]
    %v6076 = vld [vmem:[%s13 + $0x8c8] sm:$0xff]
    %v6077 = vld [vmem:[%s13 + $0x8d0] sm:$0xff]
    %v6078 = vld [vmem:[%s13 + $0x8d8] sm:$0xf]
    %v6079 = vld [vmem:[%s13 + $0x8dc] sm:$0xff]
    %v6080 = vld [vmem:[%s13 + $0x8e4] sm:$0xff]
    %v6081 = vld [vmem:[%s13 + $0x8ec] sm:$0xff]
    %v6082 = vld [vmem:[%s13 + $0x8f4] sm:$0xf]
    %v6083 = vld [vmem:[%s13 + $0x8f8] sm:$0xff]
    %v6084 = vld [vmem:[%s13 + $0x900] sm:$0xff]
    %v6085 = vld [vmem:[%s13 + $0x908] sm:$0xff]
    %v6086 = vld [vmem:[%s13 + $0x910] sm:$0xf]
    %v6087 = vld [vmem:[%s13 + $0x914] sm:$0xff]
    %v6088 = vld [vmem:[%s13 + $0x91c] sm:$0xff]
    %v6089 = vld [vmem:[%s13 + $0x924] sm:$0xff]
    %v6090 = vld [vmem:[%s13 + $0x92c] sm:$0xf]
    %v6091 = vld [vmem:[%s13 + $0x930] sm:$0xff]
    %v6092 = vld [vmem:[%s13 + $0x938] sm:$0xff]
    %v6093 = vld [vmem:[%s13 + $0x940] sm:$0xff]
    %v6094 = vld [vmem:[%s13 + $0x948] sm:$0xf]
    %v6095 = vld [vmem:[%s13 + $0x94c] sm:$0xff]
    %v6096 = vld [vmem:[%s13 + $0x954] sm:$0xff]
    %v6097 = vld [vmem:[%s13 + $0x95c] sm:$0xff]
    %v6098 = vld [vmem:[%s13 + $0x964] sm:$0xf]
    %v6099 = vld [vmem:[%s13 + $0x968] sm:$0xff]
    %v6100 = vld [vmem:[%s13 + $0x970] sm:$0xff]
    %v6101 = vld [vmem:[%s13 + $0x978] sm:$0xff]
    %v6102 = vld [vmem:[%s13 + $0x980] sm:$0xf]
    %v6103 = vld [vmem:[%s13 + $0x984] sm:$0xff]
    %v6104 = vld [vmem:[%s13 + $0x98c] sm:$0xff]
    %v6105 = vld [vmem:[%s13 + $0x994] sm:$0xff]
    %v6106 = vld [vmem:[%s13 + $0x99c] sm:$0xf]
    %v6107 = vld [vmem:[%s13 + $0x9a0] sm:$0xff]
    %v6108 = vld [vmem:[%s13 + $0x9a8] sm:$0xff]
    %v6109 = vld [vmem:[%s13 + $0x9b0] sm:$0xff]
    %v6110 = vld [vmem:[%s13 + $0x9b8] sm:$0xf]
    %v6111 = vld [vmem:[%s13 + $0x9bc] sm:$0xff]
    %v6112 = vld [vmem:[%s13 + $0x9c4] sm:$0xff]
    %v6113 = vld [vmem:[%s13 + $0x9cc] sm:$0xff]
    %v6114 = vld [vmem:[%s13 + $0x9d4] sm:$0xf]
    %v6115 = vld [vmem:[%s13 + $0x9d8] sm:$0xff]
    %v6116 = vld [vmem:[%s13 + $0x9e0] sm:$0xff]
    %v6117 = vld [vmem:[%s13 + $0x9e8] sm:$0xff]
    %v6118 = vld [vmem:[%s13 + $0x9f0] sm:$0xf]
    %v6119 = vld [vmem:[%s13 + $0x9f4] sm:$0xff]
    %v6120 = vld [vmem:[%s13 + $0x9fc] sm:$0xff]
    %v6121 = vld [vmem:[%s13 + $0xa04] sm:$0xff]
    %v6122 = vld [vmem:[%s13 + $0xa0c] sm:$0xf]
    %v6123 = vld [vmem:[%s13 + $0xa10] sm:$0xff]
    %v6124 = vld [vmem:[%s13 + $0xa18] sm:$0xff]
    %v6125 = vld [vmem:[%s13 + $0xa20] sm:$0xff]
    %v6126 = vld [vmem:[%s13 + $0xa28] sm:$0xf]
    %v6127 = vld [vmem:[%s13 + $0xa2c] sm:$0xff]
    %v6128 = vld [vmem:[%s13 + $0xa34] sm:$0xff]
    %v6129 = vld [vmem:[%s13 + $0xa3c] sm:$0xff]
    %v6130 = vld [vmem:[%s13 + $0xa44] sm:$0xf]
    %v6131 = vld [vmem:[%s13 + $0xa48] sm:$0xff]
    %v6132 = vld [vmem:[%s13 + $0xa50] sm:$0xff]
    %v6133 = vld [vmem:[%s13 + $0xa58] sm:$0xff]
    %v6134 = vld [vmem:[%s13 + $0xa60] sm:$0xf]
    %v6135 = vld [vmem:[%s13 + $0xa64] sm:$0xff]
    %v6136 = vld [vmem:[%s13 + $0xa6c] sm:$0xff]
    %v6137 = vld [vmem:[%s13 + $0xa74] sm:$0xff]
    %v6138 = vld [vmem:[%s13 + $0xa7c] sm:$0xf]
    %v6139 = vld [vmem:[%s14] sm:$0x7f]
    %v6141 = vlaneseq
    %v6142 = vshrl.u32 %v6141, 7
    %v6143 = vsub.s32 0, %v6142
    %v6144 = vrot.slane %v6139, %v6143
    %v6145 = vlaneseq
    %v6146 = vshrl.u32 %v6145, 7
    %v6147 = vsub.s32 1, %v6146
    %v6148 = vrot.slane %v6139, %v6147
    %v6149 = vlaneseq
    %v6150 = vshrl.u32 %v6149, 7
    %v6151 = vsub.s32 2, %v6150
    %v6152 = vrot.slane %v6139, %v6151
    %v6153 = vlaneseq
    %v6154 = vshrl.u32 %v6153, 7
    %v6155 = vsub.s32 3, %v6154
    %v6156 = vrot.slane %v6139, %v6155
    %v6157 = vlaneseq
    %v6158 = vshrl.u32 %v6157, 7
    %v6159 = vsub.s32 4, %v6158
    %v6160 = vrot.slane %v6139, %v6159
    %v6161 = vlaneseq
    %v6162 = vshrl.u32 %v6161, 7
    %v6163 = vsub.s32 5, %v6162
    %v6164 = vrot.slane %v6139, %v6163
    %v6165 = vlaneseq
    %v6166 = vshrl.u32 %v6165, 7
    %v6167 = vsub.s32 6, %v6166
    %v6168 = vrot.slane %v6139, %v6167
    %v6560 = vunpack.c.l.b16 %v5755
    %v6561 = vunpack.c.h.b16 %v5755
    %v6562 = vunpack.c.l.b16 %v5756
    %v6563 = vunpack.c.h.b16 %v5756
    %v6564 = vunpack.c.l.b16 %v5757
    %v6565 = vunpack.c.h.b16 %v5757
    %v6566 = vunpack.c.l.b16 %v5758
    %v6567 = vunpack.c.l.b16 %v5759
    %v6568 = vunpack.c.h.b16 %v5759
    %v6569 = vunpack.c.l.b16 %v5760
    %v6570 = vunpack.c.h.b16 %v5760
    %v6571 = vunpack.c.l.b16 %v5761
    %v6572 = vunpack.c.h.b16 %v5761
    %v6573 = vunpack.c.l.b16 %v5762
    %v6574 = vunpack.c.l.b16 %v5763
    %v6575 = vunpack.c.h.b16 %v5763
    %v6576 = vunpack.c.l.b16 %v5764
    %v6577 = vunpack.c.h.b16 %v5764
    %v6578 = vunpack.c.l.b16 %v5765
    %v6579 = vunpack.c.h.b16 %v5765
    %v6580 = vunpack.c.l.b16 %v5766
    %v6581 = vunpack.c.l.b16 %v5767
    %v6582 = vunpack.c.h.b16 %v5767
    %v6583 = vunpack.c.l.b16 %v5768
    %v6584 = vunpack.c.h.b16 %v5768
    %v6585 = vunpack.c.l.b16 %v5769
    %v6586 = vunpack.c.h.b16 %v5769
    %v6587 = vunpack.c.l.b16 %v5770
    %v6588 = vunpack.c.l.b16 %v5771
    %v6589 = vunpack.c.h.b16 %v5771
    %v6590 = vunpack.c.l.b16 %v5772
    %v6591 = vunpack.c.h.b16 %v5772
    %v6592 = vunpack.c.l.b16 %v5773
    %v6593 = vunpack.c.h.b16 %v5773
    %v6594 = vunpack.c.l.b16 %v5774
    %v6595 = vunpack.c.l.b16 %v5775
    %v6596 = vunpack.c.h.b16 %v5775
    %v6597 = vunpack.c.l.b16 %v5776
    %v6598 = vunpack.c.h.b16 %v5776
    %v6599 = vunpack.c.l.b16 %v5777
    %v6600 = vunpack.c.h.b16 %v5777
    %v6601 = vunpack.c.l.b16 %v5778
    %v6602 = vunpack.c.l.b16 %v5779
    %v6603 = vunpack.c.h.b16 %v5779
    %v6604 = vunpack.c.l.b16 %v5780
    %v6605 = vunpack.c.h.b16 %v5780
    %v6606 = vunpack.c.l.b16 %v5781
    %v6607 = vunpack.c.h.b16 %v5781
    %v6608 = vunpack.c.l.b16 %v5782
    %v6609 = vunpack.c.l.b16 %v5783
    %v6610 = vunpack.c.h.b16 %v5783
    %v6611 = vunpack.c.l.b16 %v5784
    %v6612 = vunpack.c.h.b16 %v5784
    %v6613 = vunpack.c.l.b16 %v5785
    %v6614 = vunpack.c.h.b16 %v5785
    %v6615 = vunpack.c.l.b16 %v5786
    %v6616 = vunpack.c.l.b16 %v5787
    %v6617 = vunpack.c.h.b16 %v5787
    %v6618 = vunpack.c.l.b16 %v5788
    %v6619 = vunpack.c.h.b16 %v5788
    %v6620 = vunpack.c.l.b16 %v5789
    %v6621 = vunpack.c.h.b16 %v5789
    %v6622 = vunpack.c.l.b16 %v5790
    %v6623 = vunpack.c.l.b16 %v5791
    %v6624 = vunpack.c.h.b16 %v5791
    %v6625 = vunpack.c.l.b16 %v5792
    %v6626 = vunpack.c.h.b16 %v5792
    %v6627 = vunpack.c.l.b16 %v5793
    %v6628 = vunpack.c.h.b16 %v5793
    %v6629 = vunpack.c.l.b16 %v5794
    %v6630 = vunpack.c.l.b16 %v5795
    %v6631 = vunpack.c.h.b16 %v5795
    %v6632 = vunpack.c.l.b16 %v5796
    %v6633 = vunpack.c.h.b16 %v5796
    %v6634 = vunpack.c.l.b16 %v5797
    %v6635 = vunpack.c.h.b16 %v5797
    %v6636 = vunpack.c.l.b16 %v5798
    %v6637 = vunpack.c.l.b16 %v5799
    %v6638 = vunpack.c.h.b16 %v5799
    %v6639 = vunpack.c.l.b16 %v5800
    %v6640 = vunpack.c.h.b16 %v5800
    %v6641 = vunpack.c.l.b16 %v5801
    %v6642 = vunpack.c.h.b16 %v5801
    %v6643 = vunpack.c.l.b16 %v5802
    %v6644 = vunpack.c.l.b16 %v5803
    %v6645 = vunpack.c.h.b16 %v5803
    %v6646 = vunpack.c.l.b16 %v5804
    %v6647 = vunpack.c.h.b16 %v5804
    %v6648 = vunpack.c.l.b16 %v5805
    %v6649 = vunpack.c.h.b16 %v5805
    %v6650 = vunpack.c.l.b16 %v5806
    %v6651 = vunpack.c.l.b16 %v5807
    %v6652 = vunpack.c.h.b16 %v5807
    %v6653 = vunpack.c.l.b16 %v5808
    %v6654 = vunpack.c.h.b16 %v5808
    %v6655 = vunpack.c.l.b16 %v5809
    %v6656 = vunpack.c.h.b16 %v5809
    %v6657 = vunpack.c.l.b16 %v5810
    %v6658 = vunpack.c.l.b16 %v5811
    %v6659 = vunpack.c.h.b16 %v5811
    %v6660 = vunpack.c.l.b16 %v5812
    %v6661 = vunpack.c.h.b16 %v5812
    %v6662 = vunpack.c.l.b16 %v5813
    %v6663 = vunpack.c.h.b16 %v5813
    %v6664 = vunpack.c.l.b16 %v5814
    %v6665 = vunpack.c.l.b16 %v5815
    %v6666 = vunpack.c.h.b16 %v5815
    %v6667 = vunpack.c.l.b16 %v5816
    %v6668 = vunpack.c.h.b16 %v5816
    %v6669 = vunpack.c.l.b16 %v5817
    %v6670 = vunpack.c.h.b16 %v5817
    %v6671 = vunpack.c.l.b16 %v5818
    %v6672 = vunpack.c.l.b16 %v5819
    %v6673 = vunpack.c.h.b16 %v5819
    %v6674 = vunpack.c.l.b16 %v5820
    %v6675 = vunpack.c.h.b16 %v5820
    %v6676 = vunpack.c.l.b16 %v5821
    %v6677 = vunpack.c.h.b16 %v5821
    %v6678 = vunpack.c.l.b16 %v5822
    %v6679 = vunpack.c.l.b16 %v5823
    %v6680 = vunpack.c.h.b16 %v5823
    %v6681 = vunpack.c.l.b16 %v5824
    %v6682 = vunpack.c.h.b16 %v5824
    %v6683 = vunpack.c.l.b16 %v5825
    %v6684 = vunpack.c.h.b16 %v5825
    %v6685 = vunpack.c.l.b16 %v5826
    %v6686 = vunpack.c.l.b16 %v5827
    %v6687 = vunpack.c.h.b16 %v5827
    %v6688 = vunpack.c.l.b16 %v5828
    %v6689 = vunpack.c.h.b16 %v5828
    %v6690 = vunpack.c.l.b16 %v5829
    %v6691 = vunpack.c.h.b16 %v5829
    %v6692 = vunpack.c.l.b16 %v5830
    %v6693 = vunpack.c.l.b16 %v5831
    %v6694 = vunpack.c.h.b16 %v5831
    %v6695 = vunpack.c.l.b16 %v5832
    %v6696 = vunpack.c.h.b16 %v5832
    %v6697 = vunpack.c.l.b16 %v5833
    %v6698 = vunpack.c.h.b16 %v5833
    %v6699 = vunpack.c.l.b16 %v5834
    %v6700 = vunpack.c.l.b16 %v5835
    %v6701 = vunpack.c.h.b16 %v5835
    %v6702 = vunpack.c.l.b16 %v5836
    %v6703 = vunpack.c.h.b16 %v5836
    %v6704 = vunpack.c.l.b16 %v5837
    %v6705 = vunpack.c.h.b16 %v5837
    %v6706 = vunpack.c.l.b16 %v5838
    %v6707 = vunpack.c.l.b16 %v5839
    %v6708 = vunpack.c.h.b16 %v5839
    %v6709 = vunpack.c.l.b16 %v5840
    %v6710 = vunpack.c.h.b16 %v5840
    %v6711 = vunpack.c.l.b16 %v5841
    %v6712 = vunpack.c.h.b16 %v5841
    %v6713 = vunpack.c.l.b16 %v5842
    %v6714 = vunpack.c.l.b16 %v5843
    %v6715 = vunpack.c.h.b16 %v5843
    %v6716 = vunpack.c.l.b16 %v5844
    %v6717 = vunpack.c.h.b16 %v5844
    %v6718 = vunpack.c.l.b16 %v5845
    %v6719 = vunpack.c.h.b16 %v5845
    %v6720 = vunpack.c.l.b16 %v5846
    %v6721 = vunpack.c.l.b16 %v5847
    %v6722 = vunpack.c.h.b16 %v5847
    %v6723 = vunpack.c.l.b16 %v5848
    %v6724 = vunpack.c.h.b16 %v5848
    %v6725 = vunpack.c.l.b16 %v5849
    %v6726 = vunpack.c.h.b16 %v5849
    %v6727 = vunpack.c.l.b16 %v5850
    %v6728 = vunpack.c.l.b16 %v5851
    %v6729 = vunpack.c.h.b16 %v5851
    %v6730 = vunpack.c.l.b16 %v5852
    %v6731 = vunpack.c.h.b16 %v5852
    %v6732 = vunpack.c.l.b16 %v5853
    %v6733 = vunpack.c.h.b16 %v5853
    %v6734 = vunpack.c.l.b16 %v5854
    %v6735 = vunpack.c.l.b16 %v5855
    %v6736 = vunpack.c.h.b16 %v5855
    %v6737 = vunpack.c.l.b16 %v5856
    %v6738 = vunpack.c.h.b16 %v5856
    %v6739 = vunpack.c.l.b16 %v5857
    %v6740 = vunpack.c.h.b16 %v5857
    %v6741 = vunpack.c.l.b16 %v5858
    %v6742 = vunpack.c.l.b16 %v5859
    %v6743 = vunpack.c.h.b16 %v5859
    %v6744 = vunpack.c.l.b16 %v5860
    %v6745 = vunpack.c.h.b16 %v5860
    %v6746 = vunpack.c.l.b16 %v5861
    %v6747 = vunpack.c.h.b16 %v5861
    %v6748 = vunpack.c.l.b16 %v5862
    %v6749 = vunpack.c.l.b16 %v5863
    %v6750 = vunpack.c.h.b16 %v5863
    %v6751 = vunpack.c.l.b16 %v5864
    %v6752 = vunpack.c.h.b16 %v5864
    %v6753 = vunpack.c.l.b16 %v5865
    %v6754 = vunpack.c.h.b16 %v5865
    %v6755 = vunpack.c.l.b16 %v5866
    %v6756 = vunpack.c.l.b16 %v5867
    %v6757 = vunpack.c.h.b16 %v5867
    %v6758 = vunpack.c.l.b16 %v5868
    %v6759 = vunpack.c.h.b16 %v5868
    %v6760 = vunpack.c.l.b16 %v5869
    %v6761 = vunpack.c.h.b16 %v5869
    %v6762 = vunpack.c.l.b16 %v5870
    %v6763 = vunpack.c.l.b16 %v5871
    %v6764 = vunpack.c.h.b16 %v5871
    %v6765 = vunpack.c.l.b16 %v5872
    %v6766 = vunpack.c.h.b16 %v5872
    %v6767 = vunpack.c.l.b16 %v5873
    %v6768 = vunpack.c.h.b16 %v5873
    %v6769 = vunpack.c.l.b16 %v5874
    %v6770 = vunpack.c.l.b16 %v5875
    %v6771 = vunpack.c.h.b16 %v5875
    %v6772 = vunpack.c.l.b16 %v5876
    %v6773 = vunpack.c.h.b16 %v5876
    %v6774 = vunpack.c.l.b16 %v5877
    %v6775 = vunpack.c.h.b16 %v5877
    %v6776 = vunpack.c.l.b16 %v5878
    %v6777 = vunpack.c.l.b16 %v5879
    %v6778 = vunpack.c.h.b16 %v5879
    %v6779 = vunpack.c.l.b16 %v5880
    %v6780 = vunpack.c.h.b16 %v5880
    %v6781 = vunpack.c.l.b16 %v5881
    %v6782 = vunpack.c.h.b16 %v5881
    %v6783 = vunpack.c.l.b16 %v5882
    %v6784 = vunpack.c.l.b16 %v5883
    %v6785 = vunpack.c.h.b16 %v5883
    %v6786 = vunpack.c.l.b16 %v5884
    %v6787 = vunpack.c.h.b16 %v5884
    %v6788 = vunpack.c.l.b16 %v5885
    %v6789 = vunpack.c.h.b16 %v5885
    %v6790 = vunpack.c.l.b16 %v5886
    %v6791 = vunpack.c.l.b16 %v5887
    %v6792 = vunpack.c.h.b16 %v5887
    %v6793 = vunpack.c.l.b16 %v5888
    %v6794 = vunpack.c.h.b16 %v5888
    %v6795 = vunpack.c.l.b16 %v5889
    %v6796 = vunpack.c.h.b16 %v5889
    %v6797 = vunpack.c.l.b16 %v5890
    %v6798 = vunpack.c.l.b16 %v5891
    %v6799 = vunpack.c.h.b16 %v5891
    %v6800 = vunpack.c.l.b16 %v5892
    %v6801 = vunpack.c.h.b16 %v5892
    %v6802 = vunpack.c.l.b16 %v5893
    %v6803 = vunpack.c.h.b16 %v5893
    %v6804 = vunpack.c.l.b16 %v5894
    %v6805 = vunpack.c.l.b16 %v5895
    %v6806 = vunpack.c.h.b16 %v5895
    %v6807 = vunpack.c.l.b16 %v5896
    %v6808 = vunpack.c.h.b16 %v5896
    %v6809 = vunpack.c.l.b16 %v5897
    %v6810 = vunpack.c.h.b16 %v5897
    %v6811 = vunpack.c.l.b16 %v5898
    %v6812 = vunpack.c.l.b16 %v5899
    %v6813 = vunpack.c.h.b16 %v5899
    %v6814 = vunpack.c.l.b16 %v5900
    %v6815 = vunpack.c.h.b16 %v5900
    %v6816 = vunpack.c.l.b16 %v5901
    %v6817 = vunpack.c.h.b16 %v5901
    %v6818 = vunpack.c.l.b16 %v5902
    %v6819 = vunpack.c.l.b16 %v5903
    %v6820 = vunpack.c.h.b16 %v5903
    %v6821 = vunpack.c.l.b16 %v5904
    %v6822 = vunpack.c.h.b16 %v5904
    %v6823 = vunpack.c.l.b16 %v5905
    %v6824 = vunpack.c.h.b16 %v5905
    %v6825 = vunpack.c.l.b16 %v5906
    %v6826 = vunpack.c.l.b16 %v5907
    %v6827 = vunpack.c.h.b16 %v5907
    %v6828 = vunpack.c.l.b16 %v5908
    %v6829 = vunpack.c.h.b16 %v5908
    %v6830 = vunpack.c.l.b16 %v5909
    %v6831 = vunpack.c.h.b16 %v5909
    %v6832 = vunpack.c.l.b16 %v5910
    %v6833 = vunpack.c.l.b16 %v5911
    %v6834 = vunpack.c.h.b16 %v5911
    %v6835 = vunpack.c.l.b16 %v5912
    %v6836 = vunpack.c.h.b16 %v5912
    %v6837 = vunpack.c.l.b16 %v5913
    %v6838 = vunpack.c.h.b16 %v5913
    %v6839 = vunpack.c.l.b16 %v5914
    %v6840 = vunpack.c.l.b16 %v5915
    %v6841 = vunpack.c.h.b16 %v5915
    %v6842 = vunpack.c.l.b16 %v5916
    %v6843 = vunpack.c.h.b16 %v5916
    %v6844 = vunpack.c.l.b16 %v5917
    %v6845 = vunpack.c.h.b16 %v5917
    %v6846 = vunpack.c.l.b16 %v5918
    %v6847 = vunpack.c.l.b16 %v5919
    %v6848 = vunpack.c.h.b16 %v5919
    %v6849 = vunpack.c.l.b16 %v5920
    %v6850 = vunpack.c.h.b16 %v5920
    %v6851 = vunpack.c.l.b16 %v5921
    %v6852 = vunpack.c.h.b16 %v5921
    %v6853 = vunpack.c.l.b16 %v5922
    %v6854 = vunpack.c.l.b16 %v5923
    %v6855 = vunpack.c.h.b16 %v5923
    %v6856 = vunpack.c.l.b16 %v5924
    %v6857 = vunpack.c.h.b16 %v5924
    %v6858 = vunpack.c.l.b16 %v5925
    %v6859 = vunpack.c.h.b16 %v5925
    %v6860 = vunpack.c.l.b16 %v5926
    %v6861 = vunpack.c.l.b16 %v5927
    %v6862 = vunpack.c.h.b16 %v5927
    %v6863 = vunpack.c.l.b16 %v5928
    %v6864 = vunpack.c.h.b16 %v5928
    %v6865 = vunpack.c.l.b16 %v5929
    %v6866 = vunpack.c.h.b16 %v5929
    %v6867 = vunpack.c.l.b16 %v5930
    %v6868 = vunpack.c.l.b16 %v5931
    %v6869 = vunpack.c.h.b16 %v5931
    %v6870 = vunpack.c.l.b16 %v5932
    %v6871 = vunpack.c.h.b16 %v5932
    %v6872 = vunpack.c.l.b16 %v5933
    %v6873 = vunpack.c.h.b16 %v5933
    %v6874 = vunpack.c.l.b16 %v5934
    %v6875 = vunpack.c.l.b16 %v5935
    %v6876 = vunpack.c.h.b16 %v5935
    %v6877 = vunpack.c.l.b16 %v5936
    %v6878 = vunpack.c.h.b16 %v5936
    %v6879 = vunpack.c.l.b16 %v5937
    %v6880 = vunpack.c.h.b16 %v5937
    %v6881 = vunpack.c.l.b16 %v5938
    %v6882 = vunpack.c.l.b16 %v5939
    %v6883 = vunpack.c.h.b16 %v5939
    %v6884 = vunpack.c.l.b16 %v5940
    %v6885 = vunpack.c.h.b16 %v5940
    %v6886 = vunpack.c.l.b16 %v5941
    %v6887 = vunpack.c.h.b16 %v5941
    %v6888 = vunpack.c.l.b16 %v5942
    %v6889 = vunpack.c.l.b16 %v5943
    %v6890 = vunpack.c.h.b16 %v5943
    %v6891 = vunpack.c.l.b16 %v5944
    %v6892 = vunpack.c.h.b16 %v5944
    %v6893 = vunpack.c.l.b16 %v5945
    %v6894 = vunpack.c.h.b16 %v5945
    %v6895 = vunpack.c.l.b16 %v5946
    %v6896 = vunpack.c.l.b16 %v5947
    %v6897 = vunpack.c.h.b16 %v5947
    %v6898 = vunpack.c.l.b16 %v5948
    %v6899 = vunpack.c.h.b16 %v5948
    %v6900 = vunpack.c.l.b16 %v5949
    %v6901 = vunpack.c.h.b16 %v5949
    %v6902 = vunpack.c.l.b16 %v5950
    %v6903 = vunpack.c.l.b16 %v5951
    %v6904 = vunpack.c.h.b16 %v5951
    %v6905 = vunpack.c.l.b16 %v5952
    %v6906 = vunpack.c.h.b16 %v5952
    %v6907 = vunpack.c.l.b16 %v5953
    %v6908 = vunpack.c.h.b16 %v5953
    %v6909 = vunpack.c.l.b16 %v5954
    %v6910 = vunpack.c.l.b16 %v5955
    %v6911 = vunpack.c.h.b16 %v5955
    %v6912 = vunpack.c.l.b16 %v5956
    %v6913 = vunpack.c.h.b16 %v5956
    %v6914 = vunpack.c.l.b16 %v5957
    %v6915 = vunpack.c.h.b16 %v5957
    %v6916 = vunpack.c.l.b16 %v5958
    %v6917 = vunpack.c.l.b16 %v5959
    %v6918 = vunpack.c.h.b16 %v5959
    %v6919 = vunpack.c.l.b16 %v5960
    %v6920 = vunpack.c.h.b16 %v5960
    %v6921 = vunpack.c.l.b16 %v5961
    %v6922 = vunpack.c.h.b16 %v5961
    %v6923 = vunpack.c.l.b16 %v5962
    %v6924 = vunpack.c.l.b16 %v5963
    %v6925 = vunpack.c.h.b16 %v5963
    %v6926 = vunpack.c.l.b16 %v5964
    %v6927 = vunpack.c.h.b16 %v5964
    %v6928 = vunpack.c.l.b16 %v5965
    %v6929 = vunpack.c.h.b16 %v5965
    %v6930 = vunpack.c.l.b16 %v5966
    %v6931 = vunpack.c.l.b16 %v5967
    %v6932 = vunpack.c.h.b16 %v5967
    %v6933 = vunpack.c.l.b16 %v5968
    %v6934 = vunpack.c.h.b16 %v5968
    %v6935 = vunpack.c.l.b16 %v5969
    %v6936 = vunpack.c.h.b16 %v5969
    %v6937 = vunpack.c.l.b16 %v5970
    %v6938 = vunpack.c.l.b16 %v5971
    %v6939 = vunpack.c.h.b16 %v5971
    %v6940 = vunpack.c.l.b16 %v5972
    %v6941 = vunpack.c.h.b16 %v5972
    %v6942 = vunpack.c.l.b16 %v5973
    %v6943 = vunpack.c.h.b16 %v5973
    %v6944 = vunpack.c.l.b16 %v5974
    %v6945 = vunpack.c.l.b16 %v5975
    %v6946 = vunpack.c.h.b16 %v5975
    %v6947 = vunpack.c.l.b16 %v5976
    %v6948 = vunpack.c.h.b16 %v5976
    %v6949 = vunpack.c.l.b16 %v5977
    %v6950 = vunpack.c.h.b16 %v5977
    %v6951 = vunpack.c.l.b16 %v5978
    %v6952 = vunpack.c.l.b16 %v5979
    %v6953 = vunpack.c.h.b16 %v5979
    %v6954 = vunpack.c.l.b16 %v5980
    %v6955 = vunpack.c.h.b16 %v5980
    %v6956 = vunpack.c.l.b16 %v5981
    %v6957 = vunpack.c.h.b16 %v5981
    %v6958 = vunpack.c.l.b16 %v5982
    %v6959 = vunpack.c.l.b16 %v5983
    %v6960 = vunpack.c.h.b16 %v5983
    %v6961 = vunpack.c.l.b16 %v5984
    %v6962 = vunpack.c.h.b16 %v5984
    %v6963 = vunpack.c.l.b16 %v5985
    %v6964 = vunpack.c.h.b16 %v5985
    %v6965 = vunpack.c.l.b16 %v5986
    %v6966 = vunpack.c.l.b16 %v5987
    %v6967 = vunpack.c.h.b16 %v5987
    %v6968 = vunpack.c.l.b16 %v5988
    %v6969 = vunpack.c.h.b16 %v5988
    %v6970 = vunpack.c.l.b16 %v5989
    %v6971 = vunpack.c.h.b16 %v5989
    %v6972 = vunpack.c.l.b16 %v5990
    %v6973 = vunpack.c.l.b16 %v5991
    %v6974 = vunpack.c.h.b16 %v5991
    %v6975 = vunpack.c.l.b16 %v5992
    %v6976 = vunpack.c.h.b16 %v5992
    %v6977 = vunpack.c.l.b16 %v5993
    %v6978 = vunpack.c.h.b16 %v5993
    %v6979 = vunpack.c.l.b16 %v5994
    %v6980 = vunpack.c.l.b16 %v5995
    %v6981 = vunpack.c.h.b16 %v5995
    %v6982 = vunpack.c.l.b16 %v5996
    %v6983 = vunpack.c.h.b16 %v5996
    %v6984 = vunpack.c.l.b16 %v5997
    %v6985 = vunpack.c.h.b16 %v5997
    %v6986 = vunpack.c.l.b16 %v5998
    %v6987 = vunpack.c.l.b16 %v5999
    %v6988 = vunpack.c.h.b16 %v5999
    %v6989 = vunpack.c.l.b16 %v6000
    %v6990 = vunpack.c.h.b16 %v6000
    %v6991 = vunpack.c.l.b16 %v6001
    %v6992 = vunpack.c.h.b16 %v6001
    %v6993 = vunpack.c.l.b16 %v6002
    %v6994 = vunpack.c.l.b16 %v6003
    %v6995 = vunpack.c.h.b16 %v6003
    %v6996 = vunpack.c.l.b16 %v6004
    %v6997 = vunpack.c.h.b16 %v6004
    %v6998 = vunpack.c.l.b16 %v6005
    %v6999 = vunpack.c.h.b16 %v6005
    %v7000 = vunpack.c.l.b16 %v6006
    %v7001 = vunpack.c.l.b16 %v6007
    %v7002 = vunpack.c.h.b16 %v6007
    %v7003 = vunpack.c.l.b16 %v6008
    %v7004 = vunpack.c.h.b16 %v6008
    %v7005 = vunpack.c.l.b16 %v6009
    %v7006 = vunpack.c.h.b16 %v6009
    %v7007 = vunpack.c.l.b16 %v6010
    %v7008 = vunpack.c.l.b16 %v6011
    %v7009 = vunpack.c.h.b16 %v6011
    %v7010 = vunpack.c.l.b16 %v6012
    %v7011 = vunpack.c.h.b16 %v6012
    %v7012 = vunpack.c.l.b16 %v6013
    %v7013 = vunpack.c.h.b16 %v6013
    %v7014 = vunpack.c.l.b16 %v6014
    %v7015 = vunpack.c.l.b16 %v6015
    %v7016 = vunpack.c.h.b16 %v6015
    %v7017 = vunpack.c.l.b16 %v6016
    %v7018 = vunpack.c.h.b16 %v6016
    %v7019 = vunpack.c.l.b16 %v6017
    %v7020 = vunpack.c.h.b16 %v6017
    %v7021 = vunpack.c.l.b16 %v6018
    %v7022 = vunpack.c.l.b16 %v6019
    %v7023 = vunpack.c.h.b16 %v6019
    %v7024 = vunpack.c.l.b16 %v6020
    %v7025 = vunpack.c.h.b16 %v6020
    %v7026 = vunpack.c.l.b16 %v6021
    %v7027 = vunpack.c.h.b16 %v6021
    %v7028 = vunpack.c.l.b16 %v6022
    %v7029 = vunpack.c.l.b16 %v6023
    %v7030 = vunpack.c.h.b16 %v6023
    %v7031 = vunpack.c.l.b16 %v6024
    %v7032 = vunpack.c.h.b16 %v6024
    %v7033 = vunpack.c.l.b16 %v6025
    %v7034 = vunpack.c.h.b16 %v6025
    %v7035 = vunpack.c.l.b16 %v6026
    %v7036 = vunpack.c.l.b16 %v6027
    %v7037 = vunpack.c.h.b16 %v6027
    %v7038 = vunpack.c.l.b16 %v6028
    %v7039 = vunpack.c.h.b16 %v6028
    %v7040 = vunpack.c.l.b16 %v6029
    %v7041 = vunpack.c.h.b16 %v6029
    %v7042 = vunpack.c.l.b16 %v6030
    %v7043 = vunpack.c.l.b16 %v6031
    %v7044 = vunpack.c.h.b16 %v6031
    %v7045 = vunpack.c.l.b16 %v6032
    %v7046 = vunpack.c.h.b16 %v6032
    %v7047 = vunpack.c.l.b16 %v6033
    %v7048 = vunpack.c.h.b16 %v6033
    %v7049 = vunpack.c.l.b16 %v6034
    %v7050 = vunpack.c.l.b16 %v6035
    %v7051 = vunpack.c.h.b16 %v6035
    %v7052 = vunpack.c.l.b16 %v6036
    %v7053 = vunpack.c.h.b16 %v6036
    %v7054 = vunpack.c.l.b16 %v6037
    %v7055 = vunpack.c.h.b16 %v6037
    %v7056 = vunpack.c.l.b16 %v6038
    %v7057 = vunpack.c.l.b16 %v6039
    %v7058 = vunpack.c.h.b16 %v6039
    %v7059 = vunpack.c.l.b16 %v6040
    %v7060 = vunpack.c.h.b16 %v6040
    %v7061 = vunpack.c.l.b16 %v6041
    %v7062 = vunpack.c.h.b16 %v6041
    %v7063 = vunpack.c.l.b16 %v6042
    %v7064 = vunpack.c.l.b16 %v6043
    %v7065 = vunpack.c.h.b16 %v6043
    %v7066 = vunpack.c.l.b16 %v6044
    %v7067 = vunpack.c.h.b16 %v6044
    %v7068 = vunpack.c.l.b16 %v6045
    %v7069 = vunpack.c.h.b16 %v6045
    %v7070 = vunpack.c.l.b16 %v6046
    %v7071 = vunpack.c.l.b16 %v6047
    %v7072 = vunpack.c.h.b16 %v6047
    %v7073 = vunpack.c.l.b16 %v6048
    %v7074 = vunpack.c.h.b16 %v6048
    %v7075 = vunpack.c.l.b16 %v6049
    %v7076 = vunpack.c.h.b16 %v6049
    %v7077 = vunpack.c.l.b16 %v6050
    %v7078 = vunpack.c.l.b16 %v6051
    %v7079 = vunpack.c.h.b16 %v6051
    %v7080 = vunpack.c.l.b16 %v6052
    %v7081 = vunpack.c.h.b16 %v6052
    %v7082 = vunpack.c.l.b16 %v6053
    %v7083 = vunpack.c.h.b16 %v6053
    %v7084 = vunpack.c.l.b16 %v6054
    %v7085 = vunpack.c.l.b16 %v6055
    %v7086 = vunpack.c.h.b16 %v6055
    %v7087 = vunpack.c.l.b16 %v6056
    %v7088 = vunpack.c.h.b16 %v6056
    %v7089 = vunpack.c.l.b16 %v6057
    %v7090 = vunpack.c.h.b16 %v6057
    %v7091 = vunpack.c.l.b16 %v6058
    %v7092 = vunpack.c.l.b16 %v6059
    %v7093 = vunpack.c.h.b16 %v6059
    %v7094 = vunpack.c.l.b16 %v6060
    %v7095 = vunpack.c.h.b16 %v6060
    %v7096 = vunpack.c.l.b16 %v6061
    %v7097 = vunpack.c.h.b16 %v6061
    %v7098 = vunpack.c.l.b16 %v6062
    %v7099 = vunpack.c.l.b16 %v6063
    %v7100 = vunpack.c.h.b16 %v6063
    %v7101 = vunpack.c.l.b16 %v6064
    %v7102 = vunpack.c.h.b16 %v6064
    %v7103 = vunpack.c.l.b16 %v6065
    %v7104 = vunpack.c.h.b16 %v6065
    %v7105 = vunpack.c.l.b16 %v6066
    %v7106 = vunpack.c.l.b16 %v6067
    %v7107 = vunpack.c.h.b16 %v6067
    %v7108 = vunpack.c.l.b16 %v6068
    %v7109 = vunpack.c.h.b16 %v6068
    %v7110 = vunpack.c.l.b16 %v6069
    %v7111 = vunpack.c.h.b16 %v6069
    %v7112 = vunpack.c.l.b16 %v6070
    %v7113 = vunpack.c.l.b16 %v6071
    %v7114 = vunpack.c.h.b16 %v6071
    %v7115 = vunpack.c.l.b16 %v6072
    %v7116 = vunpack.c.h.b16 %v6072
    %v7117 = vunpack.c.l.b16 %v6073
    %v7118 = vunpack.c.h.b16 %v6073
    %v7119 = vunpack.c.l.b16 %v6074
    %v7120 = vunpack.c.l.b16 %v6075
    %v7121 = vunpack.c.h.b16 %v6075
    %v7122 = vunpack.c.l.b16 %v6076
    %v7123 = vunpack.c.h.b16 %v6076
    %v7124 = vunpack.c.l.b16 %v6077
    %v7125 = vunpack.c.h.b16 %v6077
    %v7126 = vunpack.c.l.b16 %v6078
    %v7127 = vunpack.c.l.b16 %v6079
    %v7128 = vunpack.c.h.b16 %v6079
    %v7129 = vunpack.c.l.b16 %v6080
    %v7130 = vunpack.c.h.b16 %v6080
    %v7131 = vunpack.c.l.b16 %v6081
    %v7132 = vunpack.c.h.b16 %v6081
    %v7133 = vunpack.c.l.b16 %v6082
    %v7134 = vunpack.c.l.b16 %v6083
    %v7135 = vunpack.c.h.b16 %v6083
    %v7136 = vunpack.c.l.b16 %v6084
    %v7137 = vunpack.c.h.b16 %v6084
    %v7138 = vunpack.c.l.b16 %v6085
    %v7139 = vunpack.c.h.b16 %v6085
    %v7140 = vunpack.c.l.b16 %v6086
    %v7141 = vunpack.c.l.b16 %v6087
    %v7142 = vunpack.c.h.b16 %v6087
    %v7143 = vunpack.c.l.b16 %v6088
    %v7144 = vunpack.c.h.b16 %v6088
    %v7145 = vunpack.c.l.b16 %v6089
    %v7146 = vunpack.c.h.b16 %v6089
    %v7147 = vunpack.c.l.b16 %v6090
    %v7148 = vunpack.c.l.b16 %v6091
    %v7149 = vunpack.c.h.b16 %v6091
    %v7150 = vunpack.c.l.b16 %v6092
    %v7151 = vunpack.c.h.b16 %v6092
    %v7152 = vunpack.c.l.b16 %v6093
    %v7153 = vunpack.c.h.b16 %v6093
    %v7154 = vunpack.c.l.b16 %v6094
    %v7155 = vunpack.c.l.b16 %v6095
    %v7156 = vunpack.c.h.b16 %v6095
    %v7157 = vunpack.c.l.b16 %v6096
    %v7158 = vunpack.c.h.b16 %v6096
    %v7159 = vunpack.c.l.b16 %v6097
    %v7160 = vunpack.c.h.b16 %v6097
    %v7161 = vunpack.c.l.b16 %v6098
    %v7162 = vunpack.c.l.b16 %v6099
    %v7163 = vunpack.c.h.b16 %v6099
    %v7164 = vunpack.c.l.b16 %v6100
    %v7165 = vunpack.c.h.b16 %v6100
    %v7166 = vunpack.c.l.b16 %v6101
    %v7167 = vunpack.c.h.b16 %v6101
    %v7168 = vunpack.c.l.b16 %v6102
    %v7169 = vunpack.c.l.b16 %v6103
    %v7170 = vunpack.c.h.b16 %v6103
    %v7171 = vunpack.c.l.b16 %v6104
    %v7172 = vunpack.c.h.b16 %v6104
    %v7173 = vunpack.c.l.b16 %v6105
    %v7174 = vunpack.c.h.b16 %v6105
    %v7175 = vunpack.c.l.b16 %v6106
    %v7176 = vunpack.c.l.b16 %v6107
    %v7177 = vunpack.c.h.b16 %v6107
    %v7178 = vunpack.c.l.b16 %v6108
    %v7179 = vunpack.c.h.b16 %v6108
    %v7180 = vunpack.c.l.b16 %v6109
    %v7181 = vunpack.c.h.b16 %v6109
    %v7182 = vunpack.c.l.b16 %v6110
    %v7183 = vunpack.c.l.b16 %v6111
    %v7184 = vunpack.c.h.b16 %v6111
    %v7185 = vunpack.c.l.b16 %v6112
    %v7186 = vunpack.c.h.b16 %v6112
    %v7187 = vunpack.c.l.b16 %v6113
    %v7188 = vunpack.c.h.b16 %v6113
    %v7189 = vunpack.c.l.b16 %v6114
    %v7190 = vunpack.c.l.b16 %v6115
    %v7191 = vunpack.c.h.b16 %v6115
    %v7192 = vunpack.c.l.b16 %v6116
    %v7193 = vunpack.c.h.b16 %v6116
    %v7194 = vunpack.c.l.b16 %v6117
    %v7195 = vunpack.c.h.b16 %v6117
    %v7196 = vunpack.c.l.b16 %v6118
    %v7197 = vunpack.c.l.b16 %v6119
    %v7198 = vunpack.c.h.b16 %v6119
    %v7199 = vunpack.c.l.b16 %v6120
    %v7200 = vunpack.c.h.b16 %v6120
    %v7201 = vunpack.c.l.b16 %v6121
    %v7202 = vunpack.c.h.b16 %v6121
    %v7203 = vunpack.c.l.b16 %v6122
    %v7204 = vunpack.c.l.b16 %v6123
    %v7205 = vunpack.c.h.b16 %v6123
    %v7206 = vunpack.c.l.b16 %v6124
    %v7207 = vunpack.c.h.b16 %v6124
    %v7208 = vunpack.c.l.b16 %v6125
    %v7209 = vunpack.c.h.b16 %v6125
    %v7210 = vunpack.c.l.b16 %v6126
    %v7211 = vunpack.c.l.b16 %v6127
    %v7212 = vunpack.c.h.b16 %v6127
    %v7213 = vunpack.c.l.b16 %v6128
    %v7214 = vunpack.c.h.b16 %v6128
    %v7215 = vunpack.c.l.b16 %v6129
    %v7216 = vunpack.c.h.b16 %v6129
    %v7217 = vunpack.c.l.b16 %v6130
    %v7218 = vunpack.c.l.b16 %v6131
    %v7219 = vunpack.c.h.b16 %v6131
    %v7220 = vunpack.c.l.b16 %v6132
    %v7221 = vunpack.c.h.b16 %v6132
    %v7222 = vunpack.c.l.b16 %v6133
    %v7223 = vunpack.c.h.b16 %v6133
    %v7224 = vunpack.c.l.b16 %v6134
    %v7225 = vunpack.c.l.b16 %v6135
    %v7226 = vunpack.c.h.b16 %v6135
    %v7227 = vunpack.c.l.b16 %v6136
    %v7228 = vunpack.c.h.b16 %v6136
    %v7229 = vunpack.c.l.b16 %v6137
    %v7230 = vunpack.c.h.b16 %v6137
    %v7231 = vunpack.c.l.b16 %v6138
    %v7232 = vpack.c.b16 %v6567, %v6560
    %v7233 = vpack.c.b16 %v6568, %v6561
    %v7234 = vpack.c.b16 %v6569, %v6562
    %v7235 = vpack.c.b16 %v6570, %v6563
    %v7236 = vpack.c.b16 %v6571, %v6564
    %v7237 = vpack.c.b16 %v6572, %v6565
    %v7238 = vpack.c.b16 %v6573, %v6566
    %v7239 = vpack.c.b16 %v6581, %v6574
    %v7240 = vpack.c.b16 %v6582, %v6575
    %v7241 = vpack.c.b16 %v6583, %v6576
    %v7242 = vpack.c.b16 %v6584, %v6577
    %v7243 = vpack.c.b16 %v6585, %v6578
    %v7244 = vpack.c.b16 %v6586, %v6579
    %v7245 = vpack.c.b16 %v6587, %v6580
    %v7246 = vpack.c.b16 %v6595, %v6588
    %v7247 = vpack.c.b16 %v6596, %v6589
    %v7248 = vpack.c.b16 %v6597, %v6590
    %v7249 = vpack.c.b16 %v6598, %v6591
    %v7250 = vpack.c.b16 %v6599, %v6592
    %v7251 = vpack.c.b16 %v6600, %v6593
    %v7252 = vpack.c.b16 %v6601, %v6594
    %v7253 = vpack.c.b16 %v6609, %v6602
    %v7254 = vpack.c.b16 %v6610, %v6603
    %v7255 = vpack.c.b16 %v6611, %v6604
    %v7256 = vpack.c.b16 %v6612, %v6605
    %v7257 = vpack.c.b16 %v6613, %v6606
    %v7258 = vpack.c.b16 %v6614, %v6607
    %v7259 = vpack.c.b16 %v6615, %v6608
    %v7260 = vpack.c.b16 %v6623, %v6616
    %v7261 = vpack.c.b16 %v6624, %v6617
    %v7262 = vpack.c.b16 %v6625, %v6618
    %v7263 = vpack.c.b16 %v6626, %v6619
    %v7264 = vpack.c.b16 %v6627, %v6620
    %v7265 = vpack.c.b16 %v6628, %v6621
    %v7266 = vpack.c.b16 %v6629, %v6622
    %v7267 = vpack.c.b16 %v6637, %v6630
    %v7268 = vpack.c.b16 %v6638, %v6631
    %v7269 = vpack.c.b16 %v6639, %v6632
    %v7270 = vpack.c.b16 %v6640, %v6633
    %v7271 = vpack.c.b16 %v6641, %v6634
    %v7272 = vpack.c.b16 %v6642, %v6635
    %v7273 = vpack.c.b16 %v6643, %v6636
    %v7274 = vpack.c.b16 %v6651, %v6644
    %v7275 = vpack.c.b16 %v6652, %v6645
    %v7276 = vpack.c.b16 %v6653, %v6646
    %v7277 = vpack.c.b16 %v6654, %v6647
    %v7278 = vpack.c.b16 %v6655, %v6648
    %v7279 = vpack.c.b16 %v6656, %v6649
    %v7280 = vpack.c.b16 %v6657, %v6650
    %v7281 = vpack.c.b16 %v6665, %v6658
    %v7282 = vpack.c.b16 %v6666, %v6659
    %v7283 = vpack.c.b16 %v6667, %v6660
    %v7284 = vpack.c.b16 %v6668, %v6661
    %v7285 = vpack.c.b16 %v6669, %v6662
    %v7286 = vpack.c.b16 %v6670, %v6663
    %v7287 = vpack.c.b16 %v6671, %v6664
    %v7288 = vpack.c.b16 %v6679, %v6672
    %v7289 = vpack.c.b16 %v6680, %v6673
    %v7290 = vpack.c.b16 %v6681, %v6674
    %v7291 = vpack.c.b16 %v6682, %v6675
    %v7292 = vpack.c.b16 %v6683, %v6676
    %v7293 = vpack.c.b16 %v6684, %v6677
    %v7294 = vpack.c.b16 %v6685, %v6678
    %v7295 = vpack.c.b16 %v6693, %v6686
    %v7296 = vpack.c.b16 %v6694, %v6687
    %v7297 = vpack.c.b16 %v6695, %v6688
    %v7298 = vpack.c.b16 %v6696, %v6689
    %v7299 = vpack.c.b16 %v6697, %v6690
    %v7300 = vpack.c.b16 %v6698, %v6691
    %v7301 = vpack.c.b16 %v6699, %v6692
    %v7302 = vpack.c.b16 %v6707, %v6700
    %v7303 = vpack.c.b16 %v6708, %v6701
    %v7304 = vpack.c.b16 %v6709, %v6702
    %v7305 = vpack.c.b16 %v6710, %v6703
    %v7306 = vpack.c.b16 %v6711, %v6704
    %v7307 = vpack.c.b16 %v6712, %v6705
    %v7308 = vpack.c.b16 %v6713, %v6706
    %v7309 = vpack.c.b16 %v6721, %v6714
    %v7310 = vpack.c.b16 %v6722, %v6715
    %v7311 = vpack.c.b16 %v6723, %v6716
    %v7312 = vpack.c.b16 %v6724, %v6717
    %v7313 = vpack.c.b16 %v6725, %v6718
    %v7314 = vpack.c.b16 %v6726, %v6719
    %v7315 = vpack.c.b16 %v6727, %v6720
    %v7316 = vpack.c.b16 %v6735, %v6728
    %v7317 = vpack.c.b16 %v6736, %v6729
    %v7318 = vpack.c.b16 %v6737, %v6730
    %v7319 = vpack.c.b16 %v6738, %v6731
    %v7320 = vpack.c.b16 %v6739, %v6732
    %v7321 = vpack.c.b16 %v6740, %v6733
    %v7322 = vpack.c.b16 %v6741, %v6734
    %v7323 = vpack.c.b16 %v6749, %v6742
    %v7324 = vpack.c.b16 %v6750, %v6743
    %v7325 = vpack.c.b16 %v6751, %v6744
    %v7326 = vpack.c.b16 %v6752, %v6745
    %v7327 = vpack.c.b16 %v6753, %v6746
    %v7328 = vpack.c.b16 %v6754, %v6747
    %v7329 = vpack.c.b16 %v6755, %v6748
    %v7330 = vpack.c.b16 %v6763, %v6756
    %v7331 = vpack.c.b16 %v6764, %v6757
    %v7332 = vpack.c.b16 %v6765, %v6758
    %v7333 = vpack.c.b16 %v6766, %v6759
    %v7334 = vpack.c.b16 %v6767, %v6760
    %v7335 = vpack.c.b16 %v6768, %v6761
    %v7336 = vpack.c.b16 %v6769, %v6762
    %v7337 = vpack.c.b16 %v6777, %v6770
    %v7338 = vpack.c.b16 %v6778, %v6771
    %v7339 = vpack.c.b16 %v6779, %v6772
    %v7340 = vpack.c.b16 %v6780, %v6773
    %v7341 = vpack.c.b16 %v6781, %v6774
    %v7342 = vpack.c.b16 %v6782, %v6775
    %v7343 = vpack.c.b16 %v6783, %v6776
    %v7344 = vpack.c.b16 %v6791, %v6784
    %v7345 = vpack.c.b16 %v6792, %v6785
    %v7346 = vpack.c.b16 %v6793, %v6786
    %v7347 = vpack.c.b16 %v6794, %v6787
    %v7348 = vpack.c.b16 %v6795, %v6788
    %v7349 = vpack.c.b16 %v6796, %v6789
    %v7350 = vpack.c.b16 %v6797, %v6790
    %v7351 = vpack.c.b16 %v6805, %v6798
    %v7352 = vpack.c.b16 %v6806, %v6799
    %v7353 = vpack.c.b16 %v6807, %v6800
    %v7354 = vpack.c.b16 %v6808, %v6801
    %v7355 = vpack.c.b16 %v6809, %v6802
    %v7356 = vpack.c.b16 %v6810, %v6803
    %v7357 = vpack.c.b16 %v6811, %v6804
    %v7358 = vpack.c.b16 %v6819, %v6812
    %v7359 = vpack.c.b16 %v6820, %v6813
    %v7360 = vpack.c.b16 %v6821, %v6814
    %v7361 = vpack.c.b16 %v6822, %v6815
    %v7362 = vpack.c.b16 %v6823, %v6816
    %v7363 = vpack.c.b16 %v6824, %v6817
    %v7364 = vpack.c.b16 %v6825, %v6818
    %v7365 = vpack.c.b16 %v6833, %v6826
    %v7366 = vpack.c.b16 %v6834, %v6827
    %v7367 = vpack.c.b16 %v6835, %v6828
    %v7368 = vpack.c.b16 %v6836, %v6829
    %v7369 = vpack.c.b16 %v6837, %v6830
    %v7370 = vpack.c.b16 %v6838, %v6831
    %v7371 = vpack.c.b16 %v6839, %v6832
    %v7372 = vpack.c.b16 %v6847, %v6840
    %v7373 = vpack.c.b16 %v6848, %v6841
    %v7374 = vpack.c.b16 %v6849, %v6842
    %v7375 = vpack.c.b16 %v6850, %v6843
    %v7376 = vpack.c.b16 %v6851, %v6844
    %v7377 = vpack.c.b16 %v6852, %v6845
    %v7378 = vpack.c.b16 %v6853, %v6846
    %v7379 = vpack.c.b16 %v6861, %v6854
    %v7380 = vpack.c.b16 %v6862, %v6855
    %v7381 = vpack.c.b16 %v6863, %v6856
    %v7382 = vpack.c.b16 %v6864, %v6857
    %v7383 = vpack.c.b16 %v6865, %v6858
    %v7384 = vpack.c.b16 %v6866, %v6859
    %v7385 = vpack.c.b16 %v6867, %v6860
    %v7386 = vpack.c.b16 %v6875, %v6868
    %v7387 = vpack.c.b16 %v6876, %v6869
    %v7388 = vpack.c.b16 %v6877, %v6870
    %v7389 = vpack.c.b16 %v6878, %v6871
    %v7390 = vpack.c.b16 %v6879, %v6872
    %v7391 = vpack.c.b16 %v6880, %v6873
    %v7392 = vpack.c.b16 %v6881, %v6874
    %v7393 = vpack.c.b16 %v6889, %v6882
    %v7394 = vpack.c.b16 %v6890, %v6883
    %v7395 = vpack.c.b16 %v6891, %v6884
    %v7396 = vpack.c.b16 %v6892, %v6885
    %v7397 = vpack.c.b16 %v6893, %v6886
    %v7398 = vpack.c.b16 %v6894, %v6887
    %v7399 = vpack.c.b16 %v6895, %v6888
    %v7400 = vpack.c.b16 %v6903, %v6896
    %v7401 = vpack.c.b16 %v6904, %v6897
    %v7402 = vpack.c.b16 %v6905, %v6898
    %v7403 = vpack.c.b16 %v6906, %v6899
    %v7404 = vpack.c.b16 %v6907, %v6900
    %v7405 = vpack.c.b16 %v6908, %v6901
    %v7406 = vpack.c.b16 %v6909, %v6902
    %v7407 = vpack.c.b16 %v6917, %v6910
    %v7408 = vpack.c.b16 %v6918, %v6911
    %v7409 = vpack.c.b16 %v6919, %v6912
    %v7410 = vpack.c.b16 %v6920, %v6913
    %v7411 = vpack.c.b16 %v6921, %v6914
    %v7412 = vpack.c.b16 %v6922, %v6915
    %v7413 = vpack.c.b16 %v6923, %v6916
    %v7414 = vpack.c.b16 %v6931, %v6924
    %v7415 = vpack.c.b16 %v6932, %v6925
    %v7416 = vpack.c.b16 %v6933, %v6926
    %v7417 = vpack.c.b16 %v6934, %v6927
    %v7418 = vpack.c.b16 %v6935, %v6928
    %v7419 = vpack.c.b16 %v6936, %v6929
    %v7420 = vpack.c.b16 %v6937, %v6930
    %v7421 = vpack.c.b16 %v6945, %v6938
    %v7422 = vpack.c.b16 %v6946, %v6939
    %v7423 = vpack.c.b16 %v6947, %v6940
    %v7424 = vpack.c.b16 %v6948, %v6941
    %v7425 = vpack.c.b16 %v6949, %v6942
    %v7426 = vpack.c.b16 %v6950, %v6943
    %v7427 = vpack.c.b16 %v6951, %v6944
    %v7428 = vpack.c.b16 %v6959, %v6952
    %v7429 = vpack.c.b16 %v6960, %v6953
    %v7430 = vpack.c.b16 %v6961, %v6954
    %v7431 = vpack.c.b16 %v6962, %v6955
    %v7432 = vpack.c.b16 %v6963, %v6956
    %v7433 = vpack.c.b16 %v6964, %v6957
    %v7434 = vpack.c.b16 %v6965, %v6958
    %v7435 = vpack.c.b16 %v6973, %v6966
    %v7436 = vpack.c.b16 %v6974, %v6967
    %v7437 = vpack.c.b16 %v6975, %v6968
    %v7438 = vpack.c.b16 %v6976, %v6969
    %v7439 = vpack.c.b16 %v6977, %v6970
    %v7440 = vpack.c.b16 %v6978, %v6971
    %v7441 = vpack.c.b16 %v6979, %v6972
    %v7442 = vpack.c.b16 %v6987, %v6980
    %v7443 = vpack.c.b16 %v6988, %v6981
    %v7444 = vpack.c.b16 %v6989, %v6982
    %v7445 = vpack.c.b16 %v6990, %v6983
    %v7446 = vpack.c.b16 %v6991, %v6984
    %v7447 = vpack.c.b16 %v6992, %v6985
    %v7448 = vpack.c.b16 %v6993, %v6986
    %v7449 = vpack.c.b16 %v7001, %v6994
    %v7450 = vpack.c.b16 %v7002, %v6995
    %v7451 = vpack.c.b16 %v7003, %v6996
    %v7452 = vpack.c.b16 %v7004, %v6997
    %v7453 = vpack.c.b16 %v7005, %v6998
    %v7454 = vpack.c.b16 %v7006, %v6999
    %v7455 = vpack.c.b16 %v7007, %v7000
    %v7456 = vpack.c.b16 %v7015, %v7008
    %v7457 = vpack.c.b16 %v7016, %v7009
    %v7458 = vpack.c.b16 %v7017, %v7010
    %v7459 = vpack.c.b16 %v7018, %v7011
    %v7460 = vpack.c.b16 %v7019, %v7012
    %v7461 = vpack.c.b16 %v7020, %v7013
    %v7462 = vpack.c.b16 %v7021, %v7014
    %v7463 = vpack.c.b16 %v7029, %v7022
    %v7464 = vpack.c.b16 %v7030, %v7023
    %v7465 = vpack.c.b16 %v7031, %v7024
    %v7466 = vpack.c.b16 %v7032, %v7025
    %v7467 = vpack.c.b16 %v7033, %v7026
    %v7468 = vpack.c.b16 %v7034, %v7027
    %v7469 = vpack.c.b16 %v7035, %v7028
    %v7470 = vpack.c.b16 %v7043, %v7036
    %v7471 = vpack.c.b16 %v7044, %v7037
    %v7472 = vpack.c.b16 %v7045, %v7038
    %v7473 = vpack.c.b16 %v7046, %v7039
    %v7474 = vpack.c.b16 %v7047, %v7040
    %v7475 = vpack.c.b16 %v7048, %v7041
    %v7476 = vpack.c.b16 %v7049, %v7042
    %v7477 = vpack.c.b16 %v7057, %v7050
    %v7478 = vpack.c.b16 %v7058, %v7051
    %v7479 = vpack.c.b16 %v7059, %v7052
    %v7480 = vpack.c.b16 %v7060, %v7053
    %v7481 = vpack.c.b16 %v7061, %v7054
    %v7482 = vpack.c.b16 %v7062, %v7055
    %v7483 = vpack.c.b16 %v7063, %v7056
    %v7484 = vpack.c.b16 %v7071, %v7064
    %v7485 = vpack.c.b16 %v7072, %v7065
    %v7486 = vpack.c.b16 %v7073, %v7066
    %v7487 = vpack.c.b16 %v7074, %v7067
    %v7488 = vpack.c.b16 %v7075, %v7068
    %v7489 = vpack.c.b16 %v7076, %v7069
    %v7490 = vpack.c.b16 %v7077, %v7070
    %v7491 = vpack.c.b16 %v7085, %v7078
    %v7492 = vpack.c.b16 %v7086, %v7079
    %v7493 = vpack.c.b16 %v7087, %v7080
    %v7494 = vpack.c.b16 %v7088, %v7081
    %v7495 = vpack.c.b16 %v7089, %v7082
    %v7496 = vpack.c.b16 %v7090, %v7083
    %v7497 = vpack.c.b16 %v7091, %v7084
    %v7498 = vpack.c.b16 %v7099, %v7092
    %v7499 = vpack.c.b16 %v7100, %v7093
    %v7500 = vpack.c.b16 %v7101, %v7094
    %v7501 = vpack.c.b16 %v7102, %v7095
    %v7502 = vpack.c.b16 %v7103, %v7096
    %v7503 = vpack.c.b16 %v7104, %v7097
    %v7504 = vpack.c.b16 %v7105, %v7098
    %v7505 = vpack.c.b16 %v7113, %v7106
    %v7506 = vpack.c.b16 %v7114, %v7107
    %v7507 = vpack.c.b16 %v7115, %v7108
    %v7508 = vpack.c.b16 %v7116, %v7109
    %v7509 = vpack.c.b16 %v7117, %v7110
    %v7510 = vpack.c.b16 %v7118, %v7111
    %v7511 = vpack.c.b16 %v7119, %v7112
    %v7512 = vpack.c.b16 %v7127, %v7120
    %v7513 = vpack.c.b16 %v7128, %v7121
    %v7514 = vpack.c.b16 %v7129, %v7122
    %v7515 = vpack.c.b16 %v7130, %v7123
    %v7516 = vpack.c.b16 %v7131, %v7124
    %v7517 = vpack.c.b16 %v7132, %v7125
    %v7518 = vpack.c.b16 %v7133, %v7126
    %v7519 = vpack.c.b16 %v7141, %v7134
    %v7520 = vpack.c.b16 %v7142, %v7135
    %v7521 = vpack.c.b16 %v7143, %v7136
    %v7522 = vpack.c.b16 %v7144, %v7137
    %v7523 = vpack.c.b16 %v7145, %v7138
    %v7524 = vpack.c.b16 %v7146, %v7139
    %v7525 = vpack.c.b16 %v7147, %v7140
    %v7526 = vpack.c.b16 %v7155, %v7148
    %v7527 = vpack.c.b16 %v7156, %v7149
    %v7528 = vpack.c.b16 %v7157, %v7150
    %v7529 = vpack.c.b16 %v7158, %v7151
    %v7530 = vpack.c.b16 %v7159, %v7152
    %v7531 = vpack.c.b16 %v7160, %v7153
    %v7532 = vpack.c.b16 %v7161, %v7154
    %v7533 = vpack.c.b16 %v7169, %v7162
    %v7534 = vpack.c.b16 %v7170, %v7163
    %v7535 = vpack.c.b16 %v7171, %v7164
    %v7536 = vpack.c.b16 %v7172, %v7165
    %v7537 = vpack.c.b16 %v7173, %v7166
    %v7538 = vpack.c.b16 %v7174, %v7167
    %v7539 = vpack.c.b16 %v7175, %v7168
    %v7540 = vpack.c.b16 %v7183, %v7176
    %v7541 = vpack.c.b16 %v7184, %v7177
    %v7542 = vpack.c.b16 %v7185, %v7178
    %v7543 = vpack.c.b16 %v7186, %v7179
    %v7544 = vpack.c.b16 %v7187, %v7180
    %v7545 = vpack.c.b16 %v7188, %v7181
    %v7546 = vpack.c.b16 %v7189, %v7182
    %v7547 = vpack.c.b16 %v7197, %v7190
    %v7548 = vpack.c.b16 %v7198, %v7191
    %v7549 = vpack.c.b16 %v7199, %v7192
    %v7550 = vpack.c.b16 %v7200, %v7193
    %v7551 = vpack.c.b16 %v7201, %v7194
    %v7552 = vpack.c.b16 %v7202, %v7195
    %v7553 = vpack.c.b16 %v7203, %v7196
    %v7554 = vpack.c.b16 %v7211, %v7204
    %v7555 = vpack.c.b16 %v7212, %v7205
    %v7556 = vpack.c.b16 %v7213, %v7206
    %v7557 = vpack.c.b16 %v7214, %v7207
    %v7558 = vpack.c.b16 %v7215, %v7208
    %v7559 = vpack.c.b16 %v7216, %v7209
    %v7560 = vpack.c.b16 %v7217, %v7210
    %v7561 = vpack.c.b16 %v7225, %v7218
    %v7562 = vpack.c.b16 %v7226, %v7219
    %v7563 = vpack.c.b16 %v7227, %v7220
    %v7564 = vpack.c.b16 %v7228, %v7221
    %v7565 = vpack.c.b16 %v7229, %v7222
    %v7566 = vpack.c.b16 %v7230, %v7223
    %v7567 = vpack.c.b16 %v7231, %v7224
    %7904 = vmatprep.subr.bf16.mxu0 %v7233
    %7905 = vmatpush1.bf16.msra.mxu0 %v7232
    %7906 = vmatprep.subr.bf16.mxu0 %v7240
    %7907 = vmatpush1.bf16.msra.mxu0 %v7239
    %7908 = vmatprep.subr.bf16.mxu0 %v7247
    %7909 = vmatpush1.bf16.msra.mxu0 %v7246
    %7910 = vmatprep.subr.bf16.mxu0 %v7254
    %7911 = vmatpush1.bf16.msra.mxu0 %v7253
    %7912 = vmatprep.subr.bf16.mxu0 %v7261
    %7913 = vmatpush1.bf16.msra.mxu0 %v7260
    %7914 = vmatprep.subr.bf16.mxu0 %v7268
    %7915 = vmatpush1.bf16.msra.mxu0 %v7267
    %7916 = vmatprep.subr.bf16.mxu0 %v7275
    %7917 = vmatpush1.bf16.msra.mxu0 %v7274
    %7918 = vmatprep.subr.bf16.mxu0 %v7282
    %7919 = vmatpush1.bf16.msra.mxu0 %v7281
    %7920 = vmatprep.subr.bf16.mxu0 %v7289
    %7921 = vmatpush1.bf16.msra.mxu0 %v7288
    %7922 = vmatprep.subr.bf16.mxu0 %v7296
    %7923 = vmatpush1.bf16.msra.mxu0 %v7295
    %7924 = vmatprep.subr.bf16.mxu0 %v7303
    %7925 = vmatpush1.bf16.msra.mxu0 %v7302
    %7926 = vmatprep.subr.bf16.mxu0 %v7310
    %7927 = vmatpush1.bf16.msra.mxu0 %v7309
    %7928 = vmatprep.subr.bf16.mxu0 %v7317
    %7929 = vmatpush1.bf16.msra.mxu0 %v7316
    %7930 = vmatprep.subr.bf16.mxu0 %v7324
    %7931 = vmatpush1.bf16.msra.mxu0 %v7323
    %7932 = vmatprep.subr.bf16.mxu0 %v7331
    %7933 = vmatpush1.bf16.msra.mxu0 %v7330
    %7934 = vmatprep.subr.bf16.mxu0 %v7338
    %7935 = vmatpush1.bf16.msra.mxu0 %v7337
    %7936 = vmatprep.mubr.bf16.mxu0 %v5750
    %7937 = vmatmul.mubr.bf16.gmra.mrb[0].mxu0 %v5749
    %v7938 = vpop.f32.mrb[0].mxu0
    %v7939 = vadd.f32 %v6144, %v7938
    %v7940 = vpop.f32.mrb[0].mxu0
    %v7941 = vadd.f32 %v6148, %v7940
    %v7942 = vpop.f32.mrb[0].mxu0
    %v7943 = vpop.f32.mrb[0].mxu0
    %7944 = vdwg.mxu0
    %7945 = vmatprep.subr.bf16.mxu0 %v7345
    %7946 = vmatpush1.bf16.msra.mxu0 %v7344
    %7947 = vmatprep.subr.bf16.mxu0 %v7352
    %7948 = vmatpush1.bf16.msra.mxu0 %v7351
    %7949 = vmatprep.subr.bf16.mxu0 %v7359
    %7950 = vmatpush1.bf16.msra.mxu0 %v7358
    %7951 = vmatprep.subr.bf16.mxu0 %v7366
    %7952 = vmatpush1.bf16.msra.mxu0 %v7365
    %7953 = vmatprep.subr.bf16.mxu0 %v7373
    %7954 = vmatpush1.bf16.msra.mxu0 %v7372
    %7955 = vmatprep.subr.bf16.mxu0 %v7380
    %7956 = vmatpush1.bf16.msra.mxu0 %v7379
    %7957 = vmatprep.subr.bf16.mxu0 %v7387
    %7958 = vmatpush1.bf16.msra.mxu0 %v7386
    %7959 = vmatprep.subr.bf16.mxu0 %v7394
    %7960 = vmatpush1.bf16.msra.mxu0 %v7393
    %7961 = vmatprep.subr.bf16.mxu0 %v7401
    %7962 = vmatpush1.bf16.msra.mxu0 %v7400
    %7963 = vmatprep.subr.bf16.mxu0 %v7408
    %7964 = vmatpush1.bf16.msra.mxu0 %v7407
    %7965 = vmatprep.subr.bf16.mxu0 %v7415
    %7966 = vmatpush1.bf16.msra.mxu0 %v7414
    %7967 = vmatprep.subr.bf16.mxu0 %v7422
    %7968 = vmatpush1.bf16.msra.mxu0 %v7421
    %7969 = vmatprep.subr.bf16.mxu0 %v7429
    %7970 = vmatpush1.bf16.msra.mxu0 %v7428
    %7971 = vmatprep.subr.bf16.mxu0 %v7436
    %7972 = vmatpush1.bf16.msra.mxu0 %v7435
    %7973 = vmatprep.subr.bf16.mxu0 %v7443
    %7974 = vmatpush1.bf16.msra.mxu0 %v7442
    %7975 = vmatprep.subr.bf16.mxu0 %v7450
    %7976 = vmatpush1.bf16.msra.mxu0 %v7449
    %7977 = vmatprep.mubr.bf16.mxu0 %v5752
    %7978 = vmatmul.mubr.bf16.gmra.mrb[0].mxu0 %v5751
    %v7979 = vpop.f32.mrb[0].mxu0
    %v7980 = vadd.f32 %v7939, %v7979
    %v7981 = vpop.f32.mrb[0].mxu0
    %v7982 = vadd.f32 %v7941, %v7981
    %v7983 = vpop.f32.mrb[0].mxu0
    %v7984 = vpop.f32.mrb[0].mxu0
    %7985 = vdwg.mxu0
    %7986 = vmatprep.subr.bf16.mxu0 %v7457
    %7987 = vmatpush1.bf16.msra.mxu0 %v7456
    %7988 = vmatprep.subr.bf16.mxu0 %v7464
    %7989 = vmatpush1.bf16.msra.mxu0 %v7463
    %7990 = vmatprep.subr.bf16.mxu0 %v7471
    %7991 = vmatpush1.bf16.msra.mxu0 %v7470
    %7992 = vmatprep.subr.bf16.mxu0 %v7478
    %7993 = vmatpush1.bf16.msra.mxu0 %v7477
    %7994 = vmatprep.subr.bf16.mxu0 %v7485
    %7995 = vmatpush1.bf16.msra.mxu0 %v7484
    %7996 = vmatprep.subr.bf16.mxu0 %v7492
    %7997 = vmatpush1.bf16.msra.mxu0 %v7491
    %7998 = vmatprep.subr.bf16.mxu0 %v7499
    %7999 = vmatpush1.bf16.msra.mxu0 %v7498
    %8000 = vmatprep.subr.bf16.mxu0 %v7506
    %8001 = vmatpush1.bf16.msra.mxu0 %v7505
    %8002 = vmatprep.subr.bf16.mxu0 %v7513
    %8003 = vmatpush1.bf16.msra.mxu0 %v7512
    %8004 = vmatprep.subr.bf16.mxu0 %v7520
    %8005 = vmatpush1.bf16.msra.mxu0 %v7519
    %8006 = vmatprep.subr.bf16.mxu0 %v7527
    %8007 = vmatpush1.bf16.msra.mxu0 %v7526
    %8008 = vmatprep.subr.bf16.mxu0 %v7534
    %8009 = vmatpush1.bf16.msra.mxu0 %v7533
    %8010 = vmatprep.subr.bf16.mxu0 %v7541
    %8011 = vmatpush1.bf16.msra.mxu0 %v7540
    %8012 = vmatprep.subr.bf16.mxu0 %v7548
    %8013 = vmatpush1.bf16.msra.mxu0 %v7547
    %8014 = vmatprep.subr.bf16.mxu0 %v7555
    %8015 = vmatpush1.bf16.msra.mxu0 %v7554
    %8016 = vmatprep.subr.bf16.mxu0 %v7562
    %8017 = vmatpush1.bf16.msra.mxu0 %v7561
    %8018 = vmatprep.mubr.bf16.mxu0 %v5754
    %8019 = vmatmul.mubr.bf16.gmra.mrb[0].mxu0 %v5753
    %v8020 = vpop.f32.mrb[0].mxu0
    %v8021 = vadd.f32 %v7980, %v8020
    %v8022 = vpop.f32.mrb[0].mxu0
    %v8023 = vadd.f32 %v7982, %v8022
    %v8024 = vpop.f32.mrb[0].mxu0
    %v8025 = vpop.f32.mrb[0].mxu0
    %8026 = vdwg.mxu0
    %8027 = vmatprep.subr.bf16.mxu0 %v7235
    %8028 = vmatpush1.bf16.msra.mxu0 %v7234
    %8029 = vmatprep.subr.bf16.mxu0 %v7242
    %8030 = vmatpush1.bf16.msra.mxu0 %v7241
    %8031 = vmatprep.subr.bf16.mxu0 %v7249
    %8032 = vmatpush1.bf16.msra.mxu0 %v7248
    %8033 = vmatprep.subr.bf16.mxu0 %v7256
    %8034 = vmatpush1.bf16.msra.mxu0 %v7255
    %8035 = vmatprep.subr.bf16.mxu0 %v7263
    %8036 = vmatpush1.bf16.msra.mxu0 %v7262
    %8037 = vmatprep.subr.bf16.mxu0 %v7270
    %8038 = vmatpush1.bf16.msra.mxu0 %v7269
    %8039 = vmatprep.subr.bf16.mxu0 %v7277
    %8040 = vmatpush1.bf16.msra.mxu0 %v7276
    %8041 = vmatprep.subr.bf16.mxu0 %v7284
    %8042 = vmatpush1.bf16.msra.mxu0 %v7283
    %8043 = vmatprep.subr.bf16.mxu0 %v7291
    %8044 = vmatpush1.bf16.msra.mxu0 %v7290
    %8045 = vmatprep.subr.bf16.mxu0 %v7298
    %8046 = vmatpush1.bf16.msra.mxu0 %v7297
    %8047 = vmatprep.subr.bf16.mxu0 %v7305
    %8048 = vmatpush1.bf16.msra.mxu0 %v7304
    %8049 = vmatprep.subr.bf16.mxu0 %v7312
    %8050 = vmatpush1.bf16.msra.mxu0 %v7311
    %8051 = vmatprep.subr.bf16.mxu0 %v7319
    %8052 = vmatpush1.bf16.msra.mxu0 %v7318
    %8053 = vmatprep.subr.bf16.mxu0 %v7326
    %8054 = vmatpush1.bf16.msra.mxu0 %v7325
    %8055 = vmatprep.subr.bf16.mxu0 %v7333
    %8056 = vmatpush1.bf16.msra.mxu0 %v7332
    %8057 = vmatprep.subr.bf16.mxu0 %v7340
    %8058 = vmatpush1.bf16.msra.mxu0 %v7339
    %8059 = vmatprep.mubr.bf16.mxu0 %v5750
    %8060 = vmatmul.mubr.bf16.gmra.mrb[0].mxu0 %v5749
    %v8061 = vpop.f32.mrb[0].mxu0
    %v8062 = vadd.f32 %v6152, %v8061
    %v8063 = vpop.f32.mrb[0].mxu0
    %v8064 = vadd.f32 %v6156, %v8063
    %v8065 = vpop.f32.mrb[0].mxu0
    %v8066 = vpop.f32.mrb[0].mxu0
    %8067 = vdwg.mxu0
    %8068 = vmatprep.subr.bf16.mxu0 %v7347
    %8069 = vmatpush1.bf16.msra.mxu0 %v7346
    %8070 = vmatprep.subr.bf16.mxu0 %v7354
    %8071 = vmatpush1.bf16.msra.mxu0 %v7353
    %8072 = vmatprep.subr.bf16.mxu0 %v7361
    %8073 = vmatpush1.bf16.msra.mxu0 %v7360
    %8074 = vmatprep.subr.bf16.mxu0 %v7368
    %8075 = vmatpush1.bf16.msra.mxu0 %v7367
    %8076 = vmatprep.subr.bf16.mxu0 %v7375
    %8077 = vmatpush1.bf16.msra.mxu0 %v7374
    %8078 = vmatprep.subr.bf16.mxu0 %v7382
    %8079 = vmatpush1.bf16.msra.mxu0 %v7381
    %8080 = vmatprep.subr.bf16.mxu0 %v7389
    %8081 = vmatpush1.bf16.msra.mxu0 %v7388
    %8082 = vmatprep.subr.bf16.mxu0 %v7396
    %8083 = vmatpush1.bf16.msra.mxu0 %v7395
    %8084 = vmatprep.subr.bf16.mxu0 %v7403
    %8085 = vmatpush1.bf16.msra.mxu0 %v7402
    %8086 = vmatprep.subr.bf16.mxu0 %v7410
    %8087 = vmatpush1.bf16.msra.mxu0 %v7409
    %8088 = vmatprep.subr.bf16.mxu0 %v7417
    %8089 = vmatpush1.bf16.msra.mxu0 %v7416
    %8090 = vmatprep.subr.bf16.mxu0 %v7424
    %8091 = vmatpush1.bf16.msra.mxu0 %v7423
    %8092 = vmatprep.subr.bf16.mxu0 %v7431
    %8093 = vmatpush1.bf16.msra.mxu0 %v7430
    %8094 = vmatprep.subr.bf16.mxu0 %v7438
    %8095 = vmatpush1.bf16.msra.mxu0 %v7437
    %8096 = vmatprep.subr.bf16.mxu0 %v7445
    %8097 = vmatpush1.bf16.msra.mxu0 %v7444
    %8098 = vmatprep.subr.bf16.mxu0 %v7452
    %8099 = vmatpush1.bf16.msra.mxu0 %v7451
    %8100 = vmatprep.mubr.bf16.mxu0 %v5752
    %8101 = vmatmul.mubr.bf16.gmra.mrb[0].mxu0 %v5751
    %v8102 = vpop.f32.mrb[0].mxu0
    %v8103 = vadd.f32 %v8062, %v8102
    %v8104 = vpop.f32.mrb[0].mxu0
    %v8105 = vadd.f32 %v8064, %v8104
    %v8106 = vpop.f32.mrb[0].mxu0
    %v8107 = vpop.f32.mrb[0].mxu0
    %8108 = vdwg.mxu0
    %8109 = vmatprep.subr.bf16.mxu0 %v7459
    %8110 = vmatpush1.bf16.msra.mxu0 %v7458
    %8111 = vmatprep.subr.bf16.mxu0 %v7466
    %8112 = vmatpush1.bf16.msra.mxu0 %v7465
    %8113 = vmatprep.subr.bf16.mxu0 %v7473
    %8114 = vmatpush1.bf16.msra.mxu0 %v7472
    %8115 = vmatprep.subr.bf16.mxu0 %v7480
    %8116 = vmatpush1.bf16.msra.mxu0 %v7479
    %8117 = vmatprep.subr.bf16.mxu0 %v7487
    %8118 = vmatpush1.bf16.msra.mxu0 %v7486
    %8119 = vmatprep.subr.bf16.mxu0 %v7494
    %8120 = vmatpush1.bf16.msra.mxu0 %v7493
    %8121 = vmatprep.subr.bf16.mxu0 %v7501
    %8122 = vmatpush1.bf16.msra.mxu0 %v7500
    %8123 = vmatprep.subr.bf16.mxu0 %v7508
    %8124 = vmatpush1.bf16.msra.mxu0 %v7507
    %8125 = vmatprep.subr.bf16.mxu0 %v7515
    %8126 = vmatpush1.bf16.msra.mxu0 %v7514
    %8127 = vmatprep.subr.bf16.mxu0 %v7522
    %8128 = vmatpush1.bf16.msra.mxu0 %v7521
    %8129 = vmatprep.subr.bf16.mxu0 %v7529
    %8130 = vmatpush1.bf16.msra.mxu0 %v7528
    %8131 = vmatprep.subr.bf16.mxu0 %v7536
    %8132 = vmatpush1.bf16.msra.mxu0 %v7535
    %8133 = vmatprep.subr.bf16.mxu0 %v7543
    %8134 = vmatpush1.bf16.msra.mxu0 %v7542
    %8135 = vmatprep.subr.bf16.mxu0 %v7550
    %8136 = vmatpush1.bf16.msra.mxu0 %v7549
    %8137 = vmatprep.subr.bf16.mxu0 %v7557
    %8138 = vmatpush1.bf16.msra.mxu0 %v7556
    %8139 = vmatprep.subr.bf16.mxu0 %v7564
    %8140 = vmatpush1.bf16.msra.mxu0 %v7563
    %8141 = vmatprep.mubr.bf16.mxu0 %v5754
    %8142 = vmatmul.mubr.bf16.gmra.mrb[0].mxu0 %v5753
    %v8143 = vpop.f32.mrb[0].mxu0
    %v8144 = vadd.f32 %v8103, %v8143
    %v8145 = vpop.f32.mrb[0].mxu0
    %v8146 = vadd.f32 %v8105, %v8145
    %v8147 = vpop.f32.mrb[0].mxu0
    %v8148 = vpop.f32.mrb[0].mxu0
    %8149 = vdwg.mxu0
    %8150 = vmatprep.subr.bf16.mxu0 %v7237
    %8151 = vmatpush1.bf16.msra.mxu0 %v7236
    %8152 = vmatprep.subr.bf16.mxu0 %v7244
    %8153 = vmatpush1.bf16.msra.mxu0 %v7243
    %8154 = vmatprep.subr.bf16.mxu0 %v7251
    %8155 = vmatpush1.bf16.msra.mxu0 %v7250
    %8156 = vmatprep.subr.bf16.mxu0 %v7258
    %8157 = vmatpush1.bf16.msra.mxu0 %v7257
    %8158 = vmatprep.subr.bf16.mxu0 %v7265
    %8159 = vmatpush1.bf16.msra.mxu0 %v7264
    %8160 = vmatprep.subr.bf16.mxu0 %v7272
    %8161 = vmatpush1.bf16.msra.mxu0 %v7271
    %8162 = vmatprep.subr.bf16.mxu0 %v7279
    %8163 = vmatpush1.bf16.msra.mxu0 %v7278
    %8164 = vmatprep.subr.bf16.mxu0 %v7286
    %8165 = vmatpush1.bf16.msra.mxu0 %v7285
    %8166 = vmatprep.subr.bf16.mxu0 %v7293
    %8167 = vmatpush1.bf16.msra.mxu0 %v7292
    %8168 = vmatprep.subr.bf16.mxu0 %v7300
    %8169 = vmatpush1.bf16.msra.mxu0 %v7299
    %8170 = vmatprep.subr.bf16.mxu0 %v7307
    %8171 = vmatpush1.bf16.msra.mxu0 %v7306
    %8172 = vmatprep.subr.bf16.mxu0 %v7314
    %8173 = vmatpush1.bf16.msra.mxu0 %v7313
    %8174 = vmatprep.subr.bf16.mxu0 %v7321
    %8175 = vmatpush1.bf16.msra.mxu0 %v7320
    %8176 = vmatprep.subr.bf16.mxu0 %v7328
    %8177 = vmatpush1.bf16.msra.mxu0 %v7327
    %8178 = vmatprep.subr.bf16.mxu0 %v7335
    %8179 = vmatpush1.bf16.msra.mxu0 %v7334
    %8180 = vmatprep.subr.bf16.mxu0 %v7342
    %8181 = vmatpush1.bf16.msra.mxu0 %v7341
    %8182 = vmatprep.mubr.bf16.mxu0 %v5750
    %8183 = vmatmul.mubr.bf16.gmra.mrb[0].mxu0 %v5749
    %v8184 = vpop.f32.mrb[0].mxu0
    %v8185 = vadd.f32 %v6160, %v8184
    %v8186 = vpop.f32.mrb[0].mxu0
    %v8187 = vadd.f32 %v6164, %v8186
    %v8188 = vpop.f32.mrb[0].mxu0
    %v8189 = vpop.f32.mrb[0].mxu0
    %8190 = vdwg.mxu0
    %8191 = vmatprep.subr.bf16.mxu0 %v7349
    %8192 = vmatpush1.bf16.msra.mxu0 %v7348
    %8193 = vmatprep.subr.bf16.mxu0 %v7356
    %8194 = vmatpush1.bf16.msra.mxu0 %v7355
    %8195 = vmatprep.subr.bf16.mxu0 %v7363
    %8196 = vmatpush1.bf16.msra.mxu0 %v7362
    %8197 = vmatprep.subr.bf16.mxu0 %v7370
    %8198 = vmatpush1.bf16.msra.mxu0 %v7369
    %8199 = vmatprep.subr.bf16.mxu0 %v7377
    %8200 = vmatpush1.bf16.msra.mxu0 %v7376
    %8201 = vmatprep.subr.bf16.mxu0 %v7384
    %8202 = vmatpush1.bf16.msra.mxu0 %v7383
    %8203 = vmatprep.subr.bf16.mxu0 %v7391
    %8204 = vmatpush1.bf16.msra.mxu0 %v7390
    %8205 = vmatprep.subr.bf16.mxu0 %v7398
    %8206 = vmatpush1.bf16.msra.mxu0 %v7397
    %8207 = vmatprep.subr.bf16.mxu0 %v7405
    %8208 = vmatpush1.bf16.msra.mxu0 %v7404
    %8209 = vmatprep.subr.bf16.mxu0 %v7412
    %8210 = vmatpush1.bf16.msra.mxu0 %v7411
    %8211 = vmatprep.subr.bf16.mxu0 %v7419
    %8212 = vmatpush1.bf16.msra.mxu0 %v7418
    %8213 = vmatprep.subr.bf16.mxu0 %v7426
    %8214 = vmatpush1.bf16.msra.mxu0 %v7425
    %8215 = vmatprep.subr.bf16.mxu0 %v7433
    %8216 = vmatpush1.bf16.msra.mxu0 %v7432
    %8217 = vmatprep.subr.bf16.mxu0 %v7440
    %8218 = vmatpush1.bf16.msra.mxu0 %v7439
    %8219 = vmatprep.subr.bf16.mxu0 %v7447
    %8220 = vmatpush1.bf16.msra.mxu0 %v7446
    %8221 = vmatprep.subr.bf16.mxu0 %v7454
    %8222 = vmatpush1.bf16.msra.mxu0 %v7453
    %8223 = vmatprep.mubr.bf16.mxu0 %v5752
    %8224 = vmatmul.mubr.bf16.gmra.mrb[0].mxu0 %v5751
    %v8225 = vpop.f32.mrb[0].mxu0
    %v8226 = vadd.f32 %v8185, %v8225
    %v8227 = vpop.f32.mrb[0].mxu0
    %v8228 = vadd.f32 %v8187, %v8227
    %v8229 = vpop.f32.mrb[0].mxu0
    %v8230 = vpop.f32.mrb[0].mxu0
    %8231 = vdwg.mxu0
    %8232 = vmatprep.subr.bf16.mxu0 %v7461
    %8233 = vmatpush1.bf16.msra.mxu0 %v7460
    %8234 = vmatprep.subr.bf16.mxu0 %v7468
    %8235 = vmatpush1.bf16.msra.mxu0 %v7467
    %8236 = vmatprep.subr.bf16.mxu0 %v7475
    %8237 = vmatpush1.bf16.msra.mxu0 %v7474
    %8238 = vmatprep.subr.bf16.mxu0 %v7482
    %8239 = vmatpush1.bf16.msra.mxu0 %v7481
    %8240 = vmatprep.subr.bf16.mxu0 %v7489
    %8241 = vmatpush1.bf16.msra.mxu0 %v7488
    %8242 = vmatprep.subr.bf16.mxu0 %v7496
    %8243 = vmatpush1.bf16.msra.mxu0 %v7495
    %8244 = vmatprep.subr.bf16.mxu0 %v7503
    %8245 = vmatpush1.bf16.msra.mxu0 %v7502
    %8246 = vmatprep.subr.bf16.mxu0 %v7510
    %8247 = vmatpush1.bf16.msra.mxu0 %v7509
    %8248 = vmatprep.subr.bf16.mxu0 %v7517
    %8249 = vmatpush1.bf16.msra.mxu0 %v7516
    %8250 = vmatprep.subr.bf16.mxu0 %v7524
    %8251 = vmatpush1.bf16.msra.mxu0 %v7523
    %8252 = vmatprep.subr.bf16.mxu0 %v7531
    %8253 = vmatpush1.bf16.msra.mxu0 %v7530
    %8254 = vmatprep.subr.bf16.mxu0 %v7538
    %8255 = vmatpush1.bf16.msra.mxu0 %v7537
    %8256 = vmatprep.subr.bf16.mxu0 %v7545
    %8257 = vmatpush1.bf16.msra.mxu0 %v7544
    %8258 = vmatprep.subr.bf16.mxu0 %v7552
    %8259 = vmatpush1.bf16.msra.mxu0 %v7551
    %8260 = vmatprep.subr.bf16.mxu0 %v7559
    %8261 = vmatpush1.bf16.msra.mxu0 %v7558
    %8262 = vmatprep.subr.bf16.mxu0 %v7566
    %8263 = vmatpush1.bf16.msra.mxu0 %v7565
    %8264 = vmatprep.mubr.bf16.mxu0 %v5754
    %8265 = vmatmul.mubr.bf16.gmra.mrb[0].mxu0 %v5753
    %v8266 = vpop.f32.mrb[0].mxu0
    %v8267 = vadd.f32 %v8226, %v8266
    %v8268 = vpop.f32.mrb[0].mxu0
    %v8269 = vadd.f32 %v8228, %v8268
    %v8270 = vpop.f32.mrb[0].mxu0
    %v8271 = vpop.f32.mrb[0].mxu0
    %8272 = vdwg.mxu0
    %8273 = vmatprep.subr.bf16.mxu0 0
    %8274 = vmatpush1.bf16.msra.mxu0 %v7238
    %8275 = vmatprep.subr.bf16.mxu0 0
    %8276 = vmatpush1.bf16.msra.mxu0 %v7245
    %8277 = vmatprep.subr.bf16.mxu0 0
    %8278 = vmatpush1.bf16.msra.mxu0 %v7252
    %8279 = vmatprep.subr.bf16.mxu0 0
    %8280 = vmatpush1.bf16.msra.mxu0 %v7259
    %8281 = vmatprep.subr.bf16.mxu0 0
    %8282 = vmatpush1.bf16.msra.mxu0 %v7266
    %8283 = vmatprep.subr.bf16.mxu0 0
    %8284 = vmatpush1.bf16.msra.mxu0 %v7273
    %8285 = vmatprep.subr.bf16.mxu0 0
    %8286 = vmatpush1.bf16.msra.mxu0 %v7280
    %8287 = vmatprep.subr.bf16.mxu0 0
    %8288 = vmatpush1.bf16.msra.mxu0 %v7287
    %8289 = vmatprep.subr.bf16.mxu0 0
    %8290 = vmatpush1.bf16.msra.mxu0 %v7294
    %8291 = vmatprep.subr.bf16.mxu0 0
    %8292 = vmatpush1.bf16.msra.mxu0 %v7301
    %8293 = vmatprep.subr.bf16.mxu0 0
    %8294 = vmatpush1.bf16.msra.mxu0 %v7308
    %8295 = vmatprep.subr.bf16.mxu0 0
    %8296 = vmatpush1.bf16.msra.mxu0 %v7315
    %8297 = vmatprep.subr.bf16.mxu0 0
    %8298 = vmatpush1.bf16.msra.mxu0 %v7322
    %8299 = vmatprep.subr.bf16.mxu0 0
    %8300 = vmatpush1.bf16.msra.mxu0 %v7329
    %8301 = vmatprep.subr.bf16.mxu0 0
    %8302 = vmatpush1.bf16.msra.mxu0 %v7336
    %8303 = vmatprep.subr.bf16.mxu0 0
    %8304 = vmatpush1.bf16.msra.mxu0 %v7343
    %8305 = vmatprep.mubr.bf16.mxu0 %v5750
    %8306 = vmatmul.mubr.bf16.gmra.mrb[0].mxu0 %v5749
    %v8307 = vpop.f32.mrb[0].mxu0
    %v8308 = vadd.f32 %v6168, %v8307
    %v8309 = vpop.f32.mrb[0].mxu0
    %v8310 = vpop.f32.mrb[0].mxu0
    %v8311 = vpop.f32.mrb[0].mxu0
    %8312 = vdwg.mxu0
    %8313 = vmatprep.subr.bf16.mxu0 0
    %8314 = vmatpush1.bf16.msra.mxu0 %v7350
    %8315 = vmatprep.subr.bf16.mxu0 0
    %8316 = vmatpush1.bf16.msra.mxu0 %v7357
    %8317 = vmatprep.subr.bf16.mxu0 0
    %8318 = vmatpush1.bf16.msra.mxu0 %v7364
    %8319 = vmatprep.subr.bf16.mxu0 0
    %8320 = vmatpush1.bf16.msra.mxu0 %v7371
    %8321 = vmatprep.subr.bf16.mxu0 0
    %8322 = vmatpush1.bf16.msra.mxu0 %v7378
    %8323 = vmatprep.subr.bf16.mxu0 0
    %8324 = vmatpush1.bf16.msra.mxu0 %v7385
    %8325 = vmatprep.subr.bf16.mxu0 0
    %8326 = vmatpush1.bf16.msra.mxu0 %v7392
    %8327 = vmatprep.subr.bf16.mxu0 0
    %8328 = vmatpush1.bf16.msra.mxu0 %v7399
    %8329 = vmatprep.subr.bf16.mxu0 0
    %8330 = vmatpush1.bf16.msra.mxu0 %v7406
    %8331 = vmatprep.subr.bf16.mxu0 0
    %8332 = vmatpush1.bf16.msra.mxu0 %v7413
    %8333 = vmatprep.subr.bf16.mxu0 0
    %8334 = vmatpush1.bf16.msra.mxu0 %v7420
    %8335 = vmatprep.subr.bf16.mxu0 0
    %8336 = vmatpush1.bf16.msra.mxu0 %v7427
    %8337 = vmatprep.subr.bf16.mxu0 0
    %8338 = vmatpush1.bf16.msra.mxu0 %v7434
    %8339 = vmatprep.subr.bf16.mxu0 0
    %8340 = vmatpush1.bf16.msra.mxu0 %v7441
    %8341 = vmatprep.subr.bf16.mxu0 0
    %8342 = vmatpush1.bf16.msra.mxu0 %v7448
    %8343 = vmatprep.subr.bf16.mxu0 0
    %8344 = vmatpush1.bf16.msra.mxu0 %v7455
    %8345 = vmatprep.mubr.bf16.mxu0 %v5752
    %8346 = vmatmul.mubr.bf16.gmra.mrb[0].mxu0 %v5751
    %v8347 = vpop.f32.mrb[0].mxu0
    %v8348 = vadd.f32 %v8308, %v8347
    %v8349 = vpop.f32.mrb[0].mxu0
    %v8350 = vpop.f32.mrb[0].mxu0
    %v8351 = vpop.f32.mrb[0].mxu0
    %8352 = vdwg.mxu0
    %8353 = vmatprep.subr.bf16.mxu0 0
    %8354 = vmatpush1.bf16.msra.mxu0 %v7462
    %8355 = vmatprep.subr.bf16.mxu0 0
    %8356 = vmatpush1.bf16.msra.mxu0 %v7469
    %8357 = vmatprep.subr.bf16.mxu0 0
    %8358 = vmatpush1.bf16.msra.mxu0 %v7476
    %8359 = vmatprep.subr.bf16.mxu0 0
    %8360 = vmatpush1.bf16.msra.mxu0 %v7483
    %8361 = vmatprep.subr.bf16.mxu0 0
    %8362 = vmatpush1.bf16.msra.mxu0 %v7490
    %8363 = vmatprep.subr.bf16.mxu0 0
    %8364 = vmatpush1.bf16.msra.mxu0 %v7497
    %8365 = vmatprep.subr.bf16.mxu0 0
    %8366 = vmatpush1.bf16.msra.mxu0 %v7504
    %8367 = vmatprep.subr.bf16.mxu0 0
    %8368 = vmatpush1.bf16.msra.mxu0 %v7511
    %8369 = vmatprep.subr.bf16.mxu0 0
    %8370 = vmatpush1.bf16.msra.mxu0 %v7518
    %8371 = vmatprep.subr.bf16.mxu0 0
    %8372 = vmatpush1.bf16.msra.mxu0 %v7525
    %8373 = vmatprep.subr.bf16.mxu0 0
    %8374 = vmatpush1.bf16.msra.mxu0 %v7532
    %8375 = vmatprep.subr.bf16.mxu0 0
    %8376 = vmatpush1.bf16.msra.mxu0 %v7539
    %8377 = vmatprep.subr.bf16.mxu0 0
    %8378 = vmatpush1.bf16.msra.mxu0 %v7546
    %8379 = vmatprep.subr.bf16.mxu0 0
    %8380 = vmatpush1.bf16.msra.mxu0 %v7553
    %8381 = vmatprep.subr.bf16.mxu0 0
    %8382 = vmatpush1.bf16.msra.mxu0 %v7560
    %8383 = vmatprep.subr.bf16.mxu0 0
    %8384 = vmatpush1.bf16.msra.mxu0 %v7567
    %8385 = vmatprep.mubr.bf16.mxu0 %v5754
    %8386 = vmatmul.mubr.bf16.gmra.mrb[0].mxu0 %v5753
    %v8387 = vpop.f32.mrb[0].mxu0
    %v8388 = vadd.f32 %v8348, %v8387
    %v8389 = vpop.f32.mrb[0].mxu0
    %v8390 = vpop.f32.mrb[0].mxu0
    %v8391 = vpop.f32.mrb[0].mxu0
    %8392 = vdwg.mxu0
    %8393 = vst [vmem:[#allocation5] sm:$0xff] %v8021
    %8394 = vst [vmem:[#allocation5 + $0x8] sm:$0xff] %v8023
    %8395 = vst [vmem:[#allocation5 + $0x10] sm:$0xff] %v8144
    %8396 = vst [vmem:[#allocation5 + $0x18] sm:$0xff] %v8146
    %8397 = vst [vmem:[#allocation5 + $0x20] sm:$0xff] %v8267
    %8398 = vst [vmem:[#allocation5 + $0x28] sm:$0xff] %v8269
    %vm8399 = vcmask 261120
    %8400 = vst.msk [vmem:[#allocation5 + $0x30] sm:$0xff] %vm8399, %v8388
    // Predicated region
    $region66: #{_mlp_forward_impl.1} parent=1 // pred_check
      _
    $region67: #{_mlp_forward_impl.1} parent=1 // pred_check_branch
      %8402 = sbr.rel (0) target = $region69
    $region68: #{_mlp_forward_impl.1} parent=1 // pred_region
      %s8404 = ssub.s32 896, 896
      %8405 = vsyncadd [#allocation4], %s8404
      %s8407 = sshll.u32 [#allocation5], 4
      %s8408 = int_to_ptr.vmem [resolvable:$true] %s8407
      %8410 = dma.vmem_to_hbm [thread:$0]  %s8408, 896, %s15, [#allocation4]
    $region69: #{_mlp_forward_impl.1} parent=1 // pred_fallthru
      _
    // Predicated region
    $region70: #{_mlp_forward_impl.1} parent=1 // pred_check
      _
    $region71: #{_mlp_forward_impl.1} parent=1 // pred_check_branch
      %8412 = sbr.rel (0) target = $region73
    $region72: #{_mlp_forward_impl.1} parent=1 // pred_region
      %8413 = dma.done [#allocation4], 896
    $region73: #{_mlp_forward_impl.1} parent=1 // pred_fallthru
      _
    %8414 = vsyncpa [#allocation3], 1
    %8415 = vsyncpa [#allocation4], 1

</llo_original>
